<compile_context>
chip_gen: v7x
topology: tpu7x:2x2x1
jax: 0.10.0
libtpu: 0.0.40
codegen_flags: <defaults>
</compile_context>

<pallas_src>
import functools

import jax
import jax.numpy as jnp
from jax import lax
from jax.experimental import pallas as pl
from jax.experimental.pallas import tpu as pltpu

MXU_DTYPE = jnp.bfloat16   # bf16 MXU inputs / weights, f32 accumulation
ACT_DTYPE = jnp.bfloat16   # inter-kernel activations in HBM
LANE = 128
_LN_EPS = 1e-5

_LAYER_KEYS = ("ln1_g", "ln1_b", "w_q", "w_k", "w_v", "w_out", "b_out",
               "ln2_g", "ln2_b", "w_ff1", "b_ff1", "w_ff2", "b_ff2")
_N_LAYER_REFS = len(_LAYER_KEYS)

_COMPILER_PARAMS = pltpu.CompilerParams(
    dimension_semantics=("parallel",),      # batch axis -> both v7x TensorCores
    # explicit per review; re-derive tiling / add a K grid axis if scaled to real
    # ViT sizes on v7x (64 MiB physical VMEM).
    vmem_limit_bytes=32 * 1024 * 1024,
)


def _round_up(x, m):
    return ((x + m - 1) // m) * m


# ----------------------------------------------------------------------------
# In-kernel helpers (operate on values already loaded from refs)
# ----------------------------------------------------------------------------
def _layernorm(x, g, b, d_real):
    """LayerNorm over the last axis. Lanes >= d_real must hold exact zeros."""
    mu = jnp.sum(x, axis=-1, keepdims=True) * (1.0 / d_real)
    diff = x - mu
    if x.shape[-1] != d_real:
        lane = lax.broadcasted_iota(jnp.int32, x.shape, x.ndim - 1)
        diff = jnp.where(lane < d_real, diff, 0.0)
    var = jnp.sum(diff * diff, axis=-1, keepdims=True) * (1.0 / d_real)
    return diff * lax.rsqrt(var + _LN_EPS) * g + b


def _matmul(a, w):
    """a @ w with bf16 MXU inputs, f32 accumulation."""
    return jnp.dot(a.astype(MXU_DTYPE), w.astype(MXU_DTYPE),
                   preferred_element_type=jnp.float32)


def _attention(x, wq, wk, wv, wo, bo, *, heads, scale):
    """All-heads attention batched over the head axis (no lane-dim slicing).

    x: (S, Dp) f32 pre-normed.  wq/wk/wv/wo: (H, dh, Dp) bf16.  bo: (1, Dp) f32.
    """
    s_len, d_pad = x.shape
    xb = jnp.broadcast_to(x.astype(MXU_DTYPE)[None], (heads, s_len, d_pad))
    q = jnp.einsum("hsd,hed->hse", xb, wq, preferred_element_type=jnp.float32)
    k = jnp.einsum("hsd,hed->hse", xb, wk, preferred_element_type=jnp.float32)
    v = jnp.einsum("hsd,hed->hse", xb, wv, preferred_element_type=jnp.float32)
    s = jnp.einsum("hqe,hke->hqk", q.astype(MXU_DTYPE), k.astype(MXU_DTYPE),
                   preferred_element_type=jnp.float32) * scale
    s = s - jnp.max(s, axis=-1, keepdims=True)
    p = jnp.exp(s)
    p = p * pl.reciprocal(jnp.sum(p, axis=-1, keepdims=True), approx=True)
    o = jnp.einsum("hqk,hke->hqe", p.astype(MXU_DTYPE), v.astype(MXU_DTYPE),
                   preferred_element_type=jnp.float32)
    out = jnp.einsum("hse,hed->hsd", o.astype(MXU_DTYPE), wo,
                     preferred_element_type=jnp.float32)
    return jnp.sum(out, axis=0) + bo


def _load_layer(lp):
    (ln1g, ln1b, wq, wk, wv, wo, bo, ln2g, ln2b, w1, b1, w2, b2) = lp
    f32 = jnp.float32
    return (ln1g[...].astype(f32), ln1b[...].astype(f32),
            wq[...], wk[...], wv[...], wo[...], bo[...].astype(f32),
            ln2g[...].astype(f32), ln2b[...].astype(f32),
            w1[...], b1[...].astype(f32), w2[...], b2[...].astype(f32))


def _vit_layer(x, vals, *, heads, scale, d_real):
    """One pre-norm ViT block: LN->MHA->(+res), LN->MLP(GELU)->(+res)."""
    (ln1g, ln1b, wq, wk, wv, wo, bo, ln2g, ln2b, w1, b1, w2, b2) = vals
    h = _layernorm(x, ln1g, ln1b, d_real)
    x = x + _attention(h, wq, wk, wv, wo, bo, heads=heads, scale=scale)
    h = _layernorm(x, ln2g, ln2b, d_real)
    h = _matmul(h, w1) + b1
    # TODO(synk): PyTorch nn.GELU() is exact-erf; tanh approximation used (EUP path).
    h = jax.nn.gelu(h, approximate=True)
    h = _matmul(h, w2) + b2
    return x + h


# ----------------------------------------------------------------------------
# Fused Pallas kernels
# ----------------------------------------------------------------------------
def _encoder_stack_kernel(*refs, depth, heads, scale, pd, d_real):
    """patch-embed -> encoder layers -> final LN -> enc_to_dec (+decoder pos-emb)."""
    it = iter(refs)
    patches_ref = next(it); pos_ref = next(it); dpos_ref = next(it)
    g1 = next(it); b1 = next(it); wpe = next(it); bpe = next(it)
    g2 = next(it); b2 = next(it)
    layer_refs = [tuple(next(it) for _ in range(_N_LAYER_REFS)) for _ in range(depth)]
    lnf_g = next(it); lnf_b = next(it); we2d = next(it); be2d = next(it)
    o_ref = next(it)
    f32 = jnp.float32

    # patch embedding: LN(patch_dim) -> Linear -> LN(dim) -> + pos
    x = patches_ref[0].astype(f32)
    x = _layernorm(x, g1[...].astype(f32), b1[...].astype(f32), pd)
    x = _matmul(x, wpe[...]) + bpe[...].astype(f32)
    x = _layernorm(x, g2[...].astype(f32), b2[...].astype(f32), d_real)
    x = x + pos_ref[0].astype(f32)

    for lp in layer_refs:
        x = _vit_layer(x, _load_layer(lp), heads=heads, scale=scale, d_real=d_real)

    x = _layernorm(x, lnf_g[...].astype(f32), lnf_b[...].astype(f32), d_real)
    # enc_to_dec + decoder positional-embedding add, fused into the epilogue
    y = _matmul(x, we2d[...]) + be2d[...].astype(f32) + dpos_ref[0].astype(f32)
    o_ref[0] = y.astype(o_ref.dtype)


def _decoder_stack_kernel(*refs, depth, heads, scale, d_real):
    """decoder layers -> final LN -> to_pixels (on all tokens)."""
    it = iter(refs)
    x_ref = next(it)
    layer_refs = [tuple(next(it) for _ in range(_N_LAYER_REFS)) for _ in range(depth)]
    lnf_g = next(it); lnf_b = next(it); wpx = next(it); bpx = next(it)
    o_ref = next(it)
    f32 = jnp.float32

    x = x_ref[0].astype(f32)
    for lp in layer_refs:
        x = _vit_layer(x, _load_layer(lp), heads=heads, scale=scale, d_real=d_real)
    x = _layernorm(x, lnf_g[...].astype(f32), lnf_b[...].astype(f32), d_real)
    y = _matmul(x, wpx[...]) + bpx[...].astype(f32)
    o_ref[0] = y.astype(o_ref.dtype)


# ----------------------------------------------------------------------------
# pallas_call wrappers
# ----------------------------------------------------------------------------
def _const_spec(shape):
    zeros = (0,) * len(shape)
    return pl.BlockSpec(shape, lambda b, _z=zeros: _z)


def _layer_specs(heads, dim_head, d_pad, mlp_pad):
    hw = _const_spec((heads, dim_head, d_pad))
    vec = _const_spec((1, d_pad))
    return [vec, vec,                       # ln1 g, b
            hw, hw, hw, hw,                 # w_q, w_k, w_v, w_out
            vec,                            # b_out
            vec, vec,                       # ln2 g, b
            _const_spec((d_pad, mlp_pad)), _const_spec((1, mlp_pad)),   # w_ff1, b_ff1
            _const_spec((mlp_pad, d_pad)), vec]                         # w_ff2, b_ff2


def encoder_forward(patches_u, pos_u, dpos_u, params, config):
    B, su, pd = patches_u.shape
    enc = params["encoder_transformer"]
    depth = config["encoder_depth"]
    heads = config["encoder_heads"]
    dim_head = config["encoder_dim_head"]
    d_real = config["encoder_dim"]
    d_pad = params["pe_w"].shape[1]
    dd_pad = params["enc2dec_w"].shape[1]
    mlp_pad = enc["layers"][0]["w_ff1"].shape[1]
    scale = dim_head ** -0.5

    args = [patches_u, pos_u, dpos_u,
            params["pe_ln1_g"], params["pe_ln1_b"], params["pe_w"], params["pe_b"],
            params["pe_ln2_g"], params["pe_ln2_b"]]
    in_specs = [pl.BlockSpec((1, su, pd), lambda b: (b, 0, 0)),
                pl.BlockSpec((1, su, d_pad), lambda b: (b, 0, 0)),
                pl.BlockSpec((1, su, dd_pad), lambda b: (b, 0, 0)),
                _const_spec((1, pd)), _const_spec((1, pd)),
                _const_spec((pd, d_pad)), _const_spec((1, d_pad)),
                _const_spec((1, d_pad)), _const_spec((1, d_pad))]
    for layer in enc["layers"]:
        args += [layer[k] for k in _LAYER_KEYS]
        in_specs += _layer_specs(heads, dim_head, d_pad, mlp_pad)
    args += [enc["ln_final_g"], enc["ln_final_b"],
             params["enc2dec_w"], params["enc2dec_b"]]
    in_specs += [_const_spec((1, d_pad)), _const_spec((1, d_pad)),
                 _const_spec((d_pad, dd_pad)), _const_spec((1, dd_pad))]

    kernel = functools.partial(_encoder_stack_kernel, depth=depth, heads=heads,
                               scale=scale, pd=pd, d_real=d_real)
    return pl.pallas_call(
        kernel,
        out_shape=jax.ShapeDtypeStruct((B, su, dd_pad), ACT_DTYPE),
        grid=(B,),
        in_specs=in_specs,
        out_specs=pl.BlockSpec((1, su, dd_pad), lambda b: (b, 0, 0)),
        compiler_params=_COMPILER_PARAMS,
    )(*args)


def decoder_forward(x, params, config):
    B, n, dd_pad = x.shape
    dec = params["decoder_transformer"]
    depth = config["decoder_depth"]
    heads = config["decoder_heads"]
    dim_head = config["decoder_dim_head"]
    d_real = config["decoder_dim"]
    mlp_pad = dec["layers"][0]["w_ff1"].shape[1]
    pd = params["to_pixels_w"].shape[1]
    scale = dim_head ** -0.5

    args = [x]
    in_specs = [pl.BlockSpec((1, n, dd_pad), lambda b: (b, 0, 0))]
    for layer in dec["layers"]:
        args += [layer[k] for k in _LAYER_KEYS]
        in_specs += _layer_specs(heads, dim_head, dd_pad, mlp_pad)
    args += [dec["ln_final_g"], dec["ln_final_b"],
             params["to_pixels_w"], params["to_pixels_b"]]
    in_specs += [_const_spec((1, dd_pad)), _const_spec((1, dd_pad)),
                 _const_spec((dd_pad, pd)), _const_spec((1, pd))]

    kernel = functools.partial(_decoder_stack_kernel, depth=depth, heads=heads,
                               scale=scale, d_real=d_real)
    return pl.pallas_call(
        kernel,
        out_shape=jax.ShapeDtypeStruct((B, n, pd), jnp.float32),
        grid=(B,),
        in_specs=in_specs,
        out_specs=pl.BlockSpec((1, n, pd), lambda b: (b, 0, 0)),
        compiler_params=_COMPILER_PARAMS,
    )(*args)


# ----------------------------------------------------------------------------
# Parameter construction (zero-padded to lane-dense shapes)
# ----------------------------------------------------------------------------
def _padded_weight(key, real_shape, padded_shape, scale=0.02, dtype=MXU_DTYPE):
    w = scale * jax.random.normal(key, real_shape, jnp.float32)
    out = jnp.zeros(padded_shape, jnp.float32)
    out = out.at[tuple(slice(0, s) for s in real_shape)].set(w)
    return out.astype(dtype)


def _padded_gain(d_real, d_pad):
    return jnp.zeros((1, d_pad), jnp.float32).at[:, :d_real].set(1.0)


def init_transformer(key, dim, dim_pad, depth, heads, dim_head, mlp_dim, mlp_pad):
    layers = []
    for _ in range(depth):
        key, kq, kk, kv, ko, k1, k2 = jax.random.split(key, 7)
        layers.append({
            "ln1_g": _padded_gain(dim, dim_pad),
            "ln1_b": jnp.zeros((1, dim_pad), jnp.float32),
            # per-head projection weights stored (heads, dim_head, dim_pad), bf16
            "w_q": _padded_weight(kq, (heads, dim_head, dim), (heads, dim_head, dim_pad)),
            "w_k": _padded_weight(kk, (heads, dim_head, dim), (heads, dim_head, dim_pad)),
            "w_v": _padded_weight(kv, (heads, dim_head, dim), (heads, dim_head, dim_pad)),
            "w_out": _padded_weight(ko, (heads, dim_head, dim), (heads, dim_head, dim_pad)),
            "b_out": jnp.zeros((1, dim_pad), jnp.float32),
            "ln2_g": _padded_gain(dim, dim_pad),
            "ln2_b": jnp.zeros((1, dim_pad), jnp.float32),
            "w_ff1": _padded_weight(k1, (dim, mlp_dim), (dim_pad, mlp_pad)),
            "b_ff1": jnp.zeros((1, mlp_pad), jnp.float32),
            "w_ff2": _padded_weight(k2, (mlp_dim, dim), (mlp_pad, dim_pad)),
            "b_ff2": jnp.zeros((1, dim_pad), jnp.float32),
        })
    return {"layers": layers,
            "ln_final_g": _padded_gain(dim, dim_pad),
            "ln_final_b": jnp.zeros((1, dim_pad), jnp.float32)}


def init_mae(key, config):
    p_sz, img_sz, channels = config["patch_size"], config["image_size"], config["channels"]
    e_dim, e_depth = config["encoder_dim"], config["encoder_depth"]
    e_heads, e_dh = config["encoder_heads"], config["encoder_dim_head"]
    d_dim, d_depth = config["decoder_dim"], config["decoder_depth"]
    d_heads, d_dh = config["decoder_heads"], config["decoder_dim_head"]

    num_patches = (img_sz // p_sz) ** 2
    patch_dim = p_sz * p_sz * channels
    de_pad = _round_up(e_dim, LANE)
    dd_pad = _round_up(d_dim, LANE)
    e_mlp_pad = _round_up(4 * e_dim, LANE)
    d_mlp_pad = _round_up(4 * d_dim, LANE)

    ks = jax.random.split(key, 9)
    return {
        # encoder.to_patch_embedding[1:] = LayerNorm(patch_dim), Linear, LayerNorm(dim)
        "pe_ln1_g": jnp.ones((1, patch_dim), jnp.float32),
        "pe_ln1_b": jnp.zeros((1, patch_dim), jnp.float32),
        "pe_w": _padded_weight(ks[0], (patch_dim, e_dim), (patch_dim, de_pad)),
        "pe_b": jnp.zeros((1, de_pad), jnp.float32),
        "pe_ln2_g": _padded_gain(e_dim, de_pad),
        "pe_ln2_b": jnp.zeros((1, de_pad), jnp.float32),
        # pool == 'cls' -> pos_embedding keeps a CLS slot: (1, num_patches + 1, dim)
        "pos_embedding": _padded_weight(ks[1], (1, num_patches + 1, e_dim),
                                        (1, num_patches + 1, de_pad),
                                        scale=1.0, dtype=jnp.float32),
        "encoder_transformer": init_transformer(ks[2], e_dim, de_pad, e_depth,
                                                e_heads, e_dh, 4 * e_dim, e_mlp_pad),
        "enc2dec_w": _padded_weight(ks[3], (e_dim, d_dim), (de_pad, dd_pad)),
        "enc2dec_b": jnp.zeros((1, dd_pad), jnp.float32),
        "mask_token": _padded_weight(ks[4], (d_dim,), (dd_pad,),
                                     scale=1.0, dtype=jnp.float32),
        "decoder_transformer": init_transformer(ks[5], d_dim, dd_pad, d_depth,
                                                d_heads, d_dh, 4 * d_dim, d_mlp_pad),
        # reference uses nn.Embedding(pos_embedding.shape[-2], decoder_dim) ==
        # num_patches + 1 rows; only rows 0..num_patches-1 are ever indexed.
        "decoder_pos_emb": _padded_weight(ks[6], (num_patches + 1, d_dim),
                                          (num_patches + 1, dd_pad),
                                          scale=1.0, dtype=jnp.float32),
        "to_pixels_w": _padded_weight(ks[7], (d_dim, patch_dim), (dd_pad, patch_dim)),
        "to_pixels_b": jnp.zeros((1, patch_dim), jnp.float32),
    }


# ----------------------------------------------------------------------------
# MAE_Recon forward (data-dependent glue in plain JAX)
# ----------------------------------------------------------------------------
def mae_forward(params, img, mask_key, *, config):
    B, C, H, W = img.shape
    p = config["patch_size"]
    hn, wn = H // p, W // p
    num_patches = hn * wn
    patch_dim = p * p * C

    # to_patch: 'b c (h p1) (w p2) -> b (h w) (p1 p2 c)'
    x = img.reshape(B, C, hn, p, wn, p).transpose(0, 2, 4, 3, 5, 1)
    patches = x.reshape(B, num_patches, patch_dim)

    num_masked = int(config["masking_ratio"] * num_patches)
    rand = jax.random.uniform(mask_key, (B, num_patches))
    rand_indices = jnp.argsort(rand, axis=-1)
    batch_range = jnp.arange(B)[:, None]

    pos_patches = params["pos_embedding"][0, 1:num_patches + 1]   # pool == 'cls'
    dec_pos = params["decoder_pos_emb"]

    # TODO(synk): token gathers / inverse-permutation scatter stay in plain JAX;
    # they could move into the kernels via PrefetchScalarGridSpec index prefetch.
    # TODO(synk): the two ragged mask chunks (S=4 / S=12) compile two encoder
    # specializations; a single padded invocation with attention masking would
    # halve weight DMA and kernel launches.
    all_masked_indices, all_pred = [], []
    for i in range(0, num_patches, num_masked):
        masked_indices = rand_indices[:, i:i + num_masked]
        if i != 0:
            unmasked_indices = jnp.concatenate(
                [rand_indices[:, :i], rand_indices[:, i + num_masked:]], axis=1)
        else:
            unmasked_indices = rand_indices[:, i + num_masked:]

        patches_u = patches[batch_range, unmasked_indices]
        masked_patches = patches[batch_range, masked_indices]
        pos_u = pos_patches[unmasked_indices]
        dpos_u = dec_pos[unmasked_indices]

        # fused: patch-embed -> encoder layers -> final LN -> enc_to_dec (+dec pos)
        unmasked_decoder_tokens = encoder_forward(patches_u, pos_u, dpos_u,
                                                  params, config)

        mask_tok = (params["mask_token"][None, None, :]
                    + dec_pos[masked_indices]).astype(ACT_DTYPE)

        # unmasked + masked indices form a full permutation, so the torch scatter
        # is equivalent to an inverse-permutation gather.
        full_idx = jnp.concatenate([unmasked_indices, masked_indices], axis=1)
        full_vals = jnp.concatenate([unmasked_decoder_tokens, mask_tok], axis=1)
        inv = jnp.argsort(full_idx, axis=1)
        decoder_tokens = jnp.take_along_axis(full_vals, inv[:, :, None], axis=1)

        # fused: decoder layers -> final LN -> to_pixels (applied to all tokens;
        # to_pixels is per-token so gathering masked rows afterwards is identical).
        pred_all = decoder_forward(decoder_tokens, params, config)
        pred_pixel_values = pred_all[batch_range, masked_indices]

        _recon_loss = jnp.mean((pred_pixel_values - masked_patches) ** 2)  # computed, unused (matches reference)

        all_masked_indices.append(masked_indices)
        all_pred.append(pred_pixel_values)

    final_indices = jnp.concatenate(all_masked_indices, axis=1)   # full permutation
    final_pred = jnp.concatenate(all_pred, axis=1)
    inv = jnp.argsort(final_indices, axis=1)
    reconstructed = jnp.take_along_axis(final_pred, inv[:, :, None], axis=1)

    # invert_patch: 'b (h w) (p1 p2 c) -> b c (h p1) (w p2)'
    r = reconstructed.reshape(B, hn, wn, p, p, C).transpose(0, 5, 1, 3, 2, 4)
    reconstructed_image = r.reshape(B, C, H, W)
    return img, reconstructed_image


# ----------------------------------------------------------------------------
if __name__ == "__main__":
    key = jax.random.PRNGKey(0)
    k_img, k_params, k_mask = jax.random.split(key, 3)

    B, C, H, W = 2, 4, 32, 32
    config = dict(
        image_size=H, channels=C, patch_size=8, masking_ratio=0.75,   # 16 patches, 12 masked
        encoder_dim=32, encoder_depth=1, encoder_heads=4, encoder_dim_head=8,
        decoder_dim=48, decoder_depth=1, decoder_heads=4, decoder_dim_head=16,
    )

    img = jax.random.normal(k_img, (B, C, H, W), jnp.float32)
    params = init_mae(k_params, config)

    fwd = jax.jit(functools.partial(mae_forward, config=config))
    orig, recon = fwd(params, img, k_mask)
    jax.block_until_ready(recon)

    assert orig.shape == (B, C, H, W)
    assert recon.shape == (B, C, H, W)
    assert bool(jnp.all(jnp.isfinite(recon)))
    print("KERNEL_OK")
</pallas_src>

<mosaic_0001>
module attributes {stable_mosaic.version = 11 : i64} {
  func.func @_encoder_stack_kernel(%arg0: i32, %arg1: memref<1x4x256xf32, #tpu.memory_space<vmem>>, %arg2: memref<1x4x128xf32, #tpu.memory_space<vmem>>, %arg3: memref<1x4x128xf32, #tpu.memory_space<vmem>>, %arg4: memref<1x256xf32, #tpu.memory_space<vmem>>, %arg5: memref<1x256xf32, #tpu.memory_space<vmem>>, %arg6: memref<256x128xbf16, #tpu.memory_space<vmem>>, %arg7: memref<1x128xf32, #tpu.memory_space<vmem>>, %arg8: memref<1x128xf32, #tpu.memory_space<vmem>>, %arg9: memref<1x128xf32, #tpu.memory_space<vmem>>, %arg10: memref<1x128xf32, #tpu.memory_space<vmem>>, %arg11: memref<1x128xf32, #tpu.memory_space<vmem>>, %arg12: memref<4x8x128xbf16, #tpu.memory_space<vmem>>, %arg13: memref<4x8x128xbf16, #tpu.memory_space<vmem>>, %arg14: memref<4x8x128xbf16, #tpu.memory_space<vmem>>, %arg15: memref<4x8x128xbf16, #tpu.memory_space<vmem>>, %arg16: memref<1x128xf32, #tpu.memory_space<vmem>>, %arg17: memref<1x128xf32, #tpu.memory_space<vmem>>, %arg18: memref<1x128xf32, #tpu.memory_space<vmem>>, %arg19: memref<128x128xbf16, #tpu.memory_space<vmem>>, %arg20: memref<1x128xf32, #tpu.memory_space<vmem>>, %arg21: memref<128x128xbf16, #tpu.memory_space<vmem>>, %arg22: memref<1x128xf32, #tpu.memory_space<vmem>>, %arg23: memref<1x128xf32, #tpu.memory_space<vmem>>, %arg24: memref<1x128xf32, #tpu.memory_space<vmem>>, %arg25: memref<128x128xbf16, #tpu.memory_space<vmem>>, %arg26: memref<1x128xf32, #tpu.memory_space<vmem>>, %arg27: memref<1x4x128xbf16, #tpu.memory_space<vmem>>) attributes {dimension_semantics = [#tpu.dimension_semantics<parallel>], iteration_bounds = array<i64: 2>, scalar_prefetch = 0 : i64, scratch_operands = 0 : i64, tpu.core_type = #tpu.core_type<tc>, window_params = [{transform_indices = @transform_0, window_bounds = array<i64: 1, 4, 256>}, {transform_indices = @transform_1, window_bounds = array<i64: 1, 4, 128>}, {transform_indices = @transform_2, window_bounds = array<i64: 1, 4, 128>}, {pipeline_mode = #tpu.pipeline_mode<synchronous>, transform_indices = @transform_3, window_bounds = array<i64: 1, 256>}, {pipeline_mode = #tpu.pipeline_mode<synchronous>, transform_indices = @transform_4, window_bounds = array<i64: 1, 256>}, {pipeline_mode = #tpu.pipeline_mode<synchronous>, transform_indices = @transform_5, window_bounds = array<i64: 256, 128>}, {pipeline_mode = #tpu.pipeline_mode<synchronous>, transform_indices = @transform_6, window_bounds = array<i64: 1, 128>}, {pipeline_mode = #tpu.pipeline_mode<synchronous>, transform_indices = @transform_7, window_bounds = array<i64: 1, 128>}, {pipeline_mode = #tpu.pipeline_mode<synchronous>, transform_indices = @transform_8, window_bounds = array<i64: 1, 128>}, {pipeline_mode = #tpu.pipeline_mode<synchronous>, transform_indices = @transform_9, window_bounds = array<i64: 1, 128>}, {pipeline_mode = #tpu.pipeline_mode<synchronous>, transform_indices = @transform_10, window_bounds = array<i64: 1, 128>}, {pipeline_mode = #tpu.pipeline_mode<synchronous>, transform_indices = @transform_11, window_bounds = array<i64: 4, 8, 128>}, {pipeline_mode = #tpu.pipeline_mode<synchronous>, transform_indices = @transform_12, window_bounds = array<i64: 4, 8, 128>}, {pipeline_mode = #tpu.pipeline_mode<synchronous>, transform_indices = @transform_13, window_bounds = array<i64: 4, 8, 128>}, {pipeline_mode = #tpu.pipeline_mode<synchronous>, transform_indices = @transform_14, window_bounds = array<i64: 4, 8, 128>}, {pipeline_mode = #tpu.pipeline_mode<synchronous>, transform_indices = @transform_15, window_bounds = array<i64: 1, 128>}, {pipeline_mode = #tpu.pipeline_mode<synchronous>, transform_indices = @transform_16, window_bounds = array<i64: 1, 128>}, {pipeline_mode = #tpu.pipeline_mode<synchronous>, transform_indices = @transform_17, window_bounds = array<i64: 1, 128>}, {pipeline_mode = #tpu.pipeline_mode<synchronous>, transform_indices = @transform_18, window_bounds = array<i64: 128, 128>}, {pipeline_mode = #tpu.pipeline_mode<synchronous>, transform_indices = @transform_19, window_bounds = array<i64: 1, 128>}, {pipeline_mode = #tpu.pipeline_mode<synchronous>, transform_indices = @transform_20, window_bounds = array<i64: 128, 128>}, {pipeline_mode = #tpu.pipeline_mode<synchronous>, transform_indices = @transform_21, window_bounds = array<i64: 1, 128>}, {pipeline_mode = #tpu.pipeline_mode<synchronous>, transform_indices = @transform_22, window_bounds = array<i64: 1, 128>}, {pipeline_mode = #tpu.pipeline_mode<synchronous>, transform_indices = @transform_23, window_bounds = array<i64: 1, 128>}, {pipeline_mode = #tpu.pipeline_mode<synchronous>, transform_indices = @transform_24, window_bounds = array<i64: 128, 128>}, {pipeline_mode = #tpu.pipeline_mode<synchronous>, transform_indices = @transform_25, window_bounds = array<i64: 1, 128>}, {transform_indices = @transform_26, window_bounds = array<i64: 1, 4, 128>}]} {
    %c0 = arith.constant 0 : index
    %c0_0 = arith.constant 0 : index
    %c0_1 = arith.constant 0 : index
    %0 = vector.load %arg1[%c0, %c0_0, %c0_1] : memref<1x4x256xf32, #tpu.memory_space<vmem>>, vector<1x4x256xf32>
    %1 = vector.shape_cast %0 : vector<1x4x256xf32> to vector<4x256xf32>
    %c0_2 = arith.constant 0 : index
    %c0_3 = arith.constant 0 : index
    %2 = vector.load %arg4[%c0_2, %c0_3] : memref<1x256xf32, #tpu.memory_space<vmem>>, vector<1x256xf32>
    %c0_4 = arith.constant 0 : index
    %c0_5 = arith.constant 0 : index
    %3 = vector.load %arg5[%c0_4, %c0_5] : memref<1x256xf32, #tpu.memory_space<vmem>>, vector<1x256xf32>
    %cst = arith.constant dense<0.000000e+00> : vector<4xf32>
    %4 = vector.multi_reduction <add>, %1, %cst [1] : vector<4x256xf32> to vector<4xf32>
    %5 = vector.shape_cast %4 : vector<4xf32> to vector<4x1xf32>
    %cst_6 = arith.constant 3.906250e-03 : f32
    %6 = vector.broadcast %cst_6 : f32 to vector<4x1xf32>
    %7 = arith.mulf %5, %6 : vector<4x1xf32>
    %8 = vector.broadcast %7 : vector<4x1xf32> to vector<4x256xf32>
    %9 = arith.subf %1, %8 : vector<4x256xf32>
    %10 = arith.mulf %9, %9 : vector<4x256xf32>
    %cst_7 = arith.constant dense<0.000000e+00> : vector<4xf32>
    %11 = vector.multi_reduction <add>, %10, %cst_7 [1] : vector<4x256xf32> to vector<4xf32>
    %12 = vector.shape_cast %11 : vector<4xf32> to vector<4x1xf32>
    %cst_8 = arith.constant 3.906250e-03 : f32
    %13 = vector.broadcast %cst_8 : f32 to vector<4x1xf32>
    %14 = arith.mulf %12, %13 : vector<4x1xf32>
    %cst_9 = arith.constant 9.99999974E-6 : f32
    %15 = vector.broadcast %cst_9 : f32 to vector<4x1xf32>
    %16 = arith.addf %14, %15 : vector<4x1xf32>
    %17 = math.rsqrt %16 : vector<4x1xf32>
    %18 = vector.broadcast %17 : vector<4x1xf32> to vector<4x256xf32>
    %19 = arith.mulf %9, %18 : vector<4x256xf32>
    %20 = vector.broadcast %2 : vector<1x256xf32> to vector<4x256xf32>
    %21 = arith.mulf %19, %20 : vector<4x256xf32>
    %22 = vector.broadcast %3 : vector<1x256xf32> to vector<4x256xf32>
    %23 = arith.addf %21, %22 : vector<4x256xf32>
    %c0_10 = arith.constant 0 : index
    %c0_11 = arith.constant 0 : index
    %24 = vector.load %arg6[%c0_10, %c0_11] : memref<256x128xbf16, #tpu.memory_space<vmem>>, vector<256x128xbf16>
    %25 = arith.truncf %23 : vector<4x256xf32> to vector<4x256xbf16>
    %cst_12 = arith.constant dense<0.000000e+00> : vector<4x128xf32>
    %26 = tpu.matmul %25, %24, %cst_12 {dimension_numbers = #tpu.dot_dimension_numbers<[1], [0], [0], [1], [0, 0, 1, 1], [], []>} : vector<4x256xbf16>, vector<256x128xbf16>, vector<4x128xf32> -> vector<4x128xf32>
    %c0_13 = arith.constant 0 : index
    %c0_14 = arith.constant 0 : index
    %27 = vector.load %arg7[%c0_13, %c0_14] : memref<1x128xf32, #tpu.memory_space<vmem>>, vector<1x128xf32>
    %28 = vector.broadcast %27 : vector<1x128xf32> to vector<4x128xf32>
    %29 = arith.addf %26, %28 : vector<4x128xf32>
    %c0_15 = arith.constant 0 : index
    %c0_16 = arith.constant 0 : index
    %30 = vector.load %arg8[%c0_15, %c0_16] : memref<1x128xf32, #tpu.memory_space<vmem>>, vector<1x128xf32>
    %c0_17 = arith.constant 0 : index
    %c0_18 = arith.constant 0 : index
    %31 = vector.load %arg9[%c0_17, %c0_18] : memref<1x128xf32, #tpu.memory_space<vmem>>, vector<1x128xf32>
    %cst_19 = arith.constant dense<0.000000e+00> : vector<4xf32>
    %32 = vector.multi_reduction <add>, %29, %cst_19 [1] : vector<4x128xf32> to vector<4xf32>
    %33 = vector.shape_cast %32 : vector<4xf32> to vector<4x1xf32>
    %cst_20 = arith.constant 3.125000e-02 : f32
    %34 = vector.broadcast %cst_20 : f32 to vector<4x1xf32>
    %35 = arith.mulf %33, %34 : vector<4x1xf32>
    %36 = vector.broadcast %35 : vector<4x1xf32> to vector<4x128xf32>
    %37 = arith.subf %29, %36 : vector<4x128xf32>
    %38 = tpu.iota {dimensions = array<i32: 1>} : vector<4x128xi32>
    %c32_i32 = arith.constant 32 : i32
    %39 = vector.broadcast %c32_i32 : i32 to vector<4x128xi32>
    %40 = arith.cmpi slt, %38, %39 : vector<4x128xi32>
    %cst_21 = arith.constant 0.000000e+00 : f32
    %41 = vector.broadcast %cst_21 : f32 to vector<4x128xf32>
    %42 = arith.select %40, %37, %41 : vector<4x128xi1>, vector<4x128xf32>
    %43 = arith.mulf %42, %42 : vector<4x128xf32>
    %cst_22 = arith.constant dense<0.000000e+00> : vector<4xf32>
    %44 = vector.multi_reduction <add>, %43, %cst_22 [1] : vector<4x128xf32> to vector<4xf32>
    %45 = vector.shape_cast %44 : vector<4xf32> to vector<4x1xf32>
    %cst_23 = arith.constant 3.125000e-02 : f32
    %46 = vector.broadcast %cst_23 : f32 to vector<4x1xf32>
    %47 = arith.mulf %45, %46 : vector<4x1xf32>
    %cst_24 = arith.constant 9.99999974E-6 : f32
    %48 = vector.broadcast %cst_24 : f32 to vector<4x1xf32>
    %49 = arith.addf %47, %48 : vector<4x1xf32>
    %50 = math.rsqrt %49 : vector<4x1xf32>
    %51 = vector.broadcast %50 : vector<4x1xf32> to vector<4x128xf32>
    %52 = arith.mulf %42, %51 : vector<4x128xf32>
    %53 = vector.broadcast %30 : vector<1x128xf32> to vector<4x128xf32>
    %54 = arith.mulf %52, %53 : vector<4x128xf32>
    %55 = vector.broadcast %31 : vector<1x128xf32> to vector<4x128xf32>
    %56 = arith.addf %54, %55 : vector<4x128xf32>
    %c0_25 = arith.constant 0 : index
    %c0_26 = arith.constant 0 : index
    %c0_27 = arith.constant 0 : index
    %57 = vector.load %arg2[%c0_25, %c0_26, %c0_27] : memref<1x4x128xf32, #tpu.memory_space<vmem>>, vector<1x4x128xf32>
    %58 = vector.shape_cast %57 : vector<1x4x128xf32> to vector<4x128xf32>
    %59 = arith.addf %56, %58 : vector<4x128xf32>
    %c0_28 = arith.constant 0 : index
    %c0_29 = arith.constant 0 : index
    %60 = vector.load %arg10[%c0_28, %c0_29] : memref<1x128xf32, #tpu.memory_space<vmem>>, vector<1x128xf32>
    %c0_30 = arith.constant 0 : index
    %c0_31 = arith.constant 0 : index
    %61 = vector.load %arg11[%c0_30, %c0_31] : memref<1x128xf32, #tpu.memory_space<vmem>>, vector<1x128xf32>
    %c0_32 = arith.constant 0 : index
    %c0_33 = arith.constant 0 : index
    %c0_34 = arith.constant 0 : index
    %62 = vector.load %arg12[%c0_32, %c0_33, %c0_34] : memref<4x8x128xbf16, #tpu.memory_space<vmem>>, vector<4x8x128xbf16>
    %c0_35 = arith.constant 0 : index
    %c0_36 = arith.constant 0 : index
    %c0_37 = arith.constant 0 : index
    %63 = vector.load %arg13[%c0_35, %c0_36, %c0_37] : memref<4x8x128xbf16, #tpu.memory_space<vmem>>, vector<4x8x128xbf16>
    %c0_38 = arith.constant 0 : index
    %c0_39 = arith.constant 0 : index
    %c0_40 = arith.constant 0 : index
    %64 = vector.load %arg14[%c0_38, %c0_39, %c0_40] : memref<4x8x128xbf16, #tpu.memory_space<vmem>>, vector<4x8x128xbf16>
    %c0_41 = arith.constant 0 : index
    %c0_42 = arith.constant 0 : index
    %c0_43 = arith.constant 0 : index
    %65 = vector.load %arg15[%c0_41, %c0_42, %c0_43] : memref<4x8x128xbf16, #tpu.memory_space<vmem>>, vector<4x8x128xbf16>
    %c0_44 = arith.constant 0 : index
    %c0_45 = arith.constant 0 : index
    %66 = vector.load %arg16[%c0_44, %c0_45] : memref<1x128xf32, #tpu.memory_space<vmem>>, vector<1x128xf32>
    %c0_46 = arith.constant 0 : index
    %c0_47 = arith.constant 0 : index
    %67 = vector.load %arg17[%c0_46, %c0_47] : memref<1x128xf32, #tpu.memory_space<vmem>>, vector<1x128xf32>
    %c0_48 = arith.constant 0 : index
    %c0_49 = arith.constant 0 : index
    %68 = vector.load %arg18[%c0_48, %c0_49] : memref<1x128xf32, #tpu.memory_space<vmem>>, vector<1x128xf32>
    %c0_50 = arith.constant 0 : index
    %c0_51 = arith.constant 0 : index
    %69 = vector.load %arg19[%c0_50, %c0_51] : memref<128x128xbf16, #tpu.memory_space<vmem>>, vector<128x128xbf16>
    %c0_52 = arith.constant 0 : index
    %c0_53 = arith.constant 0 : index
    %70 = vector.load %arg20[%c0_52, %c0_53] : memref<1x128xf32, #tpu.memory_space<vmem>>, vector<1x128xf32>
    %c0_54 = arith.constant 0 : index
    %c0_55 = arith.constant 0 : index
    %71 = vector.load %arg21[%c0_54, %c0_55] : memref<128x128xbf16, #tpu.memory_space<vmem>>, vector<128x128xbf16>
    %c0_56 = arith.constant 0 : index
    %c0_57 = arith.constant 0 : index
    %72 = vector.load %arg22[%c0_56, %c0_57] : memref<1x128xf32, #tpu.memory_space<vmem>>, vector<1x128xf32>
    %cst_58 = arith.constant dense<0.000000e+00> : vector<4xf32>
    %73 = vector.multi_reduction <add>, %59, %cst_58 [1] : vector<4x128xf32> to vector<4xf32>
    %74 = vector.shape_cast %73 : vector<4xf32> to vector<4x1xf32>
    %cst_59 = arith.constant 3.125000e-02 : f32
    %75 = vector.broadcast %cst_59 : f32 to vector<4x1xf32>
    %76 = arith.mulf %74, %75 : vector<4x1xf32>
    %77 = vector.broadcast %76 : vector<4x1xf32> to vector<4x128xf32>
    %78 = arith.subf %59, %77 : vector<4x128xf32>
    %79 = tpu.iota {dimensions = array<i32: 1>} : vector<4x128xi32>
    %c32_i32_60 = arith.constant 32 : i32
    %80 = vector.broadcast %c32_i32_60 : i32 to vector<4x128xi32>
    %81 = arith.cmpi slt, %79, %80 : vector<4x128xi32>
    %cst_61 = arith.constant 0.000000e+00 : f32
    %82 = vector.broadcast %cst_61 : f32 to vector<4x128xf32>
    %83 = arith.select %81, %78, %82 : vector<4x128xi1>, vector<4x128xf32>
    %84 = arith.mulf %83, %83 : vector<4x128xf32>
    %cst_62 = arith.constant dense<0.000000e+00> : vector<4xf32>
    %85 = vector.multi_reduction <add>, %84, %cst_62 [1] : vector<4x128xf32> to vector<4xf32>
    %86 = vector.shape_cast %85 : vector<4xf32> to vector<4x1xf32>
    %cst_63 = arith.constant 3.125000e-02 : f32
    %87 = vector.broadcast %cst_63 : f32 to vector<4x1xf32>
    %88 = arith.mulf %86, %87 : vector<4x1xf32>
    %cst_64 = arith.constant 9.99999974E-6 : f32
    %89 = vector.broadcast %cst_64 : f32 to vector<4x1xf32>
    %90 = arith.addf %88, %89 : vector<4x1xf32>
    %91 = math.rsqrt %90 : vector<4x1xf32>
    %92 = vector.broadcast %91 : vector<4x1xf32> to vector<4x128xf32>
    %93 = arith.mulf %83, %92 : vector<4x128xf32>
    %94 = vector.broadcast %60 : vector<1x128xf32> to vector<4x128xf32>
    %95 = arith.mulf %93, %94 : vector<4x128xf32>
    %96 = vector.broadcast %61 : vector<1x128xf32> to vector<4x128xf32>
    %97 = arith.addf %95, %96 : vector<4x128xf32>
    %98 = arith.truncf %97 : vector<4x128xf32> to vector<4x128xbf16>
    %99 = vector.shape_cast %98 : vector<4x128xbf16> to vector<1x4x128xbf16>
    %100 = vector.shape_cast %99 : vector<1x4x128xbf16> to vector<1x4x128xbf16>
    %101 = vector.broadcast %100 : vector<1x4x128xbf16> to vector<4x4x128xbf16>
    "tpu.trace_start"() <{level = 10 : i32, message = "hsd,hed->hse"}> : () -> ()
    %cst_65 = arith.constant dense<0.000000e+00> : vector<4x4x8xf32>
    %102 = tpu.matmul %101, %62, %cst_65 {dimension_numbers = #tpu.dot_dimension_numbers<[2], [2], [1], [1], [0, 0, 0, 1, 1, 1], [0], [0]>} : vector<4x4x128xbf16>, vector<4x8x128xbf16>, vector<4x4x8xf32> -> vector<4x4x8xf32>
    %cst_66 = arith.constant dense<0.000000e+00> : vector<4x4x8xf32>
    %103 = tpu.matmul %101, %63, %cst_66 {dimension_numbers = #tpu.dot_dimension_numbers<[2], [2], [1], [1], [0, 0, 0, 1, 1, 1], [0], [0]>} : vector<4x4x128xbf16>, vector<4x8x128xbf16>, vector<4x4x8xf32> -> vector<4x4x8xf32>
    %cst_67 = arith.constant dense<0.000000e+00> : vector<4x4x8xf32>
    %104 = tpu.matmul %101, %64, %cst_67 {dimension_numbers = #tpu.dot_dimension_numbers<[2], [2], [1], [1], [0, 0, 0, 1, 1, 1], [0], [0]>} : vector<4x4x128xbf16>, vector<4x8x128xbf16>, vector<4x4x8xf32> -> vector<4x4x8xf32>
    "tpu.trace_stop"() : () -> ()
    %105 = arith.truncf %102 : vector<4x4x8xf32> to vector<4x4x8xbf16>
    %106 = arith.truncf %103 : vector<4x4x8xf32> to vector<4x4x8xbf16>
    "tpu.trace_start"() <{level = 10 : i32, message = "hqe,hke->hqk"}> : () -> ()
    %cst_68 = arith.constant dense<0.000000e+00> : vector<4x4x4xf32>
    %107 = tpu.matmul %105, %106, %cst_68 {dimension_numbers = #tpu.dot_dimension_numbers<[2], [2], [1], [1], [0, 0, 0, 1, 1, 1], [0], [0]>} : vector<4x4x8xbf16>, vector<4x4x8xbf16>, vector<4x4x4xf32> -> vector<4x4x4xf32>
    "tpu.trace_stop"() : () -> ()
    %cst_69 = arith.constant 0.353553385 : f32
    %108 = vector.broadcast %cst_69 : f32 to vector<4x4x4xf32>
    %109 = arith.mulf %107, %108 : vector<4x4x4xf32>
    %cst_70 = arith.constant dense<0xFF800000> : vector<4x4xf32>
    %110 = vector.multi_reduction <maximumf>, %109, %cst_70 [2] : vector<4x4x4xf32> to vector<4x4xf32>
    %111 = vector.shape_cast %110 : vector<4x4xf32> to vector<4x4x1xf32>
    %112 = vector.broadcast %111 : vector<4x4x1xf32> to vector<4x4x4xf32>
    %113 = arith.subf %109, %112 : vector<4x4x4xf32>
    %114 = math.exp %113 : vector<4x4x4xf32>
    %cst_71 = arith.constant dense<0.000000e+00> : vector<4x4xf32>
    %115 = vector.multi_reduction <add>, %114, %cst_71 [2] : vector<4x4x4xf32> to vector<4x4xf32>
    %116 = vector.shape_cast %115 : vector<4x4xf32> to vector<4x4x1xf32>
    %117 = tpu.reciprocal %116 {approx = true} : vector<4x4x1xf32> -> vector<4x4x1xf32>
    %118 = vector.broadcast %117 : vector<4x4x1xf32> to vector<4x4x4xf32>
    %119 = arith.mulf %114, %118 : vector<4x4x4xf32>
    %120 = arith.truncf %119 : vector<4x4x4xf32> to vector<4x4x4xbf16>
    %121 = arith.truncf %104 : vector<4x4x8xf32> to vector<4x4x8xbf16>
    "tpu.trace_start"() <{level = 10 : i32, message = "hqk,hke->hqe"}> : () -> ()
    %cst_72 = arith.constant dense<0.000000e+00> : vector<4x4x8xf32>
    %122 = tpu.matmul %120, %121, %cst_72 {dimension_numbers = #tpu.dot_dimension_numbers<[2], [1], [1], [2], [0, 0, 0, 1, 1, 2], [0], [0]>} : vector<4x4x4xbf16>, vector<4x4x8xbf16>, vector<4x4x8xf32> -> vector<4x4x8xf32>
    "tpu.trace_stop"() : () -> ()
    %123 = arith.truncf %122 : vector<4x4x8xf32> to vector<4x4x8xbf16>
    "tpu.trace_start"() <{level = 10 : i32, message = "hse,hed->hsd"}> : () -> ()
    %cst_73 = arith.constant dense<0.000000e+00> : vector<4x4x128xf32>
    %124 = tpu.matmul %123, %65, %cst_73 {dimension_numbers = #tpu.dot_dimension_numbers<[2], [1], [1], [2], [0, 0, 0, 1, 1, 2], [0], [0]>} : vector<4x4x8xbf16>, vector<4x8x128xbf16>, vector<4x4x128xf32> -> vector<4x4x128xf32>
    "tpu.trace_stop"() : () -> ()
    %cst_74 = arith.constant dense<0.000000e+00> : vector<4x128xf32>
    %125 = vector.multi_reduction <add>, %124, %cst_74 [0] : vector<4x4x128xf32> to vector<4x128xf32>
    %126 = vector.broadcast %66 : vector<1x128xf32> to vector<4x128xf32>
    %127 = arith.addf %125, %126 : vector<4x128xf32>
    %128 = arith.addf %59, %127 : vector<4x128xf32>
    %cst_75 = arith.constant dense<0.000000e+00> : vector<4xf32>
    %129 = vector.multi_reduction <add>, %128, %cst_75 [1] : vector<4x128xf32> to vector<4xf32>
    %130 = vector.shape_cast %129 : vector<4xf32> to vector<4x1xf32>
    %cst_76 = arith.constant 3.125000e-02 : f32
    %131 = vector.broadcast %cst_76 : f32 to vector<4x1xf32>
    %132 = arith.mulf %130, %131 : vector<4x1xf32>
    %133 = vector.broadcast %132 : vector<4x1xf32> to vector<4x128xf32>
    %134 = arith.subf %128, %133 : vector<4x128xf32>
    %135 = tpu.iota {dimensions = array<i32: 1>} : vector<4x128xi32>
    %c32_i32_77 = arith.constant 32 : i32
    %136 = vector.broadcast %c32_i32_77 : i32 to vector<4x128xi32>
    %137 = arith.cmpi slt, %135, %136 : vector<4x128xi32>
    %cst_78 = arith.constant 0.000000e+00 : f32
    %138 = vector.broadcast %cst_78 : f32 to vector<4x128xf32>
    %139 = arith.select %137, %134, %138 : vector<4x128xi1>, vector<4x128xf32>
    %140 = arith.mulf %139, %139 : vector<4x128xf32>
    %cst_79 = arith.constant dense<0.000000e+00> : vector<4xf32>
    %141 = vector.multi_reduction <add>, %140, %cst_79 [1] : vector<4x128xf32> to vector<4xf32>
    %142 = vector.shape_cast %141 : vector<4xf32> to vector<4x1xf32>
    %cst_80 = arith.constant 3.125000e-02 : f32
    %143 = vector.broadcast %cst_80 : f32 to vector<4x1xf32>
    %144 = arith.mulf %142, %143 : vector<4x1xf32>
    %cst_81 = arith.constant 9.99999974E-6 : f32
    %145 = vector.broadcast %cst_81 : f32 to vector<4x1xf32>
    %146 = arith.addf %144, %145 : vector<4x1xf32>
    %147 = math.rsqrt %146 : vector<4x1xf32>
    %148 = vector.broadcast %147 : vector<4x1xf32> to vector<4x128xf32>
    %149 = arith.mulf %139, %148 : vector<4x128xf32>
    %150 = vector.broadcast %67 : vector<1x128xf32> to vector<4x128xf32>
    %151 = arith.mulf %149, %150 : vector<4x128xf32>
    %152 = vector.broadcast %68 : vector<1x128xf32> to vector<4x128xf32>
    %153 = arith.addf %151, %152 : vector<4x128xf32>
    %154 = arith.truncf %153 : vector<4x128xf32> to vector<4x128xbf16>
    %cst_82 = arith.constant dense<0.000000e+00> : vector<4x128xf32>
    %155 = tpu.matmul %154, %69, %cst_82 {dimension_numbers = #tpu.dot_dimension_numbers<[1], [0], [0], [1], [0, 0, 1, 1], [], []>} : vector<4x128xbf16>, vector<128x128xbf16>, vector<4x128xf32> -> vector<4x128xf32>
    %156 = vector.broadcast %70 : vector<1x128xf32> to vector<4x128xf32>
    %157 = arith.addf %155, %156 : vector<4x128xf32>
    %158 = arith.mulf %157, %157 : vector<4x128xf32>
    %159 = arith.mulf %157, %158 : vector<4x128xf32>
    %cst_83 = arith.constant 4.471500e-02 : f32
    %160 = vector.broadcast %cst_83 : f32 to vector<4x128xf32>
    %161 = arith.mulf %160, %159 : vector<4x128xf32>
    %162 = arith.addf %157, %161 : vector<4x128xf32>
    %cst_84 = arith.constant 0.797884583 : f32
    %163 = vector.broadcast %cst_84 : f32 to vector<4x128xf32>
    %164 = arith.mulf %163, %162 : vector<4x128xf32>
    %165 = math.tanh %164 : vector<4x128xf32>
    %cst_85 = arith.constant 1.000000e+00 : f32
    %166 = vector.broadcast %cst_85 : f32 to vector<4x128xf32>
    %167 = arith.addf %166, %165 : vector<4x128xf32>
    %cst_86 = arith.constant 5.000000e-01 : f32
    %168 = vector.broadcast %cst_86 : f32 to vector<4x128xf32>
    %169 = arith.mulf %168, %167 : vector<4x128xf32>
    %170 = arith.mulf %157, %169 : vector<4x128xf32>
    %171 = arith.truncf %170 : vector<4x128xf32> to vector<4x128xbf16>
    %cst_87 = arith.constant dense<0.000000e+00> : vector<4x128xf32>
    %172 = tpu.matmul %171, %71, %cst_87 {dimension_numbers = #tpu.dot_dimension_numbers<[1], [0], [0], [1], [0, 0, 1, 1], [], []>} : vector<4x128xbf16>, vector<128x128xbf16>, vector<4x128xf32> -> vector<4x128xf32>
    %173 = vector.broadcast %72 : vector<1x128xf32> to vector<4x128xf32>
    %174 = arith.addf %172, %173 : vector<4x128xf32>
    %175 = arith.addf %128, %174 : vector<4x128xf32>
    %c0_88 = arith.constant 0 : index
    %c0_89 = arith.constant 0 : index
    %176 = vector.load %arg23[%c0_88, %c0_89] : memref<1x128xf32, #tpu.memory_space<vmem>>, vector<1x128xf32>
    %c0_90 = arith.constant 0 : index
    %c0_91 = arith.constant 0 : index
    %177 = vector.load %arg24[%c0_90, %c0_91] : memref<1x128xf32, #tpu.memory_space<vmem>>, vector<1x128xf32>
    %cst_92 = arith.constant dense<0.000000e+00> : vector<4xf32>
    %178 = vector.multi_reduction <add>, %175, %cst_92 [1] : vector<4x128xf32> to vector<4xf32>
    %179 = vector.shape_cast %178 : vector<4xf32> to vector<4x1xf32>
    %cst_93 = arith.constant 3.125000e-02 : f32
    %180 = vector.broadcast %cst_93 : f32 to vector<4x1xf32>
    %181 = arith.mulf %179, %180 : vector<4x1xf32>
    %182 = vector.broadcast %181 : vector<4x1xf32> to vector<4x128xf32>
    %183 = arith.subf %175, %182 : vector<4x128xf32>
    %184 = tpu.iota {dimensions = array<i32: 1>} : vector<4x128xi32>
    %c32_i32_94 = arith.constant 32 : i32
    %185 = vector.broadcast %c32_i32_94 : i32 to vector<4x128xi32>
    %186 = arith.cmpi slt, %184, %185 : vector<4x128xi32>
    %cst_95 = arith.constant 0.000000e+00 : f32
    %187 = vector.broadcast %cst_95 : f32 to vector<4x128xf32>
    %188 = arith.select %186, %183, %187 : vector<4x128xi1>, vector<4x128xf32>
    %189 = arith.mulf %188, %188 : vector<4x128xf32>
    %cst_96 = arith.constant dense<0.000000e+00> : vector<4xf32>
    %190 = vector.multi_reduction <add>, %189, %cst_96 [1] : vector<4x128xf32> to vector<4xf32>
    %191 = vector.shape_cast %190 : vector<4xf32> to vector<4x1xf32>
    %cst_97 = arith.constant 3.125000e-02 : f32
    %192 = vector.broadcast %cst_97 : f32 to vector<4x1xf32>
    %193 = arith.mulf %191, %192 : vector<4x1xf32>
    %cst_98 = arith.constant 9.99999974E-6 : f32
    %194 = vector.broadcast %cst_98 : f32 to vector<4x1xf32>
    %195 = arith.addf %193, %194 : vector<4x1xf32>
    %196 = math.rsqrt %195 : vector<4x1xf32>
    %197 = vector.broadcast %196 : vector<4x1xf32> to vector<4x128xf32>
    %198 = arith.mulf %188, %197 : vector<4x128xf32>
    %199 = vector.broadcast %176 : vector<1x128xf32> to vector<4x128xf32>
    %200 = arith.mulf %198, %199 : vector<4x128xf32>
    %201 = vector.broadcast %177 : vector<1x128xf32> to vector<4x128xf32>
    %202 = arith.addf %200, %201 : vector<4x128xf32>
    %c0_99 = arith.constant 0 : index
    %c0_100 = arith.constant 0 : index
    %203 = vector.load %arg25[%c0_99, %c0_100] : memref<128x128xbf16, #tpu.memory_space<vmem>>, vector<128x128xbf16>
    %204 = arith.truncf %202 : vector<4x128xf32> to vector<4x128xbf16>
    %cst_101 = arith.constant dense<0.000000e+00> : vector<4x128xf32>
    %205 = tpu.matmul %204, %203, %cst_101 {dimension_numbers = #tpu.dot_dimension_numbers<[1], [0], [0], [1], [0, 0, 1, 1], [], []>} : vector<4x128xbf16>, vector<128x128xbf16>, vector<4x128xf32> -> vector<4x128xf32>
    %c0_102 = arith.constant 0 : index
    %c0_103 = arith.constant 0 : index
    %206 = vector.load %arg26[%c0_102, %c0_103] : memref<1x128xf32, #tpu.memory_space<vmem>>, vector<1x128xf32>
    %207 = vector.broadcast %206 : vector<1x128xf32> to vector<4x128xf32>
    %208 = arith.addf %205, %207 : vector<4x128xf32>
    %c0_104 = arith.constant 0 : index
    %c0_105 = arith.constant 0 : index
    %c0_106 = arith.constant 0 : index
    %209 = vector.load %arg3[%c0_104, %c0_105, %c0_106] : memref<1x4x128xf32, #tpu.memory_space<vmem>>, vector<1x4x128xf32>
    %210 = vector.shape_cast %209 : vector<1x4x128xf32> to vector<4x128xf32>
    %211 = arith.addf %208, %210 : vector<4x128xf32>
    %212 = arith.truncf %211 : vector<4x128xf32> to vector<4x128xbf16>
    %c0_107 = arith.constant 0 : index
    %c0_108 = arith.constant 0 : index
    %c0_109 = arith.constant 0 : index
    %213 = vector.load %arg27[%c0_107, %c0_108, %c0_109] : memref<1x4x128xbf16, #tpu.memory_space<vmem>>, vector<1x4x128xbf16>
    %214 = vector.shape_cast %213 : vector<1x4x128xbf16> to vector<4x128xbf16>
    %215 = vector.shape_cast %212 : vector<4x128xbf16> to vector<1x4x128xbf16>
    tpu.vector_store %arg27[%c0_107, %c0_108, %c0_109], %215 {strides = array<i32>} : memref<1x4x128xbf16, #tpu.memory_space<vmem>>, vector<1x4x128xbf16>,
    return
  }
  func.func @transform_0(%arg0: i32) -> (i32, i32, i32) {
    %c0_i32 = arith.constant 0 : i32
    %c0_i32_0 = arith.constant 0 : i32
    %c0_i32_1 = arith.constant 0 : i32
    return %arg0, %c0_i32, %c0_i32_0 : i32, i32, i32
  }
  func.func @transform_1(%arg0: i32) -> (i32, i32, i32) {
    %c0_i32 = arith.constant 0 : i32
    %c0_i32_0 = arith.constant 0 : i32
    %c0_i32_1 = arith.constant 0 : i32
    return %arg0, %c0_i32, %c0_i32_0 : i32, i32, i32
  }
  func.func @transform_2(%arg0: i32) -> (i32, i32, i32) {
    %c0_i32 = arith.constant 0 : i32
    %c0_i32_0 = arith.constant 0 : i32
    %c0_i32_1 = arith.constant 0 : i32
    return %arg0, %c0_i32, %c0_i32_0 : i32, i32, i32
  }
  func.func @transform_3(%arg0: i32) -> (i32, i32) {
    %c0_i32 = arith.constant 0 : i32
    %c0_i32_0 = arith.constant 0 : i32
    %c0_i32_1 = arith.constant 0 : i32
    return %c0_i32, %c0_i32_0 : i32, i32
  }
  func.func @transform_4(%arg0: i32) -> (i32, i32) {
    %c0_i32 = arith.constant 0 : i32
    %c0_i32_0 = arith.constant 0 : i32
    %c0_i32_1 = arith.constant 0 : i32
    return %c0_i32, %c0_i32_0 : i32, i32
  }
  func.func @transform_5(%arg0: i32) -> (i32, i32) {
    %c0_i32 = arith.constant 0 : i32
    %c0_i32_0 = arith.constant 0 : i32
    %c0_i32_1 = arith.constant 0 : i32
    return %c0_i32, %c0_i32_0 : i32, i32
  }
  func.func @transform_6(%arg0: i32) -> (i32, i32) {
    %c0_i32 = arith.constant 0 : i32
    %c0_i32_0 = arith.constant 0 : i32
    %c0_i32_1 = arith.constant 0 : i32
    return %c0_i32, %c0_i32_0 : i32, i32
  }
  func.func @transform_7(%arg0: i32) -> (i32, i32) {
    %c0_i32 = arith.constant 0 : i32
    %c0_i32_0 = arith.constant 0 : i32
    %c0_i32_1 = arith.constant 0 : i32
    return %c0_i32, %c0_i32_0 : i32, i32
  }
  func.func @transform_8(%arg0: i32) -> (i32, i32) {
    %c0_i32 = arith.constant 0 : i32
    %c0_i32_0 = arith.constant 0 : i32
    %c0_i32_1 = arith.constant 0 : i32
    return %c0_i32, %c0_i32_0 : i32, i32
  }
  func.func @transform_9(%arg0: i32) -> (i32, i32) {
    %c0_i32 = arith.constant 0 : i32
    %c0_i32_0 = arith.constant 0 : i32
    %c0_i32_1 = arith.constant 0 : i32
    return %c0_i32, %c0_i32_0 : i32, i32
  }
  func.func @transform_10(%arg0: i32) -> (i32, i32) {
    %c0_i32 = arith.constant 0 : i32
    %c0_i32_0 = arith.constant 0 : i32
    %c0_i32_1 = arith.constant 0 : i32
    return %c0_i32, %c0_i32_0 : i32, i32
  }
  func.func @transform_11(%arg0: i32) -> (i32, i32, i32) {
    %c0_i32 = arith.constant 0 : i32
    %c0_i32_0 = arith.constant 0 : i32
    %c0_i32_1 = arith.constant 0 : i32
    %c0_i32_2 = arith.constant 0 : i32
    return %c0_i32, %c0_i32_0, %c0_i32_1 : i32, i32, i32
  }
  func.func @transform_12(%arg0: i32) -> (i32, i32, i32) {
    %c0_i32 = arith.constant 0 : i32
    %c0_i32_0 = arith.constant 0 : i32
    %c0_i32_1 = arith.constant 0 : i32
    %c0_i32_2 = arith.constant 0 : i32
    return %c0_i32, %c0_i32_0, %c0_i32_1 : i32, i32, i32
  }
  func.func @transform_13(%arg0: i32) -> (i32, i32, i32) {
    %c0_i32 = arith.constant 0 : i32
    %c0_i32_0 = arith.constant 0 : i32
    %c0_i32_1 = arith.constant 0 : i32
    %c0_i32_2 = arith.constant 0 : i32
    return %c0_i32, %c0_i32_0, %c0_i32_1 : i32, i32, i32
  }
  func.func @transform_14(%arg0: i32) -> (i32, i32, i32) {
    %c0_i32 = arith.constant 0 : i32
    %c0_i32_0 = arith.constant 0 : i32
    %c0_i32_1 = arith.constant 0 : i32
    %c0_i32_2 = arith.constant 0 : i32
    return %c0_i32, %c0_i32_0, %c0_i32_1 : i32, i32, i32
  }
  func.func @transform_15(%arg0: i32) -> (i32, i32) {
    %c0_i32 = arith.constant 0 : i32
    %c0_i32_0 = arith.constant 0 : i32
    %c0_i32_1 = arith.constant 0 : i32
    return %c0_i32, %c0_i32_0 : i32, i32
  }
  func.func @transform_16(%arg0: i32) -> (i32, i32) {
    %c0_i32 = arith.constant 0 : i32
    %c0_i32_0 = arith.constant 0 : i32
    %c0_i32_1 = arith.constant 0 : i32
    return %c0_i32, %c0_i32_0 : i32, i32
  }
  func.func @transform_17(%arg0: i32) -> (i32, i32) {
    %c0_i32 = arith.constant 0 : i32
    %c0_i32_0 = arith.constant 0 : i32
    %c0_i32_1 = arith.constant 0 : i32
    return %c0_i32, %c0_i32_0 : i32, i32
  }
  func.func @transform_18(%arg0: i32) -> (i32, i32) {
    %c0_i32 = arith.constant 0 : i32
    %c0_i32_0 = arith.constant 0 : i32
    %c0_i32_1 = arith.constant 0 : i32
    return %c0_i32, %c0_i32_0 : i32, i32
  }
  func.func @transform_19(%arg0: i32) -> (i32, i32) {
    %c0_i32 = arith.constant 0 : i32
    %c0_i32_0 = arith.constant 0 : i32
    %c0_i32_1 = arith.constant 0 : i32
    return %c0_i32, %c0_i32_0 : i32, i32
  }
  func.func @transform_20(%arg0: i32) -> (i32, i32) {
    %c0_i32 = arith.constant 0 : i32
    %c0_i32_0 = arith.constant 0 : i32
    %c0_i32_1 = arith.constant 0 : i32
    return %c0_i32, %c0_i32_0 : i32, i32
  }
  func.func @transform_21(%arg0: i32) -> (i32, i32) {
    %c0_i32 = arith.constant 0 : i32
    %c0_i32_0 = arith.constant 0 : i32
    %c0_i32_1 = arith.constant 0 : i32
    return %c0_i32, %c0_i32_0 : i32, i32
  }
  func.func @transform_22(%arg0: i32) -> (i32, i32) {
    %c0_i32 = arith.constant 0 : i32
    %c0_i32_0 = arith.constant 0 : i32
    %c0_i32_1 = arith.constant 0 : i32
    return %c0_i32, %c0_i32_0 : i32, i32
  }
  func.func @transform_23(%arg0: i32) -> (i32, i32) {
    %c0_i32 = arith.constant 0 : i32
    %c0_i32_0 = arith.constant 0 : i32
    %c0_i32_1 = arith.constant 0 : i32
    return %c0_i32, %c0_i32_0 : i32, i32
  }
  func.func @transform_24(%arg0: i32) -> (i32, i32) {
    %c0_i32 = arith.constant 0 : i32
    %c0_i32_0 = arith.constant 0 : i32
    %c0_i32_1 = arith.constant 0 : i32
    return %c0_i32, %c0_i32_0 : i32, i32
  }
  func.func @transform_25(%arg0: i32) -> (i32, i32) {
    %c0_i32 = arith.constant 0 : i32
    %c0_i32_0 = arith.constant 0 : i32
    %c0_i32_1 = arith.constant 0 : i32
    return %c0_i32, %c0_i32_0 : i32, i32
  }
  func.func @transform_26(%arg0: i32) -> (i32, i32, i32) {
    %c0_i32 = arith.constant 0 : i32
    %c0_i32_0 = arith.constant 0 : i32
    %c0_i32_1 = arith.constant 0 : i32
    return %arg0, %c0_i32, %c0_i32_0 : i32, i32, i32
  }
}

module attributes {stable_mosaic.version = 11 : i64} {
  func.func @_decoder_stack_kernel(%arg0: i32, %arg1: memref<1x16x128xbf16, #tpu.memory_space<vmem>>, %arg2: memref<1x128xf32, #tpu.memory_space<vmem>>, %arg3: memref<1x128xf32, #tpu.memory_space<vmem>>, %arg4: memref<4x16x128xbf16, #tpu.memory_space<vmem>>, %arg5: memref<4x16x128xbf16, #tpu.memory_space<vmem>>, %arg6: memref<4x16x128xbf16, #tpu.memory_space<vmem>>, %arg7: memref<4x16x128xbf16, #tpu.memory_space<vmem>>, %arg8: memref<1x128xf32, #tpu.memory_space<vmem>>, %arg9: memref<1x128xf32, #tpu.memory_space<vmem>>, %arg10: memref<1x128xf32, #tpu.memory_space<vmem>>, %arg11: memref<128x256xbf16, #tpu.memory_space<vmem>>, %arg12: memref<1x256xf32, #tpu.memory_space<vmem>>, %arg13: memref<256x128xbf16, #tpu.memory_space<vmem>>, %arg14: memref<1x128xf32, #tpu.memory_space<vmem>>, %arg15: memref<1x128xf32, #tpu.memory_space<vmem>>, %arg16: memref<1x128xf32, #tpu.memory_space<vmem>>, %arg17: memref<128x256xbf16, #tpu.memory_space<vmem>>, %arg18: memref<1x256xf32, #tpu.memory_space<vmem>>, %arg19: memref<1x16x256xf32, #tpu.memory_space<vmem>>) attributes {dimension_semantics = [#tpu.dimension_semantics<parallel>], iteration_bounds = array<i64: 2>, scalar_prefetch = 0 : i64, scratch_operands = 0 : i64, tpu.core_type = #tpu.core_type<tc>, window_params = [{transform_indices = @transform_0, window_bounds = array<i64: 1, 16, 128>}, {pipeline_mode = #tpu.pipeline_mode<synchronous>, transform_indices = @transform_1, window_bounds = array<i64: 1, 128>}, {pipeline_mode = #tpu.pipeline_mode<synchronous>, transform_indices = @transform_2, window_bounds = array<i64: 1, 128>}, {pipeline_mode = #tpu.pipeline_mode<synchronous>, transform_indices = @transform_3, window_bounds = array<i64: 4, 16, 128>}, {pipeline_mode = #tpu.pipeline_mode<synchronous>, transform_indices = @transform_4, window_bounds = array<i64: 4, 16, 128>}, {pipeline_mode = #tpu.pipeline_mode<synchronous>, transform_indices = @transform_5, window_bounds = array<i64: 4, 16, 128>}, {pipeline_mode = #tpu.pipeline_mode<synchronous>, transform_indices = @transform_6, window_bounds = array<i64: 4, 16, 128>}, {pipeline_mode = #tpu.pipeline_mode<synchronous>, transform_indices = @transform_7, window_bounds = array<i64: 1, 128>}, {pipeline_mode = #tpu.pipeline_mode<synchronous>, transform_indices = @transform_8, window_bounds = array<i64: 1, 128>}, {pipeline_mode = #tpu.pipeline_mode<synchronous>, transform_indices = @transform_9, window_bounds = array<i64: 1, 128>}, {pipeline_mode = #tpu.pipeline_mode<synchronous>, transform_indices = @transform_10, window_bounds = array<i64: 128, 256>}, {pipeline_mode = #tpu.pipeline_mode<synchronous>, transform_indices = @transform_11, window_bounds = array<i64: 1, 256>}, {pipeline_mode = #tpu.pipeline_mode<synchronous>, transform_indices = @transform_12, window_bounds = array<i64: 256, 128>}, {pipeline_mode = #tpu.pipeline_mode<synchronous>, transform_indices = @transform_13, window_bounds = array<i64: 1, 128>}, {pipeline_mode = #tpu.pipeline_mode<synchronous>, transform_indices = @transform_14, window_bounds = array<i64: 1, 128>}, {pipeline_mode = #tpu.pipeline_mode<synchronous>, transform_indices = @transform_15, window_bounds = array<i64: 1, 128>}, {pipeline_mode = #tpu.pipeline_mode<synchronous>, transform_indices = @transform_16, window_bounds = array<i64: 128, 256>}, {pipeline_mode = #tpu.pipeline_mode<synchronous>, transform_indices = @transform_17, window_bounds = array<i64: 1, 256>}, {transform_indices = @transform_18, window_bounds = array<i64: 1, 16, 256>}]} {
    %c0 = arith.constant 0 : index
    %c0_0 = arith.constant 0 : index
    %c0_1 = arith.constant 0 : index
    %0 = vector.load %arg1[%c0, %c0_0, %c0_1] : memref<1x16x128xbf16, #tpu.memory_space<vmem>>, vector<1x16x128xbf16>
    %1 = vector.shape_cast %0 : vector<1x16x128xbf16> to vector<16x128xbf16>
    %2 = arith.extf %1 : vector<16x128xbf16> to vector<16x128xf32>
    %c0_2 = arith.constant 0 : index
    %c0_3 = arith.constant 0 : index
    %3 = vector.load %arg2[%c0_2, %c0_3] : memref<1x128xf32, #tpu.memory_space<vmem>>, vector<1x128xf32>
    %c0_4 = arith.constant 0 : index
    %c0_5 = arith.constant 0 : index
    %4 = vector.load %arg3[%c0_4, %c0_5] : memref<1x128xf32, #tpu.memory_space<vmem>>, vector<1x128xf32>
    %c0_6 = arith.constant 0 : index
    %c0_7 = arith.constant 0 : index
    %c0_8 = arith.constant 0 : index
    %5 = vector.load %arg4[%c0_6, %c0_7, %c0_8] : memref<4x16x128xbf16, #tpu.memory_space<vmem>>, vector<4x16x128xbf16>
    %c0_9 = arith.constant 0 : index
    %c0_10 = arith.constant 0 : index
    %c0_11 = arith.constant 0 : index
    %6 = vector.load %arg5[%c0_9, %c0_10, %c0_11] : memref<4x16x128xbf16, #tpu.memory_space<vmem>>, vector<4x16x128xbf16>
    %c0_12 = arith.constant 0 : index
    %c0_13 = arith.constant 0 : index
    %c0_14 = arith.constant 0 : index
    %7 = vector.load %arg6[%c0_12, %c0_13, %c0_14] : memref<4x16x128xbf16, #tpu.memory_space<vmem>>, vector<4x16x128xbf16>
    %c0_15 = arith.constant 0 : index
    %c0_16 = arith.constant 0 : index
    %c0_17 = arith.constant 0 : index
    %8 = vector.load %arg7[%c0_15, %c0_16, %c0_17] : memref<4x16x128xbf16, #tpu.memory_space<vmem>>, vector<4x16x128xbf16>
    %c0_18 = arith.constant 0 : index
    %c0_19 = arith.constant 0 : index
    %9 = vector.load %arg8[%c0_18, %c0_19] : memref<1x128xf32, #tpu.memory_space<vmem>>, vector<1x128xf32>
    %c0_20 = arith.constant 0 : index
    %c0_21 = arith.constant 0 : index
    %10 = vector.load %arg9[%c0_20, %c0_21] : memref<1x128xf32, #tpu.memory_space<vmem>>, vector<1x128xf32>
    %c0_22 = arith.constant 0 : index
    %c0_23 = arith.constant 0 : index
    %11 = vector.load %arg10[%c0_22, %c0_23] : memref<1x128xf32, #tpu.memory_space<vmem>>, vector<1x128xf32>
    %c0_24 = arith.constant 0 : index
    %c0_25 = arith.constant 0 : index
    %12 = vector.load %arg11[%c0_24, %c0_25] : memref<128x256xbf16, #tpu.memory_space<vmem>>, vector<128x256xbf16>
    %c0_26 = arith.constant 0 : index
    %c0_27 = arith.constant 0 : index
    %13 = vector.load %arg12[%c0_26, %c0_27] : memref<1x256xf32, #tpu.memory_space<vmem>>, vector<1x256xf32>
    %c0_28 = arith.constant 0 : index
    %c0_29 = arith.constant 0 : index
    %14 = vector.load %arg13[%c0_28, %c0_29] : memref<256x128xbf16, #tpu.memory_space<vmem>>, vector<256x128xbf16>
    %c0_30 = arith.constant 0 : index
    %c0_31 = arith.constant 0 : index
    %15 = vector.load %arg14[%c0_30, %c0_31] : memref<1x128xf32, #tpu.memory_space<vmem>>, vector<1x128xf32>
    %cst = arith.constant dense<0.000000e+00> : vector<16xf32>
    %16 = vector.multi_reduction <add>, %2, %cst [1] : vector<16x128xf32> to vector<16xf32>
    %17 = vector.shape_cast %16 : vector<16xf32> to vector<16x1xf32>
    %cst_32 = arith.constant 0.020833334 : f32
    %18 = vector.broadcast %cst_32 : f32 to vector<16x1xf32>
    %19 = arith.mulf %17, %18 : vector<16x1xf32>
    %20 = vector.broadcast %19 : vector<16x1xf32> to vector<16x128xf32>
    %21 = arith.subf %2, %20 : vector<16x128xf32>
    %22 = tpu.iota {dimensions = array<i32: 1>} : vector<16x128xi32>
    %c48_i32 = arith.constant 48 : i32
    %23 = vector.broadcast %c48_i32 : i32 to vector<16x128xi32>
    %24 = arith.cmpi slt, %22, %23 : vector<16x128xi32>
    %cst_33 = arith.constant 0.000000e+00 : f32
    %25 = vector.broadcast %cst_33 : f32 to vector<16x128xf32>
    %26 = arith.select %24, %21, %25 : vector<16x128xi1>, vector<16x128xf32>
    %27 = arith.mulf %26, %26 : vector<16x128xf32>
    %cst_34 = arith.constant dense<0.000000e+00> : vector<16xf32>
    %28 = vector.multi_reduction <add>, %27, %cst_34 [1] : vector<16x128xf32> to vector<16xf32>
    %29 = vector.shape_cast %28 : vector<16xf32> to vector<16x1xf32>
    %cst_35 = arith.constant 0.020833334 : f32
    %30 = vector.broadcast %cst_35 : f32 to vector<16x1xf32>
    %31 = arith.mulf %29, %30 : vector<16x1xf32>
    %cst_36 = arith.constant 9.99999974E-6 : f32
    %32 = vector.broadcast %cst_36 : f32 to vector<16x1xf32>
    %33 = arith.addf %31, %32 : vector<16x1xf32>
    %34 = math.rsqrt %33 : vector<16x1xf32>
    %35 = vector.broadcast %34 : vector<16x1xf32> to vector<16x128xf32>
    %36 = arith.mulf %26, %35 : vector<16x128xf32>
    %37 = vector.broadcast %3 : vector<1x128xf32> to vector<16x128xf32>
    %38 = arith.mulf %36, %37 : vector<16x128xf32>
    %39 = vector.broadcast %4 : vector<1x128xf32> to vector<16x128xf32>
    %40 = arith.addf %38, %39 : vector<16x128xf32>
    %41 = arith.truncf %40 : vector<16x128xf32> to vector<16x128xbf16>
    %42 = vector.shape_cast %41 : vector<16x128xbf16> to vector<1x16x128xbf16>
    %43 = vector.shape_cast %42 : vector<1x16x128xbf16> to vector<1x16x128xbf16>
    %44 = vector.broadcast %43 : vector<1x16x128xbf16> to vector<4x16x128xbf16>
    "tpu.trace_start"() <{level = 10 : i32, message = "hsd,hed->hse"}> : () -> ()
    %cst_37 = arith.constant dense<0.000000e+00> : vector<4x16x16xf32>
    %45 = tpu.matmul %44, %5, %cst_37 {dimension_numbers = #tpu.dot_dimension_numbers<[2], [2], [1], [1], [0, 0, 0, 1, 1, 1], [0], [0]>} : vector<4x16x128xbf16>, vector<4x16x128xbf16>, vector<4x16x16xf32> -> vector<4x16x16xf32>
    %cst_38 = arith.constant dense<0.000000e+00> : vector<4x16x16xf32>
    %46 = tpu.matmul %44, %6, %cst_38 {dimension_numbers = #tpu.dot_dimension_numbers<[2], [2], [1], [1], [0, 0, 0, 1, 1, 1], [0], [0]>} : vector<4x16x128xbf16>, vector<4x16x128xbf16>, vector<4x16x16xf32> -> vector<4x16x16xf32>
    %cst_39 = arith.constant dense<0.000000e+00> : vector<4x16x16xf32>
    %47 = tpu.matmul %44, %7, %cst_39 {dimension_numbers = #tpu.dot_dimension_numbers<[2], [2], [1], [1], [0, 0, 0, 1, 1, 1], [0], [0]>} : vector<4x16x128xbf16>, vector<4x16x128xbf16>, vector<4x16x16xf32> -> vector<4x16x16xf32>
    "tpu.trace_stop"() : () -> ()
    %48 = arith.truncf %45 : vector<4x16x16xf32> to vector<4x16x16xbf16>
    %49 = arith.truncf %46 : vector<4x16x16xf32> to vector<4x16x16xbf16>
    "tpu.trace_start"() <{level = 10 : i32, message = "hqe,hke->hqk"}> : () -> ()
    %cst_40 = arith.constant dense<0.000000e+00> : vector<4x16x16xf32>
    %50 = tpu.matmul %48, %49, %cst_40 {dimension_numbers = #tpu.dot_dimension_numbers<[2], [2], [1], [1], [0, 0, 0, 1, 1, 1], [0], [0]>} : vector<4x16x16xbf16>, vector<4x16x16xbf16>, vector<4x16x16xf32> -> vector<4x16x16xf32>
    "tpu.trace_stop"() : () -> ()
    %cst_41 = arith.constant 2.500000e-01 : f32
    %51 = vector.broadcast %cst_41 : f32 to vector<4x16x16xf32>
    %52 = arith.mulf %50, %51 : vector<4x16x16xf32>
    %cst_42 = arith.constant dense<0xFF800000> : vector<4x16xf32>
    %53 = vector.multi_reduction <maximumf>, %52, %cst_42 [2] : vector<4x16x16xf32> to vector<4x16xf32>
    %54 = vector.shape_cast %53 : vector<4x16xf32> to vector<4x16x1xf32>
    %55 = vector.broadcast %54 : vector<4x16x1xf32> to vector<4x16x16xf32>
    %56 = arith.subf %52, %55 : vector<4x16x16xf32>
    %57 = math.exp %56 : vector<4x16x16xf32>
    %cst_43 = arith.constant dense<0.000000e+00> : vector<4x16xf32>
    %58 = vector.multi_reduction <add>, %57, %cst_43 [2] : vector<4x16x16xf32> to vector<4x16xf32>
    %59 = vector.shape_cast %58 : vector<4x16xf32> to vector<4x16x1xf32>
    %60 = tpu.reciprocal %59 {approx = true} : vector<4x16x1xf32> -> vector<4x16x1xf32>
    %61 = vector.broadcast %60 : vector<4x16x1xf32> to vector<4x16x16xf32>
    %62 = arith.mulf %57, %61 : vector<4x16x16xf32>
    %63 = arith.truncf %62 : vector<4x16x16xf32> to vector<4x16x16xbf16>
    %64 = arith.truncf %47 : vector<4x16x16xf32> to vector<4x16x16xbf16>
    "tpu.trace_start"() <{level = 10 : i32, message = "hqk,hke->hqe"}> : () -> ()
    %cst_44 = arith.constant dense<0.000000e+00> : vector<4x16x16xf32>
    %65 = tpu.matmul %63, %64, %cst_44 {dimension_numbers = #tpu.dot_dimension_numbers<[2], [1], [1], [2], [0, 0, 0, 1, 1, 2], [0], [0]>} : vector<4x16x16xbf16>, vector<4x16x16xbf16>, vector<4x16x16xf32> -> vector<4x16x16xf32>
    "tpu.trace_stop"() : () -> ()
    %66 = arith.truncf %65 : vector<4x16x16xf32> to vector<4x16x16xbf16>
    "tpu.trace_start"() <{level = 10 : i32, message = "hse,hed->hsd"}> : () -> ()
    %cst_45 = arith.constant dense<0.000000e+00> : vector<4x16x128xf32>
    %67 = tpu.matmul %66, %8, %cst_45 {dimension_numbers = #tpu.dot_dimension_numbers<[2], [1], [1], [2], [0, 0, 0, 1, 1, 2], [0], [0]>} : vector<4x16x16xbf16>, vector<4x16x128xbf16>, vector<4x16x128xf32> -> vector<4x16x128xf32>
    "tpu.trace_stop"() : () -> ()
    %cst_46 = arith.constant dense<0.000000e+00> : vector<16x128xf32>
    %68 = vector.multi_reduction <add>, %67, %cst_46 [0] : vector<4x16x128xf32> to vector<16x128xf32>
    %69 = vector.broadcast %9 : vector<1x128xf32> to vector<16x128xf32>
    %70 = arith.addf %68, %69 : vector<16x128xf32>
    %71 = arith.addf %2, %70 : vector<16x128xf32>
    %cst_47 = arith.constant dense<0.000000e+00> : vector<16xf32>
    %72 = vector.multi_reduction <add>, %71, %cst_47 [1] : vector<16x128xf32> to vector<16xf32>
    %73 = vector.shape_cast %72 : vector<16xf32> to vector<16x1xf32>
    %cst_48 = arith.constant 0.020833334 : f32
    %74 = vector.broadcast %cst_48 : f32 to vector<16x1xf32>
    %75 = arith.mulf %73, %74 : vector<16x1xf32>
    %76 = vector.broadcast %75 : vector<16x1xf32> to vector<16x128xf32>
    %77 = arith.subf %71, %76 : vector<16x128xf32>
    %78 = tpu.iota {dimensions = array<i32: 1>} : vector<16x128xi32>
    %c48_i32_49 = arith.constant 48 : i32
    %79 = vector.broadcast %c48_i32_49 : i32 to vector<16x128xi32>
    %80 = arith.cmpi slt, %78, %79 : vector<16x128xi32>
    %cst_50 = arith.constant 0.000000e+00 : f32
    %81 = vector.broadcast %cst_50 : f32 to vector<16x128xf32>
    %82 = arith.select %80, %77, %81 : vector<16x128xi1>, vector<16x128xf32>
    %83 = arith.mulf %82, %82 : vector<16x128xf32>
    %cst_51 = arith.constant dense<0.000000e+00> : vector<16xf32>
    %84 = vector.multi_reduction <add>, %83, %cst_51 [1] : vector<16x128xf32> to vector<16xf32>
    %85 = vector.shape_cast %84 : vector<16xf32> to vector<16x1xf32>
    %cst_52 = arith.constant 0.020833334 : f32
    %86 = vector.broadcast %cst_52 : f32 to vector<16x1xf32>
    %87 = arith.mulf %85, %86 : vector<16x1xf32>
    %cst_53 = arith.constant 9.99999974E-6 : f32
    %88 = vector.broadcast %cst_53 : f32 to vector<16x1xf32>
    %89 = arith.addf %87, %88 : vector<16x1xf32>
    %90 = math.rsqrt %89 : vector<16x1xf32>
    %91 = vector.broadcast %90 : vector<16x1xf32> to vector<16x128xf32>
    %92 = arith.mulf %82, %91 : vector<16x128xf32>
    %93 = vector.broadcast %10 : vector<1x128xf32> to vector<16x128xf32>
    %94 = arith.mulf %92, %93 : vector<16x128xf32>
    %95 = vector.broadcast %11 : vector<1x128xf32> to vector<16x128xf32>
    %96 = arith.addf %94, %95 : vector<16x128xf32>
    %97 = arith.truncf %96 : vector<16x128xf32> to vector<16x128xbf16>
    %cst_54 = arith.constant dense<0.000000e+00> : vector<16x256xf32>
    %98 = tpu.matmul %97, %12, %cst_54 {dimension_numbers = #tpu.dot_dimension_numbers<[1], [0], [0], [1], [0, 0, 1, 1], [], []>} : vector<16x128xbf16>, vector<128x256xbf16>, vector<16x256xf32> -> vector<16x256xf32>
    %99 = vector.broadcast %13 : vector<1x256xf32> to vector<16x256xf32>
    %100 = arith.addf %98, %99 : vector<16x256xf32>
    %101 = arith.mulf %100, %100 : vector<16x256xf32>
    %102 = arith.mulf %100, %101 : vector<16x256xf32>
    %cst_55 = arith.constant 4.471500e-02 : f32
    %103 = vector.broadcast %cst_55 : f32 to vector<16x256xf32>
    %104 = arith.mulf %103, %102 : vector<16x256xf32>
    %105 = arith.addf %100, %104 : vector<16x256xf32>
    %cst_56 = arith.constant 0.797884583 : f32
    %106 = vector.broadcast %cst_56 : f32 to vector<16x256xf32>
    %107 = arith.mulf %106, %105 : vector<16x256xf32>
    %108 = math.tanh %107 : vector<16x256xf32>
    %cst_57 = arith.constant 1.000000e+00 : f32
    %109 = vector.broadcast %cst_57 : f32 to vector<16x256xf32>
    %110 = arith.addf %109, %108 : vector<16x256xf32>
    %cst_58 = arith.constant 5.000000e-01 : f32
    %111 = vector.broadcast %cst_58 : f32 to vector<16x256xf32>
    %112 = arith.mulf %111, %110 : vector<16x256xf32>
    %113 = arith.mulf %100, %112 : vector<16x256xf32>
    %114 = arith.truncf %113 : vector<16x256xf32> to vector<16x256xbf16>
    %cst_59 = arith.constant dense<0.000000e+00> : vector<16x128xf32>
    %115 = tpu.matmul %114, %14, %cst_59 {dimension_numbers = #tpu.dot_dimension_numbers<[1], [0], [0], [1], [0, 0, 1, 1], [], []>} : vector<16x256xbf16>, vector<256x128xbf16>, vector<16x128xf32> -> vector<16x128xf32>
    %116 = vector.broadcast %15 : vector<1x128xf32> to vector<16x128xf32>
    %117 = arith.addf %115, %116 : vector<16x128xf32>
    %118 = arith.addf %71, %117 : vector<16x128xf32>
    %c0_60 = arith.constant 0 : index
    %c0_61 = arith.constant 0 : index
    %119 = vector.load %arg15[%c0_60, %c0_61] : memref<1x128xf32, #tpu.memory_space<vmem>>, vector<1x128xf32>
    %c0_62 = arith.constant 0 : index
    %c0_63 = arith.constant 0 : index
    %120 = vector.load %arg16[%c0_62, %c0_63] : memref<1x128xf32, #tpu.memory_space<vmem>>, vector<1x128xf32>
    %cst_64 = arith.constant dense<0.000000e+00> : vector<16xf32>
    %121 = vector.multi_reduction <add>, %118, %cst_64 [1] : vector<16x128xf32> to vector<16xf32>
    %122 = vector.shape_cast %121 : vector<16xf32> to vector<16x1xf32>
    %cst_65 = arith.constant 0.020833334 : f32
    %123 = vector.broadcast %cst_65 : f32 to vector<16x1xf32>
    %124 = arith.mulf %122, %123 : vector<16x1xf32>
    %125 = vector.broadcast %124 : vector<16x1xf32> to vector<16x128xf32>
    %126 = arith.subf %118, %125 : vector<16x128xf32>
    %127 = tpu.iota {dimensions = array<i32: 1>} : vector<16x128xi32>
    %c48_i32_66 = arith.constant 48 : i32
    %128 = vector.broadcast %c48_i32_66 : i32 to vector<16x128xi32>
    %129 = arith.cmpi slt, %127, %128 : vector<16x128xi32>
    %cst_67 = arith.constant 0.000000e+00 : f32
    %130 = vector.broadcast %cst_67 : f32 to vector<16x128xf32>
    %131 = arith.select %129, %126, %130 : vector<16x128xi1>, vector<16x128xf32>
    %132 = arith.mulf %131, %131 : vector<16x128xf32>
    %cst_68 = arith.constant dense<0.000000e+00> : vector<16xf32>
    %133 = vector.multi_reduction <add>, %132, %cst_68 [1] : vector<16x128xf32> to vector<16xf32>
    %134 = vector.shape_cast %133 : vector<16xf32> to vector<16x1xf32>
    %cst_69 = arith.constant 0.020833334 : f32
    %135 = vector.broadcast %cst_69 : f32 to vector<16x1xf32>
    %136 = arith.mulf %134, %135 : vector<16x1xf32>
    %cst_70 = arith.constant 9.99999974E-6 : f32
    %137 = vector.broadcast %cst_70 : f32 to vector<16x1xf32>
    %138 = arith.addf %136, %137 : vector<16x1xf32>
    %139 = math.rsqrt %138 : vector<16x1xf32>
    %140 = vector.broadcast %139 : vector<16x1xf32> to vector<16x128xf32>
    %141 = arith.mulf %131, %140 : vector<16x128xf32>
    %142 = vector.broadcast %119 : vector<1x128xf32> to vector<16x128xf32>
    %143 = arith.mulf %141, %142 : vector<16x128xf32>
    %144 = vector.broadcast %120 : vector<1x128xf32> to vector<16x128xf32>
    %145 = arith.addf %143, %144 : vector<16x128xf32>
    %c0_71 = arith.constant 0 : index
    %c0_72 = arith.constant 0 : index
    %146 = vector.load %arg17[%c0_71, %c0_72] : memref<128x256xbf16, #tpu.memory_space<vmem>>, vector<128x256xbf16>
    %147 = arith.truncf %145 : vector<16x128xf32> to vector<16x128xbf16>
    %cst_73 = arith.constant dense<0.000000e+00> : vector<16x256xf32>
    %148 = tpu.matmul %147, %146, %cst_73 {dimension_numbers = #tpu.dot_dimension_numbers<[1], [0], [0], [1], [0, 0, 1, 1], [], []>} : vector<16x128xbf16>, vector<128x256xbf16>, vector<16x256xf32> -> vector<16x256xf32>
    %c0_74 = arith.constant 0 : index
    %c0_75 = arith.constant 0 : index
    %149 = vector.load %arg18[%c0_74, %c0_75] : memref<1x256xf32, #tpu.memory_space<vmem>>, vector<1x256xf32>
    %150 = vector.broadcast %149 : vector<1x256xf32> to vector<16x256xf32>
    %151 = arith.addf %148, %150 : vector<16x256xf32>
    %c0_76 = arith.constant 0 : index
    %c0_77 = arith.constant 0 : index
    %c0_78 = arith.constant 0 : index
    %152 = vector.load %arg19[%c0_76, %c0_77, %c0_78] : memref<1x16x256xf32, #tpu.memory_space<vmem>>, vector<1x16x256xf32>
    %153 = vector.shape_cast %152 : vector<1x16x256xf32> to vector<16x256xf32>
    %154 = vector.shape_cast %151 : vector<16x256xf32> to vector<1x16x256xf32>
    tpu.vector_store %arg19[%c0_76, %c0_77, %c0_78], %154 {strides = array<i32>} : memref<1x16x256xf32, #tpu.memory_space<vmem>>, vector<1x16x256xf32>,
    return
  }
  func.func @transform_0(%arg0: i32) -> (i32, i32, i32) {
    %c0_i32 = arith.constant 0 : i32
    %c0_i32_0 = arith.constant 0 : i32
    %c0_i32_1 = arith.constant 0 : i32
    return %arg0, %c0_i32, %c0_i32_0 : i32, i32, i32
  }
  func.func @transform_1(%arg0: i32) -> (i32, i32) {
    %c0_i32 = arith.constant 0 : i32
    %c0_i32_0 = arith.constant 0 : i32
    %c0_i32_1 = arith.constant 0 : i32
    return %c0_i32, %c0_i32_0 : i32, i32
  }
  func.func @transform_2(%arg0: i32) -> (i32, i32) {
    %c0_i32 = arith.constant 0 : i32
    %c0_i32_0 = arith.constant 0 : i32
    %c0_i32_1 = arith.constant 0 : i32
    return %c0_i32, %c0_i32_0 : i32, i32
  }
  func.func @transform_3(%arg0: i32) -> (i32, i32, i32) {
    %c0_i32 = arith.constant 0 : i32
    %c0_i32_0 = arith.constant 0 : i32
    %c0_i32_1 = arith.constant 0 : i32
    %c0_i32_2 = arith.constant 0 : i32
    return %c0_i32, %c0_i32_0, %c0_i32_1 : i32, i32, i32
  }
  func.func @transform_4(%arg0: i32) -> (i32, i32, i32) {
    %c0_i32 = arith.constant 0 : i32
    %c0_i32_0 = arith.constant 0 : i32
    %c0_i32_1 = arith.constant 0 : i32
    %c0_i32_2 = arith.constant 0 : i32
    return %c0_i32, %c0_i32_0, %c0_i32_1 : i32, i32, i32
  }
  func.func @transform_5(%arg0: i32) -> (i32, i32, i32) {
    %c0_i32 = arith.constant 0 : i32
    %c0_i32_0 = arith.constant 0 : i32
    %c0_i32_1 = arith.constant 0 : i32
    %c0_i32_2 = arith.constant 0 : i32
    return %c0_i32, %c0_i32_0, %c0_i32_1 : i32, i32, i32
  }
  func.func @transform_6(%arg0: i32) -> (i32, i32, i32) {
    %c0_i32 = arith.constant 0 : i32
    %c0_i32_0 = arith.constant 0 : i32
    %c0_i32_1 = arith.constant 0 : i32
    %c0_i32_2 = arith.constant 0 : i32
    return %c0_i32, %c0_i32_0, %c0_i32_1 : i32, i32, i32
  }
  func.func @transform_7(%arg0: i32) -> (i32, i32) {
    %c0_i32 = arith.constant 0 : i32
    %c0_i32_0 = arith.constant 0 : i32
    %c0_i32_1 = arith.constant 0 : i32
    return %c0_i32, %c0_i32_0 : i32, i32
  }
  func.func @transform_8(%arg0: i32) -> (i32, i32) {
    %c0_i32 = arith.constant 0 : i32
    %c0_i32_0 = arith.constant 0 : i32
    %c0_i32_1 = arith.constant 0 : i32
    return %c0_i32, %c0_i32_0 : i32, i32
  }
  func.func @transform_9(%arg0: i32) -> (i32, i32) {
    %c0_i32 = arith.constant 0 : i32
    %c0_i32_0 = arith.constant 0 : i32
    %c0_i32_1 = arith.constant 0 : i32
    return %c0_i32, %c0_i32_0 : i32, i32
  }
  func.func @transform_10(%arg0: i32) -> (i32, i32) {
    %c0_i32 = arith.constant 0 : i32
    %c0_i32_0 = arith.constant 0 : i32
    %c0_i32_1 = arith.constant 0 : i32
    return %c0_i32, %c0_i32_0 : i32, i32
  }
  func.func @transform_11(%arg0: i32) -> (i32, i32) {
    %c0_i32 = arith.constant 0 : i32
    %c0_i32_0 = arith.constant 0 : i32
    %c0_i32_1 = arith.constant 0 : i32
    return %c0_i32, %c0_i32_0 : i32, i32
  }
  func.func @transform_12(%arg0: i32) -> (i32, i32) {
    %c0_i32 = arith.constant 0 : i32
    %c0_i32_0 = arith.constant 0 : i32
    %c0_i32_1 = arith.constant 0 : i32
    return %c0_i32, %c0_i32_0 : i32, i32
  }
  func.func @transform_13(%arg0: i32) -> (i32, i32) {
    %c0_i32 = arith.constant 0 : i32
    %c0_i32_0 = arith.constant 0 : i32
    %c0_i32_1 = arith.constant 0 : i32
    return %c0_i32, %c0_i32_0 : i32, i32
  }
  func.func @transform_14(%arg0: i32) -> (i32, i32) {
    %c0_i32 = arith.constant 0 : i32
    %c0_i32_0 = arith.constant 0 : i32
    %c0_i32_1 = arith.constant 0 : i32
    return %c0_i32, %c0_i32_0 : i32, i32
  }
  func.func @transform_15(%arg0: i32) -> (i32, i32) {
    %c0_i32 = arith.constant 0 : i32
    %c0_i32_0 = arith.constant 0 : i32
    %c0_i32_1 = arith.constant 0 : i32
    return %c0_i32, %c0_i32_0 : i32, i32
  }
  func.func @transform_16(%arg0: i32) -> (i32, i32) {
    %c0_i32 = arith.constant 0 : i32
    %c0_i32_0 = arith.constant 0 : i32
    %c0_i32_1 = arith.constant 0 : i32
    return %c0_i32, %c0_i32_0 : i32, i32
  }
  func.func @transform_17(%arg0: i32) -> (i32, i32) {
    %c0_i32 = arith.constant 0 : i32
    %c0_i32_0 = arith.constant 0 : i32
    %c0_i32_1 = arith.constant 0 : i32
    return %c0_i32, %c0_i32_0 : i32, i32
  }
  func.func @transform_18(%arg0: i32) -> (i32, i32, i32) {
    %c0_i32 = arith.constant 0 : i32
    %c0_i32_0 = arith.constant 0 : i32
    %c0_i32_1 = arith.constant 0 : i32
    return %arg0, %c0_i32, %c0_i32_0 : i32, i32, i32
  }
}

module attributes {stable_mosaic.version = 11 : i64} {
  func.func @_encoder_stack_kernel(%arg0: i32, %arg1: memref<1x12x256xf32, #tpu.memory_space<vmem>>, %arg2: memref<1x12x128xf32, #tpu.memory_space<vmem>>, %arg3: memref<1x12x128xf32, #tpu.memory_space<vmem>>, %arg4: memref<1x256xf32, #tpu.memory_space<vmem>>, %arg5: memref<1x256xf32, #tpu.memory_space<vmem>>, %arg6: memref<256x128xbf16, #tpu.memory_space<vmem>>, %arg7: memref<1x128xf32, #tpu.memory_space<vmem>>, %arg8: memref<1x128xf32, #tpu.memory_space<vmem>>, %arg9: memref<1x128xf32, #tpu.memory_space<vmem>>, %arg10: memref<1x128xf32, #tpu.memory_space<vmem>>, %arg11: memref<1x128xf32, #tpu.memory_space<vmem>>, %arg12: memref<4x8x128xbf16, #tpu.memory_space<vmem>>, %arg13: memref<4x8x128xbf16, #tpu.memory_space<vmem>>, %arg14: memref<4x8x128xbf16, #tpu.memory_space<vmem>>, %arg15: memref<4x8x128xbf16, #tpu.memory_space<vmem>>, %arg16: memref<1x128xf32, #tpu.memory_space<vmem>>, %arg17: memref<1x128xf32, #tpu.memory_space<vmem>>, %arg18: memref<1x128xf32, #tpu.memory_space<vmem>>, %arg19: memref<128x128xbf16, #tpu.memory_space<vmem>>, %arg20: memref<1x128xf32, #tpu.memory_space<vmem>>, %arg21: memref<128x128xbf16, #tpu.memory_space<vmem>>, %arg22: memref<1x128xf32, #tpu.memory_space<vmem>>, %arg23: memref<1x128xf32, #tpu.memory_space<vmem>>, %arg24: memref<1x128xf32, #tpu.memory_space<vmem>>, %arg25: memref<128x128xbf16, #tpu.memory_space<vmem>>, %arg26: memref<1x128xf32, #tpu.memory_space<vmem>>, %arg27: memref<1x12x128xbf16, #tpu.memory_space<vmem>>) attributes {dimension_semantics = [#tpu.dimension_semantics<parallel>], iteration_bounds = array<i64: 2>, scalar_prefetch = 0 : i64, scratch_operands = 0 : i64, tpu.core_type = #tpu.core_type<tc>, window_params = [{transform_indices = @transform_0, window_bounds = array<i64: 1, 12, 256>}, {transform_indices = @transform_1, window_bounds = array<i64: 1, 12, 128>}, {transform_indices = @transform_2, window_bounds = array<i64: 1, 12, 128>}, {pipeline_mode = #tpu.pipeline_mode<synchronous>, transform_indices = @transform_3, window_bounds = array<i64: 1, 256>}, {pipeline_mode = #tpu.pipeline_mode<synchronous>, transform_indices = @transform_4, window_bounds = array<i64: 1, 256>}, {pipeline_mode = #tpu.pipeline_mode<synchronous>, transform_indices = @transform_5, window_bounds = array<i64: 256, 128>}, {pipeline_mode = #tpu.pipeline_mode<synchronous>, transform_indices = @transform_6, window_bounds = array<i64: 1, 128>}, {pipeline_mode = #tpu.pipeline_mode<synchronous>, transform_indices = @transform_7, window_bounds = array<i64: 1, 128>}, {pipeline_mode = #tpu.pipeline_mode<synchronous>, transform_indices = @transform_8, window_bounds = array<i64: 1, 128>}, {pipeline_mode = #tpu.pipeline_mode<synchronous>, transform_indices = @transform_9, window_bounds = array<i64: 1, 128>}, {pipeline_mode = #tpu.pipeline_mode<synchronous>, transform_indices = @transform_10, window_bounds = array<i64: 1, 128>}, {pipeline_mode = #tpu.pipeline_mode<synchronous>, transform_indices = @transform_11, window_bounds = array<i64: 4, 8, 128>}, {pipeline_mode = #tpu.pipeline_mode<synchronous>, transform_indices = @transform_12, window_bounds = array<i64: 4, 8, 128>}, {pipeline_mode = #tpu.pipeline_mode<synchronous>, transform_indices = @transform_13, window_bounds = array<i64: 4, 8, 128>}, {pipeline_mode = #tpu.pipeline_mode<synchronous>, transform_indices = @transform_14, window_bounds = array<i64: 4, 8, 128>}, {pipeline_mode = #tpu.pipeline_mode<synchronous>, transform_indices = @transform_15, window_bounds = array<i64: 1, 128>}, {pipeline_mode = #tpu.pipeline_mode<synchronous>, transform_indices = @transform_16, window_bounds = array<i64: 1, 128>}, {pipeline_mode = #tpu.pipeline_mode<synchronous>, transform_indices = @transform_17, window_bounds = array<i64: 1, 128>}, {pipeline_mode = #tpu.pipeline_mode<synchronous>, transform_indices = @transform_18, window_bounds = array<i64: 128, 128>}, {pipeline_mode = #tpu.pipeline_mode<synchronous>, transform_indices = @transform_19, window_bounds = array<i64: 1, 128>}, {pipeline_mode = #tpu.pipeline_mode<synchronous>, transform_indices = @transform_20, window_bounds = array<i64: 128, 128>}, {pipeline_mode = #tpu.pipeline_mode<synchronous>, transform_indices = @transform_21, window_bounds = array<i64: 1, 128>}, {pipeline_mode = #tpu.pipeline_mode<synchronous>, transform_indices = @transform_22, window_bounds = array<i64: 1, 128>}, {pipeline_mode = #tpu.pipeline_mode<synchronous>, transform_indices = @transform_23, window_bounds = array<i64: 1, 128>}, {pipeline_mode = #tpu.pipeline_mode<synchronous>, transform_indices = @transform_24, window_bounds = array<i64: 128, 128>}, {pipeline_mode = #tpu.pipeline_mode<synchronous>, transform_indices = @transform_25, window_bounds = array<i64: 1, 128>}, {transform_indices = @transform_26, window_bounds = array<i64: 1, 12, 128>}]} {
    %c0 = arith.constant 0 : index
    %c0_0 = arith.constant 0 : index
    %c0_1 = arith.constant 0 : index
    %0 = vector.load %arg1[%c0, %c0_0, %c0_1] : memref<1x12x256xf32, #tpu.memory_space<vmem>>, vector<1x12x256xf32>
    %1 = vector.shape_cast %0 : vector<1x12x256xf32> to vector<12x256xf32>
    %c0_2 = arith.constant 0 : index
    %c0_3 = arith.constant 0 : index
    %2 = vector.load %arg4[%c0_2, %c0_3] : memref<1x256xf32, #tpu.memory_space<vmem>>, vector<1x256xf32>
    %c0_4 = arith.constant 0 : index
    %c0_5 = arith.constant 0 : index
    %3 = vector.load %arg5[%c0_4, %c0_5] : memref<1x256xf32, #tpu.memory_space<vmem>>, vector<1x256xf32>
    %cst = arith.constant dense<0.000000e+00> : vector<12xf32>
    %4 = vector.multi_reduction <add>, %1, %cst [1] : vector<12x256xf32> to vector<12xf32>
    %5 = vector.shape_cast %4 : vector<12xf32> to vector<12x1xf32>
    %cst_6 = arith.constant 3.906250e-03 : f32
    %6 = vector.broadcast %cst_6 : f32 to vector<12x1xf32>
    %7 = arith.mulf %5, %6 : vector<12x1xf32>
    %8 = vector.broadcast %7 : vector<12x1xf32> to vector<12x256xf32>
    %9 = arith.subf %1, %8 : vector<12x256xf32>
    %10 = arith.mulf %9, %9 : vector<12x256xf32>
    %cst_7 = arith.constant dense<0.000000e+00> : vector<12xf32>
    %11 = vector.multi_reduction <add>, %10, %cst_7 [1] : vector<12x256xf32> to vector<12xf32>
    %12 = vector.shape_cast %11 : vector<12xf32> to vector<12x1xf32>
    %cst_8 = arith.constant 3.906250e-03 : f32
    %13 = vector.broadcast %cst_8 : f32 to vector<12x1xf32>
    %14 = arith.mulf %12, %13 : vector<12x1xf32>
    %cst_9 = arith.constant 9.99999974E-6 : f32
    %15 = vector.broadcast %cst_9 : f32 to vector<12x1xf32>
    %16 = arith.addf %14, %15 : vector<12x1xf32>
    %17 = math.rsqrt %16 : vector<12x1xf32>
    %18 = vector.broadcast %17 : vector<12x1xf32> to vector<12x256xf32>
    %19 = arith.mulf %9, %18 : vector<12x256xf32>
    %20 = vector.broadcast %2 : vector<1x256xf32> to vector<12x256xf32>
    %21 = arith.mulf %19, %20 : vector<12x256xf32>
    %22 = vector.broadcast %3 : vector<1x256xf32> to vector<12x256xf32>
    %23 = arith.addf %21, %22 : vector<12x256xf32>
    %c0_10 = arith.constant 0 : index
    %c0_11 = arith.constant 0 : index
    %24 = vector.load %arg6[%c0_10, %c0_11] : memref<256x128xbf16, #tpu.memory_space<vmem>>, vector<256x128xbf16>
    %25 = arith.truncf %23 : vector<12x256xf32> to vector<12x256xbf16>
    %cst_12 = arith.constant dense<0.000000e+00> : vector<12x128xf32>
    %26 = tpu.matmul %25, %24, %cst_12 {dimension_numbers = #tpu.dot_dimension_numbers<[1], [0], [0], [1], [0, 0, 1, 1], [], []>} : vector<12x256xbf16>, vector<256x128xbf16>, vector<12x128xf32> -> vector<12x128xf32>
    %c0_13 = arith.constant 0 : index
    %c0_14 = arith.constant 0 : index
    %27 = vector.load %arg7[%c0_13, %c0_14] : memref<1x128xf32, #tpu.memory_space<vmem>>, vector<1x128xf32>
    %28 = vector.broadcast %27 : vector<1x128xf32> to vector<12x128xf32>
    %29 = arith.addf %26, %28 : vector<12x128xf32>
    %c0_15 = arith.constant 0 : index
    %c0_16 = arith.constant 0 : index
    %30 = vector.load %arg8[%c0_15, %c0_16] : memref<1x128xf32, #tpu.memory_space<vmem>>, vector<1x128xf32>
    %c0_17 = arith.constant 0 : index
    %c0_18 = arith.constant 0 : index
    %31 = vector.load %arg9[%c0_17, %c0_18] : memref<1x128xf32, #tpu.memory_space<vmem>>, vector<1x128xf32>
    %cst_19 = arith.constant dense<0.000000e+00> : vector<12xf32>
    %32 = vector.multi_reduction <add>, %29, %cst_19 [1] : vector<12x128xf32> to vector<12xf32>
    %33 = vector.shape_cast %32 : vector<12xf32> to vector<12x1xf32>
    %cst_20 = arith.constant 3.125000e-02 : f32
    %34 = vector.broadcast %cst_20 : f32 to vector<12x1xf32>
    %35 = arith.mulf %33, %34 : vector<12x1xf32>
    %36 = vector.broadcast %35 : vector<12x1xf32> to vector<12x128xf32>
    %37 = arith.subf %29, %36 : vector<12x128xf32>
    %38 = tpu.iota {dimensions = array<i32: 1>} : vector<12x128xi32>
    %c32_i32 = arith.constant 32 : i32
    %39 = vector.broadcast %c32_i32 : i32 to vector<12x128xi32>
    %40 = arith.cmpi slt, %38, %39 : vector<12x128xi32>
    %cst_21 = arith.constant 0.000000e+00 : f32
    %41 = vector.broadcast %cst_21 : f32 to vector<12x128xf32>
    %42 = arith.select %40, %37, %41 : vector<12x128xi1>, vector<12x128xf32>
    %43 = arith.mulf %42, %42 : vector<12x128xf32>
    %cst_22 = arith.constant dense<0.000000e+00> : vector<12xf32>
    %44 = vector.multi_reduction <add>, %43, %cst_22 [1] : vector<12x128xf32> to vector<12xf32>
    %45 = vector.shape_cast %44 : vector<12xf32> to vector<12x1xf32>
    %cst_23 = arith.constant 3.125000e-02 : f32
    %46 = vector.broadcast %cst_23 : f32 to vector<12x1xf32>
    %47 = arith.mulf %45, %46 : vector<12x1xf32>
    %cst_24 = arith.constant 9.99999974E-6 : f32
    %48 = vector.broadcast %cst_24 : f32 to vector<12x1xf32>
    %49 = arith.addf %47, %48 : vector<12x1xf32>
    %50 = math.rsqrt %49 : vector<12x1xf32>
    %51 = vector.broadcast %50 : vector<12x1xf32> to vector<12x128xf32>
    %52 = arith.mulf %42, %51 : vector<12x128xf32>
    %53 = vector.broadcast %30 : vector<1x128xf32> to vector<12x128xf32>
    %54 = arith.mulf %52, %53 : vector<12x128xf32>
    %55 = vector.broadcast %31 : vector<1x128xf32> to vector<12x128xf32>
    %56 = arith.addf %54, %55 : vector<12x128xf32>
    %c0_25 = arith.constant 0 : index
    %c0_26 = arith.constant 0 : index
    %c0_27 = arith.constant 0 : index
    %57 = vector.load %arg2[%c0_25, %c0_26, %c0_27] : memref<1x12x128xf32, #tpu.memory_space<vmem>>, vector<1x12x128xf32>
    %58 = vector.shape_cast %57 : vector<1x12x128xf32> to vector<12x128xf32>
    %59 = arith.addf %56, %58 : vector<12x128xf32>
    %c0_28 = arith.constant 0 : index
    %c0_29 = arith.constant 0 : index
    %60 = vector.load %arg10[%c0_28, %c0_29] : memref<1x128xf32, #tpu.memory_space<vmem>>, vector<1x128xf32>
    %c0_30 = arith.constant 0 : index
    %c0_31 = arith.constant 0 : index
    %61 = vector.load %arg11[%c0_30, %c0_31] : memref<1x128xf32, #tpu.memory_space<vmem>>, vector<1x128xf32>
    %c0_32 = arith.constant 0 : index
    %c0_33 = arith.constant 0 : index
    %c0_34 = arith.constant 0 : index
    %62 = vector.load %arg12[%c0_32, %c0_33, %c0_34] : memref<4x8x128xbf16, #tpu.memory_space<vmem>>, vector<4x8x128xbf16>
    %c0_35 = arith.constant 0 : index
    %c0_36 = arith.constant 0 : index
    %c0_37 = arith.constant 0 : index
    %63 = vector.load %arg13[%c0_35, %c0_36, %c0_37] : memref<4x8x128xbf16, #tpu.memory_space<vmem>>, vector<4x8x128xbf16>
    %c0_38 = arith.constant 0 : index
    %c0_39 = arith.constant 0 : index
    %c0_40 = arith.constant 0 : index
    %64 = vector.load %arg14[%c0_38, %c0_39, %c0_40] : memref<4x8x128xbf16, #tpu.memory_space<vmem>>, vector<4x8x128xbf16>
    %c0_41 = arith.constant 0 : index
    %c0_42 = arith.constant 0 : index
    %c0_43 = arith.constant 0 : index
    %65 = vector.load %arg15[%c0_41, %c0_42, %c0_43] : memref<4x8x128xbf16, #tpu.memory_space<vmem>>, vector<4x8x128xbf16>
    %c0_44 = arith.constant 0 : index
    %c0_45 = arith.constant 0 : index
    %66 = vector.load %arg16[%c0_44, %c0_45] : memref<1x128xf32, #tpu.memory_space<vmem>>, vector<1x128xf32>
    %c0_46 = arith.constant 0 : index
    %c0_47 = arith.constant 0 : index
    %67 = vector.load %arg17[%c0_46, %c0_47] : memref<1x128xf32, #tpu.memory_space<vmem>>, vector<1x128xf32>
    %c0_48 = arith.constant 0 : index
    %c0_49 = arith.constant 0 : index
    %68 = vector.load %arg18[%c0_48, %c0_49] : memref<1x128xf32, #tpu.memory_space<vmem>>, vector<1x128xf32>
    %c0_50 = arith.constant 0 : index
    %c0_51 = arith.constant 0 : index
    %69 = vector.load %arg19[%c0_50, %c0_51] : memref<128x128xbf16, #tpu.memory_space<vmem>>, vector<128x128xbf16>
    %c0_52 = arith.constant 0 : index
    %c0_53 = arith.constant 0 : index
    %70 = vector.load %arg20[%c0_52, %c0_53] : memref<1x128xf32, #tpu.memory_space<vmem>>, vector<1x128xf32>
    %c0_54 = arith.constant 0 : index
    %c0_55 = arith.constant 0 : index
    %71 = vector.load %arg21[%c0_54, %c0_55] : memref<128x128xbf16, #tpu.memory_space<vmem>>, vector<128x128xbf16>
    %c0_56 = arith.constant 0 : index
    %c0_57 = arith.constant 0 : index
    %72 = vector.load %arg22[%c0_56, %c0_57] : memref<1x128xf32, #tpu.memory_space<vmem>>, vector<1x128xf32>
    %cst_58 = arith.constant dense<0.000000e+00> : vector<12xf32>
    %73 = vector.multi_reduction <add>, %59, %cst_58 [1] : vector<12x128xf32> to vector<12xf32>
    %74 = vector.shape_cast %73 : vector<12xf32> to vector<12x1xf32>
    %cst_59 = arith.constant 3.125000e-02 : f32
    %75 = vector.broadcast %cst_59 : f32 to vector<12x1xf32>
    %76 = arith.mulf %74, %75 : vector<12x1xf32>
    %77 = vector.broadcast %76 : vector<12x1xf32> to vector<12x128xf32>
    %78 = arith.subf %59, %77 : vector<12x128xf32>
    %79 = tpu.iota {dimensions = array<i32: 1>} : vector<12x128xi32>
    %c32_i32_60 = arith.constant 32 : i32
    %80 = vector.broadcast %c32_i32_60 : i32 to vector<12x128xi32>
    %81 = arith.cmpi slt, %79, %80 : vector<12x128xi32>
    %cst_61 = arith.constant 0.000000e+00 : f32
    %82 = vector.broadcast %cst_61 : f32 to vector<12x128xf32>
    %83 = arith.select %81, %78, %82 : vector<12x128xi1>, vector<12x128xf32>
    %84 = arith.mulf %83, %83 : vector<12x128xf32>
    %cst_62 = arith.constant dense<0.000000e+00> : vector<12xf32>
    %85 = vector.multi_reduction <add>, %84, %cst_62 [1] : vector<12x128xf32> to vector<12xf32>
    %86 = vector.shape_cast %85 : vector<12xf32> to vector<12x1xf32>
    %cst_63 = arith.constant 3.125000e-02 : f32
    %87 = vector.broadcast %cst_63 : f32 to vector<12x1xf32>
    %88 = arith.mulf %86, %87 : vector<12x1xf32>
    %cst_64 = arith.constant 9.99999974E-6 : f32
    %89 = vector.broadcast %cst_64 : f32 to vector<12x1xf32>
    %90 = arith.addf %88, %89 : vector<12x1xf32>
    %91 = math.rsqrt %90 : vector<12x1xf32>
    %92 = vector.broadcast %91 : vector<12x1xf32> to vector<12x128xf32>
    %93 = arith.mulf %83, %92 : vector<12x128xf32>
    %94 = vector.broadcast %60 : vector<1x128xf32> to vector<12x128xf32>
    %95 = arith.mulf %93, %94 : vector<12x128xf32>
    %96 = vector.broadcast %61 : vector<1x128xf32> to vector<12x128xf32>
    %97 = arith.addf %95, %96 : vector<12x128xf32>
    %98 = arith.truncf %97 : vector<12x128xf32> to vector<12x128xbf16>
    %99 = vector.shape_cast %98 : vector<12x128xbf16> to vector<1x12x128xbf16>
    %100 = vector.shape_cast %99 : vector<1x12x128xbf16> to vector<1x12x128xbf16>
    %101 = vector.broadcast %100 : vector<1x12x128xbf16> to vector<4x12x128xbf16>
    "tpu.trace_start"() <{level = 10 : i32, message = "hsd,hed->hse"}> : () -> ()
    %cst_65 = arith.constant dense<0.000000e+00> : vector<4x12x8xf32>
    %102 = tpu.matmul %101, %62, %cst_65 {dimension_numbers = #tpu.dot_dimension_numbers<[2], [2], [1], [1], [0, 0, 0, 1, 1, 1], [0], [0]>} : vector<4x12x128xbf16>, vector<4x8x128xbf16>, vector<4x12x8xf32> -> vector<4x12x8xf32>
    %cst_66 = arith.constant dense<0.000000e+00> : vector<4x12x8xf32>
    %103 = tpu.matmul %101, %63, %cst_66 {dimension_numbers = #tpu.dot_dimension_numbers<[2], [2], [1], [1], [0, 0, 0, 1, 1, 1], [0], [0]>} : vector<4x12x128xbf16>, vector<4x8x128xbf16>, vector<4x12x8xf32> -> vector<4x12x8xf32>
    %cst_67 = arith.constant dense<0.000000e+00> : vector<4x12x8xf32>
    %104 = tpu.matmul %101, %64, %cst_67 {dimension_numbers = #tpu.dot_dimension_numbers<[2], [2], [1], [1], [0, 0, 0, 1, 1, 1], [0], [0]>} : vector<4x12x128xbf16>, vector<4x8x128xbf16>, vector<4x12x8xf32> -> vector<4x12x8xf32>
    "tpu.trace_stop"() : () -> ()
    %105 = arith.truncf %102 : vector<4x12x8xf32> to vector<4x12x8xbf16>
    %106 = arith.truncf %103 : vector<4x12x8xf32> to vector<4x12x8xbf16>
    "tpu.trace_start"() <{level = 10 : i32, message = "hqe,hke->hqk"}> : () -> ()
    %cst_68 = arith.constant dense<0.000000e+00> : vector<4x12x12xf32>
    %107 = tpu.matmul %105, %106, %cst_68 {dimension_numbers = #tpu.dot_dimension_numbers<[2], [2], [1], [1], [0, 0, 0, 1, 1, 1], [0], [0]>} : vector<4x12x8xbf16>, vector<4x12x8xbf16>, vector<4x12x12xf32> -> vector<4x12x12xf32>
    "tpu.trace_stop"() : () -> ()
    %cst_69 = arith.constant 0.353553385 : f32
    %108 = vector.broadcast %cst_69 : f32 to vector<4x12x12xf32>
    %109 = arith.mulf %107, %108 : vector<4x12x12xf32>
    %cst_70 = arith.constant dense<0xFF800000> : vector<4x12xf32>
    %110 = vector.multi_reduction <maximumf>, %109, %cst_70 [2] : vector<4x12x12xf32> to vector<4x12xf32>
    %111 = vector.shape_cast %110 : vector<4x12xf32> to vector<4x12x1xf32>
    %112 = vector.broadcast %111 : vector<4x12x1xf32> to vector<4x12x12xf32>
    %113 = arith.subf %109, %112 : vector<4x12x12xf32>
    %114 = math.exp %113 : vector<4x12x12xf32>
    %cst_71 = arith.constant dense<0.000000e+00> : vector<4x12xf32>
    %115 = vector.multi_reduction <add>, %114, %cst_71 [2] : vector<4x12x12xf32> to vector<4x12xf32>
    %116 = vector.shape_cast %115 : vector<4x12xf32> to vector<4x12x1xf32>
    %117 = tpu.reciprocal %116 {approx = true} : vector<4x12x1xf32> -> vector<4x12x1xf32>
    %118 = vector.broadcast %117 : vector<4x12x1xf32> to vector<4x12x12xf32>
    %119 = arith.mulf %114, %118 : vector<4x12x12xf32>
    %120 = arith.truncf %119 : vector<4x12x12xf32> to vector<4x12x12xbf16>
    %121 = arith.truncf %104 : vector<4x12x8xf32> to vector<4x12x8xbf16>
    "tpu.trace_start"() <{level = 10 : i32, message = "hqk,hke->hqe"}> : () -> ()
    %cst_72 = arith.constant dense<0.000000e+00> : vector<4x12x8xf32>
    %122 = tpu.matmul %120, %121, %cst_72 {dimension_numbers = #tpu.dot_dimension_numbers<[2], [1], [1], [2], [0, 0, 0, 1, 1, 2], [0], [0]>} : vector<4x12x12xbf16>, vector<4x12x8xbf16>, vector<4x12x8xf32> -> vector<4x12x8xf32>
    "tpu.trace_stop"() : () -> ()
    %123 = arith.truncf %122 : vector<4x12x8xf32> to vector<4x12x8xbf16>
    "tpu.trace_start"() <{level = 10 : i32, message = "hse,hed->hsd"}> : () -> ()
    %cst_73 = arith.constant dense<0.000000e+00> : vector<4x12x128xf32>
    %124 = tpu.matmul %123, %65, %cst_73 {dimension_numbers = #tpu.dot_dimension_numbers<[2], [1], [1], [2], [0, 0, 0, 1, 1, 2], [0], [0]>} : vector<4x12x8xbf16>, vector<4x8x128xbf16>, vector<4x12x128xf32> -> vector<4x12x128xf32>
    "tpu.trace_stop"() : () -> ()
    %cst_74 = arith.constant dense<0.000000e+00> : vector<12x128xf32>
    %125 = vector.multi_reduction <add>, %124, %cst_74 [0] : vector<4x12x128xf32> to vector<12x128xf32>
    %126 = vector.broadcast %66 : vector<1x128xf32> to vector<12x128xf32>
    %127 = arith.addf %125, %126 : vector<12x128xf32>
    %128 = arith.addf %59, %127 : vector<12x128xf32>
    %cst_75 = arith.constant dense<0.000000e+00> : vector<12xf32>
    %129 = vector.multi_reduction <add>, %128, %cst_75 [1] : vector<12x128xf32> to vector<12xf32>
    %130 = vector.shape_cast %129 : vector<12xf32> to vector<12x1xf32>
    %cst_76 = arith.constant 3.125000e-02 : f32
    %131 = vector.broadcast %cst_76 : f32 to vector<12x1xf32>
    %132 = arith.mulf %130, %131 : vector<12x1xf32>
    %133 = vector.broadcast %132 : vector<12x1xf32> to vector<12x128xf32>
    %134 = arith.subf %128, %133 : vector<12x128xf32>
    %135 = tpu.iota {dimensions = array<i32: 1>} : vector<12x128xi32>
    %c32_i32_77 = arith.constant 32 : i32
    %136 = vector.broadcast %c32_i32_77 : i32 to vector<12x128xi32>
    %137 = arith.cmpi slt, %135, %136 : vector<12x128xi32>
    %cst_78 = arith.constant 0.000000e+00 : f32
    %138 = vector.broadcast %cst_78 : f32 to vector<12x128xf32>
    %139 = arith.select %137, %134, %138 : vector<12x128xi1>, vector<12x128xf32>
    %140 = arith.mulf %139, %139 : vector<12x128xf32>
    %cst_79 = arith.constant dense<0.000000e+00> : vector<12xf32>
    %141 = vector.multi_reduction <add>, %140, %cst_79 [1] : vector<12x128xf32> to vector<12xf32>
    %142 = vector.shape_cast %141 : vector<12xf32> to vector<12x1xf32>
    %cst_80 = arith.constant 3.125000e-02 : f32
    %143 = vector.broadcast %cst_80 : f32 to vector<12x1xf32>
    %144 = arith.mulf %142, %143 : vector<12x1xf32>
    %cst_81 = arith.constant 9.99999974E-6 : f32
    %145 = vector.broadcast %cst_81 : f32 to vector<12x1xf32>
    %146 = arith.addf %144, %145 : vector<12x1xf32>
    %147 = math.rsqrt %146 : vector<12x1xf32>
    %148 = vector.broadcast %147 : vector<12x1xf32> to vector<12x128xf32>
    %149 = arith.mulf %139, %148 : vector<12x128xf32>
    %150 = vector.broadcast %67 : vector<1x128xf32> to vector<12x128xf32>
    %151 = arith.mulf %149, %150 : vector<12x128xf32>
    %152 = vector.broadcast %68 : vector<1x128xf32> to vector<12x128xf32>
    %153 = arith.addf %151, %152 : vector<12x128xf32>
    %154 = arith.truncf %153 : vector<12x128xf32> to vector<12x128xbf16>
    %cst_82 = arith.constant dense<0.000000e+00> : vector<12x128xf32>
    %155 = tpu.matmul %154, %69, %cst_82 {dimension_numbers = #tpu.dot_dimension_numbers<[1], [0], [0], [1], [0, 0, 1, 1], [], []>} : vector<12x128xbf16>, vector<128x128xbf16>, vector<12x128xf32> -> vector<12x128xf32>
    %156 = vector.broadcast %70 : vector<1x128xf32> to vector<12x128xf32>
    %157 = arith.addf %155, %156 : vector<12x128xf32>
    %158 = arith.mulf %157, %157 : vector<12x128xf32>
    %159 = arith.mulf %157, %158 : vector<12x128xf32>
    %cst_83 = arith.constant 4.471500e-02 : f32
    %160 = vector.broadcast %cst_83 : f32 to vector<12x128xf32>
    %161 = arith.mulf %160, %159 : vector<12x128xf32>
    %162 = arith.addf %157, %161 : vector<12x128xf32>
    %cst_84 = arith.constant 0.797884583 : f32
    %163 = vector.broadcast %cst_84 : f32 to vector<12x128xf32>
    %164 = arith.mulf %163, %162 : vector<12x128xf32>
    %165 = math.tanh %164 : vector<12x128xf32>
    %cst_85 = arith.constant 1.000000e+00 : f32
    %166 = vector.broadcast %cst_85 : f32 to vector<12x128xf32>
    %167 = arith.addf %166, %165 : vector<12x128xf32>
    %cst_86 = arith.constant 5.000000e-01 : f32
    %168 = vector.broadcast %cst_86 : f32 to vector<12x128xf32>
    %169 = arith.mulf %168, %167 : vector<12x128xf32>
    %170 = arith.mulf %157, %169 : vector<12x128xf32>
    %171 = arith.truncf %170 : vector<12x128xf32> to vector<12x128xbf16>
    %cst_87 = arith.constant dense<0.000000e+00> : vector<12x128xf32>
    %172 = tpu.matmul %171, %71, %cst_87 {dimension_numbers = #tpu.dot_dimension_numbers<[1], [0], [0], [1], [0, 0, 1, 1], [], []>} : vector<12x128xbf16>, vector<128x128xbf16>, vector<12x128xf32> -> vector<12x128xf32>
    %173 = vector.broadcast %72 : vector<1x128xf32> to vector<12x128xf32>
    %174 = arith.addf %172, %173 : vector<12x128xf32>
    %175 = arith.addf %128, %174 : vector<12x128xf32>
    %c0_88 = arith.constant 0 : index
    %c0_89 = arith.constant 0 : index
    %176 = vector.load %arg23[%c0_88, %c0_89] : memref<1x128xf32, #tpu.memory_space<vmem>>, vector<1x128xf32>
    %c0_90 = arith.constant 0 : index
    %c0_91 = arith.constant 0 : index
    %177 = vector.load %arg24[%c0_90, %c0_91] : memref<1x128xf32, #tpu.memory_space<vmem>>, vector<1x128xf32>
    %cst_92 = arith.constant dense<0.000000e+00> : vector<12xf32>
    %178 = vector.multi_reduction <add>, %175, %cst_92 [1] : vector<12x128xf32> to vector<12xf32>
    %179 = vector.shape_cast %178 : vector<12xf32> to vector<12x1xf32>
    %cst_93 = arith.constant 3.125000e-02 : f32
    %180 = vector.broadcast %cst_93 : f32 to vector<12x1xf32>
    %181 = arith.mulf %179, %180 : vector<12x1xf32>
    %182 = vector.broadcast %181 : vector<12x1xf32> to vector<12x128xf32>
    %183 = arith.subf %175, %182 : vector<12x128xf32>
    %184 = tpu.iota {dimensions = array<i32: 1>} : vector<12x128xi32>
    %c32_i32_94 = arith.constant 32 : i32
    %185 = vector.broadcast %c32_i32_94 : i32 to vector<12x128xi32>
    %186 = arith.cmpi slt, %184, %185 : vector<12x128xi32>
    %cst_95 = arith.constant 0.000000e+00 : f32
    %187 = vector.broadcast %cst_95 : f32 to vector<12x128xf32>
    %188 = arith.select %186, %183, %187 : vector<12x128xi1>, vector<12x128xf32>
    %189 = arith.mulf %188, %188 : vector<12x128xf32>
    %cst_96 = arith.constant dense<0.000000e+00> : vector<12xf32>
    %190 = vector.multi_reduction <add>, %189, %cst_96 [1] : vector<12x128xf32> to vector<12xf32>
    %191 = vector.shape_cast %190 : vector<12xf32> to vector<12x1xf32>
    %cst_97 = arith.constant 3.125000e-02 : f32
    %192 = vector.broadcast %cst_97 : f32 to vector<12x1xf32>
    %193 = arith.mulf %191, %192 : vector<12x1xf32>
    %cst_98 = arith.constant 9.99999974E-6 : f32
    %194 = vector.broadcast %cst_98 : f32 to vector<12x1xf32>
    %195 = arith.addf %193, %194 : vector<12x1xf32>
    %196 = math.rsqrt %195 : vector<12x1xf32>
    %197 = vector.broadcast %196 : vector<12x1xf32> to vector<12x128xf32>
    %198 = arith.mulf %188, %197 : vector<12x128xf32>
    %199 = vector.broadcast %176 : vector<1x128xf32> to vector<12x128xf32>
    %200 = arith.mulf %198, %199 : vector<12x128xf32>
    %201 = vector.broadcast %177 : vector<1x128xf32> to vector<12x128xf32>
    %202 = arith.addf %200, %201 : vector<12x128xf32>
    %c0_99 = arith.constant 0 : index
    %c0_100 = arith.constant 0 : index
    %203 = vector.load %arg25[%c0_99, %c0_100] : memref<128x128xbf16, #tpu.memory_space<vmem>>, vector<128x128xbf16>
    %204 = arith.truncf %202 : vector<12x128xf32> to vector<12x128xbf16>
    %cst_101 = arith.constant dense<0.000000e+00> : vector<12x128xf32>
    %205 = tpu.matmul %204, %203, %cst_101 {dimension_numbers = #tpu.dot_dimension_numbers<[1], [0], [0], [1], [0, 0, 1, 1], [], []>} : vector<12x128xbf16>, vector<128x128xbf16>, vector<12x128xf32> -> vector<12x128xf32>
    %c0_102 = arith.constant 0 : index
    %c0_103 = arith.constant 0 : index
    %206 = vector.load %arg26[%c0_102, %c0_103] : memref<1x128xf32, #tpu.memory_space<vmem>>, vector<1x128xf32>
    %207 = vector.broadcast %206 : vector<1x128xf32> to vector<12x128xf32>
    %208 = arith.addf %205, %207 : vector<12x128xf32>
    %c0_104 = arith.constant 0 : index
    %c0_105 = arith.constant 0 : index
    %c0_106 = arith.constant 0 : index
    %209 = vector.load %arg3[%c0_104, %c0_105, %c0_106] : memref<1x12x128xf32, #tpu.memory_space<vmem>>, vector<1x12x128xf32>
    %210 = vector.shape_cast %209 : vector<1x12x128xf32> to vector<12x128xf32>
    %211 = arith.addf %208, %210 : vector<12x128xf32>
    %212 = arith.truncf %211 : vector<12x128xf32> to vector<12x128xbf16>
    %c0_107 = arith.constant 0 : index
    %c0_108 = arith.constant 0 : index
    %c0_109 = arith.constant 0 : index
    %213 = vector.load %arg27[%c0_107, %c0_108, %c0_109] : memref<1x12x128xbf16, #tpu.memory_space<vmem>>, vector<1x12x128xbf16>
    %214 = vector.shape_cast %213 : vector<1x12x128xbf16> to vector<12x128xbf16>
    %215 = vector.shape_cast %212 : vector<12x128xbf16> to vector<1x12x128xbf16>
    tpu.vector_store %arg27[%c0_107, %c0_108, %c0_109], %215 {strides = array<i32>} : memref<1x12x128xbf16, #tpu.memory_space<vmem>>, vector<1x12x128xbf16>,
    return
  }
  func.func @transform_0(%arg0: i32) -> (i32, i32, i32) {
    %c0_i32 = arith.constant 0 : i32
    %c0_i32_0 = arith.constant 0 : i32
    %c0_i32_1 = arith.constant 0 : i32
    return %arg0, %c0_i32, %c0_i32_0 : i32, i32, i32
  }
  func.func @transform_1(%arg0: i32) -> (i32, i32, i32) {
    %c0_i32 = arith.constant 0 : i32
    %c0_i32_0 = arith.constant 0 : i32
    %c0_i32_1 = arith.constant 0 : i32
    return %arg0, %c0_i32, %c0_i32_0 : i32, i32, i32
  }
  func.func @transform_2(%arg0: i32) -> (i32, i32, i32) {
    %c0_i32 = arith.constant 0 : i32
    %c0_i32_0 = arith.constant 0 : i32
    %c0_i32_1 = arith.constant 0 : i32
    return %arg0, %c0_i32, %c0_i32_0 : i32, i32, i32
  }
  func.func @transform_3(%arg0: i32) -> (i32, i32) {
    %c0_i32 = arith.constant 0 : i32
    %c0_i32_0 = arith.constant 0 : i32
    %c0_i32_1 = arith.constant 0 : i32
    return %c0_i32, %c0_i32_0 : i32, i32
  }
  func.func @transform_4(%arg0: i32) -> (i32, i32) {
    %c0_i32 = arith.constant 0 : i32
    %c0_i32_0 = arith.constant 0 : i32
    %c0_i32_1 = arith.constant 0 : i32
    return %c0_i32, %c0_i32_0 : i32, i32
  }
  func.func @transform_5(%arg0: i32) -> (i32, i32) {
    %c0_i32 = arith.constant 0 : i32
    %c0_i32_0 = arith.constant 0 : i32
    %c0_i32_1 = arith.constant 0 : i32
    return %c0_i32, %c0_i32_0 : i32, i32
  }
  func.func @transform_6(%arg0: i32) -> (i32, i32) {
    %c0_i32 = arith.constant 0 : i32
    %c0_i32_0 = arith.constant 0 : i32
    %c0_i32_1 = arith.constant 0 : i32
    return %c0_i32, %c0_i32_0 : i32, i32
  }
  func.func @transform_7(%arg0: i32) -> (i32, i32) {
    %c0_i32 = arith.constant 0 : i32
    %c0_i32_0 = arith.constant 0 : i32
    %c0_i32_1 = arith.constant 0 : i32
    return %c0_i32, %c0_i32_0 : i32, i32
  }
  func.func @transform_8(%arg0: i32) -> (i32, i32) {
    %c0_i32 = arith.constant 0 : i32
    %c0_i32_0 = arith.constant 0 : i32
    %c0_i32_1 = arith.constant 0 : i32
    return %c0_i32, %c0_i32_0 : i32, i32
  }
  func.func @transform_9(%arg0: i32) -> (i32, i32) {
    %c0_i32 = arith.constant 0 : i32
    %c0_i32_0 = arith.constant 0 : i32
    %c0_i32_1 = arith.constant 0 : i32
    return %c0_i32, %c0_i32_0 : i32, i32
  }
  func.func @transform_10(%arg0: i32) -> (i32, i32) {
    %c0_i32 = arith.constant 0 : i32
    %c0_i32_0 = arith.constant 0 : i32
    %c0_i32_1 = arith.constant 0 : i32
    return %c0_i32, %c0_i32_0 : i32, i32
  }
  func.func @transform_11(%arg0: i32) -> (i32, i32, i32) {
    %c0_i32 = arith.constant 0 : i32
    %c0_i32_0 = arith.constant 0 : i32
    %c0_i32_1 = arith.constant 0 : i32
    %c0_i32_2 = arith.constant 0 : i32
    return %c0_i32, %c0_i32_0, %c0_i32_1 : i32, i32, i32
  }
  func.func @transform_12(%arg0: i32) -> (i32, i32, i32) {
    %c0_i32 = arith.constant 0 : i32
    %c0_i32_0 = arith.constant 0 : i32
    %c0_i32_1 = arith.constant 0 : i32
    %c0_i32_2 = arith.constant 0 : i32
    return %c0_i32, %c0_i32_0, %c0_i32_1 : i32, i32, i32
  }
  func.func @transform_13(%arg0: i32) -> (i32, i32, i32) {
    %c0_i32 = arith.constant 0 : i32
    %c0_i32_0 = arith.constant 0 : i32
    %c0_i32_1 = arith.constant 0 : i32
    %c0_i32_2 = arith.constant 0 : i32
    return %c0_i32, %c0_i32_0, %c0_i32_1 : i32, i32, i32
  }
  func.func @transform_14(%arg0: i32) -> (i32, i32, i32) {
    %c0_i32 = arith.constant 0 : i32
    %c0_i32_0 = arith.constant 0 : i32
    %c0_i32_1 = arith.constant 0 : i32
    %c0_i32_2 = arith.constant 0 : i32
    return %c0_i32, %c0_i32_0, %c0_i32_1 : i32, i32, i32
  }
  func.func @transform_15(%arg0: i32) -> (i32, i32) {
    %c0_i32 = arith.constant 0 : i32
    %c0_i32_0 = arith.constant 0 : i32
    %c0_i32_1 = arith.constant 0 : i32
    return %c0_i32, %c0_i32_0 : i32, i32
  }
  func.func @transform_16(%arg0: i32) -> (i32, i32) {
    %c0_i32 = arith.constant 0 : i32
    %c0_i32_0 = arith.constant 0 : i32
    %c0_i32_1 = arith.constant 0 : i32
    return %c0_i32, %c0_i32_0 : i32, i32
  }
  func.func @transform_17(%arg0: i32) -> (i32, i32) {
    %c0_i32 = arith.constant 0 : i32
    %c0_i32_0 = arith.constant 0 : i32
    %c0_i32_1 = arith.constant 0 : i32
    return %c0_i32, %c0_i32_0 : i32, i32
  }
  func.func @transform_18(%arg0: i32) -> (i32, i32) {
    %c0_i32 = arith.constant 0 : i32
    %c0_i32_0 = arith.constant 0 : i32
    %c0_i32_1 = arith.constant 0 : i32
    return %c0_i32, %c0_i32_0 : i32, i32
  }
  func.func @transform_19(%arg0: i32) -> (i32, i32) {
    %c0_i32 = arith.constant 0 : i32
    %c0_i32_0 = arith.constant 0 : i32
    %c0_i32_1 = arith.constant 0 : i32
    return %c0_i32, %c0_i32_0 : i32, i32
  }
  func.func @transform_20(%arg0: i32) -> (i32, i32) {
    %c0_i32 = arith.constant 0 : i32
    %c0_i32_0 = arith.constant 0 : i32
    %c0_i32_1 = arith.constant 0 : i32
    return %c0_i32, %c0_i32_0 : i32, i32
  }
  func.func @transform_21(%arg0: i32) -> (i32, i32) {
    %c0_i32 = arith.constant 0 : i32
    %c0_i32_0 = arith.constant 0 : i32
    %c0_i32_1 = arith.constant 0 : i32
    return %c0_i32, %c0_i32_0 : i32, i32
  }
  func.func @transform_22(%arg0: i32) -> (i32, i32) {
    %c0_i32 = arith.constant 0 : i32
    %c0_i32_0 = arith.constant 0 : i32
    %c0_i32_1 = arith.constant 0 : i32
    return %c0_i32, %c0_i32_0 : i32, i32
  }
  func.func @transform_23(%arg0: i32) -> (i32, i32) {
    %c0_i32 = arith.constant 0 : i32
    %c0_i32_0 = arith.constant 0 : i32
    %c0_i32_1 = arith.constant 0 : i32
    return %c0_i32, %c0_i32_0 : i32, i32
  }
  func.func @transform_24(%arg0: i32) -> (i32, i32) {
    %c0_i32 = arith.constant 0 : i32
    %c0_i32_0 = arith.constant 0 : i32
    %c0_i32_1 = arith.constant 0 : i32
    return %c0_i32, %c0_i32_0 : i32, i32
  }
  func.func @transform_25(%arg0: i32) -> (i32, i32) {
    %c0_i32 = arith.constant 0 : i32
    %c0_i32_0 = arith.constant 0 : i32
    %c0_i32_1 = arith.constant 0 : i32
    return %c0_i32, %c0_i32_0 : i32, i32
  }
  func.func @transform_26(%arg0: i32) -> (i32, i32, i32) {
    %c0_i32 = arith.constant 0 : i32
    %c0_i32_0 = arith.constant 0 : i32
    %c0_i32_1 = arith.constant 0 : i32
    return %arg0, %c0_i32, %c0_i32_0 : i32, i32, i32
  }
}

</mosaic_0001>

<llo_original>
// kernel: mae_forward.4
$region0: #{mae_forward.4}
  #allocation0 [shape = 'u32[]', space=smem, size = 0x4, offset = 0x4, fixed_abs, tag = 'smem constant byte address 0x4 - core index']
  #allocation1 [shape = 'u32[144,128]{1,0:T(1,128)}', space=vmem, size = 0x12000, scoped, tag = 'internal scratch']
  %s0 = inlined_call_operand.vmem [shape: f32[2,4,256], index: 0, kind: input, shape index: {}]
  %s1 = inlined_call_operand.vmem [shape: f32[2,4,128], index: 1, kind: input, shape index: {}]
  %s2 = inlined_call_operand.vmem [shape: f32[2,4,128], index: 2, kind: input, shape index: {}]
  %s3 = inlined_call_operand.vmem [shape: f32[1,256], index: 3, kind: input, shape index: {}]
  %s4 = inlined_call_operand.vmem [shape: f32[1,256], index: 4, kind: input, shape index: {}]
  %s5 = inlined_call_operand.vmem [shape: bf16[256,128], index: 5, kind: input, shape index: {}]
  %s6 = inlined_call_operand.vmem [shape: f32[1,128], index: 6, kind: input, shape index: {}]
  %s7 = inlined_call_operand.vmem [shape: f32[1,128], index: 7, kind: input, shape index: {}]
  %s8 = inlined_call_operand.vmem [shape: f32[1,128], index: 8, kind: input, shape index: {}]
  %s9 = inlined_call_operand.vmem [shape: f32[1,128], index: 9, kind: input, shape index: {}]
  %s10 = inlined_call_operand.vmem [shape: f32[1,128], index: 10, kind: input, shape index: {}]
  %s11 = inlined_call_operand.vmem [shape: bf16[4,8,128], index: 11, kind: input, shape index: {}]
  %s12 = inlined_call_operand.vmem [shape: bf16[4,8,128], index: 12, kind: input, shape index: {}]
  %s13 = inlined_call_operand.vmem [shape: bf16[4,8,128], index: 13, kind: input, shape index: {}]
  %s14 = inlined_call_operand.vmem [shape: bf16[4,8,128], index: 14, kind: input, shape index: {}]
  %s15 = inlined_call_operand.vmem [shape: f32[1,128], index: 15, kind: input, shape index: {}]
  %s16 = inlined_call_operand.vmem [shape: f32[1,128], index: 16, kind: input, shape index: {}]
  %s17 = inlined_call_operand.vmem [shape: f32[1,128], index: 17, kind: input, shape index: {}]
  %s18 = inlined_call_operand.vmem [shape: bf16[128,128], index: 18, kind: input, shape index: {}]
  %s19 = inlined_call_operand.vmem [shape: f32[1,128], index: 19, kind: input, shape index: {}]
  %s20 = inlined_call_operand.vmem [shape: bf16[128,128], index: 20, kind: input, shape index: {}]
  %s21 = inlined_call_operand.vmem [shape: f32[1,128], index: 21, kind: input, shape index: {}]
  %s22 = inlined_call_operand.vmem [shape: f32[1,128], index: 22, kind: input, shape index: {}]
  %s23 = inlined_call_operand.vmem [shape: f32[1,128], index: 23, kind: input, shape index: {}]
  %s24 = inlined_call_operand.vmem [shape: bf16[128,128], index: 24, kind: input, shape index: {}]
  %s25 = inlined_call_operand.vmem [shape: f32[1,128], index: 25, kind: input, shape index: {}]
  %s26 = inlined_call_operand.vmem [shape: bf16[2,4,128], index: 26, kind: output, shape index: {}]
  %s27 = sld [smem:[#allocation0]]
  $region137: #{mae_forward.4} parent=0
    _
  %s29 = ssub.s32 1, %s27
  %s30 = scalar_select 0, %s29, %s27
  loop: start=0, step=1, limit=4
  $region2: #{mae_forward.4} parent=0 // loop_pre_header
    _
  $region3: #{mae_forward.4} parent=0 // loop_header
    %s32 = sphi 0, %s36
    %p33 = scmp.ge.s32.totalorder %s32, 4
    %s42 = sphi 0, %s44
    %s45 = sphi 0, %s42
    %s46 = sphi 0, %s45
    %s62 = sphi 0, %s46
    %s68 = sphi 0, %s70
    %s71 = sphi 0, %s68
    %s72 = sphi 0, %s71
    %s88 = sphi 0, %s72
    %s94 = sphi 0, %s96
    %s97 = sphi 0, %s94
    %s98 = sphi 0, %s97
    %s114 = sphi 0, %s98
    %s118 = sphi 0, %s118
    %s120 = sphi 0, %s118
    %s121 = sphi 0, %s120
    %s135 = sphi 0, %s121
    %s139 = sphi 0, %s139
    %s141 = sphi 0, %s139
    %s142 = sphi 0, %s141
    %s156 = sphi 0, %s142
    %s160 = sphi 0, %s160
    %s162 = sphi 0, %s160
    %s163 = sphi 0, %s162
    %s177 = sphi 0, %s163
    %s181 = sphi 0, %s181
    %s183 = sphi 0, %s181
    %s184 = sphi 0, %s183
    %s198 = sphi 0, %s184
    %s202 = sphi 0, %s202
    %s204 = sphi 0, %s202
    %s205 = sphi 0, %s204
    %s219 = sphi 0, %s205
    %s223 = sphi 0, %s223
    %s225 = sphi 0, %s223
    %s226 = sphi 0, %s225
    %s240 = sphi 0, %s226
    %s244 = sphi 0, %s244
    %s246 = sphi 0, %s244
    %s247 = sphi 0, %s246
    %s261 = sphi 0, %s247
    %s265 = sphi 0, %s265
    %s267 = sphi 0, %s265
    %s268 = sphi 0, %s267
    %s282 = sphi 0, %s268
    %s286 = sphi 0, %s286
    %s288 = sphi 0, %s286
    %s289 = sphi 0, %s288
    %s303 = sphi 0, %s289
    %s307 = sphi 0, %s307
    %s309 = sphi 0, %s307
    %s310 = sphi 0, %s309
    %s324 = sphi 0, %s310
    %s328 = sphi 0, %s328
    %s330 = sphi 0, %s328
    %s331 = sphi 0, %s330
    %s345 = sphi 0, %s331
    %s349 = sphi 0, %s349
    %s351 = sphi 0, %s349
    %s352 = sphi 0, %s351
    %s366 = sphi 0, %s352
    %s370 = sphi 0, %s370
    %s372 = sphi 0, %s370
    %s373 = sphi 0, %s372
    %s387 = sphi 0, %s373
    %s391 = sphi 0, %s391
    %s393 = sphi 0, %s391
    %s394 = sphi 0, %s393
    %s408 = sphi 0, %s394
    %s412 = sphi 0, %s412
    %s414 = sphi 0, %s412
    %s415 = sphi 0, %s414
    %s429 = sphi 0, %s415
    %s433 = sphi 0, %s433
    %s435 = sphi 0, %s433
    %s436 = sphi 0, %s435
    %s450 = sphi 0, %s436
    %s454 = sphi 0, %s454
    %s456 = sphi 0, %s454
    %s457 = sphi 0, %s456
    %s471 = sphi 0, %s457
    %s475 = sphi 0, %s475
    %s477 = sphi 0, %s475
    %s478 = sphi 0, %s477
    %s492 = sphi 0, %s478
    %s496 = sphi 0, %s496
    %s498 = sphi 0, %s496
    %s499 = sphi 0, %s498
    %s513 = sphi 0, %s499
    %s517 = sphi 0, %s517
    %s519 = sphi 0, %s517
    %s520 = sphi 0, %s519
    %s534 = sphi 0, %s520
    %s538 = sphi 0, %s538
    %s540 = sphi 0, %s538
    %s541 = sphi 0, %s540
    %s555 = sphi 0, %s541
    %s559 = sphi 0, %s559
    %s561 = sphi 0, %s559
    %s562 = sphi 0, %s561
    %s576 = sphi 0, %s562
    %s580 = sphi 0, %s580
    %s582 = sphi 0, %s580
    %s583 = sphi 0, %s582
    %s597 = sphi 0, %s583
    %s603 = sphi 0, %s605
    %s606 = sphi 0, %s603
    %s607 = sphi 0, %s606
    %s623 = sphi 0, %s607
  $region4: #{mae_forward.4} parent=0 // loop_header_branch
    %35 = sbr.rel (%p33) target = $region8
  $region5: #{mae_forward.4} parent=0 // loop_body
    %s37 = ssub.s32 %s32, 1
    %s38 = ssub.s32 %s32, 2
    %s39 = sadd.s32 %s32, 1
    %s40 = ssub.s32 %s32, %s39
    %p41 = scmp.eq.s32.totalorder %s40, 0
    %s43 = sadd.s32 %s42, 1
    %s44 = scalar_select %p41, %s42, %s43
    %p47 = pneg %p41
    %p48 = scmp.eq.s32.totalorder %s32, 1
    %p49 = por %p47, %p48
    %p50 = scmp.ne.s32.totalorder %s42, %s45
    %p51 = scmp.eq.s32.totalorder %s32, 0
    %p52 = por %p50, %p51
    %p53 = scmp.ne.s32.totalorder %s42, %s45
    %p54 = scmp.eq.s32.totalorder %s37, 1
    %p55 = por %p53, %p54
    %p56 = scmp.ne.s32.totalorder %s45, %s46
    %p57 = scmp.eq.s32.totalorder %s37, 0
    %p58 = por %p56, %p57
    %p59 = scmp.ne.s32.totalorder %s45, %s46
    %p60 = scmp.eq.s32.totalorder %s38, 1
    %p61 = por %p59, %p60
    %p63 = scmp.ne.s32.totalorder %s46, %s62
    %p64 = scmp.eq.s32.totalorder %s38, 0
    %p65 = por %p63, %p64
    %s66 = ssub.s32 %s32, %s39
    %p67 = scmp.eq.s32.totalorder %s66, 0
    %s69 = sadd.s32 %s68, 1
    %s70 = scalar_select %p67, %s68, %s69
    %p73 = pneg %p67
    %p74 = scmp.eq.s32.totalorder %s32, 1
    %p75 = por %p73, %p74
    %p76 = scmp.ne.s32.totalorder %s68, %s71
    %p77 = scmp.eq.s32.totalorder %s32, 0
    %p78 = por %p76, %p77
    %p79 = scmp.ne.s32.totalorder %s68, %s71
    %p80 = scmp.eq.s32.totalorder %s37, 1
    %p81 = por %p79, %p80
    %p82 = scmp.ne.s32.totalorder %s71, %s72
    %p83 = scmp.eq.s32.totalorder %s37, 0
    %p84 = por %p82, %p83
    %p85 = scmp.ne.s32.totalorder %s71, %s72
    %p86 = scmp.eq.s32.totalorder %s38, 1
    %p87 = por %p85, %p86
    %p89 = scmp.ne.s32.totalorder %s72, %s88
    %p90 = scmp.eq.s32.totalorder %s38, 0
    %p91 = por %p89, %p90
    %s92 = ssub.s32 %s32, %s39
    %p93 = scmp.eq.s32.totalorder %s92, 0
    %s95 = sadd.s32 %s94, 1
    %s96 = scalar_select %p93, %s94, %s95
    %p99 = pneg %p93
    %p100 = scmp.eq.s32.totalorder %s32, 1
    %p101 = por %p99, %p100
    %p102 = scmp.ne.s32.totalorder %s94, %s97
    %p103 = scmp.eq.s32.totalorder %s32, 0
    %p104 = por %p102, %p103
    %p105 = scmp.ne.s32.totalorder %s94, %s97
    %p106 = scmp.eq.s32.totalorder %s37, 1
    %p107 = por %p105, %p106
    %p108 = scmp.ne.s32.totalorder %s97, %s98
    %p109 = scmp.eq.s32.totalorder %s37, 0
    %p110 = por %p108, %p109
    %p111 = scmp.ne.s32.totalorder %s97, %s98
    %p112 = scmp.eq.s32.totalorder %s38, 1
    %p113 = por %p111, %p112
    %p115 = scmp.ne.s32.totalorder %s98, %s114
    %p116 = scmp.eq.s32.totalorder %s38, 0
    %p117 = por %p115, %p116
    %s119 = sadd.s32 %s118, 1
    %p122 = scmp.eq.s32.totalorder %s32, 1
    %p123 = scmp.ne.s32.totalorder %s118, %s120
    %p124 = scmp.eq.s32.totalorder %s32, 0
    %p125 = por %p123, %p124
    %p126 = scmp.ne.s32.totalorder %s118, %s120
    %p127 = scmp.eq.s32.totalorder %s37, 1
    %p128 = por %p126, %p127
    %p129 = scmp.ne.s32.totalorder %s120, %s121
    %p130 = scmp.eq.s32.totalorder %s37, 0
    %p131 = por %p129, %p130
    %p132 = scmp.ne.s32.totalorder %s120, %s121
    %p133 = scmp.eq.s32.totalorder %s38, 1
    %p134 = por %p132, %p133
    %p136 = scmp.ne.s32.totalorder %s121, %s135
    %p137 = scmp.eq.s32.totalorder %s38, 0
    %p138 = por %p136, %p137
    %s140 = sadd.s32 %s139, 1
    %p143 = scmp.eq.s32.totalorder %s32, 1
    %p144 = scmp.ne.s32.totalorder %s139, %s141
    %p145 = scmp.eq.s32.totalorder %s32, 0
    %p146 = por %p144, %p145
    %p147 = scmp.ne.s32.totalorder %s139, %s141
    %p148 = scmp.eq.s32.totalorder %s37, 1
    %p149 = por %p147, %p148
    %p150 = scmp.ne.s32.totalorder %s141, %s142
    %p151 = scmp.eq.s32.totalorder %s37, 0
    %p152 = por %p150, %p151
    %p153 = scmp.ne.s32.totalorder %s141, %s142
    %p154 = scmp.eq.s32.totalorder %s38, 1
    %p155 = por %p153, %p154
    %p157 = scmp.ne.s32.totalorder %s142, %s156
    %p158 = scmp.eq.s32.totalorder %s38, 0
    %p159 = por %p157, %p158
    %s161 = sadd.s32 %s160, 1
    %p164 = scmp.eq.s32.totalorder %s32, 1
    %p165 = scmp.ne.s32.totalorder %s160, %s162
    %p166 = scmp.eq.s32.totalorder %s32, 0
    %p167 = por %p165, %p166
    %p168 = scmp.ne.s32.totalorder %s160, %s162
    %p169 = scmp.eq.s32.totalorder %s37, 1
    %p170 = por %p168, %p169
    %p171 = scmp.ne.s32.totalorder %s162, %s163
    %p172 = scmp.eq.s32.totalorder %s37, 0
    %p173 = por %p171, %p172
    %p174 = scmp.ne.s32.totalorder %s162, %s163
    %p175 = scmp.eq.s32.totalorder %s38, 1
    %p176 = por %p174, %p175
    %p178 = scmp.ne.s32.totalorder %s163, %s177
    %p179 = scmp.eq.s32.totalorder %s38, 0
    %p180 = por %p178, %p179
    %s182 = sadd.s32 %s181, 1
    %p185 = scmp.eq.s32.totalorder %s32, 1
    %p186 = scmp.ne.s32.totalorder %s181, %s183
    %p187 = scmp.eq.s32.totalorder %s32, 0
    %p188 = por %p186, %p187
    %p189 = scmp.ne.s32.totalorder %s181, %s183
    %p190 = scmp.eq.s32.totalorder %s37, 1
    %p191 = por %p189, %p190
    %p192 = scmp.ne.s32.totalorder %s183, %s184
    %p193 = scmp.eq.s32.totalorder %s37, 0
    %p194 = por %p192, %p193
    %p195 = scmp.ne.s32.totalorder %s183, %s184
    %p196 = scmp.eq.s32.totalorder %s38, 1
    %p197 = por %p195, %p196
    %p199 = scmp.ne.s32.totalorder %s184, %s198
    %p200 = scmp.eq.s32.totalorder %s38, 0
    %p201 = por %p199, %p200
    %s203 = sadd.s32 %s202, 1
    %p206 = scmp.eq.s32.totalorder %s32, 1
    %p207 = scmp.ne.s32.totalorder %s202, %s204
    %p208 = scmp.eq.s32.totalorder %s32, 0
    %p209 = por %p207, %p208
    %p210 = scmp.ne.s32.totalorder %s202, %s204
    %p211 = scmp.eq.s32.totalorder %s37, 1
    %p212 = por %p210, %p211
    %p213 = scmp.ne.s32.totalorder %s204, %s205
    %p214 = scmp.eq.s32.totalorder %s37, 0
    %p215 = por %p213, %p214
    %p216 = scmp.ne.s32.totalorder %s204, %s205
    %p217 = scmp.eq.s32.totalorder %s38, 1
    %p218 = por %p216, %p217
    %p220 = scmp.ne.s32.totalorder %s205, %s219
    %p221 = scmp.eq.s32.totalorder %s38, 0
    %p222 = por %p220, %p221
    %s224 = sadd.s32 %s223, 1
    %p227 = scmp.eq.s32.totalorder %s32, 1
    %p228 = scmp.ne.s32.totalorder %s223, %s225
    %p229 = scmp.eq.s32.totalorder %s32, 0
    %p230 = por %p228, %p229
    %p231 = scmp.ne.s32.totalorder %s223, %s225
    %p232 = scmp.eq.s32.totalorder %s37, 1
    %p233 = por %p231, %p232
    %p234 = scmp.ne.s32.totalorder %s225, %s226
    %p235 = scmp.eq.s32.totalorder %s37, 0
    %p236 = por %p234, %p235
    %p237 = scmp.ne.s32.totalorder %s225, %s226
    %p238 = scmp.eq.s32.totalorder %s38, 1
    %p239 = por %p237, %p238
    %p241 = scmp.ne.s32.totalorder %s226, %s240
    %p242 = scmp.eq.s32.totalorder %s38, 0
    %p243 = por %p241, %p242
    %s245 = sadd.s32 %s244, 1
    %p248 = scmp.eq.s32.totalorder %s32, 1
    %p249 = scmp.ne.s32.totalorder %s244, %s246
    %p250 = scmp.eq.s32.totalorder %s32, 0
    %p251 = por %p249, %p250
    %p252 = scmp.ne.s32.totalorder %s244, %s246
    %p253 = scmp.eq.s32.totalorder %s37, 1
    %p254 = por %p252, %p253
    %p255 = scmp.ne.s32.totalorder %s246, %s247
    %p256 = scmp.eq.s32.totalorder %s37, 0
    %p257 = por %p255, %p256
    %p258 = scmp.ne.s32.totalorder %s246, %s247
    %p259 = scmp.eq.s32.totalorder %s38, 1
    %p260 = por %p258, %p259
    %p262 = scmp.ne.s32.totalorder %s247, %s261
    %p263 = scmp.eq.s32.totalorder %s38, 0
    %p264 = por %p262, %p263
    %s266 = sadd.s32 %s265, 1
    %p269 = scmp.eq.s32.totalorder %s32, 1
    %p270 = scmp.ne.s32.totalorder %s265, %s267
    %p271 = scmp.eq.s32.totalorder %s32, 0
    %p272 = por %p270, %p271
    %p273 = scmp.ne.s32.totalorder %s265, %s267
    %p274 = scmp.eq.s32.totalorder %s37, 1
    %p275 = por %p273, %p274
    %p276 = scmp.ne.s32.totalorder %s267, %s268
    %p277 = scmp.eq.s32.totalorder %s37, 0
    %p278 = por %p276, %p277
    %p279 = scmp.ne.s32.totalorder %s267, %s268
    %p280 = scmp.eq.s32.totalorder %s38, 1
    %p281 = por %p279, %p280
    %p283 = scmp.ne.s32.totalorder %s268, %s282
    %p284 = scmp.eq.s32.totalorder %s38, 0
    %p285 = por %p283, %p284
    %s287 = sadd.s32 %s286, 1
    %p290 = scmp.eq.s32.totalorder %s32, 1
    %p291 = scmp.ne.s32.totalorder %s286, %s288
    %p292 = scmp.eq.s32.totalorder %s32, 0
    %p293 = por %p291, %p292
    %p294 = scmp.ne.s32.totalorder %s286, %s288
    %p295 = scmp.eq.s32.totalorder %s37, 1
    %p296 = por %p294, %p295
    %p297 = scmp.ne.s32.totalorder %s288, %s289
    %p298 = scmp.eq.s32.totalorder %s37, 0
    %p299 = por %p297, %p298
    %p300 = scmp.ne.s32.totalorder %s288, %s289
    %p301 = scmp.eq.s32.totalorder %s38, 1
    %p302 = por %p300, %p301
    %p304 = scmp.ne.s32.totalorder %s289, %s303
    %p305 = scmp.eq.s32.totalorder %s38, 0
    %p306 = por %p304, %p305
    %s308 = sadd.s32 %s307, 1
    %p311 = scmp.eq.s32.totalorder %s32, 1
    %p312 = scmp.ne.s32.totalorder %s307, %s309
    %p313 = scmp.eq.s32.totalorder %s32, 0
    %p314 = por %p312, %p313
    %p315 = scmp.ne.s32.totalorder %s307, %s309
    %p316 = scmp.eq.s32.totalorder %s37, 1
    %p317 = por %p315, %p316
    %p318 = scmp.ne.s32.totalorder %s309, %s310
    %p319 = scmp.eq.s32.totalorder %s37, 0
    %p320 = por %p318, %p319
    %p321 = scmp.ne.s32.totalorder %s309, %s310
    %p322 = scmp.eq.s32.totalorder %s38, 1
    %p323 = por %p321, %p322
    %p325 = scmp.ne.s32.totalorder %s310, %s324
    %p326 = scmp.eq.s32.totalorder %s38, 0
    %p327 = por %p325, %p326
    %s329 = sadd.s32 %s328, 1
    %p332 = scmp.eq.s32.totalorder %s32, 1
    %p333 = scmp.ne.s32.totalorder %s328, %s330
    %p334 = scmp.eq.s32.totalorder %s32, 0
    %p335 = por %p333, %p334
    %p336 = scmp.ne.s32.totalorder %s328, %s330
    %p337 = scmp.eq.s32.totalorder %s37, 1
    %p338 = por %p336, %p337
    %p339 = scmp.ne.s32.totalorder %s330, %s331
    %p340 = scmp.eq.s32.totalorder %s37, 0
    %p341 = por %p339, %p340
    %p342 = scmp.ne.s32.totalorder %s330, %s331
    %p343 = scmp.eq.s32.totalorder %s38, 1
    %p344 = por %p342, %p343
    %p346 = scmp.ne.s32.totalorder %s331, %s345
    %p347 = scmp.eq.s32.totalorder %s38, 0
    %p348 = por %p346, %p347
    %s350 = sadd.s32 %s349, 1
    %p353 = scmp.eq.s32.totalorder %s32, 1
    %p354 = scmp.ne.s32.totalorder %s349, %s351
    %p355 = scmp.eq.s32.totalorder %s32, 0
    %p356 = por %p354, %p355
    %p357 = scmp.ne.s32.totalorder %s349, %s351
    %p358 = scmp.eq.s32.totalorder %s37, 1
    %p359 = por %p357, %p358
    %p360 = scmp.ne.s32.totalorder %s351, %s352
    %p361 = scmp.eq.s32.totalorder %s37, 0
    %p362 = por %p360, %p361
    %p363 = scmp.ne.s32.totalorder %s351, %s352
    %p364 = scmp.eq.s32.totalorder %s38, 1
    %p365 = por %p363, %p364
    %p367 = scmp.ne.s32.totalorder %s352, %s366
    %p368 = scmp.eq.s32.totalorder %s38, 0
    %p369 = por %p367, %p368
    %s371 = sadd.s32 %s370, 1
    %p374 = scmp.eq.s32.totalorder %s32, 1
    %p375 = scmp.ne.s32.totalorder %s370, %s372
    %p376 = scmp.eq.s32.totalorder %s32, 0
    %p377 = por %p375, %p376
    %p378 = scmp.ne.s32.totalorder %s370, %s372
    %p379 = scmp.eq.s32.totalorder %s37, 1
    %p380 = por %p378, %p379
    %p381 = scmp.ne.s32.totalorder %s372, %s373
    %p382 = scmp.eq.s32.totalorder %s37, 0
    %p383 = por %p381, %p382
    %p384 = scmp.ne.s32.totalorder %s372, %s373
    %p385 = scmp.eq.s32.totalorder %s38, 1
    %p386 = por %p384, %p385
    %p388 = scmp.ne.s32.totalorder %s373, %s387
    %p389 = scmp.eq.s32.totalorder %s38, 0
    %p390 = por %p388, %p389
    %s392 = sadd.s32 %s391, 1
    %p395 = scmp.eq.s32.totalorder %s32, 1
    %p396 = scmp.ne.s32.totalorder %s391, %s393
    %p397 = scmp.eq.s32.totalorder %s32, 0
    %p398 = por %p396, %p397
    %p399 = scmp.ne.s32.totalorder %s391, %s393
    %p400 = scmp.eq.s32.totalorder %s37, 1
    %p401 = por %p399, %p400
    %p402 = scmp.ne.s32.totalorder %s393, %s394
    %p403 = scmp.eq.s32.totalorder %s37, 0
    %p404 = por %p402, %p403
    %p405 = scmp.ne.s32.totalorder %s393, %s394
    %p406 = scmp.eq.s32.totalorder %s38, 1
    %p407 = por %p405, %p406
    %p409 = scmp.ne.s32.totalorder %s394, %s408
    %p410 = scmp.eq.s32.totalorder %s38, 0
    %p411 = por %p409, %p410
    %s413 = sadd.s32 %s412, 1
    %p416 = scmp.eq.s32.totalorder %s32, 1
    %p417 = scmp.ne.s32.totalorder %s412, %s414
    %p418 = scmp.eq.s32.totalorder %s32, 0
    %p419 = por %p417, %p418
    %p420 = scmp.ne.s32.totalorder %s412, %s414
    %p421 = scmp.eq.s32.totalorder %s37, 1
    %p422 = por %p420, %p421
    %p423 = scmp.ne.s32.totalorder %s414, %s415
    %p424 = scmp.eq.s32.totalorder %s37, 0
    %p425 = por %p423, %p424
    %p426 = scmp.ne.s32.totalorder %s414, %s415
    %p427 = scmp.eq.s32.totalorder %s38, 1
    %p428 = por %p426, %p427
    %p430 = scmp.ne.s32.totalorder %s415, %s429
    %p431 = scmp.eq.s32.totalorder %s38, 0
    %p432 = por %p430, %p431
    %s434 = sadd.s32 %s433, 1
    %p437 = scmp.eq.s32.totalorder %s32, 1
    %p438 = scmp.ne.s32.totalorder %s433, %s435
    %p439 = scmp.eq.s32.totalorder %s32, 0
    %p440 = por %p438, %p439
    %p441 = scmp.ne.s32.totalorder %s433, %s435
    %p442 = scmp.eq.s32.totalorder %s37, 1
    %p443 = por %p441, %p442
    %p444 = scmp.ne.s32.totalorder %s435, %s436
    %p445 = scmp.eq.s32.totalorder %s37, 0
    %p446 = por %p444, %p445
    %p447 = scmp.ne.s32.totalorder %s435, %s436
    %p448 = scmp.eq.s32.totalorder %s38, 1
    %p449 = por %p447, %p448
    %p451 = scmp.ne.s32.totalorder %s436, %s450
    %p452 = scmp.eq.s32.totalorder %s38, 0
    %p453 = por %p451, %p452
    %s455 = sadd.s32 %s454, 1
    %p458 = scmp.eq.s32.totalorder %s32, 1
    %p459 = scmp.ne.s32.totalorder %s454, %s456
    %p460 = scmp.eq.s32.totalorder %s32, 0
    %p461 = por %p459, %p460
    %p462 = scmp.ne.s32.totalorder %s454, %s456
    %p463 = scmp.eq.s32.totalorder %s37, 1
    %p464 = por %p462, %p463
    %p465 = scmp.ne.s32.totalorder %s456, %s457
    %p466 = scmp.eq.s32.totalorder %s37, 0
    %p467 = por %p465, %p466
    %p468 = scmp.ne.s32.totalorder %s456, %s457
    %p469 = scmp.eq.s32.totalorder %s38, 1
    %p470 = por %p468, %p469
    %p472 = scmp.ne.s32.totalorder %s457, %s471
    %p473 = scmp.eq.s32.totalorder %s38, 0
    %p474 = por %p472, %p473
    %s476 = sadd.s32 %s475, 1
    %p479 = scmp.eq.s32.totalorder %s32, 1
    %p480 = scmp.ne.s32.totalorder %s475, %s477
    %p481 = scmp.eq.s32.totalorder %s32, 0
    %p482 = por %p480, %p481
    %p483 = scmp.ne.s32.totalorder %s475, %s477
    %p484 = scmp.eq.s32.totalorder %s37, 1
    %p485 = por %p483, %p484
    %p486 = scmp.ne.s32.totalorder %s477, %s478
    %p487 = scmp.eq.s32.totalorder %s37, 0
    %p488 = por %p486, %p487
    %p489 = scmp.ne.s32.totalorder %s477, %s478
    %p490 = scmp.eq.s32.totalorder %s38, 1
    %p491 = por %p489, %p490
    %p493 = scmp.ne.s32.totalorder %s478, %s492
    %p494 = scmp.eq.s32.totalorder %s38, 0
    %p495 = por %p493, %p494
    %s497 = sadd.s32 %s496, 1
    %p500 = scmp.eq.s32.totalorder %s32, 1
    %p501 = scmp.ne.s32.totalorder %s496, %s498
    %p502 = scmp.eq.s32.totalorder %s32, 0
    %p503 = por %p501, %p502
    %p504 = scmp.ne.s32.totalorder %s496, %s498
    %p505 = scmp.eq.s32.totalorder %s37, 1
    %p506 = por %p504, %p505
    %p507 = scmp.ne.s32.totalorder %s498, %s499
    %p508 = scmp.eq.s32.totalorder %s37, 0
    %p509 = por %p507, %p508
    %p510 = scmp.ne.s32.totalorder %s498, %s499
    %p511 = scmp.eq.s32.totalorder %s38, 1
    %p512 = por %p510, %p511
    %p514 = scmp.ne.s32.totalorder %s499, %s513
    %p515 = scmp.eq.s32.totalorder %s38, 0
    %p516 = por %p514, %p515
    %s518 = sadd.s32 %s517, 1
    %p521 = scmp.eq.s32.totalorder %s32, 1
    %p522 = scmp.ne.s32.totalorder %s517, %s519
    %p523 = scmp.eq.s32.totalorder %s32, 0
    %p524 = por %p522, %p523
    %p525 = scmp.ne.s32.totalorder %s517, %s519
    %p526 = scmp.eq.s32.totalorder %s37, 1
    %p527 = por %p525, %p526
    %p528 = scmp.ne.s32.totalorder %s519, %s520
    %p529 = scmp.eq.s32.totalorder %s37, 0
    %p530 = por %p528, %p529
    %p531 = scmp.ne.s32.totalorder %s519, %s520
    %p532 = scmp.eq.s32.totalorder %s38, 1
    %p533 = por %p531, %p532
    %p535 = scmp.ne.s32.totalorder %s520, %s534
    %p536 = scmp.eq.s32.totalorder %s38, 0
    %p537 = por %p535, %p536
    %s539 = sadd.s32 %s538, 1
    %p542 = scmp.eq.s32.totalorder %s32, 1
    %p543 = scmp.ne.s32.totalorder %s538, %s540
    %p544 = scmp.eq.s32.totalorder %s32, 0
    %p545 = por %p543, %p544
    %p546 = scmp.ne.s32.totalorder %s538, %s540
    %p547 = scmp.eq.s32.totalorder %s37, 1
    %p548 = por %p546, %p547
    %p549 = scmp.ne.s32.totalorder %s540, %s541
    %p550 = scmp.eq.s32.totalorder %s37, 0
    %p551 = por %p549, %p550
    %p552 = scmp.ne.s32.totalorder %s540, %s541
    %p553 = scmp.eq.s32.totalorder %s38, 1
    %p554 = por %p552, %p553
    %p556 = scmp.ne.s32.totalorder %s541, %s555
    %p557 = scmp.eq.s32.totalorder %s38, 0
    %p558 = por %p556, %p557
    %s560 = sadd.s32 %s559, 1
    %p563 = scmp.eq.s32.totalorder %s32, 1
    %p564 = scmp.ne.s32.totalorder %s559, %s561
    %p565 = scmp.eq.s32.totalorder %s32, 0
    %p566 = por %p564, %p565
    %p567 = scmp.ne.s32.totalorder %s559, %s561
    %p568 = scmp.eq.s32.totalorder %s37, 1
    %p569 = por %p567, %p568
    %p570 = scmp.ne.s32.totalorder %s561, %s562
    %p571 = scmp.eq.s32.totalorder %s37, 0
    %p572 = por %p570, %p571
    %p573 = scmp.ne.s32.totalorder %s561, %s562
    %p574 = scmp.eq.s32.totalorder %s38, 1
    %p575 = por %p573, %p574
    %p577 = scmp.ne.s32.totalorder %s562, %s576
    %p578 = scmp.eq.s32.totalorder %s38, 0
    %p579 = por %p577, %p578
    %s581 = sadd.s32 %s580, 1
    %p584 = scmp.eq.s32.totalorder %s32, 1
    %p585 = scmp.ne.s32.totalorder %s580, %s582
    %p586 = scmp.eq.s32.totalorder %s32, 0
    %p587 = por %p585, %p586
    %p588 = scmp.ne.s32.totalorder %s580, %s582
    %p589 = scmp.eq.s32.totalorder %s37, 1
    %p590 = por %p588, %p589
    %p591 = scmp.ne.s32.totalorder %s582, %s583
    %p592 = scmp.eq.s32.totalorder %s37, 0
    %p593 = por %p591, %p592
    %p594 = scmp.ne.s32.totalorder %s582, %s583
    %p595 = scmp.eq.s32.totalorder %s38, 1
    %p596 = por %p594, %p595
    %p598 = scmp.ne.s32.totalorder %s583, %s597
    %p599 = scmp.eq.s32.totalorder %s38, 0
    %p600 = por %p598, %p599
    %s601 = ssub.s32 %s32, %s39
    %p602 = scmp.eq.s32.totalorder %s601, 0
    %s604 = sadd.s32 %s603, 1
    %s605 = scalar_select %p602, %s603, %s604
    %p608 = pneg %p602
    %p609 = scmp.eq.s32.totalorder %s32, 1
    %p610 = por %p608, %p609
    %p611 = scmp.ne.s32.totalorder %s603, %s606
    %p612 = scmp.eq.s32.totalorder %s32, 0
    %p613 = por %p611, %p612
    %p614 = scmp.ne.s32.totalorder %s603, %s606
    %p615 = scmp.eq.s32.totalorder %s37, 1
    %p616 = por %p614, %p615
    %p617 = scmp.ne.s32.totalorder %s606, %s607
    %p618 = scmp.eq.s32.totalorder %s37, 0
    %p619 = por %p617, %p618
    %p620 = scmp.ne.s32.totalorder %s606, %s607
    %p621 = scmp.eq.s32.totalorder %s38, 1
    %p622 = por %p620, %p621
    %p624 = scmp.ne.s32.totalorder %s607, %s623
    %p625 = scmp.eq.s32.totalorder %s38, 0
    %p626 = por %p624, %p625
    %p627 = scmp.le.s32.totalorder 1, %s32
    %p628 = scmp.lt.s32.totalorder %s32, 3
    %p629 = pnand %p627, %p628
    %p630 = pneg %p629
    // Predicated region
    $region9: #{mae_forward.4} parent=5 // pred_check
      _
    $region10: #{mae_forward.4} parent=5 // pred_check_branch
      %632 = sbr.rel (%p629) target = $region12
    $region11: #{mae_forward.4} parent=5 // pred_region
      %s633 = ssub.s32 %s32, 1
      // Predicated region
      $region13: #{mae_forward.4} parent=11 // pred_check
        %p634 = pneg %p131
      $region14: #{mae_forward.4} parent=11 // pred_check_branch
        %636 = sbr.rel (%p634) target = $region16
      $region15: #{mae_forward.4} parent=11 // pred_region
        _
      $region16: #{mae_forward.4} parent=11 // pred_fallthru
        _
      // Predicated region
      $region17: #{mae_forward.4} parent=11 // pred_check
        %p637 = pneg %p152
      $region18: #{mae_forward.4} parent=11 // pred_check_branch
        %639 = sbr.rel (%p637) target = $region20
      $region19: #{mae_forward.4} parent=11 // pred_region
        _
      $region20: #{mae_forward.4} parent=11 // pred_fallthru
        _
      // Predicated region
      $region21: #{mae_forward.4} parent=11 // pred_check
        %p640 = pneg %p173
      $region22: #{mae_forward.4} parent=11 // pred_check_branch
        %642 = sbr.rel (%p640) target = $region24
      $region23: #{mae_forward.4} parent=11 // pred_region
        _
      $region24: #{mae_forward.4} parent=11 // pred_fallthru
        _
      // Predicated region
      $region25: #{mae_forward.4} parent=11 // pred_check
        %p643 = pneg %p194
      $region26: #{mae_forward.4} parent=11 // pred_check_branch
        %645 = sbr.rel (%p643) target = $region28
      $region27: #{mae_forward.4} parent=11 // pred_region
        _
      $region28: #{mae_forward.4} parent=11 // pred_fallthru
        _
      // Predicated region
      $region29: #{mae_forward.4} parent=11 // pred_check
        %p646 = pneg %p215
      $region30: #{mae_forward.4} parent=11 // pred_check_branch
        %648 = sbr.rel (%p646) target = $region32
      $region31: #{mae_forward.4} parent=11 // pred_region
        _
      $region32: #{mae_forward.4} parent=11 // pred_fallthru
        _
      // Predicated region
      $region33: #{mae_forward.4} parent=11 // pred_check
        %p649 = pneg %p236
      $region34: #{mae_forward.4} parent=11 // pred_check_branch
        %651 = sbr.rel (%p649) target = $region36
      $region35: #{mae_forward.4} parent=11 // pred_region
        _
      $region36: #{mae_forward.4} parent=11 // pred_fallthru
        _
      // Predicated region
      $region37: #{mae_forward.4} parent=11 // pred_check
        %p652 = pneg %p257
      $region38: #{mae_forward.4} parent=11 // pred_check_branch
        %654 = sbr.rel (%p652) target = $region40
      $region39: #{mae_forward.4} parent=11 // pred_region
        _
      $region40: #{mae_forward.4} parent=11 // pred_fallthru
        _
      // Predicated region
      $region41: #{mae_forward.4} parent=11 // pred_check
        %p655 = pneg %p278
      $region42: #{mae_forward.4} parent=11 // pred_check_branch
        %657 = sbr.rel (%p655) target = $region44
      $region43: #{mae_forward.4} parent=11 // pred_region
        _
      $region44: #{mae_forward.4} parent=11 // pred_fallthru
        _
      // Predicated region
      $region45: #{mae_forward.4} parent=11 // pred_check
        %p658 = pneg %p299
      $region46: #{mae_forward.4} parent=11 // pred_check_branch
        %660 = sbr.rel (%p658) target = $region48
      $region47: #{mae_forward.4} parent=11 // pred_region
        _
      $region48: #{mae_forward.4} parent=11 // pred_fallthru
        _
      // Predicated region
      $region49: #{mae_forward.4} parent=11 // pred_check
        %p661 = pneg %p320
      $region50: #{mae_forward.4} parent=11 // pred_check_branch
        %663 = sbr.rel (%p661) target = $region52
      $region51: #{mae_forward.4} parent=11 // pred_region
        _
      $region52: #{mae_forward.4} parent=11 // pred_fallthru
        _
      // Predicated region
      $region53: #{mae_forward.4} parent=11 // pred_check
        %p664 = pneg %p341
      $region54: #{mae_forward.4} parent=11 // pred_check_branch
        %666 = sbr.rel (%p664) target = $region56
      $region55: #{mae_forward.4} parent=11 // pred_region
        _
      $region56: #{mae_forward.4} parent=11 // pred_fallthru
        _
      // Predicated region
      $region57: #{mae_forward.4} parent=11 // pred_check
        %p667 = pneg %p362
      $region58: #{mae_forward.4} parent=11 // pred_check_branch
        %669 = sbr.rel (%p667) target = $region60
      $region59: #{mae_forward.4} parent=11 // pred_region
        _
      $region60: #{mae_forward.4} parent=11 // pred_fallthru
        _
      // Predicated region
      $region61: #{mae_forward.4} parent=11 // pred_check
        %p670 = pneg %p383
      $region62: #{mae_forward.4} parent=11 // pred_check_branch
        %672 = sbr.rel (%p670) target = $region64
      $region63: #{mae_forward.4} parent=11 // pred_region
        _
      $region64: #{mae_forward.4} parent=11 // pred_fallthru
        _
      // Predicated region
      $region65: #{mae_forward.4} parent=11 // pred_check
        %p673 = pneg %p404
      $region66: #{mae_forward.4} parent=11 // pred_check_branch
        %675 = sbr.rel (%p673) target = $region68
      $region67: #{mae_forward.4} parent=11 // pred_region
        _
      $region68: #{mae_forward.4} parent=11 // pred_fallthru
        _
      // Predicated region
      $region69: #{mae_forward.4} parent=11 // pred_check
        %p676 = pneg %p425
      $region70: #{mae_forward.4} parent=11 // pred_check_branch
        %678 = sbr.rel (%p676) target = $region72
      $region71: #{mae_forward.4} parent=11 // pred_region
        _
      $region72: #{mae_forward.4} parent=11 // pred_fallthru
        _
      // Predicated region
      $region73: #{mae_forward.4} parent=11 // pred_check
        %p679 = pneg %p446
      $region74: #{mae_forward.4} parent=11 // pred_check_branch
        %681 = sbr.rel (%p679) target = $region76
      $region75: #{mae_forward.4} parent=11 // pred_region
        _
      $region76: #{mae_forward.4} parent=11 // pred_fallthru
        _
      // Predicated region
      $region77: #{mae_forward.4} parent=11 // pred_check
        %p682 = pneg %p467
      $region78: #{mae_forward.4} parent=11 // pred_check_branch
        %684 = sbr.rel (%p682) target = $region80
      $region79: #{mae_forward.4} parent=11 // pred_region
        _
      $region80: #{mae_forward.4} parent=11 // pred_fallthru
        _
      // Predicated region
      $region81: #{mae_forward.4} parent=11 // pred_check
        %p685 = pneg %p488
      $region82: #{mae_forward.4} parent=11 // pred_check_branch
        %687 = sbr.rel (%p685) target = $region84
      $region83: #{mae_forward.4} parent=11 // pred_region
        _
      $region84: #{mae_forward.4} parent=11 // pred_fallthru
        _
      // Predicated region
      $region85: #{mae_forward.4} parent=11 // pred_check
        %p688 = pneg %p509
      $region86: #{mae_forward.4} parent=11 // pred_check_branch
        %690 = sbr.rel (%p688) target = $region88
      $region87: #{mae_forward.4} parent=11 // pred_region
        _
      $region88: #{mae_forward.4} parent=11 // pred_fallthru
        _
      // Predicated region
      $region89: #{mae_forward.4} parent=11 // pred_check
        %p691 = pneg %p530
      $region90: #{mae_forward.4} parent=11 // pred_check_branch
        %693 = sbr.rel (%p691) target = $region92
      $region91: #{mae_forward.4} parent=11 // pred_region
        _
      $region92: #{mae_forward.4} parent=11 // pred_fallthru
        _
      // Predicated region
      $region93: #{mae_forward.4} parent=11 // pred_check
        %p694 = pneg %p551
      $region94: #{mae_forward.4} parent=11 // pred_check_branch
        %696 = sbr.rel (%p694) target = $region96
      $region95: #{mae_forward.4} parent=11 // pred_region
        _
      $region96: #{mae_forward.4} parent=11 // pred_fallthru
        _
      // Predicated region
      $region97: #{mae_forward.4} parent=11 // pred_check
        %p697 = pneg %p572
      $region98: #{mae_forward.4} parent=11 // pred_check_branch
        %699 = sbr.rel (%p697) target = $region100
      $region99: #{mae_forward.4} parent=11 // pred_region
        _
      $region100: #{mae_forward.4} parent=11 // pred_fallthru
        _
      // Predicated region
      $region101: #{mae_forward.4} parent=11 // pred_check
        %p700 = pneg %p593
      $region102: #{mae_forward.4} parent=11 // pred_check_branch
        %702 = sbr.rel (%p700) target = $region104
      $region103: #{mae_forward.4} parent=11 // pred_region
        _
      $region104: #{mae_forward.4} parent=11 // pred_fallthru
        _
    $region12: #{mae_forward.4} parent=5 // pred_fallthru
      _
    %p703 = scmp.lt.s32.totalorder %s32, 2
    // Predicated region
    $region105: #{mae_forward.4} parent=5 // pred_check
      %p704 = pneg %p703
    $region106: #{mae_forward.4} parent=5 // pred_check_branch
      %706 = sbr.rel (%p704) target = $region108
    $region107: #{mae_forward.4} parent=5 // pred_region
      // Predicated region
      $region109: #{mae_forward.4} parent=107 // pred_check
        %p707 = pneg %p52
      $region110: #{mae_forward.4} parent=107 // pred_check_branch
        %709 = sbr.rel (%p707) target = $region112
      $region111: #{mae_forward.4} parent=107 // pred_region
        %p710 = scmp.lt.s32.totalorder %s32, 1
        %s711 = scalar_select %p710, %s32, 1
        %s712 = smul.addr %s711, 2
        %s713 = smul.addr %s712, 4
        %s714 = scalar_lea.vmem %s0, %s713
      $region112: #{mae_forward.4} parent=107 // pred_fallthru
        _
      // Predicated region
      $region113: #{mae_forward.4} parent=107 // pred_check
        %p715 = pneg %p78
      $region114: #{mae_forward.4} parent=107 // pred_check_branch
        %717 = sbr.rel (%p715) target = $region116
      $region115: #{mae_forward.4} parent=107 // pred_region
        %p718 = scmp.lt.s32.totalorder %s32, 1
        %s719 = scalar_select %p718, %s32, 1
        %s720 = smul.addr %s719, 4
        %s721 = scalar_lea.vmem %s1, %s720
      $region116: #{mae_forward.4} parent=107 // pred_fallthru
        _
      // Predicated region
      $region117: #{mae_forward.4} parent=107 // pred_check
        %p722 = pneg %p104
      $region118: #{mae_forward.4} parent=107 // pred_check_branch
        %724 = sbr.rel (%p722) target = $region120
      $region119: #{mae_forward.4} parent=107 // pred_region
        %p725 = scmp.lt.s32.totalorder %s32, 1
        %s726 = scalar_select %p725, %s32, 1
        %s727 = smul.addr %s726, 4
        %s728 = scalar_lea.vmem %s2, %s727
      $region120: #{mae_forward.4} parent=107 // pred_fallthru
        _
    $region108: #{mae_forward.4} parent=5 // pred_fallthru
      _
    %p729 = scmp.le.s32.totalorder 1, %s32
    %p730 = scmp.lt.s32.totalorder %s32, 3
    %p731 = pnand %p729, %p730
    %p732 = pneg %p731
    // Predicated region
    $region121: #{mae_forward.4} parent=5 // pred_check
      _
    $region122: #{mae_forward.4} parent=5 // pred_check_branch
      %734 = sbr.rel (%p731) target = $region124
    $region123: #{mae_forward.4} parent=5 // pred_region
      %s735 = ssub.s32 %s32, 1
      %p736 = scmp.lt.s32.totalorder %s37, 1
      %s737 = scalar_select %p736, %s37, 1
      %s738 = smul.addr %s737, 2
      %s739 = smul.addr %s738, 4
      %s740 = scalar_lea.vmem %s0, %s739
      %p741 = pneg %p58
      %p742 = pneg %p55
      %p743 = scmp.lt.s32.totalorder %s37, 1
      %s744 = scalar_select %p743, %s37, 1
      %s745 = smul.addr %s744, 4
      %s746 = scalar_lea.vmem %s1, %s745
      %p747 = pneg %p84
      %p748 = pneg %p81
      %p749 = scmp.lt.s32.totalorder %s37, 1
      %s750 = scalar_select %p749, %s37, 1
      %s751 = smul.addr %s750, 4
      %s752 = scalar_lea.vmem %s2, %s751
      %p753 = pneg %p110
      %p754 = pneg %p107
      %p755 = pneg %p131
      %p756 = pneg %p128
      %p757 = pneg %p152
      %p758 = pneg %p149
      %p759 = pneg %p173
      %p760 = pneg %p170
      %p761 = pneg %p194
      %p762 = pneg %p191
      %p763 = pneg %p215
      %p764 = pneg %p212
      %p765 = pneg %p236
      %p766 = pneg %p233
      %p767 = pneg %p257
      %p768 = pneg %p254
      %p769 = pneg %p278
      %p770 = pneg %p275
      %p771 = pneg %p299
      %p772 = pneg %p296
      %p773 = pneg %p320
      %p774 = pneg %p317
      %p775 = pneg %p341
      %p776 = pneg %p338
      %p777 = pneg %p362
      %p778 = pneg %p359
      %p779 = pneg %p383
      %p780 = pneg %p380
      %p781 = pneg %p404
      %p782 = pneg %p401
      %p783 = pneg %p425
      %p784 = pneg %p422
      %p785 = pneg %p446
      %p786 = pneg %p443
      %p787 = pneg %p467
      %p788 = pneg %p464
      %p789 = pneg %p488
      %p790 = pneg %p485
      %p791 = pneg %p509
      %p792 = pneg %p506
      %p793 = pneg %p530
      %p794 = pneg %p527
      %p795 = pneg %p551
      %p796 = pneg %p548
      %p797 = pneg %p572
      %p798 = pneg %p569
      %p799 = pneg %p593
      %p800 = pneg %p590
      %p801 = pneg %p619
      %p802 = pneg %p616
      %p803 = scmp.lt.s32.totalorder %s37, 1
      %s804 = scalar_select %p803, %s37, 1
      %s805 = smul.addr %s804, 2
      %s806 = scalar_lea.vmem %s26, %s805
      %p807 = scmp.lt.s32.totalorder %s37, 1
      %s808 = scalar_select %p807, %s37, 1
      %s809 = smul.addr %s808, 2
      %s810 = smul.addr %s809, 4
      %s811 = scalar_lea.vmem %s0, %s810
      %p812 = scmp.lt.s32.totalorder %s37, 1
      %s813 = scalar_select %p812, %s37, 1
      %s814 = smul.addr %s813, 4
      %s815 = scalar_lea.vmem %s1, %s814
      %p816 = scmp.lt.s32.totalorder %s37, 1
      %s817 = scalar_select %p816, %s37, 1
      %s818 = smul.addr %s817, 4
      %s819 = scalar_lea.vmem %s2, %s818
      %p820 = scmp.lt.s32.totalorder %s37, 1
      %s821 = scalar_select %p820, %s37, 1
      %s822 = smul.addr %s821, 2
      %s823 = scalar_lea.vmem %s26, %s822
      %v825 = vld [vmem:[%s811] sm:$0xff]
      %v826 = vld [vmem:[%s3] sm:$0x3]
      %v827 = vld [vmem:[%s4] sm:$0x3]
      %v829 = vcombine.high %v825, %v825
      %vm831 = vcmask 1043456
      %v832 = vsel %vm831, %v825, 0.0
      %v833 = vsel %vm831, %v829, 0.0
      %v834 = vadd.f32 %v832, %v833
      %835 = vadd.xlane.f32.xlu0 %v834
      %v836 = vpop.xlane.xlu0 %835
      %v837 = vmul.f32 %v836, 0.00390625
      %v840 = vunpack.c.l.s4 839922192
      %v841 = vunpack.c.0.s8 %v840
      %v842 = vlaneseq
      %v843 = vshrl.u32 %v842, 7
      %v844 = vsub.s32 %v841, %v843
      %v845 = vrot.slane %v837, %v844
      %v847 = vsub.f32 %v825, %v845
      %v848 = vmul.f32 %v847, %v847
      %v850 = vcombine.high %v848, %v848
      %v852 = vsel %vm831, %v848, 0.0
      %v853 = vsel %vm831, %v850, 0.0
      %v854 = vadd.f32 %v852, %v853
      %855 = vadd.xlane.f32.xlu0 %v854
      %v856 = vpop.xlane.xlu0 %855
      %v857 = vmul.f32 %v856, 0.00390625
      %v858 = vadd.f32 %v857, 1e-05
      %v859 = vrsqrt.pop %v858
      %v862 = vunpack.c.l.s4 839922192
      %v863 = vunpack.c.0.s8 %v862
      %v864 = vlaneseq
      %v865 = vshrl.u32 %v864, 7
      %v866 = vsub.s32 %v863, %v865
      %v867 = vrot.slane %v859, %v866
      %v869 = vmul.f32 %v847, %v867
      %v871 = vlaneseq
      %v872 = vshrl.u32 %v871, 7
      %v873 = vsub.s32 0, %v872
      %v874 = vrot.slane %v826, %v873
      %v875 = vlaneseq
      %v876 = vshrl.u32 %v875, 7
      %v877 = vsub.s32 1, %v876
      %v878 = vrot.slane %v826, %v877
      %v879 = vcombine.low %v874, %v878
      %v881 = vmul.f32 %v869, %v879
      %v883 = vlaneseq
      %v884 = vshrl.u32 %v883, 7
      %v885 = vsub.s32 0, %v884
      %v886 = vrot.slane %v827, %v885
      %v887 = vlaneseq
      %v888 = vshrl.u32 %v887, 7
      %v889 = vsub.s32 1, %v888
      %v890 = vrot.slane %v827, %v889
      %v891 = vcombine.low %v886, %v890
      %v893 = vadd.f32 %v881, %v891
      %v894 = vld [vmem:[%s5] sm:$0xf]
      %v895 = vld [vmem:[%s5 + $0x4] sm:$0xf]
      %v896 = vld [vmem:[%s5 + $0x8] sm:$0xf]
      %v897 = vld [vmem:[%s5 + $0xc] sm:$0xf]
      %v898 = vld [vmem:[%s5 + $0x10] sm:$0xf]
      %v899 = vld [vmem:[%s5 + $0x14] sm:$0xf]
      %v900 = vld [vmem:[%s5 + $0x18] sm:$0xf]
      %v901 = vld [vmem:[%s5 + $0x1c] sm:$0xf]
      %v902 = vld [vmem:[%s5 + $0x20] sm:$0xf]
      %v903 = vld [vmem:[%s5 + $0x24] sm:$0xf]
      %v904 = vld [vmem:[%s5 + $0x28] sm:$0xf]
      %v905 = vld [vmem:[%s5 + $0x2c] sm:$0xf]
      %v906 = vld [vmem:[%s5 + $0x30] sm:$0xf]
      %v907 = vld [vmem:[%s5 + $0x34] sm:$0xf]
      %v908 = vld [vmem:[%s5 + $0x38] sm:$0xf]
      %v909 = vld [vmem:[%s5 + $0x3c] sm:$0xf]
      %v910 = vld [vmem:[%s5 + $0x40] sm:$0xf]
      %v911 = vld [vmem:[%s5 + $0x44] sm:$0xf]
      %v912 = vld [vmem:[%s5 + $0x48] sm:$0xf]
      %v913 = vld [vmem:[%s5 + $0x4c] sm:$0xf]
      %v914 = vld [vmem:[%s5 + $0x50] sm:$0xf]
      %v915 = vld [vmem:[%s5 + $0x54] sm:$0xf]
      %v916 = vld [vmem:[%s5 + $0x58] sm:$0xf]
      %v917 = vld [vmem:[%s5 + $0x5c] sm:$0xf]
      %v918 = vld [vmem:[%s5 + $0x60] sm:$0xf]
      %v919 = vld [vmem:[%s5 + $0x64] sm:$0xf]
      %v920 = vld [vmem:[%s5 + $0x68] sm:$0xf]
      %v921 = vld [vmem:[%s5 + $0x6c] sm:$0xf]
      %v922 = vld [vmem:[%s5 + $0x70] sm:$0xf]
      %v923 = vld [vmem:[%s5 + $0x74] sm:$0xf]
      %v924 = vld [vmem:[%s5 + $0x78] sm:$0xf]
      %v925 = vld [vmem:[%s5 + $0x7c] sm:$0xf]
      %v927 = vcombine.high %v893, %v893
      %v929 = vpack.c.bf16 %v893, %v893
      %v930 = vpack.c.bf16 %v927, %v927
      %v931 = vld [vmem:[%s6] sm:$0x1]
      %v933 = vlaneseq
      %v934 = vshrl.u32 %v933, 7
      %v935 = vsub.s32 0, %v934
      %v936 = vrot.slane %v931, %v935
      %v970 = vunpack.c.l.b16 %v894
      %v971 = vunpack.c.l.b16 %v895
      %v972 = vunpack.c.l.b16 %v896
      %v973 = vunpack.c.l.b16 %v897
      %v974 = vunpack.c.l.b16 %v898
      %v975 = vunpack.c.l.b16 %v899
      %v976 = vunpack.c.l.b16 %v900
      %v977 = vunpack.c.l.b16 %v901
      %v978 = vunpack.c.l.b16 %v902
      %v979 = vunpack.c.l.b16 %v903
      %v980 = vunpack.c.l.b16 %v904
      %v981 = vunpack.c.l.b16 %v905
      %v982 = vunpack.c.l.b16 %v906
      %v983 = vunpack.c.l.b16 %v907
      %v984 = vunpack.c.l.b16 %v908
      %v985 = vunpack.c.l.b16 %v909
      %v986 = vunpack.c.l.b16 %v910
      %v987 = vunpack.c.l.b16 %v911
      %v988 = vunpack.c.l.b16 %v912
      %v989 = vunpack.c.l.b16 %v913
      %v990 = vunpack.c.l.b16 %v914
      %v991 = vunpack.c.l.b16 %v915
      %v992 = vunpack.c.l.b16 %v916
      %v993 = vunpack.c.l.b16 %v917
      %v994 = vunpack.c.l.b16 %v918
      %v995 = vunpack.c.l.b16 %v919
      %v996 = vunpack.c.l.b16 %v920
      %v997 = vunpack.c.l.b16 %v921
      %v998 = vunpack.c.l.b16 %v922
      %v999 = vunpack.c.l.b16 %v923
      %v1000 = vunpack.c.l.b16 %v924
      %v1001 = vunpack.c.l.b16 %v925
      %v1002 = vpack.c.b16 %v971, %v970
      %v1003 = vpack.c.b16 %v973, %v972
      %v1004 = vpack.c.b16 %v975, %v974
      %v1005 = vpack.c.b16 %v977, %v976
      %v1006 = vpack.c.b16 %v979, %v978
      %v1007 = vpack.c.b16 %v981, %v980
      %v1008 = vpack.c.b16 %v983, %v982
      %v1009 = vpack.c.b16 %v985, %v984
      %v1010 = vpack.c.b16 %v987, %v986
      %v1011 = vpack.c.b16 %v989, %v988
      %v1012 = vpack.c.b16 %v991, %v990
      %v1013 = vpack.c.b16 %v993, %v992
      %v1014 = vpack.c.b16 %v995, %v994
      %v1015 = vpack.c.b16 %v997, %v996
      %v1016 = vpack.c.b16 %v999, %v998
      %v1017 = vpack.c.b16 %v1001, %v1000
      %1034 = vmatprep.subr.bf16.mxu0 0
      %1035 = vmatpush1.bf16.msra.mxu0 %v1002
      %1036 = vmatprep.subr.bf16.mxu0 0
      %1037 = vmatpush1.bf16.msra.mxu0 %v1003
      %1038 = vmatprep.subr.bf16.mxu0 0
      %1039 = vmatpush1.bf16.msra.mxu0 %v1004
      %1040 = vmatprep.subr.bf16.mxu0 0
      %1041 = vmatpush1.bf16.msra.mxu0 %v1005
      %1042 = vmatprep.subr.bf16.mxu0 0
      %1043 = vmatpush1.bf16.msra.mxu0 %v1006
      %1044 = vmatprep.subr.bf16.mxu0 0
      %1045 = vmatpush1.bf16.msra.mxu0 %v1007
      %1046 = vmatprep.subr.bf16.mxu0 0
      %1047 = vmatpush1.bf16.msra.mxu0 %v1008
      %1048 = vmatprep.subr.bf16.mxu0 0
      %1049 = vmatpush1.bf16.msra.mxu0 %v1009
      %1050 = vmatprep.subr.bf16.mxu0 0
      %1051 = vmatpush1.bf16.msra.mxu0 %v1010
      %1052 = vmatprep.subr.bf16.mxu0 0
      %1053 = vmatpush1.bf16.msra.mxu0 %v1011
      %1054 = vmatprep.subr.bf16.mxu0 0
      %1055 = vmatpush1.bf16.msra.mxu0 %v1012
      %1056 = vmatprep.subr.bf16.mxu0 0
      %1057 = vmatpush1.bf16.msra.mxu0 %v1013
      %1058 = vmatprep.subr.bf16.mxu0 0
      %1059 = vmatpush1.bf16.msra.mxu0 %v1014
      %1060 = vmatprep.subr.bf16.mxu0 0
      %1061 = vmatpush1.bf16.msra.mxu0 %v1015
      %1062 = vmatprep.subr.bf16.mxu0 0
      %1063 = vmatpush1.bf16.msra.mxu0 %v1016
      %1064 = vmatprep.subr.bf16.mxu0 0
      %1065 = vmatpush1.bf16.msra.mxu0 %v1017
      %1066 = vmatprep.mubr.bf16.mxu0 %v930
      %1067 = vmatmul.mubr.bf16.gmra.mrb[0].mxu0 %v929
      %v1068 = vpop.f32.mrb[0].mxu0
      %v1069 = vadd.f32 %v936, %v1068
      %v1070 = vpop.f32.mrb[0].mxu0
      %v1071 = vpop.f32.mrb[0].mxu0
      %v1072 = vpop.f32.mrb[0].mxu0
      %1073 = vdwg.mxu0
      %v1074 = vld [vmem:[%s7] sm:$0x1]
      %v1075 = vld [vmem:[%s8] sm:$0x1]
      %v1076 = vsel %vm831, %v1069, 0.0
      %1077 = vadd.xlane.f32.xlu0 %v1076
      %v1078 = vpop.xlane.xlu0 %1077
      %v1079 = vmul.f32 %v1078, 0.03125
      %v1080 = vsub.f32 %v1069, %v1079
      %v1081 = vlaneseq
      %v1082 = vand.u32 %v1081, 127
      %vm1083 = vcmp.lt.s32.totalorder %v1082, 32
      %v1084 = vsel %vm1083, %v1080, 0.0
      %v1085 = vmul.f32 %v1084, %v1084
      %v1086 = vsel %vm831, %v1085, 0.0
      %1087 = vadd.xlane.f32.xlu0 %v1086
      %v1088 = vpop.xlane.xlu0 %1087
      %v1089 = vmul.f32 %v1088, 0.03125
      %v1090 = vadd.f32 %v1089, 1e-05
      %v1091 = vrsqrt.pop %v1090
      %v1092 = vmul.f32 %v1084, %v1091
      %v1094 = vlaneseq
      %v1095 = vshrl.u32 %v1094, 7
      %v1096 = vsub.s32 0, %v1095
      %v1097 = vrot.slane %v1074, %v1096
      %v1099 = vmul.f32 %v1092, %v1097
      %v1101 = vlaneseq
      %v1102 = vshrl.u32 %v1101, 7
      %v1103 = vsub.s32 0, %v1102
      %v1104 = vrot.slane %v1075, %v1103
      %v1106 = vadd.f32 %v1099, %v1104
      %v1107 = vld [vmem:[%s815] sm:$0xf]
      %v1108 = vadd.f32 %v1106, %v1107
      %v1109 = vld [vmem:[%s9] sm:$0x1]
      %v1110 = vld [vmem:[%s10] sm:$0x1]
      %v1111 = vld [vmem:[%s11] sm:$0xf]
      %v1112 = vld [vmem:[%s11 + $0x4] sm:$0xf]
      %v1113 = vld [vmem:[%s11 + $0x8] sm:$0xf]
      %v1114 = vld [vmem:[%s11 + $0xc] sm:$0xf]
      %v1115 = vld [vmem:[%s12] sm:$0xf]
      %v1116 = vld [vmem:[%s12 + $0x4] sm:$0xf]
      %v1117 = vld [vmem:[%s12 + $0x8] sm:$0xf]
      %v1118 = vld [vmem:[%s12 + $0xc] sm:$0xf]
      %v1119 = vld [vmem:[%s13] sm:$0xf]
      %v1120 = vld [vmem:[%s13 + $0x4] sm:$0xf]
      %v1121 = vld [vmem:[%s13 + $0x8] sm:$0xf]
      %v1122 = vld [vmem:[%s13 + $0xc] sm:$0xf]
      %v1123 = vld [vmem:[%s14] sm:$0xf]
      %v1124 = vld [vmem:[%s14 + $0x4] sm:$0xf]
      %v1125 = vld [vmem:[%s14 + $0x8] sm:$0xf]
      %v1126 = vld [vmem:[%s14 + $0xc] sm:$0xf]
      %v1127 = vld [vmem:[%s15] sm:$0x1]
      %v1128 = vld [vmem:[%s16] sm:$0x1]
      %v1129 = vld [vmem:[%s17] sm:$0x1]
      %v1130 = vld [vmem:[%s18] sm:$0xf]
      %v1131 = vld [vmem:[%s18 + $0x4] sm:$0xf]
      %v1132 = vld [vmem:[%s18 + $0x8] sm:$0xf]
      %v1133 = vld [vmem:[%s18 + $0xc] sm:$0xf]
      %v1134 = vld [vmem:[%s18 + $0x10] sm:$0xf]
      %v1135 = vld [vmem:[%s18 + $0x14] sm:$0xf]
      %v1136 = vld [vmem:[%s18 + $0x18] sm:$0xf]
      %v1137 = vld [vmem:[%s18 + $0x1c] sm:$0xf]
      %v1138 = vld [vmem:[%s18 + $0x20] sm:$0xf]
      %v1139 = vld [vmem:[%s18 + $0x24] sm:$0xf]
      %v1140 = vld [vmem:[%s18 + $0x28] sm:$0xf]
      %v1141 = vld [vmem:[%s18 + $0x2c] sm:$0xf]
      %v1142 = vld [vmem:[%s18 + $0x30] sm:$0xf]
      %v1143 = vld [vmem:[%s18 + $0x34] sm:$0xf]
      %v1144 = vld [vmem:[%s18 + $0x38] sm:$0xf]
      %v1145 = vld [vmem:[%s18 + $0x3c] sm:$0xf]
      %v1146 = vld [vmem:[%s19] sm:$0x1]
      %v1147 = vld [vmem:[%s20] sm:$0xf]
      %v1148 = vld [vmem:[%s20 + $0x4] sm:$0xf]
      %v1149 = vld [vmem:[%s20 + $0x8] sm:$0xf]
      %v1150 = vld [vmem:[%s20 + $0xc] sm:$0xf]
      %v1151 = vld [vmem:[%s20 + $0x10] sm:$0xf]
      %v1152 = vld [vmem:[%s20 + $0x14] sm:$0xf]
      %v1153 = vld [vmem:[%s20 + $0x18] sm:$0xf]
      %v1154 = vld [vmem:[%s20 + $0x1c] sm:$0xf]
      %v1155 = vld [vmem:[%s20 + $0x20] sm:$0xf]
      %v1156 = vld [vmem:[%s20 + $0x24] sm:$0xf]
      %v1157 = vld [vmem:[%s20 + $0x28] sm:$0xf]
      %v1158 = vld [vmem:[%s20 + $0x2c] sm:$0xf]
      %v1159 = vld [vmem:[%s20 + $0x30] sm:$0xf]
      %v1160 = vld [vmem:[%s20 + $0x34] sm:$0xf]
      %v1161 = vld [vmem:[%s20 + $0x38] sm:$0xf]
      %v1162 = vld [vmem:[%s20 + $0x3c] sm:$0xf]
      %v1163 = vld [vmem:[%s21] sm:$0x1]
      %v1164 = vsel %vm831, %v1108, 0.0
      %1165 = vadd.xlane.f32.xlu0 %v1164
      %v1166 = vpop.xlane.xlu0 %1165
      %v1167 = vmul.f32 %v1166, 0.03125
      %v1168 = vsub.f32 %v1108, %v1167
      %v1169 = vsel %vm1083, %v1168, 0.0
      %v1170 = vmul.f32 %v1169, %v1169
      %v1171 = vsel %vm831, %v1170, 0.0
      %1172 = vadd.xlane.f32.xlu0 %v1171
      %v1173 = vpop.xlane.xlu0 %1172
      %v1174 = vmul.f32 %v1173, 0.03125
      %v1175 = vadd.f32 %v1174, 1e-05
      %v1176 = vrsqrt.pop %v1175
      %v1177 = vmul.f32 %v1169, %v1176
      %v1179 = vlaneseq
      %v1180 = vshrl.u32 %v1179, 7
      %v1181 = vsub.s32 0, %v1180
      %v1182 = vrot.slane %v1109, %v1181
      %v1184 = vmul.f32 %v1177, %v1182
      %v1186 = vlaneseq
      %v1187 = vshrl.u32 %v1186, 7
      %v1188 = vsub.s32 0, %v1187
      %v1189 = vrot.slane %v1110, %v1188
      %v1191 = vadd.f32 %v1184, %v1189
      %v1192 = vpack.c.bf16 %v1191, %v1191
      %1193 = vmatprep.subr.bf16.mxu0 0
      %1194 = vmatpush1.bf16.xpose.msra.mxu0 %v1111
      %1195 = vmatprep.subr.bf16.mxu0 0
      %1196 = vmatpush1.bf16.xpose.msra.mxu0 0
      %1197 = vmatprep.subr.bf16.mxu0 0
      %1198 = vmatpush1.bf16.xpose.msra.mxu0 0
      %1199 = vmatprep.subr.bf16.mxu0 0
      %1200 = vmatpush1.bf16.xpose.msra.mxu0 0
      %1201 = vmatprep.subr.bf16.mxu0 0
      %1202 = vmatpush1.bf16.xpose.msra.mxu0 0
      %1203 = vmatprep.subr.bf16.mxu0 0
      %1204 = vmatpush1.bf16.xpose.msra.mxu0 0
      %1205 = vmatprep.subr.bf16.mxu0 0
      %1206 = vmatpush1.bf16.xpose.msra.mxu0 0
      %1207 = vmatprep.subr.bf16.mxu0 0
      %1208 = vmatpush1.bf16.xpose.msra.mxu0 0
      %1209 = vmatprep.subr.bf16.mxu0 0
      %1210 = vmatpush1.bf16.xpose.msra.mxu0 0
      %1211 = vmatprep.subr.bf16.mxu0 0
      %1212 = vmatpush1.bf16.xpose.msra.mxu0 0
      %1213 = vmatprep.subr.bf16.mxu0 0
      %1214 = vmatpush1.bf16.xpose.msra.mxu0 0
      %1215 = vmatprep.subr.bf16.mxu0 0
      %1216 = vmatpush1.bf16.xpose.msra.mxu0 0
      %1217 = vmatprep.subr.bf16.mxu0 0
      %1218 = vmatpush1.bf16.xpose.msra.mxu0 0
      %1219 = vmatprep.subr.bf16.mxu0 0
      %1220 = vmatpush1.bf16.xpose.msra.mxu0 0
      %1221 = vmatprep.subr.bf16.mxu0 0
      %1222 = vmatpush1.bf16.xpose.msra.mxu0 0
      %1223 = vmatprep.subr.bf16.mxu0 0
      %1224 = vmatpush1.bf16.xpose.msra.mxu0 0
      %1225 = vmatprep.mubr.bf16.mxu0 0
      %1226 = vmatmul.mubr.bf16.gmra.mrb[0].mxu0 %v1192
      %v1227 = vpop.f32.mrb[0].mxu0
      %v1228 = vadd.f32 0.0, %v1227
      %v1229 = vpop.f32.mrb[0].mxu0
      %v1230 = vpop.f32.mrb[0].mxu0
      %v1231 = vpop.f32.mrb[0].mxu0
      %1232 = vdwg.mxu0
      %1233 = vmatprep.subr.bf16.mxu0 0
      %1234 = vmatpush1.bf16.xpose.msra.mxu0 %v1112
      %1235 = vmatprep.subr.bf16.mxu0 0
      %1236 = vmatpush1.bf16.xpose.msra.mxu0 0
      %1237 = vmatprep.subr.bf16.mxu0 0
      %1238 = vmatpush1.bf16.xpose.msra.mxu0 0
      %1239 = vmatprep.subr.bf16.mxu0 0
      %1240 = vmatpush1.bf16.xpose.msra.mxu0 0
      %1241 = vmatprep.subr.bf16.mxu0 0
      %1242 = vmatpush1.bf16.xpose.msra.mxu0 0
      %1243 = vmatprep.subr.bf16.mxu0 0
      %1244 = vmatpush1.bf16.xpose.msra.mxu0 0
      %1245 = vmatprep.subr.bf16.mxu0 0
      %1246 = vmatpush1.bf16.xpose.msra.mxu0 0
      %1247 = vmatprep.subr.bf16.mxu0 0
      %1248 = vmatpush1.bf16.xpose.msra.mxu0 0
      %1249 = vmatprep.subr.bf16.mxu0 0
      %1250 = vmatpush1.bf16.xpose.msra.mxu0 0
      %1251 = vmatprep.subr.bf16.mxu0 0
      %1252 = vmatpush1.bf16.xpose.msra.mxu0 0
      %1253 = vmatprep.subr.bf16.mxu0 0
      %1254 = vmatpush1.bf16.xpose.msra.mxu0 0
      %1255 = vmatprep.subr.bf16.mxu0 0
      %1256 = vmatpush1.bf16.xpose.msra.mxu0 0
      %1257 = vmatprep.subr.bf16.mxu0 0
      %1258 = vmatpush1.bf16.xpose.msra.mxu0 0
      %1259 = vmatprep.subr.bf16.mxu0 0
      %1260 = vmatpush1.bf16.xpose.msra.mxu0 0
      %1261 = vmatprep.subr.bf16.mxu0 0
      %1262 = vmatpush1.bf16.xpose.msra.mxu0 0
      %1263 = vmatprep.subr.bf16.mxu0 0
      %1264 = vmatpush1.bf16.xpose.msra.mxu0 0
      %1265 = vmatprep.mubr.bf16.mxu0 0
      %1266 = vmatmul.mubr.bf16.gmra.mrb[0].mxu0 %v1192
      %v1267 = vpop.f32.mrb[0].mxu0
      %v1268 = vadd.f32 0.0, %v1267
      %v1269 = vpop.f32.mrb[0].mxu0
      %v1270 = vpop.f32.mrb[0].mxu0
      %v1271 = vpop.f32.mrb[0].mxu0
      %1272 = vdwg.mxu0
      %1273 = vmatprep.subr.bf16.mxu0 0
      %1274 = vmatpush1.bf16.xpose.msra.mxu0 %v1113
      %1275 = vmatprep.subr.bf16.mxu0 0
      %1276 = vmatpush1.bf16.xpose.msra.mxu0 0
      %1277 = vmatprep.subr.bf16.mxu0 0
      %1278 = vmatpush1.bf16.xpose.msra.mxu0 0
      %1279 = vmatprep.subr.bf16.mxu0 0
      %1280 = vmatpush1.bf16.xpose.msra.mxu0 0
      %1281 = vmatprep.subr.bf16.mxu0 0
      %1282 = vmatpush1.bf16.xpose.msra.mxu0 0
      %1283 = vmatprep.subr.bf16.mxu0 0
      %1284 = vmatpush1.bf16.xpose.msra.mxu0 0
      %1285 = vmatprep.subr.bf16.mxu0 0
      %1286 = vmatpush1.bf16.xpose.msra.mxu0 0
      %1287 = vmatprep.subr.bf16.mxu0 0
      %1288 = vmatpush1.bf16.xpose.msra.mxu0 0
      %1289 = vmatprep.subr.bf16.mxu0 0
      %1290 = vmatpush1.bf16.xpose.msra.mxu0 0
      %1291 = vmatprep.subr.bf16.mxu0 0
      %1292 = vmatpush1.bf16.xpose.msra.mxu0 0
      %1293 = vmatprep.subr.bf16.mxu0 0
      %1294 = vmatpush1.bf16.xpose.msra.mxu0 0
      %1295 = vmatprep.subr.bf16.mxu0 0
      %1296 = vmatpush1.bf16.xpose.msra.mxu0 0
      %1297 = vmatprep.subr.bf16.mxu0 0
      %1298 = vmatpush1.bf16.xpose.msra.mxu0 0
      %1299 = vmatprep.subr.bf16.mxu0 0
      %1300 = vmatpush1.bf16.xpose.msra.mxu0 0
      %1301 = vmatprep.subr.bf16.mxu0 0
      %1302 = vmatpush1.bf16.xpose.msra.mxu0 0
      %1303 = vmatprep.subr.bf16.mxu0 0
      %1304 = vmatpush1.bf16.xpose.msra.mxu0 0
      %1305 = vmatprep.mubr.bf16.mxu0 0
      %1306 = vmatmul.mubr.bf16.gmra.mrb[0].mxu0 %v1192
      %v1307 = vpop.f32.mrb[0].mxu0
      %v1308 = vadd.f32 0.0, %v1307
      %v1309 = vpop.f32.mrb[0].mxu0
      %v1310 = vpop.f32.mrb[0].mxu0
      %v1311 = vpop.f32.mrb[0].mxu0
      %1312 = vdwg.mxu0
      %1313 = vmatprep.subr.bf16.mxu0 0
      %1314 = vmatpush1.bf16.xpose.msra.mxu0 %v1114
      %1315 = vmatprep.subr.bf16.mxu0 0
      %1316 = vmatpush1.bf16.xpose.msra.mxu0 0
      %1317 = vmatprep.subr.bf16.mxu0 0
      %1318 = vmatpush1.bf16.xpose.msra.mxu0 0
      %1319 = vmatprep.subr.bf16.mxu0 0
      %1320 = vmatpush1.bf16.xpose.msra.mxu0 0
      %1321 = vmatprep.subr.bf16.mxu0 0
      %1322 = vmatpush1.bf16.xpose.msra.mxu0 0
      %1323 = vmatprep.subr.bf16.mxu0 0
      %1324 = vmatpush1.bf16.xpose.msra.mxu0 0
      %1325 = vmatprep.subr.bf16.mxu0 0
      %1326 = vmatpush1.bf16.xpose.msra.mxu0 0
      %1327 = vmatprep.subr.bf16.mxu0 0
      %1328 = vmatpush1.bf16.xpose.msra.mxu0 0
      %1329 = vmatprep.subr.bf16.mxu0 0
      %1330 = vmatpush1.bf16.xpose.msra.mxu0 0
      %1331 = vmatprep.subr.bf16.mxu0 0
      %1332 = vmatpush1.bf16.xpose.msra.mxu0 0
      %1333 = vmatprep.subr.bf16.mxu0 0
      %1334 = vmatpush1.bf16.xpose.msra.mxu0 0
      %1335 = vmatprep.subr.bf16.mxu0 0
      %1336 = vmatpush1.bf16.xpose.msra.mxu0 0
      %1337 = vmatprep.subr.bf16.mxu0 0
      %1338 = vmatpush1.bf16.xpose.msra.mxu0 0
      %1339 = vmatprep.subr.bf16.mxu0 0
      %1340 = vmatpush1.bf16.xpose.msra.mxu0 0
      %1341 = vmatprep.subr.bf16.mxu0 0
      %1342 = vmatpush1.bf16.xpose.msra.mxu0 0
      %1343 = vmatprep.subr.bf16.mxu0 0
      %1344 = vmatpush1.bf16.xpose.msra.mxu0 0
      %1345 = vmatprep.mubr.bf16.mxu0 0
      %1346 = vmatmul.mubr.bf16.gmra.mrb[0].mxu0 %v1192
      %v1347 = vpop.f32.mrb[0].mxu0
      %v1348 = vadd.f32 0.0, %v1347
      %v1349 = vpop.f32.mrb[0].mxu0
      %v1350 = vpop.f32.mrb[0].mxu0
      %v1351 = vpop.f32.mrb[0].mxu0
      %1352 = vdwg.mxu0
      %1353 = vmatprep.subr.bf16.mxu0 0
      %1354 = vmatpush1.bf16.xpose.msra.mxu0 %v1115
      %1355 = vmatprep.subr.bf16.mxu0 0
      %1356 = vmatpush1.bf16.xpose.msra.mxu0 0
      %1357 = vmatprep.subr.bf16.mxu0 0
      %1358 = vmatpush1.bf16.xpose.msra.mxu0 0
      %1359 = vmatprep.subr.bf16.mxu0 0
      %1360 = vmatpush1.bf16.xpose.msra.mxu0 0
      %1361 = vmatprep.subr.bf16.mxu0 0
      %1362 = vmatpush1.bf16.xpose.msra.mxu0 0
      %1363 = vmatprep.subr.bf16.mxu0 0
      %1364 = vmatpush1.bf16.xpose.msra.mxu0 0
      %1365 = vmatprep.subr.bf16.mxu0 0
      %1366 = vmatpush1.bf16.xpose.msra.mxu0 0
      %1367 = vmatprep.subr.bf16.mxu0 0
      %1368 = vmatpush1.bf16.xpose.msra.mxu0 0
      %1369 = vmatprep.subr.bf16.mxu0 0
      %1370 = vmatpush1.bf16.xpose.msra.mxu0 0
      %1371 = vmatprep.subr.bf16.mxu0 0
      %1372 = vmatpush1.bf16.xpose.msra.mxu0 0
      %1373 = vmatprep.subr.bf16.mxu0 0
      %1374 = vmatpush1.bf16.xpose.msra.mxu0 0
      %1375 = vmatprep.subr.bf16.mxu0 0
      %1376 = vmatpush1.bf16.xpose.msra.mxu0 0
      %1377 = vmatprep.subr.bf16.mxu0 0
      %1378 = vmatpush1.bf16.xpose.msra.mxu0 0
      %1379 = vmatprep.subr.bf16.mxu0 0
      %1380 = vmatpush1.bf16.xpose.msra.mxu0 0
      %1381 = vmatprep.subr.bf16.mxu0 0
      %1382 = vmatpush1.bf16.xpose.msra.mxu0 0
      %1383 = vmatprep.subr.bf16.mxu0 0
      %1384 = vmatpush1.bf16.xpose.msra.mxu0 0
      %1385 = vmatprep.mubr.bf16.mxu0 0
      %1386 = vmatmul.mubr.bf16.gmra.mrb[0].mxu0 %v1192
      %v1387 = vpop.f32.mrb[0].mxu0
      %v1388 = vadd.f32 0.0, %v1387
      %v1389 = vpop.f32.mrb[0].mxu0
      %v1390 = vpop.f32.mrb[0].mxu0
      %v1391 = vpop.f32.mrb[0].mxu0
      %1392 = vdwg.mxu0
      %1393 = vmatprep.subr.bf16.mxu0 0
      %1394 = vmatpush1.bf16.xpose.msra.mxu0 %v1116
      %1395 = vmatprep.subr.bf16.mxu0 0
      %1396 = vmatpush1.bf16.xpose.msra.mxu0 0
      %1397 = vmatprep.subr.bf16.mxu0 0
      %1398 = vmatpush1.bf16.xpose.msra.mxu0 0
      %1399 = vmatprep.subr.bf16.mxu0 0
      %1400 = vmatpush1.bf16.xpose.msra.mxu0 0
      %1401 = vmatprep.subr.bf16.mxu0 0
      %1402 = vmatpush1.bf16.xpose.msra.mxu0 0
      %1403 = vmatprep.subr.bf16.mxu0 0
      %1404 = vmatpush1.bf16.xpose.msra.mxu0 0
      %1405 = vmatprep.subr.bf16.mxu0 0
      %1406 = vmatpush1.bf16.xpose.msra.mxu0 0
      %1407 = vmatprep.subr.bf16.mxu0 0
      %1408 = vmatpush1.bf16.xpose.msra.mxu0 0
      %1409 = vmatprep.subr.bf16.mxu0 0
      %1410 = vmatpush1.bf16.xpose.msra.mxu0 0
      %1411 = vmatprep.subr.bf16.mxu0 0
      %1412 = vmatpush1.bf16.xpose.msra.mxu0 0
      %1413 = vmatprep.subr.bf16.mxu0 0
      %1414 = vmatpush1.bf16.xpose.msra.mxu0 0
      %1415 = vmatprep.subr.bf16.mxu0 0
      %1416 = vmatpush1.bf16.xpose.msra.mxu0 0
      %1417 = vmatprep.subr.bf16.mxu0 0
      %1418 = vmatpush1.bf16.xpose.msra.mxu0 0
      %1419 = vmatprep.subr.bf16.mxu0 0
      %1420 = vmatpush1.bf16.xpose.msra.mxu0 0
      %1421 = vmatprep.subr.bf16.mxu0 0
      %1422 = vmatpush1.bf16.xpose.msra.mxu0 0
      %1423 = vmatprep.subr.bf16.mxu0 0
      %1424 = vmatpush1.bf16.xpose.msra.mxu0 0
      %1425 = vmatprep.mubr.bf16.mxu0 0
      %1426 = vmatmul.mubr.bf16.gmra.mrb[0].mxu0 %v1192
      %v1427 = vpop.f32.mrb[0].mxu0
      %v1428 = vadd.f32 0.0, %v1427
      %v1429 = vpop.f32.mrb[0].mxu0
      %v1430 = vpop.f32.mrb[0].mxu0
      %v1431 = vpop.f32.mrb[0].mxu0
      %1432 = vdwg.mxu0
      %1433 = vmatprep.subr.bf16.mxu0 0
      %1434 = vmatpush1.bf16.xpose.msra.mxu0 %v1117
      %1435 = vmatprep.subr.bf16.mxu0 0
      %1436 = vmatpush1.bf16.xpose.msra.mxu0 0
      %1437 = vmatprep.subr.bf16.mxu0 0
      %1438 = vmatpush1.bf16.xpose.msra.mxu0 0
      %1439 = vmatprep.subr.bf16.mxu0 0
      %1440 = vmatpush1.bf16.xpose.msra.mxu0 0
      %1441 = vmatprep.subr.bf16.mxu0 0
      %1442 = vmatpush1.bf16.xpose.msra.mxu0 0
      %1443 = vmatprep.subr.bf16.mxu0 0
      %1444 = vmatpush1.bf16.xpose.msra.mxu0 0
      %1445 = vmatprep.subr.bf16.mxu0 0
      %1446 = vmatpush1.bf16.xpose.msra.mxu0 0
      %1447 = vmatprep.subr.bf16.mxu0 0
      %1448 = vmatpush1.bf16.xpose.msra.mxu0 0
      %1449 = vmatprep.subr.bf16.mxu0 0
      %1450 = vmatpush1.bf16.xpose.msra.mxu0 0
      %1451 = vmatprep.subr.bf16.mxu0 0
      %1452 = vmatpush1.bf16.xpose.msra.mxu0 0
      %1453 = vmatprep.subr.bf16.mxu0 0
      %1454 = vmatpush1.bf16.xpose.msra.mxu0 0
      %1455 = vmatprep.subr.bf16.mxu0 0
      %1456 = vmatpush1.bf16.xpose.msra.mxu0 0
      %1457 = vmatprep.subr.bf16.mxu0 0
      %1458 = vmatpush1.bf16.xpose.msra.mxu0 0
      %1459 = vmatprep.subr.bf16.mxu0 0
      %1460 = vmatpush1.bf16.xpose.msra.mxu0 0
      %1461 = vmatprep.subr.bf16.mxu0 0
      %1462 = vmatpush1.bf16.xpose.msra.mxu0 0
      %1463 = vmatprep.subr.bf16.mxu0 0
      %1464 = vmatpush1.bf16.xpose.msra.mxu0 0
      %1465 = vmatprep.mubr.bf16.mxu0 0
      %1466 = vmatmul.mubr.bf16.gmra.mrb[0].mxu0 %v1192
      %v1467 = vpop.f32.mrb[0].mxu0
      %v1468 = vadd.f32 0.0, %v1467
      %v1469 = vpop.f32.mrb[0].mxu0
      %v1470 = vpop.f32.mrb[0].mxu0
      %v1471 = vpop.f32.mrb[0].mxu0
      %1472 = vdwg.mxu0
      %1473 = vmatprep.subr.bf16.mxu0 0
      %1474 = vmatpush1.bf16.xpose.msra.mxu0 %v1118
      %1475 = vmatprep.subr.bf16.mxu0 0
      %1476 = vmatpush1.bf16.xpose.msra.mxu0 0
      %1477 = vmatprep.subr.bf16.mxu0 0
      %1478 = vmatpush1.bf16.xpose.msra.mxu0 0
      %1479 = vmatprep.subr.bf16.mxu0 0
      %1480 = vmatpush1.bf16.xpose.msra.mxu0 0
      %1481 = vmatprep.subr.bf16.mxu0 0
      %1482 = vmatpush1.bf16.xpose.msra.mxu0 0
      %1483 = vmatprep.subr.bf16.mxu0 0
      %1484 = vmatpush1.bf16.xpose.msra.mxu0 0
      %1485 = vmatprep.subr.bf16.mxu0 0
      %1486 = vmatpush1.bf16.xpose.msra.mxu0 0
      %1487 = vmatprep.subr.bf16.mxu0 0
      %1488 = vmatpush1.bf16.xpose.msra.mxu0 0
      %1489 = vmatprep.subr.bf16.mxu0 0
      %1490 = vmatpush1.bf16.xpose.msra.mxu0 0
      %1491 = vmatprep.subr.bf16.mxu0 0
      %1492 = vmatpush1.bf16.xpose.msra.mxu0 0
      %1493 = vmatprep.subr.bf16.mxu0 0
      %1494 = vmatpush1.bf16.xpose.msra.mxu0 0
      %1495 = vmatprep.subr.bf16.mxu0 0
      %1496 = vmatpush1.bf16.xpose.msra.mxu0 0
      %1497 = vmatprep.subr.bf16.mxu0 0
      %1498 = vmatpush1.bf16.xpose.msra.mxu0 0
      %1499 = vmatprep.subr.bf16.mxu0 0
      %1500 = vmatpush1.bf16.xpose.msra.mxu0 0
      %1501 = vmatprep.subr.bf16.mxu0 0
      %1502 = vmatpush1.bf16.xpose.msra.mxu0 0
      %1503 = vmatprep.subr.bf16.mxu0 0
      %1504 = vmatpush1.bf16.xpose.msra.mxu0 0
      %1505 = vmatprep.mubr.bf16.mxu0 0
      %1506 = vmatmul.mubr.bf16.gmra.mrb[0].mxu0 %v1192
      %v1507 = vpop.f32.mrb[0].mxu0
      %v1508 = vadd.f32 0.0, %v1507
      %v1509 = vpop.f32.mrb[0].mxu0
      %v1510 = vpop.f32.mrb[0].mxu0
      %v1511 = vpop.f32.mrb[0].mxu0
      %1512 = vdwg.mxu0
      %1513 = vmatprep.subr.bf16.mxu0 0
      %1514 = vmatpush1.bf16.xpose.msra.mxu0 %v1119
      %1515 = vmatprep.subr.bf16.mxu0 0
      %1516 = vmatpush1.bf16.xpose.msra.mxu0 0
      %1517 = vmatprep.subr.bf16.mxu0 0
      %1518 = vmatpush1.bf16.xpose.msra.mxu0 0
      %1519 = vmatprep.subr.bf16.mxu0 0
      %1520 = vmatpush1.bf16.xpose.msra.mxu0 0
      %1521 = vmatprep.subr.bf16.mxu0 0
      %1522 = vmatpush1.bf16.xpose.msra.mxu0 0
      %1523 = vmatprep.subr.bf16.mxu0 0
      %1524 = vmatpush1.bf16.xpose.msra.mxu0 0
      %1525 = vmatprep.subr.bf16.mxu0 0
      %1526 = vmatpush1.bf16.xpose.msra.mxu0 0
      %1527 = vmatprep.subr.bf16.mxu0 0
      %1528 = vmatpush1.bf16.xpose.msra.mxu0 0
      %1529 = vmatprep.subr.bf16.mxu0 0
      %1530 = vmatpush1.bf16.xpose.msra.mxu0 0
      %1531 = vmatprep.subr.bf16.mxu0 0
      %1532 = vmatpush1.bf16.xpose.msra.mxu0 0
      %1533 = vmatprep.subr.bf16.mxu0 0
      %1534 = vmatpush1.bf16.xpose.msra.mxu0 0
      %1535 = vmatprep.subr.bf16.mxu0 0
      %1536 = vmatpush1.bf16.xpose.msra.mxu0 0
      %1537 = vmatprep.subr.bf16.mxu0 0
      %1538 = vmatpush1.bf16.xpose.msra.mxu0 0
      %1539 = vmatprep.subr.bf16.mxu0 0
      %1540 = vmatpush1.bf16.xpose.msra.mxu0 0
      %1541 = vmatprep.subr.bf16.mxu0 0
      %1542 = vmatpush1.bf16.xpose.msra.mxu0 0
      %1543 = vmatprep.subr.bf16.mxu0 0
      %1544 = vmatpush1.bf16.xpose.msra.mxu0 0
      %1545 = vmatprep.mubr.bf16.mxu0 0
      %1546 = vmatmul.mubr.bf16.gmra.mrb[0].mxu0 %v1192
      %v1547 = vpop.f32.mrb[0].mxu0
      %v1548 = vadd.f32 0.0, %v1547
      %v1549 = vpop.f32.mrb[0].mxu0
      %v1550 = vpop.f32.mrb[0].mxu0
      %v1551 = vpop.f32.mrb[0].mxu0
      %1552 = vdwg.mxu0
      %1553 = vmatprep.subr.bf16.mxu0 0
      %1554 = vmatpush1.bf16.xpose.msra.mxu0 %v1120
      %1555 = vmatprep.subr.bf16.mxu0 0
      %1556 = vmatpush1.bf16.xpose.msra.mxu0 0
      %1557 = vmatprep.subr.bf16.mxu0 0
      %1558 = vmatpush1.bf16.xpose.msra.mxu0 0
      %1559 = vmatprep.subr.bf16.mxu0 0
      %1560 = vmatpush1.bf16.xpose.msra.mxu0 0
      %1561 = vmatprep.subr.bf16.mxu0 0
      %1562 = vmatpush1.bf16.xpose.msra.mxu0 0
      %1563 = vmatprep.subr.bf16.mxu0 0
      %1564 = vmatpush1.bf16.xpose.msra.mxu0 0
      %1565 = vmatprep.subr.bf16.mxu0 0
      %1566 = vmatpush1.bf16.xpose.msra.mxu0 0
      %1567 = vmatprep.subr.bf16.mxu0 0
      %1568 = vmatpush1.bf16.xpose.msra.mxu0 0
      %1569 = vmatprep.subr.bf16.mxu0 0
      %1570 = vmatpush1.bf16.xpose.msra.mxu0 0
      %1571 = vmatprep.subr.bf16.mxu0 0
      %1572 = vmatpush1.bf16.xpose.msra.mxu0 0
      %1573 = vmatprep.subr.bf16.mxu0 0
      %1574 = vmatpush1.bf16.xpose.msra.mxu0 0
      %1575 = vmatprep.subr.bf16.mxu0 0
      %1576 = vmatpush1.bf16.xpose.msra.mxu0 0
      %1577 = vmatprep.subr.bf16.mxu0 0
      %1578 = vmatpush1.bf16.xpose.msra.mxu0 0
      %1579 = vmatprep.subr.bf16.mxu0 0
      %1580 = vmatpush1.bf16.xpose.msra.mxu0 0
      %1581 = vmatprep.subr.bf16.mxu0 0
      %1582 = vmatpush1.bf16.xpose.msra.mxu0 0
      %1583 = vmatprep.subr.bf16.mxu0 0
      %1584 = vmatpush1.bf16.xpose.msra.mxu0 0
      %1585 = vmatprep.mubr.bf16.mxu0 0
      %1586 = vmatmul.mubr.bf16.gmra.mrb[0].mxu0 %v1192
      %v1587 = vpop.f32.mrb[0].mxu0
      %v1588 = vadd.f32 0.0, %v1587
      %v1589 = vpop.f32.mrb[0].mxu0
      %v1590 = vpop.f32.mrb[0].mxu0
      %v1591 = vpop.f32.mrb[0].mxu0
      %1592 = vdwg.mxu0
      %1593 = vmatprep.subr.bf16.mxu0 0
      %1594 = vmatpush1.bf16.xpose.msra.mxu0 %v1121
      %1595 = vmatprep.subr.bf16.mxu0 0
      %1596 = vmatpush1.bf16.xpose.msra.mxu0 0
      %1597 = vmatprep.subr.bf16.mxu0 0
      %1598 = vmatpush1.bf16.xpose.msra.mxu0 0
      %1599 = vmatprep.subr.bf16.mxu0 0
      %1600 = vmatpush1.bf16.xpose.msra.mxu0 0
      %1601 = vmatprep.subr.bf16.mxu0 0
      %1602 = vmatpush1.bf16.xpose.msra.mxu0 0
      %1603 = vmatprep.subr.bf16.mxu0 0
      %1604 = vmatpush1.bf16.xpose.msra.mxu0 0
      %1605 = vmatprep.subr.bf16.mxu0 0
      %1606 = vmatpush1.bf16.xpose.msra.mxu0 0
      %1607 = vmatprep.subr.bf16.mxu0 0
      %1608 = vmatpush1.bf16.xpose.msra.mxu0 0
      %1609 = vmatprep.subr.bf16.mxu0 0
      %1610 = vmatpush1.bf16.xpose.msra.mxu0 0
      %1611 = vmatprep.subr.bf16.mxu0 0
      %1612 = vmatpush1.bf16.xpose.msra.mxu0 0
      %1613 = vmatprep.subr.bf16.mxu0 0
      %1614 = vmatpush1.bf16.xpose.msra.mxu0 0
      %1615 = vmatprep.subr.bf16.mxu0 0
      %1616 = vmatpush1.bf16.xpose.msra.mxu0 0
      %1617 = vmatprep.subr.bf16.mxu0 0
      %1618 = vmatpush1.bf16.xpose.msra.mxu0 0
      %1619 = vmatprep.subr.bf16.mxu0 0
      %1620 = vmatpush1.bf16.xpose.msra.mxu0 0
      %1621 = vmatprep.subr.bf16.mxu0 0
      %1622 = vmatpush1.bf16.xpose.msra.mxu0 0
      %1623 = vmatprep.subr.bf16.mxu0 0
      %1624 = vmatpush1.bf16.xpose.msra.mxu0 0
      %1625 = vmatprep.mubr.bf16.mxu0 0
      %1626 = vmatmul.mubr.bf16.gmra.mrb[0].mxu0 %v1192
      %v1627 = vpop.f32.mrb[0].mxu0
      %v1628 = vadd.f32 0.0, %v1627
      %v1629 = vpop.f32.mrb[0].mxu0
      %v1630 = vpop.f32.mrb[0].mxu0
      %v1631 = vpop.f32.mrb[0].mxu0
      %1632 = vdwg.mxu0
      %1633 = vmatprep.subr.bf16.mxu0 0
      %1634 = vmatpush1.bf16.xpose.msra.mxu0 %v1122
      %1635 = vmatprep.subr.bf16.mxu0 0
      %1636 = vmatpush1.bf16.xpose.msra.mxu0 0
      %1637 = vmatprep.subr.bf16.mxu0 0
      %1638 = vmatpush1.bf16.xpose.msra.mxu0 0
      %1639 = vmatprep.subr.bf16.mxu0 0
      %1640 = vmatpush1.bf16.xpose.msra.mxu0 0
      %1641 = vmatprep.subr.bf16.mxu0 0
      %1642 = vmatpush1.bf16.xpose.msra.mxu0 0
      %1643 = vmatprep.subr.bf16.mxu0 0
      %1644 = vmatpush1.bf16.xpose.msra.mxu0 0
      %1645 = vmatprep.subr.bf16.mxu0 0
      %1646 = vmatpush1.bf16.xpose.msra.mxu0 0
      %1647 = vmatprep.subr.bf16.mxu0 0
      %1648 = vmatpush1.bf16.xpose.msra.mxu0 0
      %1649 = vmatprep.subr.bf16.mxu0 0
      %1650 = vmatpush1.bf16.xpose.msra.mxu0 0
      %1651 = vmatprep.subr.bf16.mxu0 0
      %1652 = vmatpush1.bf16.xpose.msra.mxu0 0
      %1653 = vmatprep.subr.bf16.mxu0 0
      %1654 = vmatpush1.bf16.xpose.msra.mxu0 0
      %1655 = vmatprep.subr.bf16.mxu0 0
      %1656 = vmatpush1.bf16.xpose.msra.mxu0 0
      %1657 = vmatprep.subr.bf16.mxu0 0
      %1658 = vmatpush1.bf16.xpose.msra.mxu0 0
      %1659 = vmatprep.subr.bf16.mxu0 0
      %1660 = vmatpush1.bf16.xpose.msra.mxu0 0
      %1661 = vmatprep.subr.bf16.mxu0 0
      %1662 = vmatpush1.bf16.xpose.msra.mxu0 0
      %1663 = vmatprep.subr.bf16.mxu0 0
      %1664 = vmatpush1.bf16.xpose.msra.mxu0 0
      %1665 = vmatprep.mubr.bf16.mxu0 0
      %1666 = vmatmul.mubr.bf16.gmra.mrb[0].mxu0 %v1192
      %v1667 = vpop.f32.mrb[0].mxu0
      %v1668 = vadd.f32 0.0, %v1667
      %v1669 = vpop.f32.mrb[0].mxu0
      %v1670 = vpop.f32.mrb[0].mxu0
      %v1671 = vpop.f32.mrb[0].mxu0
      %1672 = vdwg.mxu0
      %v1673 = vpack.c.bf16 %v1228, %v1228
      %v1674 = vpack.c.bf16 %v1268, %v1268
      %v1675 = vpack.c.bf16 %v1308, %v1308
      %v1676 = vpack.c.bf16 %v1348, %v1348
      %v1677 = vpack.c.bf16 %v1388, %v1388
      %v1678 = vpack.c.bf16 %v1428, %v1428
      %v1679 = vpack.c.bf16 %v1468, %v1468
      %v1680 = vpack.c.bf16 %v1508, %v1508
      %vm1681 = vcmask 64512
      %v1683 = vsel %vm1681, %v1673, 0
      %v1686 = vsel %vm1681, %v1677, 0
      %1688 = vmatprep.subr.bf16.mxu0 0
      %1689 = vmatpush1.bf16.xpose.msra.mxu0 %v1686
      %1690 = vmatprep.subr.bf16.mxu0 0
      %1691 = vmatpush1.bf16.xpose.msra.mxu0 0
      %1692 = vmatprep.subr.bf16.mxu0 0
      %1693 = vmatpush1.bf16.xpose.msra.mxu0 0
      %1694 = vmatprep.subr.bf16.mxu0 0
      %1695 = vmatpush1.bf16.xpose.msra.mxu0 0
      %1696 = vmatprep.subr.bf16.mxu0 0
      %1697 = vmatpush1.bf16.xpose.msra.mxu0 0
      %1698 = vmatprep.subr.bf16.mxu0 0
      %1699 = vmatpush1.bf16.xpose.msra.mxu0 0
      %1700 = vmatprep.subr.bf16.mxu0 0
      %1701 = vmatpush1.bf16.xpose.msra.mxu0 0
      %1702 = vmatprep.subr.bf16.mxu0 0
      %1703 = vmatpush1.bf16.xpose.msra.mxu0 0
      %1704 = vmatprep.subr.bf16.mxu0 0
      %1705 = vmatpush1.bf16.xpose.msra.mxu0 0
      %1706 = vmatprep.subr.bf16.mxu0 0
      %1707 = vmatpush1.bf16.xpose.msra.mxu0 0
      %1708 = vmatprep.subr.bf16.mxu0 0
      %1709 = vmatpush1.bf16.xpose.msra.mxu0 0
      %1710 = vmatprep.subr.bf16.mxu0 0
      %1711 = vmatpush1.bf16.xpose.msra.mxu0 0
      %1712 = vmatprep.subr.bf16.mxu0 0
      %1713 = vmatpush1.bf16.xpose.msra.mxu0 0
      %1714 = vmatprep.subr.bf16.mxu0 0
      %1715 = vmatpush1.bf16.xpose.msra.mxu0 0
      %1716 = vmatprep.subr.bf16.mxu0 0
      %1717 = vmatpush1.bf16.xpose.msra.mxu0 0
      %1718 = vmatprep.subr.bf16.mxu0 0
      %1719 = vmatpush1.bf16.xpose.msra.mxu0 0
      %1720 = vmatprep.mubr.bf16.mxu0 0
      %1721 = vmatmul.mubr.bf16.gmra.mrb[0].mxu0 %v1683
      %v1722 = vpop.f32.mrb[0].mxu0
      %v1723 = vadd.f32 0.0, %v1722
      %v1724 = vpop.f32.mrb[0].mxu0
      %v1725 = vpop.f32.mrb[0].mxu0
      %v1726 = vpop.f32.mrb[0].mxu0
      %1727 = vdwg.mxu0
      %v1729 = vsel %vm1681, %v1674, 0
      %v1732 = vsel %vm1681, %v1678, 0
      %1734 = vmatprep.subr.bf16.mxu0 0
      %1735 = vmatpush1.bf16.xpose.msra.mxu0 %v1732
      %1736 = vmatprep.subr.bf16.mxu0 0
      %1737 = vmatpush1.bf16.xpose.msra.mxu0 0
      %1738 = vmatprep.subr.bf16.mxu0 0
      %1739 = vmatpush1.bf16.xpose.msra.mxu0 0
      %1740 = vmatprep.subr.bf16.mxu0 0
      %1741 = vmatpush1.bf16.xpose.msra.mxu0 0
      %1742 = vmatprep.subr.bf16.mxu0 0
      %1743 = vmatpush1.bf16.xpose.msra.mxu0 0
      %1744 = vmatprep.subr.bf16.mxu0 0
      %1745 = vmatpush1.bf16.xpose.msra.mxu0 0
      %1746 = vmatprep.subr.bf16.mxu0 0
      %1747 = vmatpush1.bf16.xpose.msra.mxu0 0
      %1748 = vmatprep.subr.bf16.mxu0 0
      %1749 = vmatpush1.bf16.xpose.msra.mxu0 0
      %1750 = vmatprep.subr.bf16.mxu0 0
      %1751 = vmatpush1.bf16.xpose.msra.mxu0 0
      %1752 = vmatprep.subr.bf16.mxu0 0
      %1753 = vmatpush1.bf16.xpose.msra.mxu0 0
      %1754 = vmatprep.subr.bf16.mxu0 0
      %1755 = vmatpush1.bf16.xpose.msra.mxu0 0
      %1756 = vmatprep.subr.bf16.mxu0 0
      %1757 = vmatpush1.bf16.xpose.msra.mxu0 0
      %1758 = vmatprep.subr.bf16.mxu0 0
      %1759 = vmatpush1.bf16.xpose.msra.mxu0 0
      %1760 = vmatprep.subr.bf16.mxu0 0
      %1761 = vmatpush1.bf16.xpose.msra.mxu0 0
      %1762 = vmatprep.subr.bf16.mxu0 0
      %1763 = vmatpush1.bf16.xpose.msra.mxu0 0
      %1764 = vmatprep.subr.bf16.mxu0 0
      %1765 = vmatpush1.bf16.xpose.msra.mxu0 0
      %1766 = vmatprep.mubr.bf16.mxu0 0
      %1767 = vmatmul.mubr.bf16.gmra.mrb[0].mxu0 %v1729
      %v1768 = vpop.f32.mrb[0].mxu0
      %v1769 = vadd.f32 0.0, %v1768
      %v1770 = vpop.f32.mrb[0].mxu0
      %v1771 = vpop.f32.mrb[0].mxu0
      %v1772 = vpop.f32.mrb[0].mxu0
      %1773 = vdwg.mxu0
      %v1775 = vsel %vm1681, %v1675, 0
      %v1778 = vsel %vm1681, %v1679, 0
      %1780 = vmatprep.subr.bf16.mxu0 0
      %1781 = vmatpush1.bf16.xpose.msra.mxu0 %v1778
      %1782 = vmatprep.subr.bf16.mxu0 0
      %1783 = vmatpush1.bf16.xpose.msra.mxu0 0
      %1784 = vmatprep.subr.bf16.mxu0 0
      %1785 = vmatpush1.bf16.xpose.msra.mxu0 0
      %1786 = vmatprep.subr.bf16.mxu0 0
      %1787 = vmatpush1.bf16.xpose.msra.mxu0 0
      %1788 = vmatprep.subr.bf16.mxu0 0
      %1789 = vmatpush1.bf16.xpose.msra.mxu0 0
      %1790 = vmatprep.subr.bf16.mxu0 0
      %1791 = vmatpush1.bf16.xpose.msra.mxu0 0
      %1792 = vmatprep.subr.bf16.mxu0 0
      %1793 = vmatpush1.bf16.xpose.msra.mxu0 0
      %1794 = vmatprep.subr.bf16.mxu0 0
      %1795 = vmatpush1.bf16.xpose.msra.mxu0 0
      %1796 = vmatprep.subr.bf16.mxu0 0
      %1797 = vmatpush1.bf16.xpose.msra.mxu0 0
      %1798 = vmatprep.subr.bf16.mxu0 0
      %1799 = vmatpush1.bf16.xpose.msra.mxu0 0
      %1800 = vmatprep.subr.bf16.mxu0 0
      %1801 = vmatpush1.bf16.xpose.msra.mxu0 0
      %1802 = vmatprep.subr.bf16.mxu0 0
      %1803 = vmatpush1.bf16.xpose.msra.mxu0 0
      %1804 = vmatprep.subr.bf16.mxu0 0
      %1805 = vmatpush1.bf16.xpose.msra.mxu0 0
      %1806 = vmatprep.subr.bf16.mxu0 0
      %1807 = vmatpush1.bf16.xpose.msra.mxu0 0
      %1808 = vmatprep.subr.bf16.mxu0 0
      %1809 = vmatpush1.bf16.xpose.msra.mxu0 0
      %1810 = vmatprep.subr.bf16.mxu0 0
      %1811 = vmatpush1.bf16.xpose.msra.mxu0 0
      %1812 = vmatprep.mubr.bf16.mxu0 0
      %1813 = vmatmul.mubr.bf16.gmra.mrb[0].mxu0 %v1775
      %v1814 = vpop.f32.mrb[0].mxu0
      %v1815 = vadd.f32 0.0, %v1814
      %v1816 = vpop.f32.mrb[0].mxu0
      %v1817 = vpop.f32.mrb[0].mxu0
      %v1818 = vpop.f32.mrb[0].mxu0
      %1819 = vdwg.mxu0
      %v1821 = vsel %vm1681, %v1676, 0
      %v1824 = vsel %vm1681, %v1680, 0
      %1826 = vmatprep.subr.bf16.mxu0 0
      %1827 = vmatpush1.bf16.xpose.msra.mxu0 %v1824
      %1828 = vmatprep.subr.bf16.mxu0 0
      %1829 = vmatpush1.bf16.xpose.msra.mxu0 0
      %1830 = vmatprep.subr.bf16.mxu0 0
      %1831 = vmatpush1.bf16.xpose.msra.mxu0 0
      %1832 = vmatprep.subr.bf16.mxu0 0
      %1833 = vmatpush1.bf16.xpose.msra.mxu0 0
      %1834 = vmatprep.subr.bf16.mxu0 0
      %1835 = vmatpush1.bf16.xpose.msra.mxu0 0
      %1836 = vmatprep.subr.bf16.mxu0 0
      %1837 = vmatpush1.bf16.xpose.msra.mxu0 0
      %1838 = vmatprep.subr.bf16.mxu0 0
      %1839 = vmatpush1.bf16.xpose.msra.mxu0 0
      %1840 = vmatprep.subr.bf16.mxu0 0
      %1841 = vmatpush1.bf16.xpose.msra.mxu0 0
      %1842 = vmatprep.subr.bf16.mxu0 0
      %1843 = vmatpush1.bf16.xpose.msra.mxu0 0
      %1844 = vmatprep.subr.bf16.mxu0 0
      %1845 = vmatpush1.bf16.xpose.msra.mxu0 0
      %1846 = vmatprep.subr.bf16.mxu0 0
      %1847 = vmatpush1.bf16.xpose.msra.mxu0 0
      %1848 = vmatprep.subr.bf16.mxu0 0
      %1849 = vmatpush1.bf16.xpose.msra.mxu0 0
      %1850 = vmatprep.subr.bf16.mxu0 0
      %1851 = vmatpush1.bf16.xpose.msra.mxu0 0
      %1852 = vmatprep.subr.bf16.mxu0 0
      %1853 = vmatpush1.bf16.xpose.msra.mxu0 0
      %1854 = vmatprep.subr.bf16.mxu0 0
      %1855 = vmatpush1.bf16.xpose.msra.mxu0 0
      %1856 = vmatprep.subr.bf16.mxu0 0
      %1857 = vmatpush1.bf16.xpose.msra.mxu0 0
      %1858 = vmatprep.mubr.bf16.mxu0 0
      %1859 = vmatmul.mubr.bf16.gmra.mrb[0].mxu0 %v1821
      %v1860 = vpop.f32.mrb[0].mxu0
      %v1861 = vadd.f32 0.0, %v1860
      %v1862 = vpop.f32.mrb[0].mxu0
      %v1863 = vpop.f32.mrb[0].mxu0
      %v1864 = vpop.f32.mrb[0].mxu0
      %1865 = vdwg.mxu0
      %v1866 = vmul.f32 %v1723, 0.35355338
      %v1867 = vmul.f32 %v1769, 0.35355338
      %v1868 = vmul.f32 %v1815, 0.35355338
      %v1869 = vmul.f32 %v1861, 0.35355338
      %vm1870 = vcmask 27648
      %v1871 = vsel %vm1870, %v1866, -inf
      %1872 = vmax.xlane.f32.xlu0 %v1871
      %v1873 = vpop.xlane.xlu0 %1872
      %v1874 = vsel %vm1870, %v1867, -inf
      %1875 = vmax.xlane.f32.xlu0 %v1874
      %v1876 = vpop.xlane.xlu0 %1875
      %v1877 = vsel %vm1870, %v1868, -inf
      %1878 = vmax.xlane.f32.xlu0 %v1877
      %v1879 = vpop.xlane.xlu0 %1878
      %v1880 = vsel %vm1870, %v1869, -inf
      %1881 = vmax.xlane.f32.xlu0 %v1880
      %v1882 = vpop.xlane.xlu0 %1881
      %v1883 = vsub.f32 %v1866, %v1873
      %v1884 = vsub.f32 %v1867, %v1876
      %v1885 = vsub.f32 %v1868, %v1879
      %v1886 = vsub.f32 %v1869, %v1882
      %v1887 = vmul.f32 %v1883, 1.442695
      %v1888 = vpow.pop %v1887
      %v1889 = vmul.f32 %v1884, 1.442695
      %v1890 = vpow.pop %v1889
      %v1891 = vmul.f32 %v1885, 1.442695
      %v1892 = vpow.pop %v1891
      %v1893 = vmul.f32 %v1886, 1.442695
      %v1894 = vpow.pop %v1893
      %v1895 = vsel %vm1870, %v1888, 0.0
      %1896 = vadd.xlane.f32.xlu0 %v1895
      %v1897 = vpop.xlane.xlu0 %1896
      %v1898 = vsel %vm1870, %v1890, 0.0
      %1899 = vadd.xlane.f32.xlu0 %v1898
      %v1900 = vpop.xlane.xlu0 %1899
      %v1901 = vsel %vm1870, %v1892, 0.0
      %1902 = vadd.xlane.f32.xlu0 %v1901
      %v1903 = vpop.xlane.xlu0 %1902
      %v1904 = vsel %vm1870, %v1894, 0.0
      %1905 = vadd.xlane.f32.xlu0 %v1904
      %v1906 = vpop.xlane.xlu0 %1905
      %v1907 = vrcp.pop %v1897
      %v1908 = vrcp.pop %v1900
      %v1909 = vrcp.pop %v1903
      %v1910 = vrcp.pop %v1906
      %v1911 = vmul.f32 %v1888, %v1907
      %v1912 = vmul.f32 %v1890, %v1908
      %v1913 = vmul.f32 %v1892, %v1909
      %v1914 = vmul.f32 %v1894, %v1910
      %v1915 = vpack.c.bf16 %v1911, %v1911
      %v1916 = vpack.c.bf16 %v1912, %v1912
      %v1917 = vpack.c.bf16 %v1913, %v1913
      %v1918 = vpack.c.bf16 %v1914, %v1914
      %v1919 = vpack.c.bf16 %v1548, %v1548
      %v1920 = vpack.c.bf16 %v1588, %v1588
      %v1921 = vpack.c.bf16 %v1628, %v1628
      %v1922 = vpack.c.bf16 %v1668, %v1668
      %vm1923 = vcmask 31744
      %v1925 = vsel %vm1923, %v1915, 0
      %vm1927 = vcmask 1041408
      %v1929 = vsel %vm1927, %v1919, 0
      %1931 = vmatprep.subr.bf16.mxu0 0
      %1932 = vmatpush1.bf16.msra.mxu0 %v1929
      %1933 = vmatprep.subr.bf16.mxu0 0
      %1934 = vmatpush1.bf16.msra.mxu0 0
      %1935 = vmatprep.subr.bf16.mxu0 0
      %1936 = vmatpush1.bf16.msra.mxu0 0
      %1937 = vmatprep.subr.bf16.mxu0 0
      %1938 = vmatpush1.bf16.msra.mxu0 0
      %1939 = vmatprep.subr.bf16.mxu0 0
      %1940 = vmatpush1.bf16.msra.mxu0 0
      %1941 = vmatprep.subr.bf16.mxu0 0
      %1942 = vmatpush1.bf16.msra.mxu0 0
      %1943 = vmatprep.subr.bf16.mxu0 0
      %1944 = vmatpush1.bf16.msra.mxu0 0
      %1945 = vmatprep.subr.bf16.mxu0 0
      %1946 = vmatpush1.bf16.msra.mxu0 0
      %1947 = vmatprep.subr.bf16.mxu0 0
      %1948 = vmatpush1.bf16.msra.mxu0 0
      %1949 = vmatprep.subr.bf16.mxu0 0
      %1950 = vmatpush1.bf16.msra.mxu0 0
      %1951 = vmatprep.subr.bf16.mxu0 0
      %1952 = vmatpush1.bf16.msra.mxu0 0
      %1953 = vmatprep.subr.bf16.mxu0 0
      %1954 = vmatpush1.bf16.msra.mxu0 0
      %1955 = vmatprep.subr.bf16.mxu0 0
      %1956 = vmatpush1.bf16.msra.mxu0 0
      %1957 = vmatprep.subr.bf16.mxu0 0
      %1958 = vmatpush1.bf16.msra.mxu0 0
      %1959 = vmatprep.subr.bf16.mxu0 0
      %1960 = vmatpush1.bf16.msra.mxu0 0
      %1961 = vmatprep.subr.bf16.mxu0 0
      %1962 = vmatpush1.bf16.msra.mxu0 0
      %1963 = vmatprep.mubr.bf16.mxu0 0
      %1964 = vmatmul.mubr.bf16.gmra.mrb[0].mxu0 %v1925
      %v1965 = vpop.f32.mrb[0].mxu0
      %v1966 = vadd.f32 0.0, %v1965
      %v1967 = vpop.f32.mrb[0].mxu0
      %v1968 = vpop.f32.mrb[0].mxu0
      %v1969 = vpop.f32.mrb[0].mxu0
      %1970 = vdwg.mxu0
      %v1972 = vsel %vm1923, %v1916, 0
      %v1975 = vsel %vm1927, %v1920, 0
      %1977 = vmatprep.subr.bf16.mxu0 0
      %1978 = vmatpush1.bf16.msra.mxu0 %v1975
      %1979 = vmatprep.subr.bf16.mxu0 0
      %1980 = vmatpush1.bf16.msra.mxu0 0
      %1981 = vmatprep.subr.bf16.mxu0 0
      %1982 = vmatpush1.bf16.msra.mxu0 0
      %1983 = vmatprep.subr.bf16.mxu0 0
      %1984 = vmatpush1.bf16.msra.mxu0 0
      %1985 = vmatprep.subr.bf16.mxu0 0
      %1986 = vmatpush1.bf16.msra.mxu0 0
      %1987 = vmatprep.subr.bf16.mxu0 0
      %1988 = vmatpush1.bf16.msra.mxu0 0
      %1989 = vmatprep.subr.bf16.mxu0 0
      %1990 = vmatpush1.bf16.msra.mxu0 0
      %1991 = vmatprep.subr.bf16.mxu0 0
      %1992 = vmatpush1.bf16.msra.mxu0 0
      %1993 = vmatprep.subr.bf16.mxu0 0
      %1994 = vmatpush1.bf16.msra.mxu0 0
      %1995 = vmatprep.subr.bf16.mxu0 0
      %1996 = vmatpush1.bf16.msra.mxu0 0
      %1997 = vmatprep.subr.bf16.mxu0 0
      %1998 = vmatpush1.bf16.msra.mxu0 0
      %1999 = vmatprep.subr.bf16.mxu0 0
      %2000 = vmatpush1.bf16.msra.mxu0 0
      %2001 = vmatprep.subr.bf16.mxu0 0
      %2002 = vmatpush1.bf16.msra.mxu0 0
      %2003 = vmatprep.subr.bf16.mxu0 0
      %2004 = vmatpush1.bf16.msra.mxu0 0
      %2005 = vmatprep.subr.bf16.mxu0 0
      %2006 = vmatpush1.bf16.msra.mxu0 0
      %2007 = vmatprep.subr.bf16.mxu0 0
      %2008 = vmatpush1.bf16.msra.mxu0 0
      %2009 = vmatprep.mubr.bf16.mxu0 0
      %2010 = vmatmul.mubr.bf16.gmra.mrb[0].mxu0 %v1972
      %v2011 = vpop.f32.mrb[0].mxu0
      %v2012 = vadd.f32 0.0, %v2011
      %v2013 = vpop.f32.mrb[0].mxu0
      %v2014 = vpop.f32.mrb[0].mxu0
      %v2015 = vpop.f32.mrb[0].mxu0
      %2016 = vdwg.mxu0
      %v2018 = vsel %vm1923, %v1917, 0
      %v2021 = vsel %vm1927, %v1921, 0
      %2023 = vmatprep.subr.bf16.mxu0 0
      %2024 = vmatpush1.bf16.msra.mxu0 %v2021
      %2025 = vmatprep.subr.bf16.mxu0 0
      %2026 = vmatpush1.bf16.msra.mxu0 0
      %2027 = vmatprep.subr.bf16.mxu0 0
      %2028 = vmatpush1.bf16.msra.mxu0 0
      %2029 = vmatprep.subr.bf16.mxu0 0
      %2030 = vmatpush1.bf16.msra.mxu0 0
      %2031 = vmatprep.subr.bf16.mxu0 0
      %2032 = vmatpush1.bf16.msra.mxu0 0
      %2033 = vmatprep.subr.bf16.mxu0 0
      %2034 = vmatpush1.bf16.msra.mxu0 0
      %2035 = vmatprep.subr.bf16.mxu0 0
      %2036 = vmatpush1.bf16.msra.mxu0 0
      %2037 = vmatprep.subr.bf16.mxu0 0
      %2038 = vmatpush1.bf16.msra.mxu0 0
      %2039 = vmatprep.subr.bf16.mxu0 0
      %2040 = vmatpush1.bf16.msra.mxu0 0
      %2041 = vmatprep.subr.bf16.mxu0 0
      %2042 = vmatpush1.bf16.msra.mxu0 0
      %2043 = vmatprep.subr.bf16.mxu0 0
      %2044 = vmatpush1.bf16.msra.mxu0 0
      %2045 = vmatprep.subr.bf16.mxu0 0
      %2046 = vmatpush1.bf16.msra.mxu0 0
      %2047 = vmatprep.subr.bf16.mxu0 0
      %2048 = vmatpush1.bf16.msra.mxu0 0
      %2049 = vmatprep.subr.bf16.mxu0 0
      %2050 = vmatpush1.bf16.msra.mxu0 0
      %2051 = vmatprep.subr.bf16.mxu0 0
      %2052 = vmatpush1.bf16.msra.mxu0 0
      %2053 = vmatprep.subr.bf16.mxu0 0
      %2054 = vmatpush1.bf16.msra.mxu0 0
      %2055 = vmatprep.mubr.bf16.mxu0 0
      %2056 = vmatmul.mubr.bf16.gmra.mrb[0].mxu0 %v2018
      %v2057 = vpop.f32.mrb[0].mxu0
      %v2058 = vadd.f32 0.0, %v2057
      %v2059 = vpop.f32.mrb[0].mxu0
      %v2060 = vpop.f32.mrb[0].mxu0
      %v2061 = vpop.f32.mrb[0].mxu0
      %2062 = vdwg.mxu0
      %v2064 = vsel %vm1923, %v1918, 0
      %v2067 = vsel %vm1927, %v1922, 0
      %2069 = vmatprep.subr.bf16.mxu0 0
      %2070 = vmatpush1.bf16.msra.mxu0 %v2067
      %2071 = vmatprep.subr.bf16.mxu0 0
      %2072 = vmatpush1.bf16.msra.mxu0 0
      %2073 = vmatprep.subr.bf16.mxu0 0
      %2074 = vmatpush1.bf16.msra.mxu0 0
      %2075 = vmatprep.subr.bf16.mxu0 0
      %2076 = vmatpush1.bf16.msra.mxu0 0
      %2077 = vmatprep.subr.bf16.mxu0 0
      %2078 = vmatpush1.bf16.msra.mxu0 0
      %2079 = vmatprep.subr.bf16.mxu0 0
      %2080 = vmatpush1.bf16.msra.mxu0 0
      %2081 = vmatprep.subr.bf16.mxu0 0
      %2082 = vmatpush1.bf16.msra.mxu0 0
      %2083 = vmatprep.subr.bf16.mxu0 0
      %2084 = vmatpush1.bf16.msra.mxu0 0
      %2085 = vmatprep.subr.bf16.mxu0 0
      %2086 = vmatpush1.bf16.msra.mxu0 0
      %2087 = vmatprep.subr.bf16.mxu0 0
      %2088 = vmatpush1.bf16.msra.mxu0 0
      %2089 = vmatprep.subr.bf16.mxu0 0
      %2090 = vmatpush1.bf16.msra.mxu0 0
      %2091 = vmatprep.subr.bf16.mxu0 0
      %2092 = vmatpush1.bf16.msra.mxu0 0
      %2093 = vmatprep.subr.bf16.mxu0 0
      %2094 = vmatpush1.bf16.msra.mxu0 0
      %2095 = vmatprep.subr.bf16.mxu0 0
      %2096 = vmatpush1.bf16.msra.mxu0 0
      %2097 = vmatprep.subr.bf16.mxu0 0
      %2098 = vmatpush1.bf16.msra.mxu0 0
      %2099 = vmatprep.subr.bf16.mxu0 0
      %2100 = vmatpush1.bf16.msra.mxu0 0
      %2101 = vmatprep.mubr.bf16.mxu0 0
      %2102 = vmatmul.mubr.bf16.gmra.mrb[0].mxu0 %v2064
      %v2103 = vpop.f32.mrb[0].mxu0
      %v2104 = vadd.f32 0.0, %v2103
      %v2105 = vpop.f32.mrb[0].mxu0
      %v2106 = vpop.f32.mrb[0].mxu0
      %v2107 = vpop.f32.mrb[0].mxu0
      %2108 = vdwg.mxu0
      %v2109 = vpack.c.bf16 %v1966, %v1966
      %v2110 = vpack.c.bf16 %v2012, %v2012
      %v2111 = vpack.c.bf16 %v2058, %v2058
      %v2112 = vpack.c.bf16 %v2104, %v2104
      %v2114 = vsel %vm1681, %v2109, 0
      %v2117 = vsel %vm831, %v1123, 0
      %2119 = vmatprep.subr.bf16.mxu0 0
      %2120 = vmatpush1.bf16.msra.mxu0 %v2117
      %2121 = vmatprep.subr.bf16.mxu0 0
      %2122 = vmatpush1.bf16.msra.mxu0 0
      %2123 = vmatprep.subr.bf16.mxu0 0
      %2124 = vmatpush1.bf16.msra.mxu0 0
      %2125 = vmatprep.subr.bf16.mxu0 0
      %2126 = vmatpush1.bf16.msra.mxu0 0
      %2127 = vmatprep.subr.bf16.mxu0 0
      %2128 = vmatpush1.bf16.msra.mxu0 0
      %2129 = vmatprep.subr.bf16.mxu0 0
      %2130 = vmatpush1.bf16.msra.mxu0 0
      %2131 = vmatprep.subr.bf16.mxu0 0
      %2132 = vmatpush1.bf16.msra.mxu0 0
      %2133 = vmatprep.subr.bf16.mxu0 0
      %2134 = vmatpush1.bf16.msra.mxu0 0
      %2135 = vmatprep.subr.bf16.mxu0 0
      %2136 = vmatpush1.bf16.msra.mxu0 0
      %2137 = vmatprep.subr.bf16.mxu0 0
      %2138 = vmatpush1.bf16.msra.mxu0 0
      %2139 = vmatprep.subr.bf16.mxu0 0
      %2140 = vmatpush1.bf16.msra.mxu0 0
      %2141 = vmatprep.subr.bf16.mxu0 0
      %2142 = vmatpush1.bf16.msra.mxu0 0
      %2143 = vmatprep.subr.bf16.mxu0 0
      %2144 = vmatpush1.bf16.msra.mxu0 0
      %2145 = vmatprep.subr.bf16.mxu0 0
      %2146 = vmatpush1.bf16.msra.mxu0 0
      %2147 = vmatprep.subr.bf16.mxu0 0
      %2148 = vmatpush1.bf16.msra.mxu0 0
      %2149 = vmatprep.subr.bf16.mxu0 0
      %2150 = vmatpush1.bf16.msra.mxu0 0
      %2151 = vmatprep.mubr.bf16.mxu0 0
      %2152 = vmatmul.mubr.bf16.gmra.mrb[0].mxu0 %v2114
      %v2153 = vpop.f32.mrb[0].mxu0
      %v2154 = vadd.f32 0.0, %v2153
      %v2155 = vpop.f32.mrb[0].mxu0
      %v2156 = vpop.f32.mrb[0].mxu0
      %v2157 = vpop.f32.mrb[0].mxu0
      %2158 = vdwg.mxu0
      %v2160 = vsel %vm1681, %v2110, 0
      %v2163 = vsel %vm831, %v1124, 0
      %2165 = vmatprep.subr.bf16.mxu0 0
      %2166 = vmatpush1.bf16.msra.mxu0 %v2163
      %2167 = vmatprep.subr.bf16.mxu0 0
      %2168 = vmatpush1.bf16.msra.mxu0 0
      %2169 = vmatprep.subr.bf16.mxu0 0
      %2170 = vmatpush1.bf16.msra.mxu0 0
      %2171 = vmatprep.subr.bf16.mxu0 0
      %2172 = vmatpush1.bf16.msra.mxu0 0
      %2173 = vmatprep.subr.bf16.mxu0 0
      %2174 = vmatpush1.bf16.msra.mxu0 0
      %2175 = vmatprep.subr.bf16.mxu0 0
      %2176 = vmatpush1.bf16.msra.mxu0 0
      %2177 = vmatprep.subr.bf16.mxu0 0
      %2178 = vmatpush1.bf16.msra.mxu0 0
      %2179 = vmatprep.subr.bf16.mxu0 0
      %2180 = vmatpush1.bf16.msra.mxu0 0
      %2181 = vmatprep.subr.bf16.mxu0 0
      %2182 = vmatpush1.bf16.msra.mxu0 0
      %2183 = vmatprep.subr.bf16.mxu0 0
      %2184 = vmatpush1.bf16.msra.mxu0 0
      %2185 = vmatprep.subr.bf16.mxu0 0
      %2186 = vmatpush1.bf16.msra.mxu0 0
      %2187 = vmatprep.subr.bf16.mxu0 0
      %2188 = vmatpush1.bf16.msra.mxu0 0
      %2189 = vmatprep.subr.bf16.mxu0 0
      %2190 = vmatpush1.bf16.msra.mxu0 0
      %2191 = vmatprep.subr.bf16.mxu0 0
      %2192 = vmatpush1.bf16.msra.mxu0 0
      %2193 = vmatprep.subr.bf16.mxu0 0
      %2194 = vmatpush1.bf16.msra.mxu0 0
      %2195 = vmatprep.subr.bf16.mxu0 0
      %2196 = vmatpush1.bf16.msra.mxu0 0
      %2197 = vmatprep.mubr.bf16.mxu0 0
      %2198 = vmatmul.mubr.bf16.gmra.mrb[0].mxu0 %v2160
      %v2199 = vpop.f32.mrb[0].mxu0
      %v2200 = vadd.f32 0.0, %v2199
      %v2201 = vpop.f32.mrb[0].mxu0
      %v2202 = vpop.f32.mrb[0].mxu0
      %v2203 = vpop.f32.mrb[0].mxu0
      %2204 = vdwg.mxu0
      %v2206 = vsel %vm1681, %v2111, 0
      %v2209 = vsel %vm831, %v1125, 0
      %2211 = vmatprep.subr.bf16.mxu0 0
      %2212 = vmatpush1.bf16.msra.mxu0 %v2209
      %2213 = vmatprep.subr.bf16.mxu0 0
      %2214 = vmatpush1.bf16.msra.mxu0 0
      %2215 = vmatprep.subr.bf16.mxu0 0
      %2216 = vmatpush1.bf16.msra.mxu0 0
      %2217 = vmatprep.subr.bf16.mxu0 0
      %2218 = vmatpush1.bf16.msra.mxu0 0
      %2219 = vmatprep.subr.bf16.mxu0 0
      %2220 = vmatpush1.bf16.msra.mxu0 0
      %2221 = vmatprep.subr.bf16.mxu0 0
      %2222 = vmatpush1.bf16.msra.mxu0 0
      %2223 = vmatprep.subr.bf16.mxu0 0
      %2224 = vmatpush1.bf16.msra.mxu0 0
      %2225 = vmatprep.subr.bf16.mxu0 0
      %2226 = vmatpush1.bf16.msra.mxu0 0
      %2227 = vmatprep.subr.bf16.mxu0 0
      %2228 = vmatpush1.bf16.msra.mxu0 0
      %2229 = vmatprep.subr.bf16.mxu0 0
      %2230 = vmatpush1.bf16.msra.mxu0 0
      %2231 = vmatprep.subr.bf16.mxu0 0
      %2232 = vmatpush1.bf16.msra.mxu0 0
      %2233 = vmatprep.subr.bf16.mxu0 0
      %2234 = vmatpush1.bf16.msra.mxu0 0
      %2235 = vmatprep.subr.bf16.mxu0 0
      %2236 = vmatpush1.bf16.msra.mxu0 0
      %2237 = vmatprep.subr.bf16.mxu0 0
      %2238 = vmatpush1.bf16.msra.mxu0 0
      %2239 = vmatprep.subr.bf16.mxu0 0
      %2240 = vmatpush1.bf16.msra.mxu0 0
      %2241 = vmatprep.subr.bf16.mxu0 0
      %2242 = vmatpush1.bf16.msra.mxu0 0
      %2243 = vmatprep.mubr.bf16.mxu0 0
      %2244 = vmatmul.mubr.bf16.gmra.mrb[0].mxu0 %v2206
      %v2245 = vpop.f32.mrb[0].mxu0
      %v2246 = vadd.f32 0.0, %v2245
      %v2247 = vpop.f32.mrb[0].mxu0
      %v2248 = vpop.f32.mrb[0].mxu0
      %v2249 = vpop.f32.mrb[0].mxu0
      %2250 = vdwg.mxu0
      %v2252 = vsel %vm1681, %v2112, 0
      %v2255 = vsel %vm831, %v1126, 0
      %2257 = vmatprep.subr.bf16.mxu0 0
      %2258 = vmatpush1.bf16.msra.mxu0 %v2255
      %2259 = vmatprep.subr.bf16.mxu0 0
      %2260 = vmatpush1.bf16.msra.mxu0 0
      %2261 = vmatprep.subr.bf16.mxu0 0
      %2262 = vmatpush1.bf16.msra.mxu0 0
      %2263 = vmatprep.subr.bf16.mxu0 0
      %2264 = vmatpush1.bf16.msra.mxu0 0
      %2265 = vmatprep.subr.bf16.mxu0 0
      %2266 = vmatpush1.bf16.msra.mxu0 0
      %2267 = vmatprep.subr.bf16.mxu0 0
      %2268 = vmatpush1.bf16.msra.mxu0 0
      %2269 = vmatprep.subr.bf16.mxu0 0
      %2270 = vmatpush1.bf16.msra.mxu0 0
      %2271 = vmatprep.subr.bf16.mxu0 0
      %2272 = vmatpush1.bf16.msra.mxu0 0
      %2273 = vmatprep.subr.bf16.mxu0 0
      %2274 = vmatpush1.bf16.msra.mxu0 0
      %2275 = vmatprep.subr.bf16.mxu0 0
      %2276 = vmatpush1.bf16.msra.mxu0 0
      %2277 = vmatprep.subr.bf16.mxu0 0
      %2278 = vmatpush1.bf16.msra.mxu0 0
      %2279 = vmatprep.subr.bf16.mxu0 0
      %2280 = vmatpush1.bf16.msra.mxu0 0
      %2281 = vmatprep.subr.bf16.mxu0 0
      %2282 = vmatpush1.bf16.msra.mxu0 0
      %2283 = vmatprep.subr.bf16.mxu0 0
      %2284 = vmatpush1.bf16.msra.mxu0 0
      %2285 = vmatprep.subr.bf16.mxu0 0
      %2286 = vmatpush1.bf16.msra.mxu0 0
      %2287 = vmatprep.subr.bf16.mxu0 0
      %2288 = vmatpush1.bf16.msra.mxu0 0
      %2289 = vmatprep.mubr.bf16.mxu0 0
      %2290 = vmatmul.mubr.bf16.gmra.mrb[0].mxu0 %v2252
      %v2291 = vpop.f32.mrb[0].mxu0
      %v2292 = vadd.f32 0.0, %v2291
      %v2293 = vpop.f32.mrb[0].mxu0
      %v2294 = vpop.f32.mrb[0].mxu0
      %v2295 = vpop.f32.mrb[0].mxu0
      %2296 = vdwg.mxu0
      %v2297 = vsel %vm831, %v2154, 0.0
      %v2298 = vsel %vm831, %v2200, 0.0
      %v2299 = vadd.f32 %v2297, %v2298
      %v2300 = vsel %vm831, %v2246, 0.0
      %v2301 = vadd.f32 %v2299, %v2300
      %v2302 = vsel %vm831, %v2292, 0.0
      %v2303 = vadd.f32 %v2301, %v2302
      %v2305 = vlaneseq
      %v2306 = vshrl.u32 %v2305, 7
      %v2307 = vsub.s32 0, %v2306
      %v2308 = vrot.slane %v1127, %v2307
      %v2310 = vadd.f32 %v2303, %v2308
      %v2311 = vadd.f32 %v1108, %v2310
      %v2312 = vsel %vm831, %v2311, 0.0
      %2313 = vadd.xlane.f32.xlu0 %v2312
      %v2314 = vpop.xlane.xlu0 %2313
      %v2315 = vmul.f32 %v2314, 0.03125
      %v2316 = vsub.f32 %v2311, %v2315
      %v2317 = vsel %vm1083, %v2316, 0.0
      %v2318 = vmul.f32 %v2317, %v2317
      %v2319 = vsel %vm831, %v2318, 0.0
      %2320 = vadd.xlane.f32.xlu0 %v2319
      %v2321 = vpop.xlane.xlu0 %2320
      %v2322 = vmul.f32 %v2321, 0.03125
      %v2323 = vadd.f32 %v2322, 1e-05
      %v2324 = vrsqrt.pop %v2323
      %v2325 = vmul.f32 %v2317, %v2324
      %v2327 = vlaneseq
      %v2328 = vshrl.u32 %v2327, 7
      %v2329 = vsub.s32 0, %v2328
      %v2330 = vrot.slane %v1128, %v2329
      %v2332 = vmul.f32 %v2325, %v2330
      %v2334 = vlaneseq
      %v2335 = vshrl.u32 %v2334, 7
      %v2336 = vsub.s32 0, %v2335
      %v2337 = vrot.slane %v1129, %v2336
      %v2339 = vadd.f32 %v2332, %v2337
      %v2340 = vpack.c.bf16 %v2339, %v2339
      %v2342 = vlaneseq
      %v2343 = vshrl.u32 %v2342, 7
      %v2344 = vsub.s32 0, %v2343
      %v2345 = vrot.slane %v1146, %v2344
      %v2363 = vunpack.c.l.b16 %v1130
      %v2364 = vunpack.c.l.b16 %v1131
      %v2365 = vunpack.c.l.b16 %v1132
      %v2366 = vunpack.c.l.b16 %v1133
      %v2367 = vunpack.c.l.b16 %v1134
      %v2368 = vunpack.c.l.b16 %v1135
      %v2369 = vunpack.c.l.b16 %v1136
      %v2370 = vunpack.c.l.b16 %v1137
      %v2371 = vunpack.c.l.b16 %v1138
      %v2372 = vunpack.c.l.b16 %v1139
      %v2373 = vunpack.c.l.b16 %v1140
      %v2374 = vunpack.c.l.b16 %v1141
      %v2375 = vunpack.c.l.b16 %v1142
      %v2376 = vunpack.c.l.b16 %v1143
      %v2377 = vunpack.c.l.b16 %v1144
      %v2378 = vunpack.c.l.b16 %v1145
      %v2379 = vpack.c.b16 %v2364, %v2363
      %v2380 = vpack.c.b16 %v2366, %v2365
      %v2381 = vpack.c.b16 %v2368, %v2367
      %v2382 = vpack.c.b16 %v2370, %v2369
      %v2383 = vpack.c.b16 %v2372, %v2371
      %v2384 = vpack.c.b16 %v2374, %v2373
      %v2385 = vpack.c.b16 %v2376, %v2375
      %v2386 = vpack.c.b16 %v2378, %v2377
      %2395 = vmatprep.subr.bf16.mxu0 0
      %2396 = vmatpush1.bf16.msra.mxu0 %v2379
      %2397 = vmatprep.subr.bf16.mxu0 0
      %2398 = vmatpush1.bf16.msra.mxu0 %v2380
      %2399 = vmatprep.subr.bf16.mxu0 0
      %2400 = vmatpush1.bf16.msra.mxu0 %v2381
      %2401 = vmatprep.subr.bf16.mxu0 0
      %2402 = vmatpush1.bf16.msra.mxu0 %v2382
      %2403 = vmatprep.subr.bf16.mxu0 0
      %2404 = vmatpush1.bf16.msra.mxu0 %v2383
      %2405 = vmatprep.subr.bf16.mxu0 0
      %2406 = vmatpush1.bf16.msra.mxu0 %v2384
      %2407 = vmatprep.subr.bf16.mxu0 0
      %2408 = vmatpush1.bf16.msra.mxu0 %v2385
      %2409 = vmatprep.subr.bf16.mxu0 0
      %2410 = vmatpush1.bf16.msra.mxu0 %v2386
      %2411 = vmatprep.subr.bf16.mxu0 0
      %2412 = vmatpush1.bf16.msra.mxu0 0
      %2413 = vmatprep.subr.bf16.mxu0 0
      %2414 = vmatpush1.bf16.msra.mxu0 0
      %2415 = vmatprep.subr.bf16.mxu0 0
      %2416 = vmatpush1.bf16.msra.mxu0 0
      %2417 = vmatprep.subr.bf16.mxu0 0
      %2418 = vmatpush1.bf16.msra.mxu0 0
      %2419 = vmatprep.subr.bf16.mxu0 0
      %2420 = vmatpush1.bf16.msra.mxu0 0
      %2421 = vmatprep.subr.bf16.mxu0 0
      %2422 = vmatpush1.bf16.msra.mxu0 0
      %2423 = vmatprep.subr.bf16.mxu0 0
      %2424 = vmatpush1.bf16.msra.mxu0 0
      %2425 = vmatprep.subr.bf16.mxu0 0
      %2426 = vmatpush1.bf16.msra.mxu0 0
      %2427 = vmatprep.mubr.bf16.mxu0 0
      %2428 = vmatmul.mubr.bf16.gmra.mrb[0].mxu0 %v2340
      %v2429 = vpop.f32.mrb[0].mxu0
      %v2430 = vadd.f32 %v2345, %v2429
      %v2431 = vpop.f32.mrb[0].mxu0
      %v2432 = vpop.f32.mrb[0].mxu0
      %v2433 = vpop.f32.mrb[0].mxu0
      %2434 = vdwg.mxu0
      %v2435 = vmul.f32 %v2430, %v2430
      %v2436 = vmul.f32 %v2430, %v2435
      %v2437 = vmul.f32 %v2436, 0.044715
      %v2438 = vadd.f32 %v2430, %v2437
      %v2439 = vmul.f32 %v2438, 0.7978846
      %v2440 = vtanh.pop %v2439
      %v2441 = vadd.f32 %v2440, 1.0
      %v2442 = vmul.f32 %v2441, 0.5
      %v2443 = vmul.f32 %v2430, %v2442
      %v2444 = vpack.c.bf16 %v2443, %v2443
      %v2446 = vlaneseq
      %v2447 = vshrl.u32 %v2446, 7
      %v2448 = vsub.s32 0, %v2447
      %v2449 = vrot.slane %v1163, %v2448
      %v2467 = vunpack.c.l.b16 %v1147
      %v2468 = vunpack.c.l.b16 %v1148
      %v2469 = vunpack.c.l.b16 %v1149
      %v2470 = vunpack.c.l.b16 %v1150
      %v2471 = vunpack.c.l.b16 %v1151
      %v2472 = vunpack.c.l.b16 %v1152
      %v2473 = vunpack.c.l.b16 %v1153
      %v2474 = vunpack.c.l.b16 %v1154
      %v2475 = vunpack.c.l.b16 %v1155
      %v2476 = vunpack.c.l.b16 %v1156
      %v2477 = vunpack.c.l.b16 %v1157
      %v2478 = vunpack.c.l.b16 %v1158
      %v2479 = vunpack.c.l.b16 %v1159
      %v2480 = vunpack.c.l.b16 %v1160
      %v2481 = vunpack.c.l.b16 %v1161
      %v2482 = vunpack.c.l.b16 %v1162
      %v2483 = vpack.c.b16 %v2468, %v2467
      %v2484 = vpack.c.b16 %v2470, %v2469
      %v2485 = vpack.c.b16 %v2472, %v2471
      %v2486 = vpack.c.b16 %v2474, %v2473
      %v2487 = vpack.c.b16 %v2476, %v2475
      %v2488 = vpack.c.b16 %v2478, %v2477
      %v2489 = vpack.c.b16 %v2480, %v2479
      %v2490 = vpack.c.b16 %v2482, %v2481
      %2499 = vmatprep.subr.bf16.mxu0 0
      %2500 = vmatpush1.bf16.msra.mxu0 %v2483
      %2501 = vmatprep.subr.bf16.mxu0 0
      %2502 = vmatpush1.bf16.msra.mxu0 %v2484
      %2503 = vmatprep.subr.bf16.mxu0 0
      %2504 = vmatpush1.bf16.msra.mxu0 %v2485
      %2505 = vmatprep.subr.bf16.mxu0 0
      %2506 = vmatpush1.bf16.msra.mxu0 %v2486
      %2507 = vmatprep.subr.bf16.mxu0 0
      %2508 = vmatpush1.bf16.msra.mxu0 %v2487
      %2509 = vmatprep.subr.bf16.mxu0 0
      %2510 = vmatpush1.bf16.msra.mxu0 %v2488
      %2511 = vmatprep.subr.bf16.mxu0 0
      %2512 = vmatpush1.bf16.msra.mxu0 %v2489
      %2513 = vmatprep.subr.bf16.mxu0 0
      %2514 = vmatpush1.bf16.msra.mxu0 %v2490
      %2515 = vmatprep.subr.bf16.mxu0 0
      %2516 = vmatpush1.bf16.msra.mxu0 0
      %2517 = vmatprep.subr.bf16.mxu0 0
      %2518 = vmatpush1.bf16.msra.mxu0 0
      %2519 = vmatprep.subr.bf16.mxu0 0
      %2520 = vmatpush1.bf16.msra.mxu0 0
      %2521 = vmatprep.subr.bf16.mxu0 0
      %2522 = vmatpush1.bf16.msra.mxu0 0
      %2523 = vmatprep.subr.bf16.mxu0 0
      %2524 = vmatpush1.bf16.msra.mxu0 0
      %2525 = vmatprep.subr.bf16.mxu0 0
      %2526 = vmatpush1.bf16.msra.mxu0 0
      %2527 = vmatprep.subr.bf16.mxu0 0
      %2528 = vmatpush1.bf16.msra.mxu0 0
      %2529 = vmatprep.subr.bf16.mxu0 0
      %2530 = vmatpush1.bf16.msra.mxu0 0
      %2531 = vmatprep.mubr.bf16.mxu0 0
      %2532 = vmatmul.mubr.bf16.gmra.mrb[0].mxu0 %v2444
      %v2533 = vpop.f32.mrb[0].mxu0
      %v2534 = vadd.f32 %v2449, %v2533
      %v2535 = vpop.f32.mrb[0].mxu0
      %v2536 = vpop.f32.mrb[0].mxu0
      %v2537 = vpop.f32.mrb[0].mxu0
      %2538 = vdwg.mxu0
      %v2539 = vadd.f32 %v2311, %v2534
      %v2540 = vld [vmem:[%s22] sm:$0x1]
      %v2541 = vld [vmem:[%s23] sm:$0x1]
      %v2542 = vsel %vm831, %v2539, 0.0
      %2543 = vadd.xlane.f32.xlu0 %v2542
      %v2544 = vpop.xlane.xlu0 %2543
      %v2545 = vmul.f32 %v2544, 0.03125
      %v2546 = vsub.f32 %v2539, %v2545
      %v2547 = vsel %vm1083, %v2546, 0.0
      %v2548 = vmul.f32 %v2547, %v2547
      %v2549 = vsel %vm831, %v2548, 0.0
      %2550 = vadd.xlane.f32.xlu0 %v2549
      %v2551 = vpop.xlane.xlu0 %2550
      %v2552 = vmul.f32 %v2551, 0.03125
      %v2553 = vadd.f32 %v2552, 1e-05
      %v2554 = vrsqrt.pop %v2553
      %v2555 = vmul.f32 %v2547, %v2554
      %v2557 = vlaneseq
      %v2558 = vshrl.u32 %v2557, 7
      %v2559 = vsub.s32 0, %v2558
      %v2560 = vrot.slane %v2540, %v2559
      %v2562 = vmul.f32 %v2555, %v2560
      %v2564 = vlaneseq
      %v2565 = vshrl.u32 %v2564, 7
      %v2566 = vsub.s32 0, %v2565
      %v2567 = vrot.slane %v2541, %v2566
      %v2569 = vadd.f32 %v2562, %v2567
      %v2570 = vld [vmem:[%s24] sm:$0xf]
      %v2571 = vld [vmem:[%s24 + $0x4] sm:$0xf]
      %v2572 = vld [vmem:[%s24 + $0x8] sm:$0xf]
      %v2573 = vld [vmem:[%s24 + $0xc] sm:$0xf]
      %v2574 = vld [vmem:[%s24 + $0x10] sm:$0xf]
      %v2575 = vld [vmem:[%s24 + $0x14] sm:$0xf]
      %v2576 = vld [vmem:[%s24 + $0x18] sm:$0xf]
      %v2577 = vld [vmem:[%s24 + $0x1c] sm:$0xf]
      %v2578 = vld [vmem:[%s24 + $0x20] sm:$0xf]
      %v2579 = vld [vmem:[%s24 + $0x24] sm:$0xf]
      %v2580 = vld [vmem:[%s24 + $0x28] sm:$0xf]
      %v2581 = vld [vmem:[%s24 + $0x2c] sm:$0xf]
      %v2582 = vld [vmem:[%s24 + $0x30] sm:$0xf]
      %v2583 = vld [vmem:[%s24 + $0x34] sm:$0xf]
      %v2584 = vld [vmem:[%s24 + $0x38] sm:$0xf]
      %v2585 = vld [vmem:[%s24 + $0x3c] sm:$0xf]
      %v2586 = vpack.c.bf16 %v2569, %v2569
      %v2587 = vld [vmem:[%s25] sm:$0x1]
      %v2589 = vlaneseq
      %v2590 = vshrl.u32 %v2589, 7
      %v2591 = vsub.s32 0, %v2590
      %v2592 = vrot.slane %v2587, %v2591
      %v2610 = vunpack.c.l.b16 %v2570
      %v2611 = vunpack.c.l.b16 %v2571
      %v2612 = vunpack.c.l.b16 %v2572
      %v2613 = vunpack.c.l.b16 %v2573
      %v2614 = vunpack.c.l.b16 %v2574
      %v2615 = vunpack.c.l.b16 %v2575
      %v2616 = vunpack.c.l.b16 %v2576
      %v2617 = vunpack.c.l.b16 %v2577
      %v2618 = vunpack.c.l.b16 %v2578
      %v2619 = vunpack.c.l.b16 %v2579
      %v2620 = vunpack.c.l.b16 %v2580
      %v2621 = vunpack.c.l.b16 %v2581
      %v2622 = vunpack.c.l.b16 %v2582
      %v2623 = vunpack.c.l.b16 %v2583
      %v2624 = vunpack.c.l.b16 %v2584
      %v2625 = vunpack.c.l.b16 %v2585
      %v2626 = vpack.c.b16 %v2611, %v2610
      %v2627 = vpack.c.b16 %v2613, %v2612
      %v2628 = vpack.c.b16 %v2615, %v2614
      %v2629 = vpack.c.b16 %v2617, %v2616
      %v2630 = vpack.c.b16 %v2619, %v2618
      %v2631 = vpack.c.b16 %v2621, %v2620
      %v2632 = vpack.c.b16 %v2623, %v2622
      %v2633 = vpack.c.b16 %v2625, %v2624
      %2642 = vmatprep.subr.bf16.mxu0 0
      %2643 = vmatpush1.bf16.msra.mxu0 %v2626
      %2644 = vmatprep.subr.bf16.mxu0 0
      %2645 = vmatpush1.bf16.msra.mxu0 %v2627
      %2646 = vmatprep.subr.bf16.mxu0 0
      %2647 = vmatpush1.bf16.msra.mxu0 %v2628
      %2648 = vmatprep.subr.bf16.mxu0 0
      %2649 = vmatpush1.bf16.msra.mxu0 %v2629
      %2650 = vmatprep.subr.bf16.mxu0 0
      %2651 = vmatpush1.bf16.msra.mxu0 %v2630
      %2652 = vmatprep.subr.bf16.mxu0 0
      %2653 = vmatpush1.bf16.msra.mxu0 %v2631
      %2654 = vmatprep.subr.bf16.mxu0 0
      %2655 = vmatpush1.bf16.msra.mxu0 %v2632
      %2656 = vmatprep.subr.bf16.mxu0 0
      %2657 = vmatpush1.bf16.msra.mxu0 %v2633
      %2658 = vmatprep.subr.bf16.mxu0 0
      %2659 = vmatpush1.bf16.msra.mxu0 0
      %2660 = vmatprep.subr.bf16.mxu0 0
      %2661 = vmatpush1.bf16.msra.mxu0 0
      %2662 = vmatprep.subr.bf16.mxu0 0
      %2663 = vmatpush1.bf16.msra.mxu0 0
      %2664 = vmatprep.subr.bf16.mxu0 0
      %2665 = vmatpush1.bf16.msra.mxu0 0
      %2666 = vmatprep.subr.bf16.mxu0 0
      %2667 = vmatpush1.bf16.msra.mxu0 0
      %2668 = vmatprep.subr.bf16.mxu0 0
      %2669 = vmatpush1.bf16.msra.mxu0 0
      %2670 = vmatprep.subr.bf16.mxu0 0
      %2671 = vmatpush1.bf16.msra.mxu0 0
      %2672 = vmatprep.subr.bf16.mxu0 0
      %2673 = vmatpush1.bf16.msra.mxu0 0
      %2674 = vmatprep.mubr.bf16.mxu0 0
      %2675 = vmatmul.mubr.bf16.gmra.mrb[0].mxu0 %v2586
      %v2676 = vpop.f32.mrb[0].mxu0
      %v2677 = vadd.f32 %v2592, %v2676
      %v2678 = vpop.f32.mrb[0].mxu0
      %v2679 = vpop.f32.mrb[0].mxu0
      %v2680 = vpop.f32.mrb[0].mxu0
      %2681 = vdwg.mxu0
      %v2682 = vld [vmem:[%s819] sm:$0xf]
      %v2683 = vadd.f32 %v2677, %v2682
      %v2684 = vpack.c.bf16 %v2683, %v2683
      %2685 = vst [vmem:[%s823] sm:$0x3] %v2684
      %p2686 = scmp.lt.s32.totalorder %s37, 1
      %s2687 = scalar_select %p2686, %s37, 1
      %s2688 = smul.addr %s2687, 2
      %s2689 = scalar_lea.vmem %s26, %s2688
      // Predicated region
      $region125: #{mae_forward.4} parent=123 // pred_check
        %p2690 = pneg %p616
      $region126: #{mae_forward.4} parent=123 // pred_check_branch
        %2692 = sbr.rel (%p2690) target = $region128
      $region127: #{mae_forward.4} parent=123 // pred_region
        _
      $region128: #{mae_forward.4} parent=123 // pred_fallthru
        _
    $region124: #{mae_forward.4} parent=5 // pred_fallthru
      _
    %p2693 = scmp.le.s32.totalorder 2, %s32
    // Predicated region
    $region129: #{mae_forward.4} parent=5 // pred_check
      %p2694 = pneg %p2693
    $region130: #{mae_forward.4} parent=5 // pred_check_branch
      %2696 = sbr.rel (%p2694) target = $region132
    $region131: #{mae_forward.4} parent=5 // pred_region
      %s2697 = ssub.s32 %s32, 2
      // Predicated region
      $region133: #{mae_forward.4} parent=131 // pred_check
        %p2698 = pneg %p622
      $region134: #{mae_forward.4} parent=131 // pred_check_branch
        %2700 = sbr.rel (%p2698) target = $region136
      $region135: #{mae_forward.4} parent=131 // pred_region
        %p2701 = scmp.lt.s32.totalorder %s38, 1
        %s2702 = scalar_select %p2701, %s38, 1
        %s2703 = smul.addr %s2702, 2
        %s2704 = scalar_lea.vmem %s26, %s2703
      $region136: #{mae_forward.4} parent=131 // pred_fallthru
        _
    $region132: #{mae_forward.4} parent=5 // pred_fallthru
      _
  $region6: #{mae_forward.4} parent=0 // loop_footer
    %s36 = sadd.s32 1, %s32
  $region7: #{mae_forward.4} parent=0 // loop_footer_branch
    %31 = sbr.rel target = $region3
  $region8: #{mae_forward.4} parent=0 // loop_exit
    _

// kernel: mae_forward.5
$region0: #{mae_forward.5}
  #allocation0 [shape = 'u32[]', space=smem, size = 0x4, offset = 0x4, fixed_abs, tag = 'smem constant byte address 0x4 - core index']
  #allocation1 [shape = 'u32[144,128]{1,0:T(1,128)}', space=vmem, size = 0x12000, scoped, tag = 'internal scratch']
  %s0 = inlined_call_operand.vmem [shape: bf16[2,16,128], index: 0, kind: input, shape index: {}]
  %s1 = inlined_call_operand.vmem [shape: f32[1,128], index: 1, kind: input, shape index: {}]
  %s2 = inlined_call_operand.vmem [shape: f32[1,128], index: 2, kind: input, shape index: {}]
  %s3 = inlined_call_operand.vmem [shape: bf16[4,16,128], index: 3, kind: input, shape index: {}]
  %s4 = inlined_call_operand.vmem [shape: bf16[4,16,128], index: 4, kind: input, shape index: {}]
  %s5 = inlined_call_operand.vmem [shape: bf16[4,16,128], index: 5, kind: input, shape index: {}]
  %s6 = inlined_call_operand.vmem [shape: bf16[4,16,128], index: 6, kind: input, shape index: {}]
  %s7 = inlined_call_operand.vmem [shape: f32[1,128], index: 7, kind: input, shape index: {}]
  %s8 = inlined_call_operand.vmem [shape: f32[1,128], index: 8, kind: input, shape index: {}]
  %s9 = inlined_call_operand.vmem [shape: f32[1,128], index: 9, kind: input, shape index: {}]
  %s10 = inlined_call_operand.vmem [shape: bf16[128,256], index: 10, kind: input, shape index: {}]
  %s11 = inlined_call_operand.vmem [shape: f32[1,256], index: 11, kind: input, shape index: {}]
  %s12 = inlined_call_operand.vmem [shape: bf16[256,128], index: 12, kind: input, shape index: {}]
  %s13 = inlined_call_operand.vmem [shape: f32[1,128], index: 13, kind: input, shape index: {}]
  %s14 = inlined_call_operand.vmem [shape: f32[1,128], index: 14, kind: input, shape index: {}]
  %s15 = inlined_call_operand.vmem [shape: f32[1,128], index: 15, kind: input, shape index: {}]
  %s16 = inlined_call_operand.vmem [shape: bf16[128,256], index: 16, kind: input, shape index: {}]
  %s17 = inlined_call_operand.vmem [shape: f32[1,256], index: 17, kind: input, shape index: {}]
  %s18 = inlined_call_operand.vmem [shape: f32[2,16,256], index: 18, kind: output, shape index: {}]
  %s19 = sld [smem:[#allocation0]]
  $region105: #{mae_forward.5} parent=0
    _
  %s21 = ssub.s32 1, %s19
  %s22 = scalar_select 0, %s21, %s19
  loop: start=0, step=1, limit=4
  $region2: #{mae_forward.5} parent=0 // loop_pre_header
    _
  $region3: #{mae_forward.5} parent=0 // loop_header
    %s24 = sphi 0, %s28
    %p25 = scmp.ge.s32.totalorder %s24, 4
    %s34 = sphi 0, %s36
    %s37 = sphi 0, %s34
    %s38 = sphi 0, %s37
    %s54 = sphi 0, %s38
    %s58 = sphi 0, %s58
    %s60 = sphi 0, %s58
    %s61 = sphi 0, %s60
    %s75 = sphi 0, %s61
    %s79 = sphi 0, %s79
    %s81 = sphi 0, %s79
    %s82 = sphi 0, %s81
    %s96 = sphi 0, %s82
    %s100 = sphi 0, %s100
    %s102 = sphi 0, %s100
    %s103 = sphi 0, %s102
    %s117 = sphi 0, %s103
    %s121 = sphi 0, %s121
    %s123 = sphi 0, %s121
    %s124 = sphi 0, %s123
    %s138 = sphi 0, %s124
    %s142 = sphi 0, %s142
    %s144 = sphi 0, %s142
    %s145 = sphi 0, %s144
    %s159 = sphi 0, %s145
    %s163 = sphi 0, %s163
    %s165 = sphi 0, %s163
    %s166 = sphi 0, %s165
    %s180 = sphi 0, %s166
    %s184 = sphi 0, %s184
    %s186 = sphi 0, %s184
    %s187 = sphi 0, %s186
    %s201 = sphi 0, %s187
    %s205 = sphi 0, %s205
    %s207 = sphi 0, %s205
    %s208 = sphi 0, %s207
    %s222 = sphi 0, %s208
    %s226 = sphi 0, %s226
    %s228 = sphi 0, %s226
    %s229 = sphi 0, %s228
    %s243 = sphi 0, %s229
    %s247 = sphi 0, %s247
    %s249 = sphi 0, %s247
    %s250 = sphi 0, %s249
    %s264 = sphi 0, %s250
    %s268 = sphi 0, %s268
    %s270 = sphi 0, %s268
    %s271 = sphi 0, %s270
    %s285 = sphi 0, %s271
    %s289 = sphi 0, %s289
    %s291 = sphi 0, %s289
    %s292 = sphi 0, %s291
    %s306 = sphi 0, %s292
    %s310 = sphi 0, %s310
    %s312 = sphi 0, %s310
    %s313 = sphi 0, %s312
    %s327 = sphi 0, %s313
    %s331 = sphi 0, %s331
    %s333 = sphi 0, %s331
    %s334 = sphi 0, %s333
    %s348 = sphi 0, %s334
    %s352 = sphi 0, %s352
    %s354 = sphi 0, %s352
    %s355 = sphi 0, %s354
    %s369 = sphi 0, %s355
    %s373 = sphi 0, %s373
    %s375 = sphi 0, %s373
    %s376 = sphi 0, %s375
    %s390 = sphi 0, %s376
    %s394 = sphi 0, %s394
    %s396 = sphi 0, %s394
    %s397 = sphi 0, %s396
    %s411 = sphi 0, %s397
    %s417 = sphi 0, %s419
    %s420 = sphi 0, %s417
    %s421 = sphi 0, %s420
    %s437 = sphi 0, %s421
  $region4: #{mae_forward.5} parent=0 // loop_header_branch
    %27 = sbr.rel (%p25) target = $region8
  $region5: #{mae_forward.5} parent=0 // loop_body
    %s29 = ssub.s32 %s24, 1
    %s30 = ssub.s32 %s24, 2
    %s31 = sadd.s32 %s24, 1
    %s32 = ssub.s32 %s24, %s31
    %p33 = scmp.eq.s32.totalorder %s32, 0
    %s35 = sadd.s32 %s34, 1
    %s36 = scalar_select %p33, %s34, %s35
    %p39 = pneg %p33
    %p40 = scmp.eq.s32.totalorder %s24, 1
    %p41 = por %p39, %p40
    %p42 = scmp.ne.s32.totalorder %s34, %s37
    %p43 = scmp.eq.s32.totalorder %s24, 0
    %p44 = por %p42, %p43
    %p45 = scmp.ne.s32.totalorder %s34, %s37
    %p46 = scmp.eq.s32.totalorder %s29, 1
    %p47 = por %p45, %p46
    %p48 = scmp.ne.s32.totalorder %s37, %s38
    %p49 = scmp.eq.s32.totalorder %s29, 0
    %p50 = por %p48, %p49
    %p51 = scmp.ne.s32.totalorder %s37, %s38
    %p52 = scmp.eq.s32.totalorder %s30, 1
    %p53 = por %p51, %p52
    %p55 = scmp.ne.s32.totalorder %s38, %s54
    %p56 = scmp.eq.s32.totalorder %s30, 0
    %p57 = por %p55, %p56
    %s59 = sadd.s32 %s58, 1
    %p62 = scmp.eq.s32.totalorder %s24, 1
    %p63 = scmp.ne.s32.totalorder %s58, %s60
    %p64 = scmp.eq.s32.totalorder %s24, 0
    %p65 = por %p63, %p64
    %p66 = scmp.ne.s32.totalorder %s58, %s60
    %p67 = scmp.eq.s32.totalorder %s29, 1
    %p68 = por %p66, %p67
    %p69 = scmp.ne.s32.totalorder %s60, %s61
    %p70 = scmp.eq.s32.totalorder %s29, 0
    %p71 = por %p69, %p70
    %p72 = scmp.ne.s32.totalorder %s60, %s61
    %p73 = scmp.eq.s32.totalorder %s30, 1
    %p74 = por %p72, %p73
    %p76 = scmp.ne.s32.totalorder %s61, %s75
    %p77 = scmp.eq.s32.totalorder %s30, 0
    %p78 = por %p76, %p77
    %s80 = sadd.s32 %s79, 1
    %p83 = scmp.eq.s32.totalorder %s24, 1
    %p84 = scmp.ne.s32.totalorder %s79, %s81
    %p85 = scmp.eq.s32.totalorder %s24, 0
    %p86 = por %p84, %p85
    %p87 = scmp.ne.s32.totalorder %s79, %s81
    %p88 = scmp.eq.s32.totalorder %s29, 1
    %p89 = por %p87, %p88
    %p90 = scmp.ne.s32.totalorder %s81, %s82
    %p91 = scmp.eq.s32.totalorder %s29, 0
    %p92 = por %p90, %p91
    %p93 = scmp.ne.s32.totalorder %s81, %s82
    %p94 = scmp.eq.s32.totalorder %s30, 1
    %p95 = por %p93, %p94
    %p97 = scmp.ne.s32.totalorder %s82, %s96
    %p98 = scmp.eq.s32.totalorder %s30, 0
    %p99 = por %p97, %p98
    %s101 = sadd.s32 %s100, 1
    %p104 = scmp.eq.s32.totalorder %s24, 1
    %p105 = scmp.ne.s32.totalorder %s100, %s102
    %p106 = scmp.eq.s32.totalorder %s24, 0
    %p107 = por %p105, %p106
    %p108 = scmp.ne.s32.totalorder %s100, %s102
    %p109 = scmp.eq.s32.totalorder %s29, 1
    %p110 = por %p108, %p109
    %p111 = scmp.ne.s32.totalorder %s102, %s103
    %p112 = scmp.eq.s32.totalorder %s29, 0
    %p113 = por %p111, %p112
    %p114 = scmp.ne.s32.totalorder %s102, %s103
    %p115 = scmp.eq.s32.totalorder %s30, 1
    %p116 = por %p114, %p115
    %p118 = scmp.ne.s32.totalorder %s103, %s117
    %p119 = scmp.eq.s32.totalorder %s30, 0
    %p120 = por %p118, %p119
    %s122 = sadd.s32 %s121, 1
    %p125 = scmp.eq.s32.totalorder %s24, 1
    %p126 = scmp.ne.s32.totalorder %s121, %s123
    %p127 = scmp.eq.s32.totalorder %s24, 0
    %p128 = por %p126, %p127
    %p129 = scmp.ne.s32.totalorder %s121, %s123
    %p130 = scmp.eq.s32.totalorder %s29, 1
    %p131 = por %p129, %p130
    %p132 = scmp.ne.s32.totalorder %s123, %s124
    %p133 = scmp.eq.s32.totalorder %s29, 0
    %p134 = por %p132, %p133
    %p135 = scmp.ne.s32.totalorder %s123, %s124
    %p136 = scmp.eq.s32.totalorder %s30, 1
    %p137 = por %p135, %p136
    %p139 = scmp.ne.s32.totalorder %s124, %s138
    %p140 = scmp.eq.s32.totalorder %s30, 0
    %p141 = por %p139, %p140
    %s143 = sadd.s32 %s142, 1
    %p146 = scmp.eq.s32.totalorder %s24, 1
    %p147 = scmp.ne.s32.totalorder %s142, %s144
    %p148 = scmp.eq.s32.totalorder %s24, 0
    %p149 = por %p147, %p148
    %p150 = scmp.ne.s32.totalorder %s142, %s144
    %p151 = scmp.eq.s32.totalorder %s29, 1
    %p152 = por %p150, %p151
    %p153 = scmp.ne.s32.totalorder %s144, %s145
    %p154 = scmp.eq.s32.totalorder %s29, 0
    %p155 = por %p153, %p154
    %p156 = scmp.ne.s32.totalorder %s144, %s145
    %p157 = scmp.eq.s32.totalorder %s30, 1
    %p158 = por %p156, %p157
    %p160 = scmp.ne.s32.totalorder %s145, %s159
    %p161 = scmp.eq.s32.totalorder %s30, 0
    %p162 = por %p160, %p161
    %s164 = sadd.s32 %s163, 1
    %p167 = scmp.eq.s32.totalorder %s24, 1
    %p168 = scmp.ne.s32.totalorder %s163, %s165
    %p169 = scmp.eq.s32.totalorder %s24, 0
    %p170 = por %p168, %p169
    %p171 = scmp.ne.s32.totalorder %s163, %s165
    %p172 = scmp.eq.s32.totalorder %s29, 1
    %p173 = por %p171, %p172
    %p174 = scmp.ne.s32.totalorder %s165, %s166
    %p175 = scmp.eq.s32.totalorder %s29, 0
    %p176 = por %p174, %p175
    %p177 = scmp.ne.s32.totalorder %s165, %s166
    %p178 = scmp.eq.s32.totalorder %s30, 1
    %p179 = por %p177, %p178
    %p181 = scmp.ne.s32.totalorder %s166, %s180
    %p182 = scmp.eq.s32.totalorder %s30, 0
    %p183 = por %p181, %p182
    %s185 = sadd.s32 %s184, 1
    %p188 = scmp.eq.s32.totalorder %s24, 1
    %p189 = scmp.ne.s32.totalorder %s184, %s186
    %p190 = scmp.eq.s32.totalorder %s24, 0
    %p191 = por %p189, %p190
    %p192 = scmp.ne.s32.totalorder %s184, %s186
    %p193 = scmp.eq.s32.totalorder %s29, 1
    %p194 = por %p192, %p193
    %p195 = scmp.ne.s32.totalorder %s186, %s187
    %p196 = scmp.eq.s32.totalorder %s29, 0
    %p197 = por %p195, %p196
    %p198 = scmp.ne.s32.totalorder %s186, %s187
    %p199 = scmp.eq.s32.totalorder %s30, 1
    %p200 = por %p198, %p199
    %p202 = scmp.ne.s32.totalorder %s187, %s201
    %p203 = scmp.eq.s32.totalorder %s30, 0
    %p204 = por %p202, %p203
    %s206 = sadd.s32 %s205, 1
    %p209 = scmp.eq.s32.totalorder %s24, 1
    %p210 = scmp.ne.s32.totalorder %s205, %s207
    %p211 = scmp.eq.s32.totalorder %s24, 0
    %p212 = por %p210, %p211
    %p213 = scmp.ne.s32.totalorder %s205, %s207
    %p214 = scmp.eq.s32.totalorder %s29, 1
    %p215 = por %p213, %p214
    %p216 = scmp.ne.s32.totalorder %s207, %s208
    %p217 = scmp.eq.s32.totalorder %s29, 0
    %p218 = por %p216, %p217
    %p219 = scmp.ne.s32.totalorder %s207, %s208
    %p220 = scmp.eq.s32.totalorder %s30, 1
    %p221 = por %p219, %p220
    %p223 = scmp.ne.s32.totalorder %s208, %s222
    %p224 = scmp.eq.s32.totalorder %s30, 0
    %p225 = por %p223, %p224
    %s227 = sadd.s32 %s226, 1
    %p230 = scmp.eq.s32.totalorder %s24, 1
    %p231 = scmp.ne.s32.totalorder %s226, %s228
    %p232 = scmp.eq.s32.totalorder %s24, 0
    %p233 = por %p231, %p232
    %p234 = scmp.ne.s32.totalorder %s226, %s228
    %p235 = scmp.eq.s32.totalorder %s29, 1
    %p236 = por %p234, %p235
    %p237 = scmp.ne.s32.totalorder %s228, %s229
    %p238 = scmp.eq.s32.totalorder %s29, 0
    %p239 = por %p237, %p238
    %p240 = scmp.ne.s32.totalorder %s228, %s229
    %p241 = scmp.eq.s32.totalorder %s30, 1
    %p242 = por %p240, %p241
    %p244 = scmp.ne.s32.totalorder %s229, %s243
    %p245 = scmp.eq.s32.totalorder %s30, 0
    %p246 = por %p244, %p245
    %s248 = sadd.s32 %s247, 1
    %p251 = scmp.eq.s32.totalorder %s24, 1
    %p252 = scmp.ne.s32.totalorder %s247, %s249
    %p253 = scmp.eq.s32.totalorder %s24, 0
    %p254 = por %p252, %p253
    %p255 = scmp.ne.s32.totalorder %s247, %s249
    %p256 = scmp.eq.s32.totalorder %s29, 1
    %p257 = por %p255, %p256
    %p258 = scmp.ne.s32.totalorder %s249, %s250
    %p259 = scmp.eq.s32.totalorder %s29, 0
    %p260 = por %p258, %p259
    %p261 = scmp.ne.s32.totalorder %s249, %s250
    %p262 = scmp.eq.s32.totalorder %s30, 1
    %p263 = por %p261, %p262
    %p265 = scmp.ne.s32.totalorder %s250, %s264
    %p266 = scmp.eq.s32.totalorder %s30, 0
    %p267 = por %p265, %p266
    %s269 = sadd.s32 %s268, 1
    %p272 = scmp.eq.s32.totalorder %s24, 1
    %p273 = scmp.ne.s32.totalorder %s268, %s270
    %p274 = scmp.eq.s32.totalorder %s24, 0
    %p275 = por %p273, %p274
    %p276 = scmp.ne.s32.totalorder %s268, %s270
    %p277 = scmp.eq.s32.totalorder %s29, 1
    %p278 = por %p276, %p277
    %p279 = scmp.ne.s32.totalorder %s270, %s271
    %p280 = scmp.eq.s32.totalorder %s29, 0
    %p281 = por %p279, %p280
    %p282 = scmp.ne.s32.totalorder %s270, %s271
    %p283 = scmp.eq.s32.totalorder %s30, 1
    %p284 = por %p282, %p283
    %p286 = scmp.ne.s32.totalorder %s271, %s285
    %p287 = scmp.eq.s32.totalorder %s30, 0
    %p288 = por %p286, %p287
    %s290 = sadd.s32 %s289, 1
    %p293 = scmp.eq.s32.totalorder %s24, 1
    %p294 = scmp.ne.s32.totalorder %s289, %s291
    %p295 = scmp.eq.s32.totalorder %s24, 0
    %p296 = por %p294, %p295
    %p297 = scmp.ne.s32.totalorder %s289, %s291
    %p298 = scmp.eq.s32.totalorder %s29, 1
    %p299 = por %p297, %p298
    %p300 = scmp.ne.s32.totalorder %s291, %s292
    %p301 = scmp.eq.s32.totalorder %s29, 0
    %p302 = por %p300, %p301
    %p303 = scmp.ne.s32.totalorder %s291, %s292
    %p304 = scmp.eq.s32.totalorder %s30, 1
    %p305 = por %p303, %p304
    %p307 = scmp.ne.s32.totalorder %s292, %s306
    %p308 = scmp.eq.s32.totalorder %s30, 0
    %p309 = por %p307, %p308
    %s311 = sadd.s32 %s310, 1
    %p314 = scmp.eq.s32.totalorder %s24, 1
    %p315 = scmp.ne.s32.totalorder %s310, %s312
    %p316 = scmp.eq.s32.totalorder %s24, 0
    %p317 = por %p315, %p316
    %p318 = scmp.ne.s32.totalorder %s310, %s312
    %p319 = scmp.eq.s32.totalorder %s29, 1
    %p320 = por %p318, %p319
    %p321 = scmp.ne.s32.totalorder %s312, %s313
    %p322 = scmp.eq.s32.totalorder %s29, 0
    %p323 = por %p321, %p322
    %p324 = scmp.ne.s32.totalorder %s312, %s313
    %p325 = scmp.eq.s32.totalorder %s30, 1
    %p326 = por %p324, %p325
    %p328 = scmp.ne.s32.totalorder %s313, %s327
    %p329 = scmp.eq.s32.totalorder %s30, 0
    %p330 = por %p328, %p329
    %s332 = sadd.s32 %s331, 1
    %p335 = scmp.eq.s32.totalorder %s24, 1
    %p336 = scmp.ne.s32.totalorder %s331, %s333
    %p337 = scmp.eq.s32.totalorder %s24, 0
    %p338 = por %p336, %p337
    %p339 = scmp.ne.s32.totalorder %s331, %s333
    %p340 = scmp.eq.s32.totalorder %s29, 1
    %p341 = por %p339, %p340
    %p342 = scmp.ne.s32.totalorder %s333, %s334
    %p343 = scmp.eq.s32.totalorder %s29, 0
    %p344 = por %p342, %p343
    %p345 = scmp.ne.s32.totalorder %s333, %s334
    %p346 = scmp.eq.s32.totalorder %s30, 1
    %p347 = por %p345, %p346
    %p349 = scmp.ne.s32.totalorder %s334, %s348
    %p350 = scmp.eq.s32.totalorder %s30, 0
    %p351 = por %p349, %p350
    %s353 = sadd.s32 %s352, 1
    %p356 = scmp.eq.s32.totalorder %s24, 1
    %p357 = scmp.ne.s32.totalorder %s352, %s354
    %p358 = scmp.eq.s32.totalorder %s24, 0
    %p359 = por %p357, %p358
    %p360 = scmp.ne.s32.totalorder %s352, %s354
    %p361 = scmp.eq.s32.totalorder %s29, 1
    %p362 = por %p360, %p361
    %p363 = scmp.ne.s32.totalorder %s354, %s355
    %p364 = scmp.eq.s32.totalorder %s29, 0
    %p365 = por %p363, %p364
    %p366 = scmp.ne.s32.totalorder %s354, %s355
    %p367 = scmp.eq.s32.totalorder %s30, 1
    %p368 = por %p366, %p367
    %p370 = scmp.ne.s32.totalorder %s355, %s369
    %p371 = scmp.eq.s32.totalorder %s30, 0
    %p372 = por %p370, %p371
    %s374 = sadd.s32 %s373, 1
    %p377 = scmp.eq.s32.totalorder %s24, 1
    %p378 = scmp.ne.s32.totalorder %s373, %s375
    %p379 = scmp.eq.s32.totalorder %s24, 0
    %p380 = por %p378, %p379
    %p381 = scmp.ne.s32.totalorder %s373, %s375
    %p382 = scmp.eq.s32.totalorder %s29, 1
    %p383 = por %p381, %p382
    %p384 = scmp.ne.s32.totalorder %s375, %s376
    %p385 = scmp.eq.s32.totalorder %s29, 0
    %p386 = por %p384, %p385
    %p387 = scmp.ne.s32.totalorder %s375, %s376
    %p388 = scmp.eq.s32.totalorder %s30, 1
    %p389 = por %p387, %p388
    %p391 = scmp.ne.s32.totalorder %s376, %s390
    %p392 = scmp.eq.s32.totalorder %s30, 0
    %p393 = por %p391, %p392
    %s395 = sadd.s32 %s394, 1
    %p398 = scmp.eq.s32.totalorder %s24, 1
    %p399 = scmp.ne.s32.totalorder %s394, %s396
    %p400 = scmp.eq.s32.totalorder %s24, 0
    %p401 = por %p399, %p400
    %p402 = scmp.ne.s32.totalorder %s394, %s396
    %p403 = scmp.eq.s32.totalorder %s29, 1
    %p404 = por %p402, %p403
    %p405 = scmp.ne.s32.totalorder %s396, %s397
    %p406 = scmp.eq.s32.totalorder %s29, 0
    %p407 = por %p405, %p406
    %p408 = scmp.ne.s32.totalorder %s396, %s397
    %p409 = scmp.eq.s32.totalorder %s30, 1
    %p410 = por %p408, %p409
    %p412 = scmp.ne.s32.totalorder %s397, %s411
    %p413 = scmp.eq.s32.totalorder %s30, 0
    %p414 = por %p412, %p413
    %s415 = ssub.s32 %s24, %s31
    %p416 = scmp.eq.s32.totalorder %s415, 0
    %s418 = sadd.s32 %s417, 1
    %s419 = scalar_select %p416, %s417, %s418
    %p422 = pneg %p416
    %p423 = scmp.eq.s32.totalorder %s24, 1
    %p424 = por %p422, %p423
    %p425 = scmp.ne.s32.totalorder %s417, %s420
    %p426 = scmp.eq.s32.totalorder %s24, 0
    %p427 = por %p425, %p426
    %p428 = scmp.ne.s32.totalorder %s417, %s420
    %p429 = scmp.eq.s32.totalorder %s29, 1
    %p430 = por %p428, %p429
    %p431 = scmp.ne.s32.totalorder %s420, %s421
    %p432 = scmp.eq.s32.totalorder %s29, 0
    %p433 = por %p431, %p432
    %p434 = scmp.ne.s32.totalorder %s420, %s421
    %p435 = scmp.eq.s32.totalorder %s30, 1
    %p436 = por %p434, %p435
    %p438 = scmp.ne.s32.totalorder %s421, %s437
    %p439 = scmp.eq.s32.totalorder %s30, 0
    %p440 = por %p438, %p439
    %p441 = scmp.le.s32.totalorder 1, %s24
    %p442 = scmp.lt.s32.totalorder %s24, 3
    %p443 = pnand %p441, %p442
    %p444 = pneg %p443
    // Predicated region
    $region9: #{mae_forward.5} parent=5 // pred_check
      _
    $region10: #{mae_forward.5} parent=5 // pred_check_branch
      %446 = sbr.rel (%p443) target = $region12
    $region11: #{mae_forward.5} parent=5 // pred_region
      %s447 = ssub.s32 %s24, 1
      // Predicated region
      $region13: #{mae_forward.5} parent=11 // pred_check
        %p448 = pneg %p71
      $region14: #{mae_forward.5} parent=11 // pred_check_branch
        %450 = sbr.rel (%p448) target = $region16
      $region15: #{mae_forward.5} parent=11 // pred_region
        _
      $region16: #{mae_forward.5} parent=11 // pred_fallthru
        _
      // Predicated region
      $region17: #{mae_forward.5} parent=11 // pred_check
        %p451 = pneg %p92
      $region18: #{mae_forward.5} parent=11 // pred_check_branch
        %453 = sbr.rel (%p451) target = $region20
      $region19: #{mae_forward.5} parent=11 // pred_region
        _
      $region20: #{mae_forward.5} parent=11 // pred_fallthru
        _
      // Predicated region
      $region21: #{mae_forward.5} parent=11 // pred_check
        %p454 = pneg %p113
      $region22: #{mae_forward.5} parent=11 // pred_check_branch
        %456 = sbr.rel (%p454) target = $region24
      $region23: #{mae_forward.5} parent=11 // pred_region
        _
      $region24: #{mae_forward.5} parent=11 // pred_fallthru
        _
      // Predicated region
      $region25: #{mae_forward.5} parent=11 // pred_check
        %p457 = pneg %p134
      $region26: #{mae_forward.5} parent=11 // pred_check_branch
        %459 = sbr.rel (%p457) target = $region28
      $region27: #{mae_forward.5} parent=11 // pred_region
        _
      $region28: #{mae_forward.5} parent=11 // pred_fallthru
        _
      // Predicated region
      $region29: #{mae_forward.5} parent=11 // pred_check
        %p460 = pneg %p155
      $region30: #{mae_forward.5} parent=11 // pred_check_branch
        %462 = sbr.rel (%p460) target = $region32
      $region31: #{mae_forward.5} parent=11 // pred_region
        _
      $region32: #{mae_forward.5} parent=11 // pred_fallthru
        _
      // Predicated region
      $region33: #{mae_forward.5} parent=11 // pred_check
        %p463 = pneg %p176
      $region34: #{mae_forward.5} parent=11 // pred_check_branch
        %465 = sbr.rel (%p463) target = $region36
      $region35: #{mae_forward.5} parent=11 // pred_region
        _
      $region36: #{mae_forward.5} parent=11 // pred_fallthru
        _
      // Predicated region
      $region37: #{mae_forward.5} parent=11 // pred_check
        %p466 = pneg %p197
      $region38: #{mae_forward.5} parent=11 // pred_check_branch
        %468 = sbr.rel (%p466) target = $region40
      $region39: #{mae_forward.5} parent=11 // pred_region
        _
      $region40: #{mae_forward.5} parent=11 // pred_fallthru
        _
      // Predicated region
      $region41: #{mae_forward.5} parent=11 // pred_check
        %p469 = pneg %p218
      $region42: #{mae_forward.5} parent=11 // pred_check_branch
        %471 = sbr.rel (%p469) target = $region44
      $region43: #{mae_forward.5} parent=11 // pred_region
        _
      $region44: #{mae_forward.5} parent=11 // pred_fallthru
        _
      // Predicated region
      $region45: #{mae_forward.5} parent=11 // pred_check
        %p472 = pneg %p239
      $region46: #{mae_forward.5} parent=11 // pred_check_branch
        %474 = sbr.rel (%p472) target = $region48
      $region47: #{mae_forward.5} parent=11 // pred_region
        _
      $region48: #{mae_forward.5} parent=11 // pred_fallthru
        _
      // Predicated region
      $region49: #{mae_forward.5} parent=11 // pred_check
        %p475 = pneg %p260
      $region50: #{mae_forward.5} parent=11 // pred_check_branch
        %477 = sbr.rel (%p475) target = $region52
      $region51: #{mae_forward.5} parent=11 // pred_region
        _
      $region52: #{mae_forward.5} parent=11 // pred_fallthru
        _
      // Predicated region
      $region53: #{mae_forward.5} parent=11 // pred_check
        %p478 = pneg %p281
      $region54: #{mae_forward.5} parent=11 // pred_check_branch
        %480 = sbr.rel (%p478) target = $region56
      $region55: #{mae_forward.5} parent=11 // pred_region
        _
      $region56: #{mae_forward.5} parent=11 // pred_fallthru
        _
      // Predicated region
      $region57: #{mae_forward.5} parent=11 // pred_check
        %p481 = pneg %p302
      $region58: #{mae_forward.5} parent=11 // pred_check_branch
        %483 = sbr.rel (%p481) target = $region60
      $region59: #{mae_forward.5} parent=11 // pred_region
        _
      $region60: #{mae_forward.5} parent=11 // pred_fallthru
        _
      // Predicated region
      $region61: #{mae_forward.5} parent=11 // pred_check
        %p484 = pneg %p323
      $region62: #{mae_forward.5} parent=11 // pred_check_branch
        %486 = sbr.rel (%p484) target = $region64
      $region63: #{mae_forward.5} parent=11 // pred_region
        _
      $region64: #{mae_forward.5} parent=11 // pred_fallthru
        _
      // Predicated region
      $region65: #{mae_forward.5} parent=11 // pred_check
        %p487 = pneg %p344
      $region66: #{mae_forward.5} parent=11 // pred_check_branch
        %489 = sbr.rel (%p487) target = $region68
      $region67: #{mae_forward.5} parent=11 // pred_region
        _
      $region68: #{mae_forward.5} parent=11 // pred_fallthru
        _
      // Predicated region
      $region69: #{mae_forward.5} parent=11 // pred_check
        %p490 = pneg %p365
      $region70: #{mae_forward.5} parent=11 // pred_check_branch
        %492 = sbr.rel (%p490) target = $region72
      $region71: #{mae_forward.5} parent=11 // pred_region
        _
      $region72: #{mae_forward.5} parent=11 // pred_fallthru
        _
      // Predicated region
      $region73: #{mae_forward.5} parent=11 // pred_check
        %p493 = pneg %p386
      $region74: #{mae_forward.5} parent=11 // pred_check_branch
        %495 = sbr.rel (%p493) target = $region76
      $region75: #{mae_forward.5} parent=11 // pred_region
        _
      $region76: #{mae_forward.5} parent=11 // pred_fallthru
        _
      // Predicated region
      $region77: #{mae_forward.5} parent=11 // pred_check
        %p496 = pneg %p407
      $region78: #{mae_forward.5} parent=11 // pred_check_branch
        %498 = sbr.rel (%p496) target = $region80
      $region79: #{mae_forward.5} parent=11 // pred_region
        _
      $region80: #{mae_forward.5} parent=11 // pred_fallthru
        _
    $region12: #{mae_forward.5} parent=5 // pred_fallthru
      _
    %p499 = scmp.lt.s32.totalorder %s24, 2
    // Predicated region
    $region81: #{mae_forward.5} parent=5 // pred_check
      %p500 = pneg %p499
    $region82: #{mae_forward.5} parent=5 // pred_check_branch
      %502 = sbr.rel (%p500) target = $region84
    $region83: #{mae_forward.5} parent=5 // pred_region
      // Predicated region
      $region85: #{mae_forward.5} parent=83 // pred_check
        %p503 = pneg %p44
      $region86: #{mae_forward.5} parent=83 // pred_check_branch
        %505 = sbr.rel (%p503) target = $region88
      $region87: #{mae_forward.5} parent=83 // pred_region
        %p506 = scmp.lt.s32.totalorder %s24, 1
        %s507 = scalar_select %p506, %s24, 1
        %s508 = smul.addr %s507, 2
        %s509 = smul.addr %s508, 4
        %s510 = scalar_lea.vmem %s0, %s509
      $region88: #{mae_forward.5} parent=83 // pred_fallthru
        _
    $region84: #{mae_forward.5} parent=5 // pred_fallthru
      _
    %p511 = scmp.le.s32.totalorder 1, %s24
    %p512 = scmp.lt.s32.totalorder %s24, 3
    %p513 = pnand %p511, %p512
    %p514 = pneg %p513
    // Predicated region
    $region89: #{mae_forward.5} parent=5 // pred_check
      _
    $region90: #{mae_forward.5} parent=5 // pred_check_branch
      %516 = sbr.rel (%p513) target = $region92
    $region91: #{mae_forward.5} parent=5 // pred_region
      %s517 = ssub.s32 %s24, 1
      %p518 = scmp.lt.s32.totalorder %s29, 1
      %s519 = scalar_select %p518, %s29, 1
      %s520 = smul.addr %s519, 2
      %s521 = smul.addr %s520, 4
      %s522 = scalar_lea.vmem %s0, %s521
      %p523 = pneg %p50
      %p524 = pneg %p47
      %p525 = pneg %p71
      %p526 = pneg %p68
      %p527 = pneg %p92
      %p528 = pneg %p89
      %p529 = pneg %p113
      %p530 = pneg %p110
      %p531 = pneg %p134
      %p532 = pneg %p131
      %p533 = pneg %p155
      %p534 = pneg %p152
      %p535 = pneg %p176
      %p536 = pneg %p173
      %p537 = pneg %p197
      %p538 = pneg %p194
      %p539 = pneg %p218
      %p540 = pneg %p215
      %p541 = pneg %p239
      %p542 = pneg %p236
      %p543 = pneg %p260
      %p544 = pneg %p257
      %p545 = pneg %p281
      %p546 = pneg %p278
      %p547 = pneg %p302
      %p548 = pneg %p299
      %p549 = pneg %p323
      %p550 = pneg %p320
      %p551 = pneg %p344
      %p552 = pneg %p341
      %p553 = pneg %p365
      %p554 = pneg %p362
      %p555 = pneg %p386
      %p556 = pneg %p383
      %p557 = pneg %p407
      %p558 = pneg %p404
      %p559 = pneg %p433
      %p560 = pneg %p430
      %p561 = scmp.lt.s32.totalorder %s29, 1
      %s562 = scalar_select %p561, %s29, 1
      %s563 = smul.addr %s562, 4
      %s564 = smul.addr %s563, 8
      %s565 = scalar_lea.vmem %s18, %s564
      %p566 = scmp.lt.s32.totalorder %s29, 1
      %s567 = scalar_select %p566, %s29, 1
      %s568 = smul.addr %s567, 2
      %s569 = smul.addr %s568, 4
      %s570 = scalar_lea.vmem %s0, %s569
      %p571 = scmp.lt.s32.totalorder %s29, 1
      %s572 = scalar_select %p571, %s29, 1
      %s573 = smul.addr %s572, 4
      %s574 = smul.addr %s573, 8
      %s575 = scalar_lea.vmem %s18, %s574
      %v577 = vld [vmem:[%s570] sm:$0xf]
      %v578 = vld [vmem:[%s570 + $0x4] sm:$0xf]
      %v579 = vunpack.c.l.bf16 %v577
      %v580 = vunpack.c.l.bf16 %v578
      %v581 = vld [vmem:[%s1] sm:$0x1]
      %v582 = vld [vmem:[%s2] sm:$0x1]
      %v583 = vld [vmem:[%s3] sm:$0xf]
      %v584 = vld [vmem:[%s3 + $0x4] sm:$0xf]
      %v585 = vld [vmem:[%s3 + $0x8] sm:$0xf]
      %v586 = vld [vmem:[%s3 + $0xc] sm:$0xf]
      %v587 = vld [vmem:[%s3 + $0x10] sm:$0xf]
      %v588 = vld [vmem:[%s3 + $0x14] sm:$0xf]
      %v589 = vld [vmem:[%s3 + $0x18] sm:$0xf]
      %v590 = vld [vmem:[%s3 + $0x1c] sm:$0xf]
      %v591 = vld [vmem:[%s4] sm:$0xf]
      %v592 = vld [vmem:[%s4 + $0x4] sm:$0xf]
      %v593 = vld [vmem:[%s4 + $0x8] sm:$0xf]
      %v594 = vld [vmem:[%s4 + $0xc] sm:$0xf]
      %v595 = vld [vmem:[%s4 + $0x10] sm:$0xf]
      %v596 = vld [vmem:[%s4 + $0x14] sm:$0xf]
      %v597 = vld [vmem:[%s4 + $0x18] sm:$0xf]
      %v598 = vld [vmem:[%s4 + $0x1c] sm:$0xf]
      %v599 = vld [vmem:[%s5] sm:$0xf]
      %v600 = vld [vmem:[%s5 + $0x4] sm:$0xf]
      %v601 = vld [vmem:[%s5 + $0x8] sm:$0xf]
      %v602 = vld [vmem:[%s5 + $0xc] sm:$0xf]
      %v603 = vld [vmem:[%s5 + $0x10] sm:$0xf]
      %v604 = vld [vmem:[%s5 + $0x14] sm:$0xf]
      %v605 = vld [vmem:[%s5 + $0x18] sm:$0xf]
      %v606 = vld [vmem:[%s5 + $0x1c] sm:$0xf]
      %v607 = vld [vmem:[%s6] sm:$0xf]
      %v608 = vld [vmem:[%s6 + $0x4] sm:$0xf]
      %v609 = vld [vmem:[%s6 + $0x8] sm:$0xf]
      %v610 = vld [vmem:[%s6 + $0xc] sm:$0xf]
      %v611 = vld [vmem:[%s6 + $0x10] sm:$0xf]
      %v612 = vld [vmem:[%s6 + $0x14] sm:$0xf]
      %v613 = vld [vmem:[%s6 + $0x18] sm:$0xf]
      %v614 = vld [vmem:[%s6 + $0x1c] sm:$0xf]
      %v615 = vld [vmem:[%s7] sm:$0x1]
      %v616 = vld [vmem:[%s8] sm:$0x1]
      %v617 = vld [vmem:[%s9] sm:$0x1]
      %v618 = vld [vmem:[%s10] sm:$0xff]
      %v619 = vld [vmem:[%s10 + $0x8] sm:$0xff]
      %v620 = vld [vmem:[%s10 + $0x10] sm:$0xff]
      %v621 = vld [vmem:[%s10 + $0x18] sm:$0xff]
      %v622 = vld [vmem:[%s10 + $0x20] sm:$0xff]
      %v623 = vld [vmem:[%s10 + $0x28] sm:$0xff]
      %v624 = vld [vmem:[%s10 + $0x30] sm:$0xff]
      %v625 = vld [vmem:[%s10 + $0x38] sm:$0xff]
      %v626 = vld [vmem:[%s10 + $0x40] sm:$0xff]
      %v627 = vld [vmem:[%s10 + $0x48] sm:$0xff]
      %v628 = vld [vmem:[%s10 + $0x50] sm:$0xff]
      %v629 = vld [vmem:[%s10 + $0x58] sm:$0xff]
      %v630 = vld [vmem:[%s10 + $0x60] sm:$0xff]
      %v631 = vld [vmem:[%s10 + $0x68] sm:$0xff]
      %v632 = vld [vmem:[%s10 + $0x70] sm:$0xff]
      %v633 = vld [vmem:[%s10 + $0x78] sm:$0xff]
      %v634 = vld [vmem:[%s11] sm:$0x3]
      %v635 = vld [vmem:[%s12] sm:$0xf]
      %v636 = vld [vmem:[%s12 + $0x4] sm:$0xf]
      %v637 = vld [vmem:[%s12 + $0x8] sm:$0xf]
      %v638 = vld [vmem:[%s12 + $0xc] sm:$0xf]
      %v639 = vld [vmem:[%s12 + $0x10] sm:$0xf]
      %v640 = vld [vmem:[%s12 + $0x14] sm:$0xf]
      %v641 = vld [vmem:[%s12 + $0x18] sm:$0xf]
      %v642 = vld [vmem:[%s12 + $0x1c] sm:$0xf]
      %v643 = vld [vmem:[%s12 + $0x20] sm:$0xf]
      %v644 = vld [vmem:[%s12 + $0x24] sm:$0xf]
      %v645 = vld [vmem:[%s12 + $0x28] sm:$0xf]
      %v646 = vld [vmem:[%s12 + $0x2c] sm:$0xf]
      %v647 = vld [vmem:[%s12 + $0x30] sm:$0xf]
      %v648 = vld [vmem:[%s12 + $0x34] sm:$0xf]
      %v649 = vld [vmem:[%s12 + $0x38] sm:$0xf]
      %v650 = vld [vmem:[%s12 + $0x3c] sm:$0xf]
      %v651 = vld [vmem:[%s12 + $0x40] sm:$0xf]
      %v652 = vld [vmem:[%s12 + $0x44] sm:$0xf]
      %v653 = vld [vmem:[%s12 + $0x48] sm:$0xf]
      %v654 = vld [vmem:[%s12 + $0x4c] sm:$0xf]
      %v655 = vld [vmem:[%s12 + $0x50] sm:$0xf]
      %v656 = vld [vmem:[%s12 + $0x54] sm:$0xf]
      %v657 = vld [vmem:[%s12 + $0x58] sm:$0xf]
      %v658 = vld [vmem:[%s12 + $0x5c] sm:$0xf]
      %v659 = vld [vmem:[%s12 + $0x60] sm:$0xf]
      %v660 = vld [vmem:[%s12 + $0x64] sm:$0xf]
      %v661 = vld [vmem:[%s12 + $0x68] sm:$0xf]
      %v662 = vld [vmem:[%s12 + $0x6c] sm:$0xf]
      %v663 = vld [vmem:[%s12 + $0x70] sm:$0xf]
      %v664 = vld [vmem:[%s12 + $0x74] sm:$0xf]
      %v665 = vld [vmem:[%s12 + $0x78] sm:$0xf]
      %v666 = vld [vmem:[%s12 + $0x7c] sm:$0xf]
      %v667 = vld [vmem:[%s13] sm:$0x1]
      %668 = vadd.xlane.f32.xlu0 %v579
      %v669 = vpop.xlane.xlu0 %668
      %670 = vadd.xlane.f32.xlu0 %v580
      %v671 = vpop.xlane.xlu0 %670
      %v672 = vmul.f32 %v669, 0.020833334
      %v673 = vmul.f32 %v671, 0.020833334
      %v674 = vsub.f32 %v579, %v672
      %v675 = vsub.f32 %v580, %v673
      %v676 = vlaneseq
      %v677 = vand.u32 %v676, 127
      %vm678 = vcmp.lt.s32.totalorder %v677, 48
      %v679 = vsel %vm678, %v674, 0.0
      %v680 = vsel %vm678, %v675, 0.0
      %v681 = vmul.f32 %v679, %v679
      %v682 = vmul.f32 %v680, %v680
      %683 = vadd.xlane.f32.xlu0 %v681
      %v684 = vpop.xlane.xlu0 %683
      %685 = vadd.xlane.f32.xlu0 %v682
      %v686 = vpop.xlane.xlu0 %685
      %v687 = vmul.f32 %v684, 0.020833334
      %v688 = vmul.f32 %v686, 0.020833334
      %v689 = vadd.f32 %v687, 1e-05
      %v690 = vadd.f32 %v688, 1e-05
      %v691 = vrsqrt.pop %v689
      %v692 = vrsqrt.pop %v690
      %v693 = vmul.f32 %v679, %v691
      %v694 = vmul.f32 %v680, %v692
      %v696 = vlaneseq
      %v697 = vshrl.u32 %v696, 7
      %v698 = vsub.s32 0, %v697
      %v699 = vrot.slane %v581, %v698
      %v701 = vmul.f32 %v693, %v699
      %v702 = vmul.f32 %v694, %v699
      %v704 = vlaneseq
      %v705 = vshrl.u32 %v704, 7
      %v706 = vsub.s32 0, %v705
      %v707 = vrot.slane %v582, %v706
      %v709 = vadd.f32 %v701, %v707
      %v710 = vadd.f32 %v702, %v707
      %v711 = vpack.c.bf16 %v710, %v709
      %v714 = vunpack.c.l.b16 %v583
      %v715 = vunpack.c.l.b16 %v584
      %v716 = vpack.c.b16 %v715, %v714
      %718 = vmatprep.subr.bf16.mxu0 0
      %719 = vmatpush1.bf16.xpose.msra.mxu0 %v716
      %720 = vmatprep.subr.bf16.mxu0 0
      %721 = vmatpush1.bf16.xpose.msra.mxu0 0
      %722 = vmatprep.subr.bf16.mxu0 0
      %723 = vmatpush1.bf16.xpose.msra.mxu0 0
      %724 = vmatprep.subr.bf16.mxu0 0
      %725 = vmatpush1.bf16.xpose.msra.mxu0 0
      %726 = vmatprep.subr.bf16.mxu0 0
      %727 = vmatpush1.bf16.xpose.msra.mxu0 0
      %728 = vmatprep.subr.bf16.mxu0 0
      %729 = vmatpush1.bf16.xpose.msra.mxu0 0
      %730 = vmatprep.subr.bf16.mxu0 0
      %731 = vmatpush1.bf16.xpose.msra.mxu0 0
      %732 = vmatprep.subr.bf16.mxu0 0
      %733 = vmatpush1.bf16.xpose.msra.mxu0 0
      %734 = vmatprep.subr.bf16.mxu0 0
      %735 = vmatpush1.bf16.xpose.msra.mxu0 0
      %736 = vmatprep.subr.bf16.mxu0 0
      %737 = vmatpush1.bf16.xpose.msra.mxu0 0
      %738 = vmatprep.subr.bf16.mxu0 0
      %739 = vmatpush1.bf16.xpose.msra.mxu0 0
      %740 = vmatprep.subr.bf16.mxu0 0
      %741 = vmatpush1.bf16.xpose.msra.mxu0 0
      %742 = vmatprep.subr.bf16.mxu0 0
      %743 = vmatpush1.bf16.xpose.msra.mxu0 0
      %744 = vmatprep.subr.bf16.mxu0 0
      %745 = vmatpush1.bf16.xpose.msra.mxu0 0
      %746 = vmatprep.subr.bf16.mxu0 0
      %747 = vmatpush1.bf16.xpose.msra.mxu0 0
      %748 = vmatprep.subr.bf16.mxu0 0
      %749 = vmatpush1.bf16.xpose.msra.mxu0 0
      %750 = vmatprep.mubr.bf16.mxu0 0
      %751 = vmatmul.mubr.bf16.gmra.mrb[0].mxu0 %v711
      %v752 = vpop.f32.mrb[0].mxu0
      %v753 = vadd.f32 0.0, %v752
      %v754 = vpop.f32.mrb[0].mxu0
      %v755 = vpop.f32.mrb[0].mxu0
      %v756 = vadd.f32 0.0, %v755
      %v757 = vpop.f32.mrb[0].mxu0
      %758 = vdwg.mxu0
      %v761 = vunpack.c.l.b16 %v585
      %v762 = vunpack.c.l.b16 %v586
      %v763 = vpack.c.b16 %v762, %v761
      %765 = vmatprep.subr.bf16.mxu0 0
      %766 = vmatpush1.bf16.xpose.msra.mxu0 %v763
      %767 = vmatprep.subr.bf16.mxu0 0
      %768 = vmatpush1.bf16.xpose.msra.mxu0 0
      %769 = vmatprep.subr.bf16.mxu0 0
      %770 = vmatpush1.bf16.xpose.msra.mxu0 0
      %771 = vmatprep.subr.bf16.mxu0 0
      %772 = vmatpush1.bf16.xpose.msra.mxu0 0
      %773 = vmatprep.subr.bf16.mxu0 0
      %774 = vmatpush1.bf16.xpose.msra.mxu0 0
      %775 = vmatprep.subr.bf16.mxu0 0
      %776 = vmatpush1.bf16.xpose.msra.mxu0 0
      %777 = vmatprep.subr.bf16.mxu0 0
      %778 = vmatpush1.bf16.xpose.msra.mxu0 0
      %779 = vmatprep.subr.bf16.mxu0 0
      %780 = vmatpush1.bf16.xpose.msra.mxu0 0
      %781 = vmatprep.subr.bf16.mxu0 0
      %782 = vmatpush1.bf16.xpose.msra.mxu0 0
      %783 = vmatprep.subr.bf16.mxu0 0
      %784 = vmatpush1.bf16.xpose.msra.mxu0 0
      %785 = vmatprep.subr.bf16.mxu0 0
      %786 = vmatpush1.bf16.xpose.msra.mxu0 0
      %787 = vmatprep.subr.bf16.mxu0 0
      %788 = vmatpush1.bf16.xpose.msra.mxu0 0
      %789 = vmatprep.subr.bf16.mxu0 0
      %790 = vmatpush1.bf16.xpose.msra.mxu0 0
      %791 = vmatprep.subr.bf16.mxu0 0
      %792 = vmatpush1.bf16.xpose.msra.mxu0 0
      %793 = vmatprep.subr.bf16.mxu0 0
      %794 = vmatpush1.bf16.xpose.msra.mxu0 0
      %795 = vmatprep.subr.bf16.mxu0 0
      %796 = vmatpush1.bf16.xpose.msra.mxu0 0
      %797 = vmatprep.mubr.bf16.mxu0 0
      %798 = vmatmul.mubr.bf16.gmra.mrb[0].mxu0 %v711
      %v799 = vpop.f32.mrb[0].mxu0
      %v800 = vadd.f32 0.0, %v799
      %v801 = vpop.f32.mrb[0].mxu0
      %v802 = vpop.f32.mrb[0].mxu0
      %v803 = vadd.f32 0.0, %v802
      %v804 = vpop.f32.mrb[0].mxu0
      %805 = vdwg.mxu0
      %v808 = vunpack.c.l.b16 %v587
      %v809 = vunpack.c.l.b16 %v588
      %v810 = vpack.c.b16 %v809, %v808
      %812 = vmatprep.subr.bf16.mxu0 0
      %813 = vmatpush1.bf16.xpose.msra.mxu0 %v810
      %814 = vmatprep.subr.bf16.mxu0 0
      %815 = vmatpush1.bf16.xpose.msra.mxu0 0
      %816 = vmatprep.subr.bf16.mxu0 0
      %817 = vmatpush1.bf16.xpose.msra.mxu0 0
      %818 = vmatprep.subr.bf16.mxu0 0
      %819 = vmatpush1.bf16.xpose.msra.mxu0 0
      %820 = vmatprep.subr.bf16.mxu0 0
      %821 = vmatpush1.bf16.xpose.msra.mxu0 0
      %822 = vmatprep.subr.bf16.mxu0 0
      %823 = vmatpush1.bf16.xpose.msra.mxu0 0
      %824 = vmatprep.subr.bf16.mxu0 0
      %825 = vmatpush1.bf16.xpose.msra.mxu0 0
      %826 = vmatprep.subr.bf16.mxu0 0
      %827 = vmatpush1.bf16.xpose.msra.mxu0 0
      %828 = vmatprep.subr.bf16.mxu0 0
      %829 = vmatpush1.bf16.xpose.msra.mxu0 0
      %830 = vmatprep.subr.bf16.mxu0 0
      %831 = vmatpush1.bf16.xpose.msra.mxu0 0
      %832 = vmatprep.subr.bf16.mxu0 0
      %833 = vmatpush1.bf16.xpose.msra.mxu0 0
      %834 = vmatprep.subr.bf16.mxu0 0
      %835 = vmatpush1.bf16.xpose.msra.mxu0 0
      %836 = vmatprep.subr.bf16.mxu0 0
      %837 = vmatpush1.bf16.xpose.msra.mxu0 0
      %838 = vmatprep.subr.bf16.mxu0 0
      %839 = vmatpush1.bf16.xpose.msra.mxu0 0
      %840 = vmatprep.subr.bf16.mxu0 0
      %841 = vmatpush1.bf16.xpose.msra.mxu0 0
      %842 = vmatprep.subr.bf16.mxu0 0
      %843 = vmatpush1.bf16.xpose.msra.mxu0 0
      %844 = vmatprep.mubr.bf16.mxu0 0
      %845 = vmatmul.mubr.bf16.gmra.mrb[0].mxu0 %v711
      %v846 = vpop.f32.mrb[0].mxu0
      %v847 = vadd.f32 0.0, %v846
      %v848 = vpop.f32.mrb[0].mxu0
      %v849 = vpop.f32.mrb[0].mxu0
      %v850 = vadd.f32 0.0, %v849
      %v851 = vpop.f32.mrb[0].mxu0
      %852 = vdwg.mxu0
      %v855 = vunpack.c.l.b16 %v589
      %v856 = vunpack.c.l.b16 %v590
      %v857 = vpack.c.b16 %v856, %v855
      %859 = vmatprep.subr.bf16.mxu0 0
      %860 = vmatpush1.bf16.xpose.msra.mxu0 %v857
      %861 = vmatprep.subr.bf16.mxu0 0
      %862 = vmatpush1.bf16.xpose.msra.mxu0 0
      %863 = vmatprep.subr.bf16.mxu0 0
      %864 = vmatpush1.bf16.xpose.msra.mxu0 0
      %865 = vmatprep.subr.bf16.mxu0 0
      %866 = vmatpush1.bf16.xpose.msra.mxu0 0
      %867 = vmatprep.subr.bf16.mxu0 0
      %868 = vmatpush1.bf16.xpose.msra.mxu0 0
      %869 = vmatprep.subr.bf16.mxu0 0
      %870 = vmatpush1.bf16.xpose.msra.mxu0 0
      %871 = vmatprep.subr.bf16.mxu0 0
      %872 = vmatpush1.bf16.xpose.msra.mxu0 0
      %873 = vmatprep.subr.bf16.mxu0 0
      %874 = vmatpush1.bf16.xpose.msra.mxu0 0
      %875 = vmatprep.subr.bf16.mxu0 0
      %876 = vmatpush1.bf16.xpose.msra.mxu0 0
      %877 = vmatprep.subr.bf16.mxu0 0
      %878 = vmatpush1.bf16.xpose.msra.mxu0 0
      %879 = vmatprep.subr.bf16.mxu0 0
      %880 = vmatpush1.bf16.xpose.msra.mxu0 0
      %881 = vmatprep.subr.bf16.mxu0 0
      %882 = vmatpush1.bf16.xpose.msra.mxu0 0
      %883 = vmatprep.subr.bf16.mxu0 0
      %884 = vmatpush1.bf16.xpose.msra.mxu0 0
      %885 = vmatprep.subr.bf16.mxu0 0
      %886 = vmatpush1.bf16.xpose.msra.mxu0 0
      %887 = vmatprep.subr.bf16.mxu0 0
      %888 = vmatpush1.bf16.xpose.msra.mxu0 0
      %889 = vmatprep.subr.bf16.mxu0 0
      %890 = vmatpush1.bf16.xpose.msra.mxu0 0
      %891 = vmatprep.mubr.bf16.mxu0 0
      %892 = vmatmul.mubr.bf16.gmra.mrb[0].mxu0 %v711
      %v893 = vpop.f32.mrb[0].mxu0
      %v894 = vadd.f32 0.0, %v893
      %v895 = vpop.f32.mrb[0].mxu0
      %v896 = vpop.f32.mrb[0].mxu0
      %v897 = vadd.f32 0.0, %v896
      %v898 = vpop.f32.mrb[0].mxu0
      %899 = vdwg.mxu0
      %v902 = vunpack.c.l.b16 %v591
      %v903 = vunpack.c.l.b16 %v592
      %v904 = vpack.c.b16 %v903, %v902
      %906 = vmatprep.subr.bf16.mxu0 0
      %907 = vmatpush1.bf16.xpose.msra.mxu0 %v904
      %908 = vmatprep.subr.bf16.mxu0 0
      %909 = vmatpush1.bf16.xpose.msra.mxu0 0
      %910 = vmatprep.subr.bf16.mxu0 0
      %911 = vmatpush1.bf16.xpose.msra.mxu0 0
      %912 = vmatprep.subr.bf16.mxu0 0
      %913 = vmatpush1.bf16.xpose.msra.mxu0 0
      %914 = vmatprep.subr.bf16.mxu0 0
      %915 = vmatpush1.bf16.xpose.msra.mxu0 0
      %916 = vmatprep.subr.bf16.mxu0 0
      %917 = vmatpush1.bf16.xpose.msra.mxu0 0
      %918 = vmatprep.subr.bf16.mxu0 0
      %919 = vmatpush1.bf16.xpose.msra.mxu0 0
      %920 = vmatprep.subr.bf16.mxu0 0
      %921 = vmatpush1.bf16.xpose.msra.mxu0 0
      %922 = vmatprep.subr.bf16.mxu0 0
      %923 = vmatpush1.bf16.xpose.msra.mxu0 0
      %924 = vmatprep.subr.bf16.mxu0 0
      %925 = vmatpush1.bf16.xpose.msra.mxu0 0
      %926 = vmatprep.subr.bf16.mxu0 0
      %927 = vmatpush1.bf16.xpose.msra.mxu0 0
      %928 = vmatprep.subr.bf16.mxu0 0
      %929 = vmatpush1.bf16.xpose.msra.mxu0 0
      %930 = vmatprep.subr.bf16.mxu0 0
      %931 = vmatpush1.bf16.xpose.msra.mxu0 0
      %932 = vmatprep.subr.bf16.mxu0 0
      %933 = vmatpush1.bf16.xpose.msra.mxu0 0
      %934 = vmatprep.subr.bf16.mxu0 0
      %935 = vmatpush1.bf16.xpose.msra.mxu0 0
      %936 = vmatprep.subr.bf16.mxu0 0
      %937 = vmatpush1.bf16.xpose.msra.mxu0 0
      %938 = vmatprep.mubr.bf16.mxu0 0
      %939 = vmatmul.mubr.bf16.gmra.mrb[0].mxu0 %v711
      %v940 = vpop.f32.mrb[0].mxu0
      %v941 = vadd.f32 0.0, %v940
      %v942 = vpop.f32.mrb[0].mxu0
      %v943 = vpop.f32.mrb[0].mxu0
      %v944 = vadd.f32 0.0, %v943
      %v945 = vpop.f32.mrb[0].mxu0
      %946 = vdwg.mxu0
      %v949 = vunpack.c.l.b16 %v593
      %v950 = vunpack.c.l.b16 %v594
      %v951 = vpack.c.b16 %v950, %v949
      %953 = vmatprep.subr.bf16.mxu0 0
      %954 = vmatpush1.bf16.xpose.msra.mxu0 %v951
      %955 = vmatprep.subr.bf16.mxu0 0
      %956 = vmatpush1.bf16.xpose.msra.mxu0 0
      %957 = vmatprep.subr.bf16.mxu0 0
      %958 = vmatpush1.bf16.xpose.msra.mxu0 0
      %959 = vmatprep.subr.bf16.mxu0 0
      %960 = vmatpush1.bf16.xpose.msra.mxu0 0
      %961 = vmatprep.subr.bf16.mxu0 0
      %962 = vmatpush1.bf16.xpose.msra.mxu0 0
      %963 = vmatprep.subr.bf16.mxu0 0
      %964 = vmatpush1.bf16.xpose.msra.mxu0 0
      %965 = vmatprep.subr.bf16.mxu0 0
      %966 = vmatpush1.bf16.xpose.msra.mxu0 0
      %967 = vmatprep.subr.bf16.mxu0 0
      %968 = vmatpush1.bf16.xpose.msra.mxu0 0
      %969 = vmatprep.subr.bf16.mxu0 0
      %970 = vmatpush1.bf16.xpose.msra.mxu0 0
      %971 = vmatprep.subr.bf16.mxu0 0
      %972 = vmatpush1.bf16.xpose.msra.mxu0 0
      %973 = vmatprep.subr.bf16.mxu0 0
      %974 = vmatpush1.bf16.xpose.msra.mxu0 0
      %975 = vmatprep.subr.bf16.mxu0 0
      %976 = vmatpush1.bf16.xpose.msra.mxu0 0
      %977 = vmatprep.subr.bf16.mxu0 0
      %978 = vmatpush1.bf16.xpose.msra.mxu0 0
      %979 = vmatprep.subr.bf16.mxu0 0
      %980 = vmatpush1.bf16.xpose.msra.mxu0 0
      %981 = vmatprep.subr.bf16.mxu0 0
      %982 = vmatpush1.bf16.xpose.msra.mxu0 0
      %983 = vmatprep.subr.bf16.mxu0 0
      %984 = vmatpush1.bf16.xpose.msra.mxu0 0
      %985 = vmatprep.mubr.bf16.mxu0 0
      %986 = vmatmul.mubr.bf16.gmra.mrb[0].mxu0 %v711
      %v987 = vpop.f32.mrb[0].mxu0
      %v988 = vadd.f32 0.0, %v987
      %v989 = vpop.f32.mrb[0].mxu0
      %v990 = vpop.f32.mrb[0].mxu0
      %v991 = vadd.f32 0.0, %v990
      %v992 = vpop.f32.mrb[0].mxu0
      %993 = vdwg.mxu0
      %v996 = vunpack.c.l.b16 %v595
      %v997 = vunpack.c.l.b16 %v596
      %v998 = vpack.c.b16 %v997, %v996
      %1000 = vmatprep.subr.bf16.mxu0 0
      %1001 = vmatpush1.bf16.xpose.msra.mxu0 %v998
      %1002 = vmatprep.subr.bf16.mxu0 0
      %1003 = vmatpush1.bf16.xpose.msra.mxu0 0
      %1004 = vmatprep.subr.bf16.mxu0 0
      %1005 = vmatpush1.bf16.xpose.msra.mxu0 0
      %1006 = vmatprep.subr.bf16.mxu0 0
      %1007 = vmatpush1.bf16.xpose.msra.mxu0 0
      %1008 = vmatprep.subr.bf16.mxu0 0
      %1009 = vmatpush1.bf16.xpose.msra.mxu0 0
      %1010 = vmatprep.subr.bf16.mxu0 0
      %1011 = vmatpush1.bf16.xpose.msra.mxu0 0
      %1012 = vmatprep.subr.bf16.mxu0 0
      %1013 = vmatpush1.bf16.xpose.msra.mxu0 0
      %1014 = vmatprep.subr.bf16.mxu0 0
      %1015 = vmatpush1.bf16.xpose.msra.mxu0 0
      %1016 = vmatprep.subr.bf16.mxu0 0
      %1017 = vmatpush1.bf16.xpose.msra.mxu0 0
      %1018 = vmatprep.subr.bf16.mxu0 0
      %1019 = vmatpush1.bf16.xpose.msra.mxu0 0
      %1020 = vmatprep.subr.bf16.mxu0 0
      %1021 = vmatpush1.bf16.xpose.msra.mxu0 0
      %1022 = vmatprep.subr.bf16.mxu0 0
      %1023 = vmatpush1.bf16.xpose.msra.mxu0 0
      %1024 = vmatprep.subr.bf16.mxu0 0
      %1025 = vmatpush1.bf16.xpose.msra.mxu0 0
      %1026 = vmatprep.subr.bf16.mxu0 0
      %1027 = vmatpush1.bf16.xpose.msra.mxu0 0
      %1028 = vmatprep.subr.bf16.mxu0 0
      %1029 = vmatpush1.bf16.xpose.msra.mxu0 0
      %1030 = vmatprep.subr.bf16.mxu0 0
      %1031 = vmatpush1.bf16.xpose.msra.mxu0 0
      %1032 = vmatprep.mubr.bf16.mxu0 0
      %1033 = vmatmul.mubr.bf16.gmra.mrb[0].mxu0 %v711
      %v1034 = vpop.f32.mrb[0].mxu0
      %v1035 = vadd.f32 0.0, %v1034
      %v1036 = vpop.f32.mrb[0].mxu0
      %v1037 = vpop.f32.mrb[0].mxu0
      %v1038 = vadd.f32 0.0, %v1037
      %v1039 = vpop.f32.mrb[0].mxu0
      %1040 = vdwg.mxu0
      %v1043 = vunpack.c.l.b16 %v597
      %v1044 = vunpack.c.l.b16 %v598
      %v1045 = vpack.c.b16 %v1044, %v1043
      %1047 = vmatprep.subr.bf16.mxu0 0
      %1048 = vmatpush1.bf16.xpose.msra.mxu0 %v1045
      %1049 = vmatprep.subr.bf16.mxu0 0
      %1050 = vmatpush1.bf16.xpose.msra.mxu0 0
      %1051 = vmatprep.subr.bf16.mxu0 0
      %1052 = vmatpush1.bf16.xpose.msra.mxu0 0
      %1053 = vmatprep.subr.bf16.mxu0 0
      %1054 = vmatpush1.bf16.xpose.msra.mxu0 0
      %1055 = vmatprep.subr.bf16.mxu0 0
      %1056 = vmatpush1.bf16.xpose.msra.mxu0 0
      %1057 = vmatprep.subr.bf16.mxu0 0
      %1058 = vmatpush1.bf16.xpose.msra.mxu0 0
      %1059 = vmatprep.subr.bf16.mxu0 0
      %1060 = vmatpush1.bf16.xpose.msra.mxu0 0
      %1061 = vmatprep.subr.bf16.mxu0 0
      %1062 = vmatpush1.bf16.xpose.msra.mxu0 0
      %1063 = vmatprep.subr.bf16.mxu0 0
      %1064 = vmatpush1.bf16.xpose.msra.mxu0 0
      %1065 = vmatprep.subr.bf16.mxu0 0
      %1066 = vmatpush1.bf16.xpose.msra.mxu0 0
      %1067 = vmatprep.subr.bf16.mxu0 0
      %1068 = vmatpush1.bf16.xpose.msra.mxu0 0
      %1069 = vmatprep.subr.bf16.mxu0 0
      %1070 = vmatpush1.bf16.xpose.msra.mxu0 0
      %1071 = vmatprep.subr.bf16.mxu0 0
      %1072 = vmatpush1.bf16.xpose.msra.mxu0 0
      %1073 = vmatprep.subr.bf16.mxu0 0
      %1074 = vmatpush1.bf16.xpose.msra.mxu0 0
      %1075 = vmatprep.subr.bf16.mxu0 0
      %1076 = vmatpush1.bf16.xpose.msra.mxu0 0
      %1077 = vmatprep.subr.bf16.mxu0 0
      %1078 = vmatpush1.bf16.xpose.msra.mxu0 0
      %1079 = vmatprep.mubr.bf16.mxu0 0
      %1080 = vmatmul.mubr.bf16.gmra.mrb[0].mxu0 %v711
      %v1081 = vpop.f32.mrb[0].mxu0
      %v1082 = vadd.f32 0.0, %v1081
      %v1083 = vpop.f32.mrb[0].mxu0
      %v1084 = vpop.f32.mrb[0].mxu0
      %v1085 = vadd.f32 0.0, %v1084
      %v1086 = vpop.f32.mrb[0].mxu0
      %1087 = vdwg.mxu0
      %v1090 = vunpack.c.l.b16 %v599
      %v1091 = vunpack.c.l.b16 %v600
      %v1092 = vpack.c.b16 %v1091, %v1090
      %1094 = vmatprep.subr.bf16.mxu0 0
      %1095 = vmatpush1.bf16.xpose.msra.mxu0 %v1092
      %1096 = vmatprep.subr.bf16.mxu0 0
      %1097 = vmatpush1.bf16.xpose.msra.mxu0 0
      %1098 = vmatprep.subr.bf16.mxu0 0
      %1099 = vmatpush1.bf16.xpose.msra.mxu0 0
      %1100 = vmatprep.subr.bf16.mxu0 0
      %1101 = vmatpush1.bf16.xpose.msra.mxu0 0
      %1102 = vmatprep.subr.bf16.mxu0 0
      %1103 = vmatpush1.bf16.xpose.msra.mxu0 0
      %1104 = vmatprep.subr.bf16.mxu0 0
      %1105 = vmatpush1.bf16.xpose.msra.mxu0 0
      %1106 = vmatprep.subr.bf16.mxu0 0
      %1107 = vmatpush1.bf16.xpose.msra.mxu0 0
      %1108 = vmatprep.subr.bf16.mxu0 0
      %1109 = vmatpush1.bf16.xpose.msra.mxu0 0
      %1110 = vmatprep.subr.bf16.mxu0 0
      %1111 = vmatpush1.bf16.xpose.msra.mxu0 0
      %1112 = vmatprep.subr.bf16.mxu0 0
      %1113 = vmatpush1.bf16.xpose.msra.mxu0 0
      %1114 = vmatprep.subr.bf16.mxu0 0
      %1115 = vmatpush1.bf16.xpose.msra.mxu0 0
      %1116 = vmatprep.subr.bf16.mxu0 0
      %1117 = vmatpush1.bf16.xpose.msra.mxu0 0
      %1118 = vmatprep.subr.bf16.mxu0 0
      %1119 = vmatpush1.bf16.xpose.msra.mxu0 0
      %1120 = vmatprep.subr.bf16.mxu0 0
      %1121 = vmatpush1.bf16.xpose.msra.mxu0 0
      %1122 = vmatprep.subr.bf16.mxu0 0
      %1123 = vmatpush1.bf16.xpose.msra.mxu0 0
      %1124 = vmatprep.subr.bf16.mxu0 0
      %1125 = vmatpush1.bf16.xpose.msra.mxu0 0
      %1126 = vmatprep.mubr.bf16.mxu0 0
      %1127 = vmatmul.mubr.bf16.gmra.mrb[0].mxu0 %v711
      %v1128 = vpop.f32.mrb[0].mxu0
      %v1129 = vadd.f32 0.0, %v1128
      %v1130 = vpop.f32.mrb[0].mxu0
      %v1131 = vpop.f32.mrb[0].mxu0
      %v1132 = vadd.f32 0.0, %v1131
      %v1133 = vpop.f32.mrb[0].mxu0
      %1134 = vdwg.mxu0
      %v1137 = vunpack.c.l.b16 %v601
      %v1138 = vunpack.c.l.b16 %v602
      %v1139 = vpack.c.b16 %v1138, %v1137
      %1141 = vmatprep.subr.bf16.mxu0 0
      %1142 = vmatpush1.bf16.xpose.msra.mxu0 %v1139
      %1143 = vmatprep.subr.bf16.mxu0 0
      %1144 = vmatpush1.bf16.xpose.msra.mxu0 0
      %1145 = vmatprep.subr.bf16.mxu0 0
      %1146 = vmatpush1.bf16.xpose.msra.mxu0 0
      %1147 = vmatprep.subr.bf16.mxu0 0
      %1148 = vmatpush1.bf16.xpose.msra.mxu0 0
      %1149 = vmatprep.subr.bf16.mxu0 0
      %1150 = vmatpush1.bf16.xpose.msra.mxu0 0
      %1151 = vmatprep.subr.bf16.mxu0 0
      %1152 = vmatpush1.bf16.xpose.msra.mxu0 0
      %1153 = vmatprep.subr.bf16.mxu0 0
      %1154 = vmatpush1.bf16.xpose.msra.mxu0 0
      %1155 = vmatprep.subr.bf16.mxu0 0
      %1156 = vmatpush1.bf16.xpose.msra.mxu0 0
      %1157 = vmatprep.subr.bf16.mxu0 0
      %1158 = vmatpush1.bf16.xpose.msra.mxu0 0
      %1159 = vmatprep.subr.bf16.mxu0 0
      %1160 = vmatpush1.bf16.xpose.msra.mxu0 0
      %1161 = vmatprep.subr.bf16.mxu0 0
      %1162 = vmatpush1.bf16.xpose.msra.mxu0 0
      %1163 = vmatprep.subr.bf16.mxu0 0
      %1164 = vmatpush1.bf16.xpose.msra.mxu0 0
      %1165 = vmatprep.subr.bf16.mxu0 0
      %1166 = vmatpush1.bf16.xpose.msra.mxu0 0
      %1167 = vmatprep.subr.bf16.mxu0 0
      %1168 = vmatpush1.bf16.xpose.msra.mxu0 0
      %1169 = vmatprep.subr.bf16.mxu0 0
      %1170 = vmatpush1.bf16.xpose.msra.mxu0 0
      %1171 = vmatprep.subr.bf16.mxu0 0
      %1172 = vmatpush1.bf16.xpose.msra.mxu0 0
      %1173 = vmatprep.mubr.bf16.mxu0 0
      %1174 = vmatmul.mubr.bf16.gmra.mrb[0].mxu0 %v711
      %v1175 = vpop.f32.mrb[0].mxu0
      %v1176 = vadd.f32 0.0, %v1175
      %v1177 = vpop.f32.mrb[0].mxu0
      %v1178 = vpop.f32.mrb[0].mxu0
      %v1179 = vadd.f32 0.0, %v1178
      %v1180 = vpop.f32.mrb[0].mxu0
      %1181 = vdwg.mxu0
      %v1184 = vunpack.c.l.b16 %v603
      %v1185 = vunpack.c.l.b16 %v604
      %v1186 = vpack.c.b16 %v1185, %v1184
      %1188 = vmatprep.subr.bf16.mxu0 0
      %1189 = vmatpush1.bf16.xpose.msra.mxu0 %v1186
      %1190 = vmatprep.subr.bf16.mxu0 0
      %1191 = vmatpush1.bf16.xpose.msra.mxu0 0
      %1192 = vmatprep.subr.bf16.mxu0 0
      %1193 = vmatpush1.bf16.xpose.msra.mxu0 0
      %1194 = vmatprep.subr.bf16.mxu0 0
      %1195 = vmatpush1.bf16.xpose.msra.mxu0 0
      %1196 = vmatprep.subr.bf16.mxu0 0
      %1197 = vmatpush1.bf16.xpose.msra.mxu0 0
      %1198 = vmatprep.subr.bf16.mxu0 0
      %1199 = vmatpush1.bf16.xpose.msra.mxu0 0
      %1200 = vmatprep.subr.bf16.mxu0 0
      %1201 = vmatpush1.bf16.xpose.msra.mxu0 0
      %1202 = vmatprep.subr.bf16.mxu0 0
      %1203 = vmatpush1.bf16.xpose.msra.mxu0 0
      %1204 = vmatprep.subr.bf16.mxu0 0
      %1205 = vmatpush1.bf16.xpose.msra.mxu0 0
      %1206 = vmatprep.subr.bf16.mxu0 0
      %1207 = vmatpush1.bf16.xpose.msra.mxu0 0
      %1208 = vmatprep.subr.bf16.mxu0 0
      %1209 = vmatpush1.bf16.xpose.msra.mxu0 0
      %1210 = vmatprep.subr.bf16.mxu0 0
      %1211 = vmatpush1.bf16.xpose.msra.mxu0 0
      %1212 = vmatprep.subr.bf16.mxu0 0
      %1213 = vmatpush1.bf16.xpose.msra.mxu0 0
      %1214 = vmatprep.subr.bf16.mxu0 0
      %1215 = vmatpush1.bf16.xpose.msra.mxu0 0
      %1216 = vmatprep.subr.bf16.mxu0 0
      %1217 = vmatpush1.bf16.xpose.msra.mxu0 0
      %1218 = vmatprep.subr.bf16.mxu0 0
      %1219 = vmatpush1.bf16.xpose.msra.mxu0 0
      %1220 = vmatprep.mubr.bf16.mxu0 0
      %1221 = vmatmul.mubr.bf16.gmra.mrb[0].mxu0 %v711
      %v1222 = vpop.f32.mrb[0].mxu0
      %v1223 = vadd.f32 0.0, %v1222
      %v1224 = vpop.f32.mrb[0].mxu0
      %v1225 = vpop.f32.mrb[0].mxu0
      %v1226 = vadd.f32 0.0, %v1225
      %v1227 = vpop.f32.mrb[0].mxu0
      %1228 = vdwg.mxu0
      %v1231 = vunpack.c.l.b16 %v605
      %v1232 = vunpack.c.l.b16 %v606
      %v1233 = vpack.c.b16 %v1232, %v1231
      %1235 = vmatprep.subr.bf16.mxu0 0
      %1236 = vmatpush1.bf16.xpose.msra.mxu0 %v1233
      %1237 = vmatprep.subr.bf16.mxu0 0
      %1238 = vmatpush1.bf16.xpose.msra.mxu0 0
      %1239 = vmatprep.subr.bf16.mxu0 0
      %1240 = vmatpush1.bf16.xpose.msra.mxu0 0
      %1241 = vmatprep.subr.bf16.mxu0 0
      %1242 = vmatpush1.bf16.xpose.msra.mxu0 0
      %1243 = vmatprep.subr.bf16.mxu0 0
      %1244 = vmatpush1.bf16.xpose.msra.mxu0 0
      %1245 = vmatprep.subr.bf16.mxu0 0
      %1246 = vmatpush1.bf16.xpose.msra.mxu0 0
      %1247 = vmatprep.subr.bf16.mxu0 0
      %1248 = vmatpush1.bf16.xpose.msra.mxu0 0
      %1249 = vmatprep.subr.bf16.mxu0 0
      %1250 = vmatpush1.bf16.xpose.msra.mxu0 0
      %1251 = vmatprep.subr.bf16.mxu0 0
      %1252 = vmatpush1.bf16.xpose.msra.mxu0 0
      %1253 = vmatprep.subr.bf16.mxu0 0
      %1254 = vmatpush1.bf16.xpose.msra.mxu0 0
      %1255 = vmatprep.subr.bf16.mxu0 0
      %1256 = vmatpush1.bf16.xpose.msra.mxu0 0
      %1257 = vmatprep.subr.bf16.mxu0 0
      %1258 = vmatpush1.bf16.xpose.msra.mxu0 0
      %1259 = vmatprep.subr.bf16.mxu0 0
      %1260 = vmatpush1.bf16.xpose.msra.mxu0 0
      %1261 = vmatprep.subr.bf16.mxu0 0
      %1262 = vmatpush1.bf16.xpose.msra.mxu0 0
      %1263 = vmatprep.subr.bf16.mxu0 0
      %1264 = vmatpush1.bf16.xpose.msra.mxu0 0
      %1265 = vmatprep.subr.bf16.mxu0 0
      %1266 = vmatpush1.bf16.xpose.msra.mxu0 0
      %1267 = vmatprep.mubr.bf16.mxu0 0
      %1268 = vmatmul.mubr.bf16.gmra.mrb[0].mxu0 %v711
      %v1269 = vpop.f32.mrb[0].mxu0
      %v1270 = vadd.f32 0.0, %v1269
      %v1271 = vpop.f32.mrb[0].mxu0
      %v1272 = vpop.f32.mrb[0].mxu0
      %v1273 = vadd.f32 0.0, %v1272
      %v1274 = vpop.f32.mrb[0].mxu0
      %1275 = vdwg.mxu0
      %v1276 = vpack.c.bf16 %v756, %v753
      %v1277 = vpack.c.bf16 %v803, %v800
      %v1278 = vpack.c.bf16 %v850, %v847
      %v1279 = vpack.c.bf16 %v897, %v894
      %v1280 = vpack.c.bf16 %v944, %v941
      %v1281 = vpack.c.bf16 %v991, %v988
      %v1282 = vpack.c.bf16 %v1038, %v1035
      %v1283 = vpack.c.bf16 %v1085, %v1082
      %vm1284 = vcmask 130048
      %v1286 = vsel %vm1284, %v1276, 0
      %v1289 = vsel %vm1284, %v1280, 0
      %1291 = vmatprep.subr.bf16.mxu0 0
      %1292 = vmatpush1.bf16.xpose.msra.mxu0 %v1289
      %1293 = vmatprep.subr.bf16.mxu0 0
      %1294 = vmatpush1.bf16.xpose.msra.mxu0 0
      %1295 = vmatprep.subr.bf16.mxu0 0
      %1296 = vmatpush1.bf16.xpose.msra.mxu0 0
      %1297 = vmatprep.subr.bf16.mxu0 0
      %1298 = vmatpush1.bf16.xpose.msra.mxu0 0
      %1299 = vmatprep.subr.bf16.mxu0 0
      %1300 = vmatpush1.bf16.xpose.msra.mxu0 0
      %1301 = vmatprep.subr.bf16.mxu0 0
      %1302 = vmatpush1.bf16.xpose.msra.mxu0 0
      %1303 = vmatprep.subr.bf16.mxu0 0
      %1304 = vmatpush1.bf16.xpose.msra.mxu0 0
      %1305 = vmatprep.subr.bf16.mxu0 0
      %1306 = vmatpush1.bf16.xpose.msra.mxu0 0
      %1307 = vmatprep.subr.bf16.mxu0 0
      %1308 = vmatpush1.bf16.xpose.msra.mxu0 0
      %1309 = vmatprep.subr.bf16.mxu0 0
      %1310 = vmatpush1.bf16.xpose.msra.mxu0 0
      %1311 = vmatprep.subr.bf16.mxu0 0
      %1312 = vmatpush1.bf16.xpose.msra.mxu0 0
      %1313 = vmatprep.subr.bf16.mxu0 0
      %1314 = vmatpush1.bf16.xpose.msra.mxu0 0
      %1315 = vmatprep.subr.bf16.mxu0 0
      %1316 = vmatpush1.bf16.xpose.msra.mxu0 0
      %1317 = vmatprep.subr.bf16.mxu0 0
      %1318 = vmatpush1.bf16.xpose.msra.mxu0 0
      %1319 = vmatprep.subr.bf16.mxu0 0
      %1320 = vmatpush1.bf16.xpose.msra.mxu0 0
      %1321 = vmatprep.subr.bf16.mxu0 0
      %1322 = vmatpush1.bf16.xpose.msra.mxu0 0
      %1323 = vmatprep.mubr.bf16.mxu0 0
      %1324 = vmatmul.mubr.bf16.gmra.mrb[0].mxu0 %v1286
      %v1325 = vpop.f32.mrb[0].mxu0
      %v1326 = vadd.f32 0.0, %v1325
      %v1327 = vpop.f32.mrb[0].mxu0
      %v1328 = vpop.f32.mrb[0].mxu0
      %v1329 = vadd.f32 0.0, %v1328
      %v1330 = vpop.f32.mrb[0].mxu0
      %1331 = vdwg.mxu0
      %v1333 = vsel %vm1284, %v1277, 0
      %v1336 = vsel %vm1284, %v1281, 0
      %1338 = vmatprep.subr.bf16.mxu0 0
      %1339 = vmatpush1.bf16.xpose.msra.mxu0 %v1336
      %1340 = vmatprep.subr.bf16.mxu0 0
      %1341 = vmatpush1.bf16.xpose.msra.mxu0 0
      %1342 = vmatprep.subr.bf16.mxu0 0
      %1343 = vmatpush1.bf16.xpose.msra.mxu0 0
      %1344 = vmatprep.subr.bf16.mxu0 0
      %1345 = vmatpush1.bf16.xpose.msra.mxu0 0
      %1346 = vmatprep.subr.bf16.mxu0 0
      %1347 = vmatpush1.bf16.xpose.msra.mxu0 0
      %1348 = vmatprep.subr.bf16.mxu0 0
      %1349 = vmatpush1.bf16.xpose.msra.mxu0 0
      %1350 = vmatprep.subr.bf16.mxu0 0
      %1351 = vmatpush1.bf16.xpose.msra.mxu0 0
      %1352 = vmatprep.subr.bf16.mxu0 0
      %1353 = vmatpush1.bf16.xpose.msra.mxu0 0
      %1354 = vmatprep.subr.bf16.mxu0 0
      %1355 = vmatpush1.bf16.xpose.msra.mxu0 0
      %1356 = vmatprep.subr.bf16.mxu0 0
      %1357 = vmatpush1.bf16.xpose.msra.mxu0 0
      %1358 = vmatprep.subr.bf16.mxu0 0
      %1359 = vmatpush1.bf16.xpose.msra.mxu0 0
      %1360 = vmatprep.subr.bf16.mxu0 0
      %1361 = vmatpush1.bf16.xpose.msra.mxu0 0
      %1362 = vmatprep.subr.bf16.mxu0 0
      %1363 = vmatpush1.bf16.xpose.msra.mxu0 0
      %1364 = vmatprep.subr.bf16.mxu0 0
      %1365 = vmatpush1.bf16.xpose.msra.mxu0 0
      %1366 = vmatprep.subr.bf16.mxu0 0
      %1367 = vmatpush1.bf16.xpose.msra.mxu0 0
      %1368 = vmatprep.subr.bf16.mxu0 0
      %1369 = vmatpush1.bf16.xpose.msra.mxu0 0
      %1370 = vmatprep.mubr.bf16.mxu0 0
      %1371 = vmatmul.mubr.bf16.gmra.mrb[0].mxu0 %v1333
      %v1372 = vpop.f32.mrb[0].mxu0
      %v1373 = vadd.f32 0.0, %v1372
      %v1374 = vpop.f32.mrb[0].mxu0
      %v1375 = vpop.f32.mrb[0].mxu0
      %v1376 = vadd.f32 0.0, %v1375
      %v1377 = vpop.f32.mrb[0].mxu0
      %1378 = vdwg.mxu0
      %v1380 = vsel %vm1284, %v1278, 0
      %v1383 = vsel %vm1284, %v1282, 0
      %1385 = vmatprep.subr.bf16.mxu0 0
      %1386 = vmatpush1.bf16.xpose.msra.mxu0 %v1383
      %1387 = vmatprep.subr.bf16.mxu0 0
      %1388 = vmatpush1.bf16.xpose.msra.mxu0 0
      %1389 = vmatprep.subr.bf16.mxu0 0
      %1390 = vmatpush1.bf16.xpose.msra.mxu0 0
      %1391 = vmatprep.subr.bf16.mxu0 0
      %1392 = vmatpush1.bf16.xpose.msra.mxu0 0
      %1393 = vmatprep.subr.bf16.mxu0 0
      %1394 = vmatpush1.bf16.xpose.msra.mxu0 0
      %1395 = vmatprep.subr.bf16.mxu0 0
      %1396 = vmatpush1.bf16.xpose.msra.mxu0 0
      %1397 = vmatprep.subr.bf16.mxu0 0
      %1398 = vmatpush1.bf16.xpose.msra.mxu0 0
      %1399 = vmatprep.subr.bf16.mxu0 0
      %1400 = vmatpush1.bf16.xpose.msra.mxu0 0
      %1401 = vmatprep.subr.bf16.mxu0 0
      %1402 = vmatpush1.bf16.xpose.msra.mxu0 0
      %1403 = vmatprep.subr.bf16.mxu0 0
      %1404 = vmatpush1.bf16.xpose.msra.mxu0 0
      %1405 = vmatprep.subr.bf16.mxu0 0
      %1406 = vmatpush1.bf16.xpose.msra.mxu0 0
      %1407 = vmatprep.subr.bf16.mxu0 0
      %1408 = vmatpush1.bf16.xpose.msra.mxu0 0
      %1409 = vmatprep.subr.bf16.mxu0 0
      %1410 = vmatpush1.bf16.xpose.msra.mxu0 0
      %1411 = vmatprep.subr.bf16.mxu0 0
      %1412 = vmatpush1.bf16.xpose.msra.mxu0 0
      %1413 = vmatprep.subr.bf16.mxu0 0
      %1414 = vmatpush1.bf16.xpose.msra.mxu0 0
      %1415 = vmatprep.subr.bf16.mxu0 0
      %1416 = vmatpush1.bf16.xpose.msra.mxu0 0
      %1417 = vmatprep.mubr.bf16.mxu0 0
      %1418 = vmatmul.mubr.bf16.gmra.mrb[0].mxu0 %v1380
      %v1419 = vpop.f32.mrb[0].mxu0
      %v1420 = vadd.f32 0.0, %v1419
      %v1421 = vpop.f32.mrb[0].mxu0
      %v1422 = vpop.f32.mrb[0].mxu0
      %v1423 = vadd.f32 0.0, %v1422
      %v1424 = vpop.f32.mrb[0].mxu0
      %1425 = vdwg.mxu0
      %v1427 = vsel %vm1284, %v1279, 0
      %v1430 = vsel %vm1284, %v1283, 0
      %1432 = vmatprep.subr.bf16.mxu0 0
      %1433 = vmatpush1.bf16.xpose.msra.mxu0 %v1430
      %1434 = vmatprep.subr.bf16.mxu0 0
      %1435 = vmatpush1.bf16.xpose.msra.mxu0 0
      %1436 = vmatprep.subr.bf16.mxu0 0
      %1437 = vmatpush1.bf16.xpose.msra.mxu0 0
      %1438 = vmatprep.subr.bf16.mxu0 0
      %1439 = vmatpush1.bf16.xpose.msra.mxu0 0
      %1440 = vmatprep.subr.bf16.mxu0 0
      %1441 = vmatpush1.bf16.xpose.msra.mxu0 0
      %1442 = vmatprep.subr.bf16.mxu0 0
      %1443 = vmatpush1.bf16.xpose.msra.mxu0 0
      %1444 = vmatprep.subr.bf16.mxu0 0
      %1445 = vmatpush1.bf16.xpose.msra.mxu0 0
      %1446 = vmatprep.subr.bf16.mxu0 0
      %1447 = vmatpush1.bf16.xpose.msra.mxu0 0
      %1448 = vmatprep.subr.bf16.mxu0 0
      %1449 = vmatpush1.bf16.xpose.msra.mxu0 0
      %1450 = vmatprep.subr.bf16.mxu0 0
      %1451 = vmatpush1.bf16.xpose.msra.mxu0 0
      %1452 = vmatprep.subr.bf16.mxu0 0
      %1453 = vmatpush1.bf16.xpose.msra.mxu0 0
      %1454 = vmatprep.subr.bf16.mxu0 0
      %1455 = vmatpush1.bf16.xpose.msra.mxu0 0
      %1456 = vmatprep.subr.bf16.mxu0 0
      %1457 = vmatpush1.bf16.xpose.msra.mxu0 0
      %1458 = vmatprep.subr.bf16.mxu0 0
      %1459 = vmatpush1.bf16.xpose.msra.mxu0 0
      %1460 = vmatprep.subr.bf16.mxu0 0
      %1461 = vmatpush1.bf16.xpose.msra.mxu0 0
      %1462 = vmatprep.subr.bf16.mxu0 0
      %1463 = vmatpush1.bf16.xpose.msra.mxu0 0
      %1464 = vmatprep.mubr.bf16.mxu0 0
      %1465 = vmatmul.mubr.bf16.gmra.mrb[0].mxu0 %v1427
      %v1466 = vpop.f32.mrb[0].mxu0
      %v1467 = vadd.f32 0.0, %v1466
      %v1468 = vpop.f32.mrb[0].mxu0
      %v1469 = vpop.f32.mrb[0].mxu0
      %v1470 = vadd.f32 0.0, %v1469
      %v1471 = vpop.f32.mrb[0].mxu0
      %1472 = vdwg.mxu0
      %v1473 = vmul.f32 %v1326, 0.25
      %v1474 = vmul.f32 %v1329, 0.25
      %v1475 = vmul.f32 %v1373, 0.25
      %v1476 = vmul.f32 %v1376, 0.25
      %v1477 = vmul.f32 %v1420, 0.25
      %v1478 = vmul.f32 %v1423, 0.25
      %v1479 = vmul.f32 %v1467, 0.25
      %v1480 = vmul.f32 %v1470, 0.25
      %v1481 = vsel %vm1284, %v1473, -inf
      %1482 = vmax.xlane.f32.xlu0 %v1481
      %v1483 = vpop.xlane.xlu0 %1482
      %v1484 = vsel %vm1284, %v1474, -inf
      %1485 = vmax.xlane.f32.xlu0 %v1484
      %v1486 = vpop.xlane.xlu0 %1485
      %v1487 = vsel %vm1284, %v1475, -inf
      %1488 = vmax.xlane.f32.xlu0 %v1487
      %v1489 = vpop.xlane.xlu0 %1488
      %v1490 = vsel %vm1284, %v1476, -inf
      %1491 = vmax.xlane.f32.xlu0 %v1490
      %v1492 = vpop.xlane.xlu0 %1491
      %v1493 = vsel %vm1284, %v1477, -inf
      %1494 = vmax.xlane.f32.xlu0 %v1493
      %v1495 = vpop.xlane.xlu0 %1494
      %v1496 = vsel %vm1284, %v1478, -inf
      %1497 = vmax.xlane.f32.xlu0 %v1496
      %v1498 = vpop.xlane.xlu0 %1497
      %v1499 = vsel %vm1284, %v1479, -inf
      %1500 = vmax.xlane.f32.xlu0 %v1499
      %v1501 = vpop.xlane.xlu0 %1500
      %v1502 = vsel %vm1284, %v1480, -inf
      %1503 = vmax.xlane.f32.xlu0 %v1502
      %v1504 = vpop.xlane.xlu0 %1503
      %v1505 = vsub.f32 %v1473, %v1483
      %v1506 = vsub.f32 %v1474, %v1486
      %v1507 = vsub.f32 %v1475, %v1489
      %v1508 = vsub.f32 %v1476, %v1492
      %v1509 = vsub.f32 %v1477, %v1495
      %v1510 = vsub.f32 %v1478, %v1498
      %v1511 = vsub.f32 %v1479, %v1501
      %v1512 = vsub.f32 %v1480, %v1504
      %v1513 = vmul.f32 %v1505, 1.442695
      %v1514 = vpow.pop %v1513
      %v1515 = vmul.f32 %v1506, 1.442695
      %v1516 = vpow.pop %v1515
      %v1517 = vmul.f32 %v1507, 1.442695
      %v1518 = vpow.pop %v1517
      %v1519 = vmul.f32 %v1508, 1.442695
      %v1520 = vpow.pop %v1519
      %v1521 = vmul.f32 %v1509, 1.442695
      %v1522 = vpow.pop %v1521
      %v1523 = vmul.f32 %v1510, 1.442695
      %v1524 = vpow.pop %v1523
      %v1525 = vmul.f32 %v1511, 1.442695
      %v1526 = vpow.pop %v1525
      %v1527 = vmul.f32 %v1512, 1.442695
      %v1528 = vpow.pop %v1527
      %v1529 = vsel %vm1284, %v1514, 0.0
      %1530 = vadd.xlane.f32.xlu0 %v1529
      %v1531 = vpop.xlane.xlu0 %1530
      %v1532 = vsel %vm1284, %v1516, 0.0
      %1533 = vadd.xlane.f32.xlu0 %v1532
      %v1534 = vpop.xlane.xlu0 %1533
      %v1535 = vsel %vm1284, %v1518, 0.0
      %1536 = vadd.xlane.f32.xlu0 %v1535
      %v1537 = vpop.xlane.xlu0 %1536
      %v1538 = vsel %vm1284, %v1520, 0.0
      %1539 = vadd.xlane.f32.xlu0 %v1538
      %v1540 = vpop.xlane.xlu0 %1539
      %v1541 = vsel %vm1284, %v1522, 0.0
      %1542 = vadd.xlane.f32.xlu0 %v1541
      %v1543 = vpop.xlane.xlu0 %1542
      %v1544 = vsel %vm1284, %v1524, 0.0
      %1545 = vadd.xlane.f32.xlu0 %v1544
      %v1546 = vpop.xlane.xlu0 %1545
      %v1547 = vsel %vm1284, %v1526, 0.0
      %1548 = vadd.xlane.f32.xlu0 %v1547
      %v1549 = vpop.xlane.xlu0 %1548
      %v1550 = vsel %vm1284, %v1528, 0.0
      %1551 = vadd.xlane.f32.xlu0 %v1550
      %v1552 = vpop.xlane.xlu0 %1551
      %v1553 = vrcp.pop %v1531
      %v1554 = vrcp.pop %v1534
      %v1555 = vrcp.pop %v1537
      %v1556 = vrcp.pop %v1540
      %v1557 = vrcp.pop %v1543
      %v1558 = vrcp.pop %v1546
      %v1559 = vrcp.pop %v1549
      %v1560 = vrcp.pop %v1552
      %v1561 = vmul.f32 %v1514, %v1553
      %v1562 = vmul.f32 %v1516, %v1554
      %v1563 = vmul.f32 %v1518, %v1555
      %v1564 = vmul.f32 %v1520, %v1556
      %v1565 = vmul.f32 %v1522, %v1557
      %v1566 = vmul.f32 %v1524, %v1558
      %v1567 = vmul.f32 %v1526, %v1559
      %v1568 = vmul.f32 %v1528, %v1560
      %v1569 = vpack.c.bf16 %v1562, %v1561
      %v1570 = vpack.c.bf16 %v1564, %v1563
      %v1571 = vpack.c.bf16 %v1566, %v1565
      %v1572 = vpack.c.bf16 %v1568, %v1567
      %v1573 = vpack.c.bf16 %v1132, %v1129
      %v1574 = vpack.c.bf16 %v1179, %v1176
      %v1575 = vpack.c.bf16 %v1226, %v1223
      %v1576 = vpack.c.bf16 %v1273, %v1270
      %v1578 = vsel %vm1284, %v1569, 0
      %1580 = vmatprep.subr.bf16.mxu0 0
      %1581 = vmatpush1.bf16.msra.mxu0 %v1573
      %1582 = vmatprep.subr.bf16.mxu0 0
      %1583 = vmatpush1.bf16.msra.mxu0 0
      %1584 = vmatprep.subr.bf16.mxu0 0
      %1585 = vmatpush1.bf16.msra.mxu0 0
      %1586 = vmatprep.subr.bf16.mxu0 0
      %1587 = vmatpush1.bf16.msra.mxu0 0
      %1588 = vmatprep.subr.bf16.mxu0 0
      %1589 = vmatpush1.bf16.msra.mxu0 0
      %1590 = vmatprep.subr.bf16.mxu0 0
      %1591 = vmatpush1.bf16.msra.mxu0 0
      %1592 = vmatprep.subr.bf16.mxu0 0
      %1593 = vmatpush1.bf16.msra.mxu0 0
      %1594 = vmatprep.subr.bf16.mxu0 0
      %1595 = vmatpush1.bf16.msra.mxu0 0
      %1596 = vmatprep.subr.bf16.mxu0 0
      %1597 = vmatpush1.bf16.msra.mxu0 0
      %1598 = vmatprep.subr.bf16.mxu0 0
      %1599 = vmatpush1.bf16.msra.mxu0 0
      %1600 = vmatprep.subr.bf16.mxu0 0
      %1601 = vmatpush1.bf16.msra.mxu0 0
      %1602 = vmatprep.subr.bf16.mxu0 0
      %1603 = vmatpush1.bf16.msra.mxu0 0
      %1604 = vmatprep.subr.bf16.mxu0 0
      %1605 = vmatpush1.bf16.msra.mxu0 0
      %1606 = vmatprep.subr.bf16.mxu0 0
      %1607 = vmatpush1.bf16.msra.mxu0 0
      %1608 = vmatprep.subr.bf16.mxu0 0
      %1609 = vmatpush1.bf16.msra.mxu0 0
      %1610 = vmatprep.subr.bf16.mxu0 0
      %1611 = vmatpush1.bf16.msra.mxu0 0
      %1612 = vmatprep.mubr.bf16.mxu0 0
      %1613 = vmatmul.mubr.bf16.gmra.mrb[0].mxu0 %v1578
      %v1614 = vpop.f32.mrb[0].mxu0
      %v1615 = vadd.f32 0.0, %v1614
      %v1616 = vpop.f32.mrb[0].mxu0
      %v1617 = vpop.f32.mrb[0].mxu0
      %v1618 = vadd.f32 0.0, %v1617
      %v1619 = vpop.f32.mrb[0].mxu0
      %1620 = vdwg.mxu0
      %v1622 = vsel %vm1284, %v1570, 0
      %1624 = vmatprep.subr.bf16.mxu0 0
      %1625 = vmatpush1.bf16.msra.mxu0 %v1574
      %1626 = vmatprep.subr.bf16.mxu0 0
      %1627 = vmatpush1.bf16.msra.mxu0 0
      %1628 = vmatprep.subr.bf16.mxu0 0
      %1629 = vmatpush1.bf16.msra.mxu0 0
      %1630 = vmatprep.subr.bf16.mxu0 0
      %1631 = vmatpush1.bf16.msra.mxu0 0
      %1632 = vmatprep.subr.bf16.mxu0 0
      %1633 = vmatpush1.bf16.msra.mxu0 0
      %1634 = vmatprep.subr.bf16.mxu0 0
      %1635 = vmatpush1.bf16.msra.mxu0 0
      %1636 = vmatprep.subr.bf16.mxu0 0
      %1637 = vmatpush1.bf16.msra.mxu0 0
      %1638 = vmatprep.subr.bf16.mxu0 0
      %1639 = vmatpush1.bf16.msra.mxu0 0
      %1640 = vmatprep.subr.bf16.mxu0 0
      %1641 = vmatpush1.bf16.msra.mxu0 0
      %1642 = vmatprep.subr.bf16.mxu0 0
      %1643 = vmatpush1.bf16.msra.mxu0 0
      %1644 = vmatprep.subr.bf16.mxu0 0
      %1645 = vmatpush1.bf16.msra.mxu0 0
      %1646 = vmatprep.subr.bf16.mxu0 0
      %1647 = vmatpush1.bf16.msra.mxu0 0
      %1648 = vmatprep.subr.bf16.mxu0 0
      %1649 = vmatpush1.bf16.msra.mxu0 0
      %1650 = vmatprep.subr.bf16.mxu0 0
      %1651 = vmatpush1.bf16.msra.mxu0 0
      %1652 = vmatprep.subr.bf16.mxu0 0
      %1653 = vmatpush1.bf16.msra.mxu0 0
      %1654 = vmatprep.subr.bf16.mxu0 0
      %1655 = vmatpush1.bf16.msra.mxu0 0
      %1656 = vmatprep.mubr.bf16.mxu0 0
      %1657 = vmatmul.mubr.bf16.gmra.mrb[0].mxu0 %v1622
      %v1658 = vpop.f32.mrb[0].mxu0
      %v1659 = vadd.f32 0.0, %v1658
      %v1660 = vpop.f32.mrb[0].mxu0
      %v1661 = vpop.f32.mrb[0].mxu0
      %v1662 = vadd.f32 0.0, %v1661
      %v1663 = vpop.f32.mrb[0].mxu0
      %1664 = vdwg.mxu0
      %v1666 = vsel %vm1284, %v1571, 0
      %1668 = vmatprep.subr.bf16.mxu0 0
      %1669 = vmatpush1.bf16.msra.mxu0 %v1575
      %1670 = vmatprep.subr.bf16.mxu0 0
      %1671 = vmatpush1.bf16.msra.mxu0 0
      %1672 = vmatprep.subr.bf16.mxu0 0
      %1673 = vmatpush1.bf16.msra.mxu0 0
      %1674 = vmatprep.subr.bf16.mxu0 0
      %1675 = vmatpush1.bf16.msra.mxu0 0
      %1676 = vmatprep.subr.bf16.mxu0 0
      %1677 = vmatpush1.bf16.msra.mxu0 0
      %1678 = vmatprep.subr.bf16.mxu0 0
      %1679 = vmatpush1.bf16.msra.mxu0 0
      %1680 = vmatprep.subr.bf16.mxu0 0
      %1681 = vmatpush1.bf16.msra.mxu0 0
      %1682 = vmatprep.subr.bf16.mxu0 0
      %1683 = vmatpush1.bf16.msra.mxu0 0
      %1684 = vmatprep.subr.bf16.mxu0 0
      %1685 = vmatpush1.bf16.msra.mxu0 0
      %1686 = vmatprep.subr.bf16.mxu0 0
      %1687 = vmatpush1.bf16.msra.mxu0 0
      %1688 = vmatprep.subr.bf16.mxu0 0
      %1689 = vmatpush1.bf16.msra.mxu0 0
      %1690 = vmatprep.subr.bf16.mxu0 0
      %1691 = vmatpush1.bf16.msra.mxu0 0
      %1692 = vmatprep.subr.bf16.mxu0 0
      %1693 = vmatpush1.bf16.msra.mxu0 0
      %1694 = vmatprep.subr.bf16.mxu0 0
      %1695 = vmatpush1.bf16.msra.mxu0 0
      %1696 = vmatprep.subr.bf16.mxu0 0
      %1697 = vmatpush1.bf16.msra.mxu0 0
      %1698 = vmatprep.subr.bf16.mxu0 0
      %1699 = vmatpush1.bf16.msra.mxu0 0
      %1700 = vmatprep.mubr.bf16.mxu0 0
      %1701 = vmatmul.mubr.bf16.gmra.mrb[0].mxu0 %v1666
      %v1702 = vpop.f32.mrb[0].mxu0
      %v1703 = vadd.f32 0.0, %v1702
      %v1704 = vpop.f32.mrb[0].mxu0
      %v1705 = vpop.f32.mrb[0].mxu0
      %v1706 = vadd.f32 0.0, %v1705
      %v1707 = vpop.f32.mrb[0].mxu0
      %1708 = vdwg.mxu0
      %v1710 = vsel %vm1284, %v1572, 0
      %1712 = vmatprep.subr.bf16.mxu0 0
      %1713 = vmatpush1.bf16.msra.mxu0 %v1576
      %1714 = vmatprep.subr.bf16.mxu0 0
      %1715 = vmatpush1.bf16.msra.mxu0 0
      %1716 = vmatprep.subr.bf16.mxu0 0
      %1717 = vmatpush1.bf16.msra.mxu0 0
      %1718 = vmatprep.subr.bf16.mxu0 0
      %1719 = vmatpush1.bf16.msra.mxu0 0
      %1720 = vmatprep.subr.bf16.mxu0 0
      %1721 = vmatpush1.bf16.msra.mxu0 0
      %1722 = vmatprep.subr.bf16.mxu0 0
      %1723 = vmatpush1.bf16.msra.mxu0 0
      %1724 = vmatprep.subr.bf16.mxu0 0
      %1725 = vmatpush1.bf16.msra.mxu0 0
      %1726 = vmatprep.subr.bf16.mxu0 0
      %1727 = vmatpush1.bf16.msra.mxu0 0
      %1728 = vmatprep.subr.bf16.mxu0 0
      %1729 = vmatpush1.bf16.msra.mxu0 0
      %1730 = vmatprep.subr.bf16.mxu0 0
      %1731 = vmatpush1.bf16.msra.mxu0 0
      %1732 = vmatprep.subr.bf16.mxu0 0
      %1733 = vmatpush1.bf16.msra.mxu0 0
      %1734 = vmatprep.subr.bf16.mxu0 0
      %1735 = vmatpush1.bf16.msra.mxu0 0
      %1736 = vmatprep.subr.bf16.mxu0 0
      %1737 = vmatpush1.bf16.msra.mxu0 0
      %1738 = vmatprep.subr.bf16.mxu0 0
      %1739 = vmatpush1.bf16.msra.mxu0 0
      %1740 = vmatprep.subr.bf16.mxu0 0
      %1741 = vmatpush1.bf16.msra.mxu0 0
      %1742 = vmatprep.subr.bf16.mxu0 0
      %1743 = vmatpush1.bf16.msra.mxu0 0
      %1744 = vmatprep.mubr.bf16.mxu0 0
      %1745 = vmatmul.mubr.bf16.gmra.mrb[0].mxu0 %v1710
      %v1746 = vpop.f32.mrb[0].mxu0
      %v1747 = vadd.f32 0.0, %v1746
      %v1748 = vpop.f32.mrb[0].mxu0
      %v1749 = vpop.f32.mrb[0].mxu0
      %v1750 = vadd.f32 0.0, %v1749
      %v1751 = vpop.f32.mrb[0].mxu0
      %1752 = vdwg.mxu0
      %v1753 = vpack.c.bf16 %v1618, %v1615
      %v1754 = vpack.c.bf16 %v1662, %v1659
      %v1755 = vpack.c.bf16 %v1706, %v1703
      %v1756 = vpack.c.bf16 %v1750, %v1747
      %v1759 = vunpack.c.l.b16 %v607
      %v1760 = vunpack.c.l.b16 %v608
      %v1761 = vpack.c.b16 %v1760, %v1759
      %v1764 = vsel %vm1284, %v1753, 0
      %1766 = vmatprep.subr.bf16.mxu0 0
      %1767 = vmatpush1.bf16.msra.mxu0 %v1761
      %1768 = vmatprep.subr.bf16.mxu0 0
      %1769 = vmatpush1.bf16.msra.mxu0 0
      %1770 = vmatprep.subr.bf16.mxu0 0
      %1771 = vmatpush1.bf16.msra.mxu0 0
      %1772 = vmatprep.subr.bf16.mxu0 0
      %1773 = vmatpush1.bf16.msra.mxu0 0
      %1774 = vmatprep.subr.bf16.mxu0 0
      %1775 = vmatpush1.bf16.msra.mxu0 0
      %1776 = vmatprep.subr.bf16.mxu0 0
      %1777 = vmatpush1.bf16.msra.mxu0 0
      %1778 = vmatprep.subr.bf16.mxu0 0
      %1779 = vmatpush1.bf16.msra.mxu0 0
      %1780 = vmatprep.subr.bf16.mxu0 0
      %1781 = vmatpush1.bf16.msra.mxu0 0
      %1782 = vmatprep.subr.bf16.mxu0 0
      %1783 = vmatpush1.bf16.msra.mxu0 0
      %1784 = vmatprep.subr.bf16.mxu0 0
      %1785 = vmatpush1.bf16.msra.mxu0 0
      %1786 = vmatprep.subr.bf16.mxu0 0
      %1787 = vmatpush1.bf16.msra.mxu0 0
      %1788 = vmatprep.subr.bf16.mxu0 0
      %1789 = vmatpush1.bf16.msra.mxu0 0
      %1790 = vmatprep.subr.bf16.mxu0 0
      %1791 = vmatpush1.bf16.msra.mxu0 0
      %1792 = vmatprep.subr.bf16.mxu0 0
      %1793 = vmatpush1.bf16.msra.mxu0 0
      %1794 = vmatprep.subr.bf16.mxu0 0
      %1795 = vmatpush1.bf16.msra.mxu0 0
      %1796 = vmatprep.subr.bf16.mxu0 0
      %1797 = vmatpush1.bf16.msra.mxu0 0
      %1798 = vmatprep.mubr.bf16.mxu0 0
      %1799 = vmatmul.mubr.bf16.gmra.mrb[0].mxu0 %v1764
      %v1800 = vpop.f32.mrb[0].mxu0
      %v1801 = vadd.f32 0.0, %v1800
      %v1802 = vpop.f32.mrb[0].mxu0
      %v1803 = vpop.f32.mrb[0].mxu0
      %v1804 = vadd.f32 0.0, %v1803
      %v1805 = vpop.f32.mrb[0].mxu0
      %1806 = vdwg.mxu0
      %v1809 = vunpack.c.l.b16 %v609
      %v1810 = vunpack.c.l.b16 %v610
      %v1811 = vpack.c.b16 %v1810, %v1809
      %v1814 = vsel %vm1284, %v1754, 0
      %1816 = vmatprep.subr.bf16.mxu0 0
      %1817 = vmatpush1.bf16.msra.mxu0 %v1811
      %1818 = vmatprep.subr.bf16.mxu0 0
      %1819 = vmatpush1.bf16.msra.mxu0 0
      %1820 = vmatprep.subr.bf16.mxu0 0
      %1821 = vmatpush1.bf16.msra.mxu0 0
      %1822 = vmatprep.subr.bf16.mxu0 0
      %1823 = vmatpush1.bf16.msra.mxu0 0
      %1824 = vmatprep.subr.bf16.mxu0 0
      %1825 = vmatpush1.bf16.msra.mxu0 0
      %1826 = vmatprep.subr.bf16.mxu0 0
      %1827 = vmatpush1.bf16.msra.mxu0 0
      %1828 = vmatprep.subr.bf16.mxu0 0
      %1829 = vmatpush1.bf16.msra.mxu0 0
      %1830 = vmatprep.subr.bf16.mxu0 0
      %1831 = vmatpush1.bf16.msra.mxu0 0
      %1832 = vmatprep.subr.bf16.mxu0 0
      %1833 = vmatpush1.bf16.msra.mxu0 0
      %1834 = vmatprep.subr.bf16.mxu0 0
      %1835 = vmatpush1.bf16.msra.mxu0 0
      %1836 = vmatprep.subr.bf16.mxu0 0
      %1837 = vmatpush1.bf16.msra.mxu0 0
      %1838 = vmatprep.subr.bf16.mxu0 0
      %1839 = vmatpush1.bf16.msra.mxu0 0
      %1840 = vmatprep.subr.bf16.mxu0 0
      %1841 = vmatpush1.bf16.msra.mxu0 0
      %1842 = vmatprep.subr.bf16.mxu0 0
      %1843 = vmatpush1.bf16.msra.mxu0 0
      %1844 = vmatprep.subr.bf16.mxu0 0
      %1845 = vmatpush1.bf16.msra.mxu0 0
      %1846 = vmatprep.subr.bf16.mxu0 0
      %1847 = vmatpush1.bf16.msra.mxu0 0
      %1848 = vmatprep.mubr.bf16.mxu0 0
      %1849 = vmatmul.mubr.bf16.gmra.mrb[0].mxu0 %v1814
      %v1850 = vpop.f32.mrb[0].mxu0
      %v1851 = vadd.f32 0.0, %v1850
      %v1852 = vpop.f32.mrb[0].mxu0
      %v1853 = vpop.f32.mrb[0].mxu0
      %v1854 = vadd.f32 0.0, %v1853
      %v1855 = vpop.f32.mrb[0].mxu0
      %1856 = vdwg.mxu0
      %v1859 = vunpack.c.l.b16 %v611
      %v1860 = vunpack.c.l.b16 %v612
      %v1861 = vpack.c.b16 %v1860, %v1859
      %v1864 = vsel %vm1284, %v1755, 0
      %1866 = vmatprep.subr.bf16.mxu0 0
      %1867 = vmatpush1.bf16.msra.mxu0 %v1861
      %1868 = vmatprep.subr.bf16.mxu0 0
      %1869 = vmatpush1.bf16.msra.mxu0 0
      %1870 = vmatprep.subr.bf16.mxu0 0
      %1871 = vmatpush1.bf16.msra.mxu0 0
      %1872 = vmatprep.subr.bf16.mxu0 0
      %1873 = vmatpush1.bf16.msra.mxu0 0
      %1874 = vmatprep.subr.bf16.mxu0 0
      %1875 = vmatpush1.bf16.msra.mxu0 0
      %1876 = vmatprep.subr.bf16.mxu0 0
      %1877 = vmatpush1.bf16.msra.mxu0 0
      %1878 = vmatprep.subr.bf16.mxu0 0
      %1879 = vmatpush1.bf16.msra.mxu0 0
      %1880 = vmatprep.subr.bf16.mxu0 0
      %1881 = vmatpush1.bf16.msra.mxu0 0
      %1882 = vmatprep.subr.bf16.mxu0 0
      %1883 = vmatpush1.bf16.msra.mxu0 0
      %1884 = vmatprep.subr.bf16.mxu0 0
      %1885 = vmatpush1.bf16.msra.mxu0 0
      %1886 = vmatprep.subr.bf16.mxu0 0
      %1887 = vmatpush1.bf16.msra.mxu0 0
      %1888 = vmatprep.subr.bf16.mxu0 0
      %1889 = vmatpush1.bf16.msra.mxu0 0
      %1890 = vmatprep.subr.bf16.mxu0 0
      %1891 = vmatpush1.bf16.msra.mxu0 0
      %1892 = vmatprep.subr.bf16.mxu0 0
      %1893 = vmatpush1.bf16.msra.mxu0 0
      %1894 = vmatprep.subr.bf16.mxu0 0
      %1895 = vmatpush1.bf16.msra.mxu0 0
      %1896 = vmatprep.subr.bf16.mxu0 0
      %1897 = vmatpush1.bf16.msra.mxu0 0
      %1898 = vmatprep.mubr.bf16.mxu0 0
      %1899 = vmatmul.mubr.bf16.gmra.mrb[0].mxu0 %v1864
      %v1900 = vpop.f32.mrb[0].mxu0
      %v1901 = vadd.f32 0.0, %v1900
      %v1902 = vpop.f32.mrb[0].mxu0
      %v1903 = vpop.f32.mrb[0].mxu0
      %v1904 = vadd.f32 0.0, %v1903
      %v1905 = vpop.f32.mrb[0].mxu0
      %1906 = vdwg.mxu0
      %v1909 = vunpack.c.l.b16 %v613
      %v1910 = vunpack.c.l.b16 %v614
      %v1911 = vpack.c.b16 %v1910, %v1909
      %v1914 = vsel %vm1284, %v1756, 0
      %1916 = vmatprep.subr.bf16.mxu0 0
      %1917 = vmatpush1.bf16.msra.mxu0 %v1911
      %1918 = vmatprep.subr.bf16.mxu0 0
      %1919 = vmatpush1.bf16.msra.mxu0 0
      %1920 = vmatprep.subr.bf16.mxu0 0
      %1921 = vmatpush1.bf16.msra.mxu0 0
      %1922 = vmatprep.subr.bf16.mxu0 0
      %1923 = vmatpush1.bf16.msra.mxu0 0
      %1924 = vmatprep.subr.bf16.mxu0 0
      %1925 = vmatpush1.bf16.msra.mxu0 0
      %1926 = vmatprep.subr.bf16.mxu0 0
      %1927 = vmatpush1.bf16.msra.mxu0 0
      %1928 = vmatprep.subr.bf16.mxu0 0
      %1929 = vmatpush1.bf16.msra.mxu0 0
      %1930 = vmatprep.subr.bf16.mxu0 0
      %1931 = vmatpush1.bf16.msra.mxu0 0
      %1932 = vmatprep.subr.bf16.mxu0 0
      %1933 = vmatpush1.bf16.msra.mxu0 0
      %1934 = vmatprep.subr.bf16.mxu0 0
      %1935 = vmatpush1.bf16.msra.mxu0 0
      %1936 = vmatprep.subr.bf16.mxu0 0
      %1937 = vmatpush1.bf16.msra.mxu0 0
      %1938 = vmatprep.subr.bf16.mxu0 0
      %1939 = vmatpush1.bf16.msra.mxu0 0
      %1940 = vmatprep.subr.bf16.mxu0 0
      %1941 = vmatpush1.bf16.msra.mxu0 0
      %1942 = vmatprep.subr.bf16.mxu0 0
      %1943 = vmatpush1.bf16.msra.mxu0 0
      %1944 = vmatprep.subr.bf16.mxu0 0
      %1945 = vmatpush1.bf16.msra.mxu0 0
      %1946 = vmatprep.subr.bf16.mxu0 0
      %1947 = vmatpush1.bf16.msra.mxu0 0
      %1948 = vmatprep.mubr.bf16.mxu0 0
      %1949 = vmatmul.mubr.bf16.gmra.mrb[0].mxu0 %v1914
      %v1950 = vpop.f32.mrb[0].mxu0
      %v1951 = vadd.f32 0.0, %v1950
      %v1952 = vpop.f32.mrb[0].mxu0
      %v1953 = vpop.f32.mrb[0].mxu0
      %v1954 = vadd.f32 0.0, %v1953
      %v1955 = vpop.f32.mrb[0].mxu0
      %1956 = vdwg.mxu0
      %v1957 = vadd.f32 %v1801, %v1851
      %v1958 = vadd.f32 %v1957, %v1901
      %v1959 = vadd.f32 %v1958, %v1951
      %v1960 = vadd.f32 %v1804, %v1854
      %v1961 = vadd.f32 %v1960, %v1904
      %v1962 = vadd.f32 %v1961, %v1954
      %v1964 = vlaneseq
      %v1965 = vshrl.u32 %v1964, 7
      %v1966 = vsub.s32 0, %v1965
      %v1967 = vrot.slane %v615, %v1966
      %v1969 = vadd.f32 %v1959, %v1967
      %v1970 = vadd.f32 %v1962, %v1967
      %v1971 = vadd.f32 %v579, %v1969
      %v1972 = vadd.f32 %v580, %v1970
      %1973 = vadd.xlane.f32.xlu0 %v1971
      %v1974 = vpop.xlane.xlu0 %1973
      %1975 = vadd.xlane.f32.xlu0 %v1972
      %v1976 = vpop.xlane.xlu0 %1975
      %v1977 = vmul.f32 %v1974, 0.020833334
      %v1978 = vmul.f32 %v1976, 0.020833334
      %v1979 = vsub.f32 %v1971, %v1977
      %v1980 = vsub.f32 %v1972, %v1978
      %v1981 = vsel %vm678, %v1979, 0.0
      %v1982 = vsel %vm678, %v1980, 0.0
      %v1983 = vmul.f32 %v1981, %v1981
      %v1984 = vmul.f32 %v1982, %v1982
      %1985 = vadd.xlane.f32.xlu0 %v1983
      %v1986 = vpop.xlane.xlu0 %1985
      %1987 = vadd.xlane.f32.xlu0 %v1984
      %v1988 = vpop.xlane.xlu0 %1987
      %v1989 = vmul.f32 %v1986, 0.020833334
      %v1990 = vmul.f32 %v1988, 0.020833334
      %v1991 = vadd.f32 %v1989, 1e-05
      %v1992 = vadd.f32 %v1990, 1e-05
      %v1993 = vrsqrt.pop %v1991
      %v1994 = vrsqrt.pop %v1992
      %v1995 = vmul.f32 %v1981, %v1993
      %v1996 = vmul.f32 %v1982, %v1994
      %v1998 = vlaneseq
      %v1999 = vshrl.u32 %v1998, 7
      %v2000 = vsub.s32 0, %v1999
      %v2001 = vrot.slane %v616, %v2000
      %v2003 = vmul.f32 %v1995, %v2001
      %v2004 = vmul.f32 %v1996, %v2001
      %v2006 = vlaneseq
      %v2007 = vshrl.u32 %v2006, 7
      %v2008 = vsub.s32 0, %v2007
      %v2009 = vrot.slane %v617, %v2008
      %v2011 = vadd.f32 %v2003, %v2009
      %v2012 = vadd.f32 %v2004, %v2009
      %v2013 = vpack.c.bf16 %v2012, %v2011
      %v2015 = vlaneseq
      %v2016 = vshrl.u32 %v2015, 7
      %v2017 = vsub.s32 0, %v2016
      %v2018 = vrot.slane %v634, %v2017
      %v2019 = vlaneseq
      %v2020 = vshrl.u32 %v2019, 7
      %v2021 = vsub.s32 1, %v2020
      %v2022 = vrot.slane %v634, %v2021
      %v2041 = vunpack.c.l.b16 %v618
      %v2042 = vunpack.c.h.b16 %v618
      %v2043 = vunpack.c.l.b16 %v619
      %v2044 = vunpack.c.h.b16 %v619
      %v2045 = vunpack.c.l.b16 %v620
      %v2046 = vunpack.c.h.b16 %v620
      %v2047 = vunpack.c.l.b16 %v621
      %v2048 = vunpack.c.h.b16 %v621
      %v2049 = vunpack.c.l.b16 %v622
      %v2050 = vunpack.c.h.b16 %v622
      %v2051 = vunpack.c.l.b16 %v623
      %v2052 = vunpack.c.h.b16 %v623
      %v2053 = vunpack.c.l.b16 %v624
      %v2054 = vunpack.c.h.b16 %v624
      %v2055 = vunpack.c.l.b16 %v625
      %v2056 = vunpack.c.h.b16 %v625
      %v2057 = vunpack.c.l.b16 %v626
      %v2058 = vunpack.c.h.b16 %v626
      %v2059 = vunpack.c.l.b16 %v627
      %v2060 = vunpack.c.h.b16 %v627
      %v2061 = vunpack.c.l.b16 %v628
      %v2062 = vunpack.c.h.b16 %v628
      %v2063 = vunpack.c.l.b16 %v629
      %v2064 = vunpack.c.h.b16 %v629
      %v2065 = vunpack.c.l.b16 %v630
      %v2066 = vunpack.c.h.b16 %v630
      %v2067 = vunpack.c.l.b16 %v631
      %v2068 = vunpack.c.h.b16 %v631
      %v2069 = vunpack.c.l.b16 %v632
      %v2070 = vunpack.c.h.b16 %v632
      %v2071 = vunpack.c.l.b16 %v633
      %v2072 = vunpack.c.h.b16 %v633
      %v2073 = vpack.c.b16 %v2043, %v2041
      %v2074 = vpack.c.b16 %v2044, %v2042
      %v2075 = vpack.c.b16 %v2047, %v2045
      %v2076 = vpack.c.b16 %v2048, %v2046
      %v2077 = vpack.c.b16 %v2051, %v2049
      %v2078 = vpack.c.b16 %v2052, %v2050
      %v2079 = vpack.c.b16 %v2055, %v2053
      %v2080 = vpack.c.b16 %v2056, %v2054
      %v2081 = vpack.c.b16 %v2059, %v2057
      %v2082 = vpack.c.b16 %v2060, %v2058
      %v2083 = vpack.c.b16 %v2063, %v2061
      %v2084 = vpack.c.b16 %v2064, %v2062
      %v2085 = vpack.c.b16 %v2067, %v2065
      %v2086 = vpack.c.b16 %v2068, %v2066
      %v2087 = vpack.c.b16 %v2071, %v2069
      %v2088 = vpack.c.b16 %v2072, %v2070
      %2105 = vmatprep.subr.bf16.mxu0 %v2074
      %2106 = vmatpush1.bf16.msra.mxu0 %v2073
      %2107 = vmatprep.subr.bf16.mxu0 %v2076
      %2108 = vmatpush1.bf16.msra.mxu0 %v2075
      %2109 = vmatprep.subr.bf16.mxu0 %v2078
      %2110 = vmatpush1.bf16.msra.mxu0 %v2077
      %2111 = vmatprep.subr.bf16.mxu0 %v2080
      %2112 = vmatpush1.bf16.msra.mxu0 %v2079
      %2113 = vmatprep.subr.bf16.mxu0 %v2082
      %2114 = vmatpush1.bf16.msra.mxu0 %v2081
      %2115 = vmatprep.subr.bf16.mxu0 %v2084
      %2116 = vmatpush1.bf16.msra.mxu0 %v2083
      %2117 = vmatprep.subr.bf16.mxu0 %v2086
      %2118 = vmatpush1.bf16.msra.mxu0 %v2085
      %2119 = vmatprep.subr.bf16.mxu0 %v2088
      %2120 = vmatpush1.bf16.msra.mxu0 %v2087
      %2121 = vmatprep.subr.bf16.mxu0 0
      %2122 = vmatpush1.bf16.msra.mxu0 0
      %2123 = vmatprep.subr.bf16.mxu0 0
      %2124 = vmatpush1.bf16.msra.mxu0 0
      %2125 = vmatprep.subr.bf16.mxu0 0
      %2126 = vmatpush1.bf16.msra.mxu0 0
      %2127 = vmatprep.subr.bf16.mxu0 0
      %2128 = vmatpush1.bf16.msra.mxu0 0
      %2129 = vmatprep.subr.bf16.mxu0 0
      %2130 = vmatpush1.bf16.msra.mxu0 0
      %2131 = vmatprep.subr.bf16.mxu0 0
      %2132 = vmatpush1.bf16.msra.mxu0 0
      %2133 = vmatprep.subr.bf16.mxu0 0
      %2134 = vmatpush1.bf16.msra.mxu0 0
      %2135 = vmatprep.subr.bf16.mxu0 0
      %2136 = vmatpush1.bf16.msra.mxu0 0
      %2137 = vmatprep.mubr.bf16.mxu0 0
      %2138 = vmatmul.mubr.bf16.gmra.mrb[0].mxu0 %v2013
      %v2139 = vpop.f32.mrb[0].mxu0
      %v2140 = vadd.f32 %v2018, %v2139
      %v2141 = vpop.f32.mrb[0].mxu0
      %v2142 = vadd.f32 %v2022, %v2141
      %v2143 = vpop.f32.mrb[0].mxu0
      %v2144 = vadd.f32 %v2018, %v2143
      %v2145 = vpop.f32.mrb[0].mxu0
      %v2146 = vadd.f32 %v2022, %v2145
      %2147 = vdwg.mxu0
      %v2148 = vmul.f32 %v2140, %v2140
      %v2149 = vmul.f32 %v2142, %v2142
      %v2150 = vmul.f32 %v2144, %v2144
      %v2151 = vmul.f32 %v2146, %v2146
      %v2152 = vmul.f32 %v2140, %v2148
      %v2153 = vmul.f32 %v2142, %v2149
      %v2154 = vmul.f32 %v2144, %v2150
      %v2155 = vmul.f32 %v2146, %v2151
      %v2156 = vmul.f32 %v2152, 0.044715
      %v2157 = vmul.f32 %v2153, 0.044715
      %v2158 = vmul.f32 %v2154, 0.044715
      %v2159 = vmul.f32 %v2155, 0.044715
      %v2160 = vadd.f32 %v2140, %v2156
      %v2161 = vadd.f32 %v2142, %v2157
      %v2162 = vadd.f32 %v2144, %v2158
      %v2163 = vadd.f32 %v2146, %v2159
      %v2164 = vmul.f32 %v2160, 0.7978846
      %v2165 = vmul.f32 %v2161, 0.7978846
      %v2166 = vmul.f32 %v2162, 0.7978846
      %v2167 = vmul.f32 %v2163, 0.7978846
      %v2168 = vtanh.pop %v2164
      %v2169 = vtanh.pop %v2165
      %v2170 = vtanh.pop %v2166
      %v2171 = vtanh.pop %v2167
      %v2172 = vadd.f32 %v2168, 1.0
      %v2173 = vadd.f32 %v2169, 1.0
      %v2174 = vadd.f32 %v2170, 1.0
      %v2175 = vadd.f32 %v2171, 1.0
      %v2176 = vmul.f32 %v2172, 0.5
      %v2177 = vmul.f32 %v2173, 0.5
      %v2178 = vmul.f32 %v2174, 0.5
      %v2179 = vmul.f32 %v2175, 0.5
      %v2180 = vmul.f32 %v2140, %v2176
      %v2181 = vmul.f32 %v2142, %v2177
      %v2182 = vmul.f32 %v2144, %v2178
      %v2183 = vmul.f32 %v2146, %v2179
      %v2184 = vpack.c.bf16 %v2182, %v2180
      %v2185 = vpack.c.bf16 %v2183, %v2181
      %v2187 = vlaneseq
      %v2188 = vshrl.u32 %v2187, 7
      %v2189 = vsub.s32 0, %v2188
      %v2190 = vrot.slane %v667, %v2189
      %v2224 = vunpack.c.l.b16 %v635
      %v2225 = vunpack.c.l.b16 %v636
      %v2226 = vunpack.c.l.b16 %v637
      %v2227 = vunpack.c.l.b16 %v638
      %v2228 = vunpack.c.l.b16 %v639
      %v2229 = vunpack.c.l.b16 %v640
      %v2230 = vunpack.c.l.b16 %v641
      %v2231 = vunpack.c.l.b16 %v642
      %v2232 = vunpack.c.l.b16 %v643
      %v2233 = vunpack.c.l.b16 %v644
      %v2234 = vunpack.c.l.b16 %v645
      %v2235 = vunpack.c.l.b16 %v646
      %v2236 = vunpack.c.l.b16 %v647
      %v2237 = vunpack.c.l.b16 %v648
      %v2238 = vunpack.c.l.b16 %v649
      %v2239 = vunpack.c.l.b16 %v650
      %v2240 = vunpack.c.l.b16 %v651
      %v2241 = vunpack.c.l.b16 %v652
      %v2242 = vunpack.c.l.b16 %v653
      %v2243 = vunpack.c.l.b16 %v654
      %v2244 = vunpack.c.l.b16 %v655
      %v2245 = vunpack.c.l.b16 %v656
      %v2246 = vunpack.c.l.b16 %v657
      %v2247 = vunpack.c.l.b16 %v658
      %v2248 = vunpack.c.l.b16 %v659
      %v2249 = vunpack.c.l.b16 %v660
      %v2250 = vunpack.c.l.b16 %v661
      %v2251 = vunpack.c.l.b16 %v662
      %v2252 = vunpack.c.l.b16 %v663
      %v2253 = vunpack.c.l.b16 %v664
      %v2254 = vunpack.c.l.b16 %v665
      %v2255 = vunpack.c.l.b16 %v666
      %v2256 = vpack.c.b16 %v2225, %v2224
      %v2257 = vpack.c.b16 %v2227, %v2226
      %v2258 = vpack.c.b16 %v2229, %v2228
      %v2259 = vpack.c.b16 %v2231, %v2230
      %v2260 = vpack.c.b16 %v2233, %v2232
      %v2261 = vpack.c.b16 %v2235, %v2234
      %v2262 = vpack.c.b16 %v2237, %v2236
      %v2263 = vpack.c.b16 %v2239, %v2238
      %v2264 = vpack.c.b16 %v2241, %v2240
      %v2265 = vpack.c.b16 %v2243, %v2242
      %v2266 = vpack.c.b16 %v2245, %v2244
      %v2267 = vpack.c.b16 %v2247, %v2246
      %v2268 = vpack.c.b16 %v2249, %v2248
      %v2269 = vpack.c.b16 %v2251, %v2250
      %v2270 = vpack.c.b16 %v2253, %v2252
      %v2271 = vpack.c.b16 %v2255, %v2254
      %2288 = vmatprep.subr.bf16.mxu0 0
      %2289 = vmatpush1.bf16.msra.mxu0 %v2256
      %2290 = vmatprep.subr.bf16.mxu0 0
      %2291 = vmatpush1.bf16.msra.mxu0 %v2257
      %2292 = vmatprep.subr.bf16.mxu0 0
      %2293 = vmatpush1.bf16.msra.mxu0 %v2258
      %2294 = vmatprep.subr.bf16.mxu0 0
      %2295 = vmatpush1.bf16.msra.mxu0 %v2259
      %2296 = vmatprep.subr.bf16.mxu0 0
      %2297 = vmatpush1.bf16.msra.mxu0 %v2260
      %2298 = vmatprep.subr.bf16.mxu0 0
      %2299 = vmatpush1.bf16.msra.mxu0 %v2261
      %2300 = vmatprep.subr.bf16.mxu0 0
      %2301 = vmatpush1.bf16.msra.mxu0 %v2262
      %2302 = vmatprep.subr.bf16.mxu0 0
      %2303 = vmatpush1.bf16.msra.mxu0 %v2263
      %2304 = vmatprep.subr.bf16.mxu0 0
      %2305 = vmatpush1.bf16.msra.mxu0 %v2264
      %2306 = vmatprep.subr.bf16.mxu0 0
      %2307 = vmatpush1.bf16.msra.mxu0 %v2265
      %2308 = vmatprep.subr.bf16.mxu0 0
      %2309 = vmatpush1.bf16.msra.mxu0 %v2266
      %2310 = vmatprep.subr.bf16.mxu0 0
      %2311 = vmatpush1.bf16.msra.mxu0 %v2267
      %2312 = vmatprep.subr.bf16.mxu0 0
      %2313 = vmatpush1.bf16.msra.mxu0 %v2268
      %2314 = vmatprep.subr.bf16.mxu0 0
      %2315 = vmatpush1.bf16.msra.mxu0 %v2269
      %2316 = vmatprep.subr.bf16.mxu0 0
      %2317 = vmatpush1.bf16.msra.mxu0 %v2270
      %2318 = vmatprep.subr.bf16.mxu0 0
      %2319 = vmatpush1.bf16.msra.mxu0 %v2271
      %2320 = vmatprep.mubr.bf16.mxu0 %v2185
      %2321 = vmatmul.mubr.bf16.gmra.mrb[0].mxu0 %v2184
      %v2322 = vpop.f32.mrb[0].mxu0
      %v2323 = vadd.f32 %v2190, %v2322
      %v2324 = vpop.f32.mrb[0].mxu0
      %v2325 = vpop.f32.mrb[0].mxu0
      %v2326 = vadd.f32 %v2190, %v2325
      %v2327 = vpop.f32.mrb[0].mxu0
      %2328 = vdwg.mxu0
      %v2329 = vadd.f32 %v1971, %v2323
      %v2330 = vadd.f32 %v1972, %v2326
      %v2331 = vld [vmem:[%s14] sm:$0x1]
      %v2332 = vld [vmem:[%s15] sm:$0x1]
      %2333 = vadd.xlane.f32.xlu0 %v2329
      %v2334 = vpop.xlane.xlu0 %2333
      %2335 = vadd.xlane.f32.xlu0 %v2330
      %v2336 = vpop.xlane.xlu0 %2335
      %v2337 = vmul.f32 %v2334, 0.020833334
      %v2338 = vmul.f32 %v2336, 0.020833334
      %v2339 = vsub.f32 %v2329, %v2337
      %v2340 = vsub.f32 %v2330, %v2338
      %v2341 = vsel %vm678, %v2339, 0.0
      %v2342 = vsel %vm678, %v2340, 0.0
      %v2343 = vmul.f32 %v2341, %v2341
      %v2344 = vmul.f32 %v2342, %v2342
      %2345 = vadd.xlane.f32.xlu0 %v2343
      %v2346 = vpop.xlane.xlu0 %2345
      %2347 = vadd.xlane.f32.xlu0 %v2344
      %v2348 = vpop.xlane.xlu0 %2347
      %v2349 = vmul.f32 %v2346, 0.020833334
      %v2350 = vmul.f32 %v2348, 0.020833334
      %v2351 = vadd.f32 %v2349, 1e-05
      %v2352 = vadd.f32 %v2350, 1e-05
      %v2353 = vrsqrt.pop %v2351
      %v2354 = vrsqrt.pop %v2352
      %v2355 = vmul.f32 %v2341, %v2353
      %v2356 = vmul.f32 %v2342, %v2354
      %v2358 = vlaneseq
      %v2359 = vshrl.u32 %v2358, 7
      %v2360 = vsub.s32 0, %v2359
      %v2361 = vrot.slane %v2331, %v2360
      %v2363 = vmul.f32 %v2355, %v2361
      %v2364 = vmul.f32 %v2356, %v2361
      %v2366 = vlaneseq
      %v2367 = vshrl.u32 %v2366, 7
      %v2368 = vsub.s32 0, %v2367
      %v2369 = vrot.slane %v2332, %v2368
      %v2371 = vadd.f32 %v2363, %v2369
      %v2372 = vadd.f32 %v2364, %v2369
      %v2373 = vld [vmem:[%s16] sm:$0xff]
      %v2374 = vld [vmem:[%s16 + $0x8] sm:$0xff]
      %v2375 = vld [vmem:[%s16 + $0x10] sm:$0xff]
      %v2376 = vld [vmem:[%s16 + $0x18] sm:$0xff]
      %v2377 = vld [vmem:[%s16 + $0x20] sm:$0xff]
      %v2378 = vld [vmem:[%s16 + $0x28] sm:$0xff]
      %v2379 = vld [vmem:[%s16 + $0x30] sm:$0xff]
      %v2380 = vld [vmem:[%s16 + $0x38] sm:$0xff]
      %v2381 = vld [vmem:[%s16 + $0x40] sm:$0xff]
      %v2382 = vld [vmem:[%s16 + $0x48] sm:$0xff]
      %v2383 = vld [vmem:[%s16 + $0x50] sm:$0xff]
      %v2384 = vld [vmem:[%s16 + $0x58] sm:$0xff]
      %v2385 = vld [vmem:[%s16 + $0x60] sm:$0xff]
      %v2386 = vld [vmem:[%s16 + $0x68] sm:$0xff]
      %v2387 = vld [vmem:[%s16 + $0x70] sm:$0xff]
      %v2388 = vld [vmem:[%s16 + $0x78] sm:$0xff]
      %v2389 = vpack.c.bf16 %v2372, %v2371
      %v2390 = vld [vmem:[%s17] sm:$0x3]
      %v2392 = vlaneseq
      %v2393 = vshrl.u32 %v2392, 7
      %v2394 = vsub.s32 0, %v2393
      %v2395 = vrot.slane %v2390, %v2394
      %v2396 = vlaneseq
      %v2397 = vshrl.u32 %v2396, 7
      %v2398 = vsub.s32 1, %v2397
      %v2399 = vrot.slane %v2390, %v2398
      %v2418 = vunpack.c.l.b16 %v2373
      %v2419 = vunpack.c.h.b16 %v2373
      %v2420 = vunpack.c.l.b16 %v2374
      %v2421 = vunpack.c.h.b16 %v2374
      %v2422 = vunpack.c.l.b16 %v2375
      %v2423 = vunpack.c.h.b16 %v2375
      %v2424 = vunpack.c.l.b16 %v2376
      %v2425 = vunpack.c.h.b16 %v2376
      %v2426 = vunpack.c.l.b16 %v2377
      %v2427 = vunpack.c.h.b16 %v2377
      %v2428 = vunpack.c.l.b16 %v2378
      %v2429 = vunpack.c.h.b16 %v2378
      %v2430 = vunpack.c.l.b16 %v2379
      %v2431 = vunpack.c.h.b16 %v2379
      %v2432 = vunpack.c.l.b16 %v2380
      %v2433 = vunpack.c.h.b16 %v2380
      %v2434 = vunpack.c.l.b16 %v2381
      %v2435 = vunpack.c.h.b16 %v2381
      %v2436 = vunpack.c.l.b16 %v2382
      %v2437 = vunpack.c.h.b16 %v2382
      %v2438 = vunpack.c.l.b16 %v2383
      %v2439 = vunpack.c.h.b16 %v2383
      %v2440 = vunpack.c.l.b16 %v2384
      %v2441 = vunpack.c.h.b16 %v2384
      %v2442 = vunpack.c.l.b16 %v2385
      %v2443 = vunpack.c.h.b16 %v2385
      %v2444 = vunpack.c.l.b16 %v2386
      %v2445 = vunpack.c.h.b16 %v2386
      %v2446 = vunpack.c.l.b16 %v2387
      %v2447 = vunpack.c.h.b16 %v2387
      %v2448 = vunpack.c.l.b16 %v2388
      %v2449 = vunpack.c.h.b16 %v2388
      %v2450 = vpack.c.b16 %v2420, %v2418
      %v2451 = vpack.c.b16 %v2421, %v2419
      %v2452 = vpack.c.b16 %v2424, %v2422
      %v2453 = vpack.c.b16 %v2425, %v2423
      %v2454 = vpack.c.b16 %v2428, %v2426
      %v2455 = vpack.c.b16 %v2429, %v2427
      %v2456 = vpack.c.b16 %v2432, %v2430
      %v2457 = vpack.c.b16 %v2433, %v2431
      %v2458 = vpack.c.b16 %v2436, %v2434
      %v2459 = vpack.c.b16 %v2437, %v2435
      %v2460 = vpack.c.b16 %v2440, %v2438
      %v2461 = vpack.c.b16 %v2441, %v2439
      %v2462 = vpack.c.b16 %v2444, %v2442
      %v2463 = vpack.c.b16 %v2445, %v2443
      %v2464 = vpack.c.b16 %v2448, %v2446
      %v2465 = vpack.c.b16 %v2449, %v2447
      %2482 = vmatprep.subr.bf16.mxu0 %v2451
      %2483 = vmatpush1.bf16.msra.mxu0 %v2450
      %2484 = vmatprep.subr.bf16.mxu0 %v2453
      %2485 = vmatpush1.bf16.msra.mxu0 %v2452
      %2486 = vmatprep.subr.bf16.mxu0 %v2455
      %2487 = vmatpush1.bf16.msra.mxu0 %v2454
      %2488 = vmatprep.subr.bf16.mxu0 %v2457
      %2489 = vmatpush1.bf16.msra.mxu0 %v2456
      %2490 = vmatprep.subr.bf16.mxu0 %v2459
      %2491 = vmatpush1.bf16.msra.mxu0 %v2458
      %2492 = vmatprep.subr.bf16.mxu0 %v2461
      %2493 = vmatpush1.bf16.msra.mxu0 %v2460
      %2494 = vmatprep.subr.bf16.mxu0 %v2463
      %2495 = vmatpush1.bf16.msra.mxu0 %v2462
      %2496 = vmatprep.subr.bf16.mxu0 %v2465
      %2497 = vmatpush1.bf16.msra.mxu0 %v2464
      %2498 = vmatprep.subr.bf16.mxu0 0
      %2499 = vmatpush1.bf16.msra.mxu0 0
      %2500 = vmatprep.subr.bf16.mxu0 0
      %2501 = vmatpush1.bf16.msra.mxu0 0
      %2502 = vmatprep.subr.bf16.mxu0 0
      %2503 = vmatpush1.bf16.msra.mxu0 0
      %2504 = vmatprep.subr.bf16.mxu0 0
      %2505 = vmatpush1.bf16.msra.mxu0 0
      %2506 = vmatprep.subr.bf16.mxu0 0
      %2507 = vmatpush1.bf16.msra.mxu0 0
      %2508 = vmatprep.subr.bf16.mxu0 0
      %2509 = vmatpush1.bf16.msra.mxu0 0
      %2510 = vmatprep.subr.bf16.mxu0 0
      %2511 = vmatpush1.bf16.msra.mxu0 0
      %2512 = vmatprep.subr.bf16.mxu0 0
      %2513 = vmatpush1.bf16.msra.mxu0 0
      %2514 = vmatprep.mubr.bf16.mxu0 0
      %2515 = vmatmul.mubr.bf16.gmra.mrb[0].mxu0 %v2389
      %v2516 = vpop.f32.mrb[0].mxu0
      %v2517 = vadd.f32 %v2395, %v2516
      %v2518 = vpop.f32.mrb[0].mxu0
      %v2519 = vadd.f32 %v2399, %v2518
      %v2520 = vpop.f32.mrb[0].mxu0
      %v2521 = vadd.f32 %v2395, %v2520
      %v2522 = vpop.f32.mrb[0].mxu0
      %v2523 = vadd.f32 %v2399, %v2522
      %2524 = vdwg.mxu0
      %2525 = vst [vmem:[%s575] sm:$0xff] %v2517
      %2526 = vst [vmem:[%s575 + $0x8] sm:$0xff] %v2519
      %2527 = vst [vmem:[%s575 + $0x10] sm:$0xff] %v2521
      %2528 = vst [vmem:[%s575 + $0x18] sm:$0xff] %v2523
      %p2529 = scmp.lt.s32.totalorder %s29, 1
      %s2530 = scalar_select %p2529, %s29, 1
      %s2531 = smul.addr %s2530, 4
      %s2532 = smul.addr %s2531, 8
      %s2533 = scalar_lea.vmem %s18, %s2532
      // Predicated region
      $region93: #{mae_forward.5} parent=91 // pred_check
        %p2534 = pneg %p430
      $region94: #{mae_forward.5} parent=91 // pred_check_branch
        %2536 = sbr.rel (%p2534) target = $region96
      $region95: #{mae_forward.5} parent=91 // pred_region
        _
      $region96: #{mae_forward.5} parent=91 // pred_fallthru
        _
    $region92: #{mae_forward.5} parent=5 // pred_fallthru
      _
    %p2537 = scmp.le.s32.totalorder 2, %s24
    // Predicated region
    $region97: #{mae_forward.5} parent=5 // pred_check
      %p2538 = pneg %p2537
    $region98: #{mae_forward.5} parent=5 // pred_check_branch
      %2540 = sbr.rel (%p2538) target = $region100
    $region99: #{mae_forward.5} parent=5 // pred_region
      %s2541 = ssub.s32 %s24, 2
      // Predicated region
      $region101: #{mae_forward.5} parent=99 // pred_check
        %p2542 = pneg %p436
      $region102: #{mae_forward.5} parent=99 // pred_check_branch
        %2544 = sbr.rel (%p2542) target = $region104
      $region103: #{mae_forward.5} parent=99 // pred_region
        %p2545 = scmp.lt.s32.totalorder %s30, 1
        %s2546 = scalar_select %p2545, %s30, 1
        %s2547 = smul.addr %s2546, 4
        %s2548 = smul.addr %s2547, 8
        %s2549 = scalar_lea.vmem %s18, %s2548
      $region104: #{mae_forward.5} parent=99 // pred_fallthru
        _
    $region100: #{mae_forward.5} parent=5 // pred_fallthru
      _
  $region6: #{mae_forward.5} parent=0 // loop_footer
    %s28 = sadd.s32 1, %s24
  $region7: #{mae_forward.5} parent=0 // loop_footer_branch
    %23 = sbr.rel target = $region3
  $region8: #{mae_forward.5} parent=0 // loop_exit
    _

// kernel: mae_forward.6
$region0: #{mae_forward.6}
  #allocation0 [shape = 'u32[]', space=smem, size = 0x4, offset = 0x4, fixed_abs, tag = 'smem constant byte address 0x4 - core index']
  #allocation1 [shape = 'u32[144,128]{1,0:T(1,128)}', space=vmem, size = 0x12000, scoped, tag = 'internal scratch']
  %s0 = inlined_call_operand.vmem [shape: f32[2,12,256], index: 0, kind: input, shape index: {}]
  %s1 = inlined_call_operand.vmem [shape: f32[2,12,128], index: 1, kind: input, shape index: {}]
  %s2 = inlined_call_operand.vmem [shape: f32[2,12,128], index: 2, kind: input, shape index: {}]
  %s3 = inlined_call_operand.vmem [shape: f32[1,256], index: 3, kind: input, shape index: {}]
  %s4 = inlined_call_operand.vmem [shape: f32[1,256], index: 4, kind: input, shape index: {}]
  %s5 = inlined_call_operand.vmem [shape: bf16[256,128], index: 5, kind: input, shape index: {}]
  %s6 = inlined_call_operand.vmem [shape: f32[1,128], index: 6, kind: input, shape index: {}]
  %s7 = inlined_call_operand.vmem [shape: f32[1,128], index: 7, kind: input, shape index: {}]
  %s8 = inlined_call_operand.vmem [shape: f32[1,128], index: 8, kind: input, shape index: {}]
  %s9 = inlined_call_operand.vmem [shape: f32[1,128], index: 9, kind: input, shape index: {}]
  %s10 = inlined_call_operand.vmem [shape: f32[1,128], index: 10, kind: input, shape index: {}]
  %s11 = inlined_call_operand.vmem [shape: bf16[4,8,128], index: 11, kind: input, shape index: {}]
  %s12 = inlined_call_operand.vmem [shape: bf16[4,8,128], index: 12, kind: input, shape index: {}]
  %s13 = inlined_call_operand.vmem [shape: bf16[4,8,128], index: 13, kind: input, shape index: {}]
  %s14 = inlined_call_operand.vmem [shape: bf16[4,8,128], index: 14, kind: input, shape index: {}]
  %s15 = inlined_call_operand.vmem [shape: f32[1,128], index: 15, kind: input, shape index: {}]
  %s16 = inlined_call_operand.vmem [shape: f32[1,128], index: 16, kind: input, shape index: {}]
  %s17 = inlined_call_operand.vmem [shape: f32[1,128], index: 17, kind: input, shape index: {}]
  %s18 = inlined_call_operand.vmem [shape: bf16[128,128], index: 18, kind: input, shape index: {}]
  %s19 = inlined_call_operand.vmem [shape: f32[1,128], index: 19, kind: input, shape index: {}]
  %s20 = inlined_call_operand.vmem [shape: bf16[128,128], index: 20, kind: input, shape index: {}]
  %s21 = inlined_call_operand.vmem [shape: f32[1,128], index: 21, kind: input, shape index: {}]
  %s22 = inlined_call_operand.vmem [shape: f32[1,128], index: 22, kind: input, shape index: {}]
  %s23 = inlined_call_operand.vmem [shape: f32[1,128], index: 23, kind: input, shape index: {}]
  %s24 = inlined_call_operand.vmem [shape: bf16[128,128], index: 24, kind: input, shape index: {}]
  %s25 = inlined_call_operand.vmem [shape: f32[1,128], index: 25, kind: input, shape index: {}]
  %s26 = inlined_call_operand.vmem [shape: bf16[2,12,128], index: 26, kind: output, shape index: {}]
  %s27 = sld [smem:[#allocation0]]
  $region137: #{mae_forward.6} parent=0
    _
  %s29 = ssub.s32 1, %s27
  %s30 = scalar_select 0, %s29, %s27
  loop: start=0, step=1, limit=4
  $region2: #{mae_forward.6} parent=0 // loop_pre_header
    _
  $region3: #{mae_forward.6} parent=0 // loop_header
    %s32 = sphi 0, %s36
    %p33 = scmp.ge.s32.totalorder %s32, 4
    %s42 = sphi 0, %s44
    %s45 = sphi 0, %s42
    %s46 = sphi 0, %s45
    %s62 = sphi 0, %s46
    %s68 = sphi 0, %s70
    %s71 = sphi 0, %s68
    %s72 = sphi 0, %s71
    %s88 = sphi 0, %s72
    %s94 = sphi 0, %s96
    %s97 = sphi 0, %s94
    %s98 = sphi 0, %s97
    %s114 = sphi 0, %s98
    %s118 = sphi 0, %s118
    %s120 = sphi 0, %s118
    %s121 = sphi 0, %s120
    %s135 = sphi 0, %s121
    %s139 = sphi 0, %s139
    %s141 = sphi 0, %s139
    %s142 = sphi 0, %s141
    %s156 = sphi 0, %s142
    %s160 = sphi 0, %s160
    %s162 = sphi 0, %s160
    %s163 = sphi 0, %s162
    %s177 = sphi 0, %s163
    %s181 = sphi 0, %s181
    %s183 = sphi 0, %s181
    %s184 = sphi 0, %s183
    %s198 = sphi 0, %s184
    %s202 = sphi 0, %s202
    %s204 = sphi 0, %s202
    %s205 = sphi 0, %s204
    %s219 = sphi 0, %s205
    %s223 = sphi 0, %s223
    %s225 = sphi 0, %s223
    %s226 = sphi 0, %s225
    %s240 = sphi 0, %s226
    %s244 = sphi 0, %s244
    %s246 = sphi 0, %s244
    %s247 = sphi 0, %s246
    %s261 = sphi 0, %s247
    %s265 = sphi 0, %s265
    %s267 = sphi 0, %s265
    %s268 = sphi 0, %s267
    %s282 = sphi 0, %s268
    %s286 = sphi 0, %s286
    %s288 = sphi 0, %s286
    %s289 = sphi 0, %s288
    %s303 = sphi 0, %s289
    %s307 = sphi 0, %s307
    %s309 = sphi 0, %s307
    %s310 = sphi 0, %s309
    %s324 = sphi 0, %s310
    %s328 = sphi 0, %s328
    %s330 = sphi 0, %s328
    %s331 = sphi 0, %s330
    %s345 = sphi 0, %s331
    %s349 = sphi 0, %s349
    %s351 = sphi 0, %s349
    %s352 = sphi 0, %s351
    %s366 = sphi 0, %s352
    %s370 = sphi 0, %s370
    %s372 = sphi 0, %s370
    %s373 = sphi 0, %s372
    %s387 = sphi 0, %s373
    %s391 = sphi 0, %s391
    %s393 = sphi 0, %s391
    %s394 = sphi 0, %s393
    %s408 = sphi 0, %s394
    %s412 = sphi 0, %s412
    %s414 = sphi 0, %s412
    %s415 = sphi 0, %s414
    %s429 = sphi 0, %s415
    %s433 = sphi 0, %s433
    %s435 = sphi 0, %s433
    %s436 = sphi 0, %s435
    %s450 = sphi 0, %s436
    %s454 = sphi 0, %s454
    %s456 = sphi 0, %s454
    %s457 = sphi 0, %s456
    %s471 = sphi 0, %s457
    %s475 = sphi 0, %s475
    %s477 = sphi 0, %s475
    %s478 = sphi 0, %s477
    %s492 = sphi 0, %s478
    %s496 = sphi 0, %s496
    %s498 = sphi 0, %s496
    %s499 = sphi 0, %s498
    %s513 = sphi 0, %s499
    %s517 = sphi 0, %s517
    %s519 = sphi 0, %s517
    %s520 = sphi 0, %s519
    %s534 = sphi 0, %s520
    %s538 = sphi 0, %s538
    %s540 = sphi 0, %s538
    %s541 = sphi 0, %s540
    %s555 = sphi 0, %s541
    %s559 = sphi 0, %s559
    %s561 = sphi 0, %s559
    %s562 = sphi 0, %s561
    %s576 = sphi 0, %s562
    %s580 = sphi 0, %s580
    %s582 = sphi 0, %s580
    %s583 = sphi 0, %s582
    %s597 = sphi 0, %s583
    %s603 = sphi 0, %s605
    %s606 = sphi 0, %s603
    %s607 = sphi 0, %s606
    %s623 = sphi 0, %s607
  $region4: #{mae_forward.6} parent=0 // loop_header_branch
    %35 = sbr.rel (%p33) target = $region8
  $region5: #{mae_forward.6} parent=0 // loop_body
    %s37 = ssub.s32 %s32, 1
    %s38 = ssub.s32 %s32, 2
    %s39 = sadd.s32 %s32, 1
    %s40 = ssub.s32 %s32, %s39
    %p41 = scmp.eq.s32.totalorder %s40, 0
    %s43 = sadd.s32 %s42, 1
    %s44 = scalar_select %p41, %s42, %s43
    %p47 = pneg %p41
    %p48 = scmp.eq.s32.totalorder %s32, 1
    %p49 = por %p47, %p48
    %p50 = scmp.ne.s32.totalorder %s42, %s45
    %p51 = scmp.eq.s32.totalorder %s32, 0
    %p52 = por %p50, %p51
    %p53 = scmp.ne.s32.totalorder %s42, %s45
    %p54 = scmp.eq.s32.totalorder %s37, 1
    %p55 = por %p53, %p54
    %p56 = scmp.ne.s32.totalorder %s45, %s46
    %p57 = scmp.eq.s32.totalorder %s37, 0
    %p58 = por %p56, %p57
    %p59 = scmp.ne.s32.totalorder %s45, %s46
    %p60 = scmp.eq.s32.totalorder %s38, 1
    %p61 = por %p59, %p60
    %p63 = scmp.ne.s32.totalorder %s46, %s62
    %p64 = scmp.eq.s32.totalorder %s38, 0
    %p65 = por %p63, %p64
    %s66 = ssub.s32 %s32, %s39
    %p67 = scmp.eq.s32.totalorder %s66, 0
    %s69 = sadd.s32 %s68, 1
    %s70 = scalar_select %p67, %s68, %s69
    %p73 = pneg %p67
    %p74 = scmp.eq.s32.totalorder %s32, 1
    %p75 = por %p73, %p74
    %p76 = scmp.ne.s32.totalorder %s68, %s71
    %p77 = scmp.eq.s32.totalorder %s32, 0
    %p78 = por %p76, %p77
    %p79 = scmp.ne.s32.totalorder %s68, %s71
    %p80 = scmp.eq.s32.totalorder %s37, 1
    %p81 = por %p79, %p80
    %p82 = scmp.ne.s32.totalorder %s71, %s72
    %p83 = scmp.eq.s32.totalorder %s37, 0
    %p84 = por %p82, %p83
    %p85 = scmp.ne.s32.totalorder %s71, %s72
    %p86 = scmp.eq.s32.totalorder %s38, 1
    %p87 = por %p85, %p86
    %p89 = scmp.ne.s32.totalorder %s72, %s88
    %p90 = scmp.eq.s32.totalorder %s38, 0
    %p91 = por %p89, %p90
    %s92 = ssub.s32 %s32, %s39
    %p93 = scmp.eq.s32.totalorder %s92, 0
    %s95 = sadd.s32 %s94, 1
    %s96 = scalar_select %p93, %s94, %s95
    %p99 = pneg %p93
    %p100 = scmp.eq.s32.totalorder %s32, 1
    %p101 = por %p99, %p100
    %p102 = scmp.ne.s32.totalorder %s94, %s97
    %p103 = scmp.eq.s32.totalorder %s32, 0
    %p104 = por %p102, %p103
    %p105 = scmp.ne.s32.totalorder %s94, %s97
    %p106 = scmp.eq.s32.totalorder %s37, 1
    %p107 = por %p105, %p106
    %p108 = scmp.ne.s32.totalorder %s97, %s98
    %p109 = scmp.eq.s32.totalorder %s37, 0
    %p110 = por %p108, %p109
    %p111 = scmp.ne.s32.totalorder %s97, %s98
    %p112 = scmp.eq.s32.totalorder %s38, 1
    %p113 = por %p111, %p112
    %p115 = scmp.ne.s32.totalorder %s98, %s114
    %p116 = scmp.eq.s32.totalorder %s38, 0
    %p117 = por %p115, %p116
    %s119 = sadd.s32 %s118, 1
    %p122 = scmp.eq.s32.totalorder %s32, 1
    %p123 = scmp.ne.s32.totalorder %s118, %s120
    %p124 = scmp.eq.s32.totalorder %s32, 0
    %p125 = por %p123, %p124
    %p126 = scmp.ne.s32.totalorder %s118, %s120
    %p127 = scmp.eq.s32.totalorder %s37, 1
    %p128 = por %p126, %p127
    %p129 = scmp.ne.s32.totalorder %s120, %s121
    %p130 = scmp.eq.s32.totalorder %s37, 0
    %p131 = por %p129, %p130
    %p132 = scmp.ne.s32.totalorder %s120, %s121
    %p133 = scmp.eq.s32.totalorder %s38, 1
    %p134 = por %p132, %p133
    %p136 = scmp.ne.s32.totalorder %s121, %s135
    %p137 = scmp.eq.s32.totalorder %s38, 0
    %p138 = por %p136, %p137
    %s140 = sadd.s32 %s139, 1
    %p143 = scmp.eq.s32.totalorder %s32, 1
    %p144 = scmp.ne.s32.totalorder %s139, %s141
    %p145 = scmp.eq.s32.totalorder %s32, 0
    %p146 = por %p144, %p145
    %p147 = scmp.ne.s32.totalorder %s139, %s141
    %p148 = scmp.eq.s32.totalorder %s37, 1
    %p149 = por %p147, %p148
    %p150 = scmp.ne.s32.totalorder %s141, %s142
    %p151 = scmp.eq.s32.totalorder %s37, 0
    %p152 = por %p150, %p151
    %p153 = scmp.ne.s32.totalorder %s141, %s142
    %p154 = scmp.eq.s32.totalorder %s38, 1
    %p155 = por %p153, %p154
    %p157 = scmp.ne.s32.totalorder %s142, %s156
    %p158 = scmp.eq.s32.totalorder %s38, 0
    %p159 = por %p157, %p158
    %s161 = sadd.s32 %s160, 1
    %p164 = scmp.eq.s32.totalorder %s32, 1
    %p165 = scmp.ne.s32.totalorder %s160, %s162
    %p166 = scmp.eq.s32.totalorder %s32, 0
    %p167 = por %p165, %p166
    %p168 = scmp.ne.s32.totalorder %s160, %s162
    %p169 = scmp.eq.s32.totalorder %s37, 1
    %p170 = por %p168, %p169
    %p171 = scmp.ne.s32.totalorder %s162, %s163
    %p172 = scmp.eq.s32.totalorder %s37, 0
    %p173 = por %p171, %p172
    %p174 = scmp.ne.s32.totalorder %s162, %s163
    %p175 = scmp.eq.s32.totalorder %s38, 1
    %p176 = por %p174, %p175
    %p178 = scmp.ne.s32.totalorder %s163, %s177
    %p179 = scmp.eq.s32.totalorder %s38, 0
    %p180 = por %p178, %p179
    %s182 = sadd.s32 %s181, 1
    %p185 = scmp.eq.s32.totalorder %s32, 1
    %p186 = scmp.ne.s32.totalorder %s181, %s183
    %p187 = scmp.eq.s32.totalorder %s32, 0
    %p188 = por %p186, %p187
    %p189 = scmp.ne.s32.totalorder %s181, %s183
    %p190 = scmp.eq.s32.totalorder %s37, 1
    %p191 = por %p189, %p190
    %p192 = scmp.ne.s32.totalorder %s183, %s184
    %p193 = scmp.eq.s32.totalorder %s37, 0
    %p194 = por %p192, %p193
    %p195 = scmp.ne.s32.totalorder %s183, %s184
    %p196 = scmp.eq.s32.totalorder %s38, 1
    %p197 = por %p195, %p196
    %p199 = scmp.ne.s32.totalorder %s184, %s198
    %p200 = scmp.eq.s32.totalorder %s38, 0
    %p201 = por %p199, %p200
    %s203 = sadd.s32 %s202, 1
    %p206 = scmp.eq.s32.totalorder %s32, 1
    %p207 = scmp.ne.s32.totalorder %s202, %s204
    %p208 = scmp.eq.s32.totalorder %s32, 0
    %p209 = por %p207, %p208
    %p210 = scmp.ne.s32.totalorder %s202, %s204
    %p211 = scmp.eq.s32.totalorder %s37, 1
    %p212 = por %p210, %p211
    %p213 = scmp.ne.s32.totalorder %s204, %s205
    %p214 = scmp.eq.s32.totalorder %s37, 0
    %p215 = por %p213, %p214
    %p216 = scmp.ne.s32.totalorder %s204, %s205
    %p217 = scmp.eq.s32.totalorder %s38, 1
    %p218 = por %p216, %p217
    %p220 = scmp.ne.s32.totalorder %s205, %s219
    %p221 = scmp.eq.s32.totalorder %s38, 0
    %p222 = por %p220, %p221
    %s224 = sadd.s32 %s223, 1
    %p227 = scmp.eq.s32.totalorder %s32, 1
    %p228 = scmp.ne.s32.totalorder %s223, %s225
    %p229 = scmp.eq.s32.totalorder %s32, 0
    %p230 = por %p228, %p229
    %p231 = scmp.ne.s32.totalorder %s223, %s225
    %p232 = scmp.eq.s32.totalorder %s37, 1
    %p233 = por %p231, %p232
    %p234 = scmp.ne.s32.totalorder %s225, %s226
    %p235 = scmp.eq.s32.totalorder %s37, 0
    %p236 = por %p234, %p235
    %p237 = scmp.ne.s32.totalorder %s225, %s226
    %p238 = scmp.eq.s32.totalorder %s38, 1
    %p239 = por %p237, %p238
    %p241 = scmp.ne.s32.totalorder %s226, %s240
    %p242 = scmp.eq.s32.totalorder %s38, 0
    %p243 = por %p241, %p242
    %s245 = sadd.s32 %s244, 1
    %p248 = scmp.eq.s32.totalorder %s32, 1
    %p249 = scmp.ne.s32.totalorder %s244, %s246
    %p250 = scmp.eq.s32.totalorder %s32, 0
    %p251 = por %p249, %p250
    %p252 = scmp.ne.s32.totalorder %s244, %s246
    %p253 = scmp.eq.s32.totalorder %s37, 1
    %p254 = por %p252, %p253
    %p255 = scmp.ne.s32.totalorder %s246, %s247
    %p256 = scmp.eq.s32.totalorder %s37, 0
    %p257 = por %p255, %p256
    %p258 = scmp.ne.s32.totalorder %s246, %s247
    %p259 = scmp.eq.s32.totalorder %s38, 1
    %p260 = por %p258, %p259
    %p262 = scmp.ne.s32.totalorder %s247, %s261
    %p263 = scmp.eq.s32.totalorder %s38, 0
    %p264 = por %p262, %p263
    %s266 = sadd.s32 %s265, 1
    %p269 = scmp.eq.s32.totalorder %s32, 1
    %p270 = scmp.ne.s32.totalorder %s265, %s267
    %p271 = scmp.eq.s32.totalorder %s32, 0
    %p272 = por %p270, %p271
    %p273 = scmp.ne.s32.totalorder %s265, %s267
    %p274 = scmp.eq.s32.totalorder %s37, 1
    %p275 = por %p273, %p274
    %p276 = scmp.ne.s32.totalorder %s267, %s268
    %p277 = scmp.eq.s32.totalorder %s37, 0
    %p278 = por %p276, %p277
    %p279 = scmp.ne.s32.totalorder %s267, %s268
    %p280 = scmp.eq.s32.totalorder %s38, 1
    %p281 = por %p279, %p280
    %p283 = scmp.ne.s32.totalorder %s268, %s282
    %p284 = scmp.eq.s32.totalorder %s38, 0
    %p285 = por %p283, %p284
    %s287 = sadd.s32 %s286, 1
    %p290 = scmp.eq.s32.totalorder %s32, 1
    %p291 = scmp.ne.s32.totalorder %s286, %s288
    %p292 = scmp.eq.s32.totalorder %s32, 0
    %p293 = por %p291, %p292
    %p294 = scmp.ne.s32.totalorder %s286, %s288
    %p295 = scmp.eq.s32.totalorder %s37, 1
    %p296 = por %p294, %p295
    %p297 = scmp.ne.s32.totalorder %s288, %s289
    %p298 = scmp.eq.s32.totalorder %s37, 0
    %p299 = por %p297, %p298
    %p300 = scmp.ne.s32.totalorder %s288, %s289
    %p301 = scmp.eq.s32.totalorder %s38, 1
    %p302 = por %p300, %p301
    %p304 = scmp.ne.s32.totalorder %s289, %s303
    %p305 = scmp.eq.s32.totalorder %s38, 0
    %p306 = por %p304, %p305
    %s308 = sadd.s32 %s307, 1
    %p311 = scmp.eq.s32.totalorder %s32, 1
    %p312 = scmp.ne.s32.totalorder %s307, %s309
    %p313 = scmp.eq.s32.totalorder %s32, 0
    %p314 = por %p312, %p313
    %p315 = scmp.ne.s32.totalorder %s307, %s309
    %p316 = scmp.eq.s32.totalorder %s37, 1
    %p317 = por %p315, %p316
    %p318 = scmp.ne.s32.totalorder %s309, %s310
    %p319 = scmp.eq.s32.totalorder %s37, 0
    %p320 = por %p318, %p319
    %p321 = scmp.ne.s32.totalorder %s309, %s310
    %p322 = scmp.eq.s32.totalorder %s38, 1
    %p323 = por %p321, %p322
    %p325 = scmp.ne.s32.totalorder %s310, %s324
    %p326 = scmp.eq.s32.totalorder %s38, 0
    %p327 = por %p325, %p326
    %s329 = sadd.s32 %s328, 1
    %p332 = scmp.eq.s32.totalorder %s32, 1
    %p333 = scmp.ne.s32.totalorder %s328, %s330
    %p334 = scmp.eq.s32.totalorder %s32, 0
    %p335 = por %p333, %p334
    %p336 = scmp.ne.s32.totalorder %s328, %s330
    %p337 = scmp.eq.s32.totalorder %s37, 1
    %p338 = por %p336, %p337
    %p339 = scmp.ne.s32.totalorder %s330, %s331
    %p340 = scmp.eq.s32.totalorder %s37, 0
    %p341 = por %p339, %p340
    %p342 = scmp.ne.s32.totalorder %s330, %s331
    %p343 = scmp.eq.s32.totalorder %s38, 1
    %p344 = por %p342, %p343
    %p346 = scmp.ne.s32.totalorder %s331, %s345
    %p347 = scmp.eq.s32.totalorder %s38, 0
    %p348 = por %p346, %p347
    %s350 = sadd.s32 %s349, 1
    %p353 = scmp.eq.s32.totalorder %s32, 1
    %p354 = scmp.ne.s32.totalorder %s349, %s351
    %p355 = scmp.eq.s32.totalorder %s32, 0
    %p356 = por %p354, %p355
    %p357 = scmp.ne.s32.totalorder %s349, %s351
    %p358 = scmp.eq.s32.totalorder %s37, 1
    %p359 = por %p357, %p358
    %p360 = scmp.ne.s32.totalorder %s351, %s352
    %p361 = scmp.eq.s32.totalorder %s37, 0
    %p362 = por %p360, %p361
    %p363 = scmp.ne.s32.totalorder %s351, %s352
    %p364 = scmp.eq.s32.totalorder %s38, 1
    %p365 = por %p363, %p364
    %p367 = scmp.ne.s32.totalorder %s352, %s366
    %p368 = scmp.eq.s32.totalorder %s38, 0
    %p369 = por %p367, %p368
    %s371 = sadd.s32 %s370, 1
    %p374 = scmp.eq.s32.totalorder %s32, 1
    %p375 = scmp.ne.s32.totalorder %s370, %s372
    %p376 = scmp.eq.s32.totalorder %s32, 0
    %p377 = por %p375, %p376
    %p378 = scmp.ne.s32.totalorder %s370, %s372
    %p379 = scmp.eq.s32.totalorder %s37, 1
    %p380 = por %p378, %p379
    %p381 = scmp.ne.s32.totalorder %s372, %s373
    %p382 = scmp.eq.s32.totalorder %s37, 0
    %p383 = por %p381, %p382
    %p384 = scmp.ne.s32.totalorder %s372, %s373
    %p385 = scmp.eq.s32.totalorder %s38, 1
    %p386 = por %p384, %p385
    %p388 = scmp.ne.s32.totalorder %s373, %s387
    %p389 = scmp.eq.s32.totalorder %s38, 0
    %p390 = por %p388, %p389
    %s392 = sadd.s32 %s391, 1
    %p395 = scmp.eq.s32.totalorder %s32, 1
    %p396 = scmp.ne.s32.totalorder %s391, %s393
    %p397 = scmp.eq.s32.totalorder %s32, 0
    %p398 = por %p396, %p397
    %p399 = scmp.ne.s32.totalorder %s391, %s393
    %p400 = scmp.eq.s32.totalorder %s37, 1
    %p401 = por %p399, %p400
    %p402 = scmp.ne.s32.totalorder %s393, %s394
    %p403 = scmp.eq.s32.totalorder %s37, 0
    %p404 = por %p402, %p403
    %p405 = scmp.ne.s32.totalorder %s393, %s394
    %p406 = scmp.eq.s32.totalorder %s38, 1
    %p407 = por %p405, %p406
    %p409 = scmp.ne.s32.totalorder %s394, %s408
    %p410 = scmp.eq.s32.totalorder %s38, 0
    %p411 = por %p409, %p410
    %s413 = sadd.s32 %s412, 1
    %p416 = scmp.eq.s32.totalorder %s32, 1
    %p417 = scmp.ne.s32.totalorder %s412, %s414
    %p418 = scmp.eq.s32.totalorder %s32, 0
    %p419 = por %p417, %p418
    %p420 = scmp.ne.s32.totalorder %s412, %s414
    %p421 = scmp.eq.s32.totalorder %s37, 1
    %p422 = por %p420, %p421
    %p423 = scmp.ne.s32.totalorder %s414, %s415
    %p424 = scmp.eq.s32.totalorder %s37, 0
    %p425 = por %p423, %p424
    %p426 = scmp.ne.s32.totalorder %s414, %s415
    %p427 = scmp.eq.s32.totalorder %s38, 1
    %p428 = por %p426, %p427
    %p430 = scmp.ne.s32.totalorder %s415, %s429
    %p431 = scmp.eq.s32.totalorder %s38, 0
    %p432 = por %p430, %p431
    %s434 = sadd.s32 %s433, 1
    %p437 = scmp.eq.s32.totalorder %s32, 1
    %p438 = scmp.ne.s32.totalorder %s433, %s435
    %p439 = scmp.eq.s32.totalorder %s32, 0
    %p440 = por %p438, %p439
    %p441 = scmp.ne.s32.totalorder %s433, %s435
    %p442 = scmp.eq.s32.totalorder %s37, 1
    %p443 = por %p441, %p442
    %p444 = scmp.ne.s32.totalorder %s435, %s436
    %p445 = scmp.eq.s32.totalorder %s37, 0
    %p446 = por %p444, %p445
    %p447 = scmp.ne.s32.totalorder %s435, %s436
    %p448 = scmp.eq.s32.totalorder %s38, 1
    %p449 = por %p447, %p448
    %p451 = scmp.ne.s32.totalorder %s436, %s450
    %p452 = scmp.eq.s32.totalorder %s38, 0
    %p453 = por %p451, %p452
    %s455 = sadd.s32 %s454, 1
    %p458 = scmp.eq.s32.totalorder %s32, 1
    %p459 = scmp.ne.s32.totalorder %s454, %s456
    %p460 = scmp.eq.s32.totalorder %s32, 0
    %p461 = por %p459, %p460
    %p462 = scmp.ne.s32.totalorder %s454, %s456
    %p463 = scmp.eq.s32.totalorder %s37, 1
    %p464 = por %p462, %p463
    %p465 = scmp.ne.s32.totalorder %s456, %s457
    %p466 = scmp.eq.s32.totalorder %s37, 0
    %p467 = por %p465, %p466
    %p468 = scmp.ne.s32.totalorder %s456, %s457
    %p469 = scmp.eq.s32.totalorder %s38, 1
    %p470 = por %p468, %p469
    %p472 = scmp.ne.s32.totalorder %s457, %s471
    %p473 = scmp.eq.s32.totalorder %s38, 0
    %p474 = por %p472, %p473
    %s476 = sadd.s32 %s475, 1
    %p479 = scmp.eq.s32.totalorder %s32, 1
    %p480 = scmp.ne.s32.totalorder %s475, %s477
    %p481 = scmp.eq.s32.totalorder %s32, 0
    %p482 = por %p480, %p481
    %p483 = scmp.ne.s32.totalorder %s475, %s477
    %p484 = scmp.eq.s32.totalorder %s37, 1
    %p485 = por %p483, %p484
    %p486 = scmp.ne.s32.totalorder %s477, %s478
    %p487 = scmp.eq.s32.totalorder %s37, 0
    %p488 = por %p486, %p487
    %p489 = scmp.ne.s32.totalorder %s477, %s478
    %p490 = scmp.eq.s32.totalorder %s38, 1
    %p491 = por %p489, %p490
    %p493 = scmp.ne.s32.totalorder %s478, %s492
    %p494 = scmp.eq.s32.totalorder %s38, 0
    %p495 = por %p493, %p494
    %s497 = sadd.s32 %s496, 1
    %p500 = scmp.eq.s32.totalorder %s32, 1
    %p501 = scmp.ne.s32.totalorder %s496, %s498
    %p502 = scmp.eq.s32.totalorder %s32, 0
    %p503 = por %p501, %p502
    %p504 = scmp.ne.s32.totalorder %s496, %s498
    %p505 = scmp.eq.s32.totalorder %s37, 1
    %p506 = por %p504, %p505
    %p507 = scmp.ne.s32.totalorder %s498, %s499
    %p508 = scmp.eq.s32.totalorder %s37, 0
    %p509 = por %p507, %p508
    %p510 = scmp.ne.s32.totalorder %s498, %s499
    %p511 = scmp.eq.s32.totalorder %s38, 1
    %p512 = por %p510, %p511
    %p514 = scmp.ne.s32.totalorder %s499, %s513
    %p515 = scmp.eq.s32.totalorder %s38, 0
    %p516 = por %p514, %p515
    %s518 = sadd.s32 %s517, 1
    %p521 = scmp.eq.s32.totalorder %s32, 1
    %p522 = scmp.ne.s32.totalorder %s517, %s519
    %p523 = scmp.eq.s32.totalorder %s32, 0
    %p524 = por %p522, %p523
    %p525 = scmp.ne.s32.totalorder %s517, %s519
    %p526 = scmp.eq.s32.totalorder %s37, 1
    %p527 = por %p525, %p526
    %p528 = scmp.ne.s32.totalorder %s519, %s520
    %p529 = scmp.eq.s32.totalorder %s37, 0
    %p530 = por %p528, %p529
    %p531 = scmp.ne.s32.totalorder %s519, %s520
    %p532 = scmp.eq.s32.totalorder %s38, 1
    %p533 = por %p531, %p532
    %p535 = scmp.ne.s32.totalorder %s520, %s534
    %p536 = scmp.eq.s32.totalorder %s38, 0
    %p537 = por %p535, %p536
    %s539 = sadd.s32 %s538, 1
    %p542 = scmp.eq.s32.totalorder %s32, 1
    %p543 = scmp.ne.s32.totalorder %s538, %s540
    %p544 = scmp.eq.s32.totalorder %s32, 0
    %p545 = por %p543, %p544
    %p546 = scmp.ne.s32.totalorder %s538, %s540
    %p547 = scmp.eq.s32.totalorder %s37, 1
    %p548 = por %p546, %p547
    %p549 = scmp.ne.s32.totalorder %s540, %s541
    %p550 = scmp.eq.s32.totalorder %s37, 0
    %p551 = por %p549, %p550
    %p552 = scmp.ne.s32.totalorder %s540, %s541
    %p553 = scmp.eq.s32.totalorder %s38, 1
    %p554 = por %p552, %p553
    %p556 = scmp.ne.s32.totalorder %s541, %s555
    %p557 = scmp.eq.s32.totalorder %s38, 0
    %p558 = por %p556, %p557
    %s560 = sadd.s32 %s559, 1
    %p563 = scmp.eq.s32.totalorder %s32, 1
    %p564 = scmp.ne.s32.totalorder %s559, %s561
    %p565 = scmp.eq.s32.totalorder %s32, 0
    %p566 = por %p564, %p565
    %p567 = scmp.ne.s32.totalorder %s559, %s561
    %p568 = scmp.eq.s32.totalorder %s37, 1
    %p569 = por %p567, %p568
    %p570 = scmp.ne.s32.totalorder %s561, %s562
    %p571 = scmp.eq.s32.totalorder %s37, 0
    %p572 = por %p570, %p571
    %p573 = scmp.ne.s32.totalorder %s561, %s562
    %p574 = scmp.eq.s32.totalorder %s38, 1
    %p575 = por %p573, %p574
    %p577 = scmp.ne.s32.totalorder %s562, %s576
    %p578 = scmp.eq.s32.totalorder %s38, 0
    %p579 = por %p577, %p578
    %s581 = sadd.s32 %s580, 1
    %p584 = scmp.eq.s32.totalorder %s32, 1
    %p585 = scmp.ne.s32.totalorder %s580, %s582
    %p586 = scmp.eq.s32.totalorder %s32, 0
    %p587 = por %p585, %p586
    %p588 = scmp.ne.s32.totalorder %s580, %s582
    %p589 = scmp.eq.s32.totalorder %s37, 1
    %p590 = por %p588, %p589
    %p591 = scmp.ne.s32.totalorder %s582, %s583
    %p592 = scmp.eq.s32.totalorder %s37, 0
    %p593 = por %p591, %p592
    %p594 = scmp.ne.s32.totalorder %s582, %s583
    %p595 = scmp.eq.s32.totalorder %s38, 1
    %p596 = por %p594, %p595
    %p598 = scmp.ne.s32.totalorder %s583, %s597
    %p599 = scmp.eq.s32.totalorder %s38, 0
    %p600 = por %p598, %p599
    %s601 = ssub.s32 %s32, %s39
    %p602 = scmp.eq.s32.totalorder %s601, 0
    %s604 = sadd.s32 %s603, 1
    %s605 = scalar_select %p602, %s603, %s604
    %p608 = pneg %p602
    %p609 = scmp.eq.s32.totalorder %s32, 1
    %p610 = por %p608, %p609
    %p611 = scmp.ne.s32.totalorder %s603, %s606
    %p612 = scmp.eq.s32.totalorder %s32, 0
    %p613 = por %p611, %p612
    %p614 = scmp.ne.s32.totalorder %s603, %s606
    %p615 = scmp.eq.s32.totalorder %s37, 1
    %p616 = por %p614, %p615
    %p617 = scmp.ne.s32.totalorder %s606, %s607
    %p618 = scmp.eq.s32.totalorder %s37, 0
    %p619 = por %p617, %p618
    %p620 = scmp.ne.s32.totalorder %s606, %s607
    %p621 = scmp.eq.s32.totalorder %s38, 1
    %p622 = por %p620, %p621
    %p624 = scmp.ne.s32.totalorder %s607, %s623
    %p625 = scmp.eq.s32.totalorder %s38, 0
    %p626 = por %p624, %p625
    %p627 = scmp.le.s32.totalorder 1, %s32
    %p628 = scmp.lt.s32.totalorder %s32, 3
    %p629 = pnand %p627, %p628
    %p630 = pneg %p629
    // Predicated region
    $region9: #{mae_forward.6} parent=5 // pred_check
      _
    $region10: #{mae_forward.6} parent=5 // pred_check_branch
      %632 = sbr.rel (%p629) target = $region12
    $region11: #{mae_forward.6} parent=5 // pred_region
      %s633 = ssub.s32 %s32, 1
      // Predicated region
      $region13: #{mae_forward.6} parent=11 // pred_check
        %p634 = pneg %p131
      $region14: #{mae_forward.6} parent=11 // pred_check_branch
        %636 = sbr.rel (%p634) target = $region16
      $region15: #{mae_forward.6} parent=11 // pred_region
        _
      $region16: #{mae_forward.6} parent=11 // pred_fallthru
        _
      // Predicated region
      $region17: #{mae_forward.6} parent=11 // pred_check
        %p637 = pneg %p152
      $region18: #{mae_forward.6} parent=11 // pred_check_branch
        %639 = sbr.rel (%p637) target = $region20
      $region19: #{mae_forward.6} parent=11 // pred_region
        _
      $region20: #{mae_forward.6} parent=11 // pred_fallthru
        _
      // Predicated region
      $region21: #{mae_forward.6} parent=11 // pred_check
        %p640 = pneg %p173
      $region22: #{mae_forward.6} parent=11 // pred_check_branch
        %642 = sbr.rel (%p640) target = $region24
      $region23: #{mae_forward.6} parent=11 // pred_region
        _
      $region24: #{mae_forward.6} parent=11 // pred_fallthru
        _
      // Predicated region
      $region25: #{mae_forward.6} parent=11 // pred_check
        %p643 = pneg %p194
      $region26: #{mae_forward.6} parent=11 // pred_check_branch
        %645 = sbr.rel (%p643) target = $region28
      $region27: #{mae_forward.6} parent=11 // pred_region
        _
      $region28: #{mae_forward.6} parent=11 // pred_fallthru
        _
      // Predicated region
      $region29: #{mae_forward.6} parent=11 // pred_check
        %p646 = pneg %p215
      $region30: #{mae_forward.6} parent=11 // pred_check_branch
        %648 = sbr.rel (%p646) target = $region32
      $region31: #{mae_forward.6} parent=11 // pred_region
        _
      $region32: #{mae_forward.6} parent=11 // pred_fallthru
        _
      // Predicated region
      $region33: #{mae_forward.6} parent=11 // pred_check
        %p649 = pneg %p236
      $region34: #{mae_forward.6} parent=11 // pred_check_branch
        %651 = sbr.rel (%p649) target = $region36
      $region35: #{mae_forward.6} parent=11 // pred_region
        _
      $region36: #{mae_forward.6} parent=11 // pred_fallthru
        _
      // Predicated region
      $region37: #{mae_forward.6} parent=11 // pred_check
        %p652 = pneg %p257
      $region38: #{mae_forward.6} parent=11 // pred_check_branch
        %654 = sbr.rel (%p652) target = $region40
      $region39: #{mae_forward.6} parent=11 // pred_region
        _
      $region40: #{mae_forward.6} parent=11 // pred_fallthru
        _
      // Predicated region
      $region41: #{mae_forward.6} parent=11 // pred_check
        %p655 = pneg %p278
      $region42: #{mae_forward.6} parent=11 // pred_check_branch
        %657 = sbr.rel (%p655) target = $region44
      $region43: #{mae_forward.6} parent=11 // pred_region
        _
      $region44: #{mae_forward.6} parent=11 // pred_fallthru
        _
      // Predicated region
      $region45: #{mae_forward.6} parent=11 // pred_check
        %p658 = pneg %p299
      $region46: #{mae_forward.6} parent=11 // pred_check_branch
        %660 = sbr.rel (%p658) target = $region48
      $region47: #{mae_forward.6} parent=11 // pred_region
        _
      $region48: #{mae_forward.6} parent=11 // pred_fallthru
        _
      // Predicated region
      $region49: #{mae_forward.6} parent=11 // pred_check
        %p661 = pneg %p320
      $region50: #{mae_forward.6} parent=11 // pred_check_branch
        %663 = sbr.rel (%p661) target = $region52
      $region51: #{mae_forward.6} parent=11 // pred_region
        _
      $region52: #{mae_forward.6} parent=11 // pred_fallthru
        _
      // Predicated region
      $region53: #{mae_forward.6} parent=11 // pred_check
        %p664 = pneg %p341
      $region54: #{mae_forward.6} parent=11 // pred_check_branch
        %666 = sbr.rel (%p664) target = $region56
      $region55: #{mae_forward.6} parent=11 // pred_region
        _
      $region56: #{mae_forward.6} parent=11 // pred_fallthru
        _
      // Predicated region
      $region57: #{mae_forward.6} parent=11 // pred_check
        %p667 = pneg %p362
      $region58: #{mae_forward.6} parent=11 // pred_check_branch
        %669 = sbr.rel (%p667) target = $region60
      $region59: #{mae_forward.6} parent=11 // pred_region
        _
      $region60: #{mae_forward.6} parent=11 // pred_fallthru
        _
      // Predicated region
      $region61: #{mae_forward.6} parent=11 // pred_check
        %p670 = pneg %p383
      $region62: #{mae_forward.6} parent=11 // pred_check_branch
        %672 = sbr.rel (%p670) target = $region64
      $region63: #{mae_forward.6} parent=11 // pred_region
        _
      $region64: #{mae_forward.6} parent=11 // pred_fallthru
        _
      // Predicated region
      $region65: #{mae_forward.6} parent=11 // pred_check
        %p673 = pneg %p404
      $region66: #{mae_forward.6} parent=11 // pred_check_branch
        %675 = sbr.rel (%p673) target = $region68
      $region67: #{mae_forward.6} parent=11 // pred_region
        _
      $region68: #{mae_forward.6} parent=11 // pred_fallthru
        _
      // Predicated region
      $region69: #{mae_forward.6} parent=11 // pred_check
        %p676 = pneg %p425
      $region70: #{mae_forward.6} parent=11 // pred_check_branch
        %678 = sbr.rel (%p676) target = $region72
      $region71: #{mae_forward.6} parent=11 // pred_region
        _
      $region72: #{mae_forward.6} parent=11 // pred_fallthru
        _
      // Predicated region
      $region73: #{mae_forward.6} parent=11 // pred_check
        %p679 = pneg %p446
      $region74: #{mae_forward.6} parent=11 // pred_check_branch
        %681 = sbr.rel (%p679) target = $region76
      $region75: #{mae_forward.6} parent=11 // pred_region
        _
      $region76: #{mae_forward.6} parent=11 // pred_fallthru
        _
      // Predicated region
      $region77: #{mae_forward.6} parent=11 // pred_check
        %p682 = pneg %p467
      $region78: #{mae_forward.6} parent=11 // pred_check_branch
        %684 = sbr.rel (%p682) target = $region80
      $region79: #{mae_forward.6} parent=11 // pred_region
        _
      $region80: #{mae_forward.6} parent=11 // pred_fallthru
        _
      // Predicated region
      $region81: #{mae_forward.6} parent=11 // pred_check
        %p685 = pneg %p488
      $region82: #{mae_forward.6} parent=11 // pred_check_branch
        %687 = sbr.rel (%p685) target = $region84
      $region83: #{mae_forward.6} parent=11 // pred_region
        _
      $region84: #{mae_forward.6} parent=11 // pred_fallthru
        _
      // Predicated region
      $region85: #{mae_forward.6} parent=11 // pred_check
        %p688 = pneg %p509
      $region86: #{mae_forward.6} parent=11 // pred_check_branch
        %690 = sbr.rel (%p688) target = $region88
      $region87: #{mae_forward.6} parent=11 // pred_region
        _
      $region88: #{mae_forward.6} parent=11 // pred_fallthru
        _
      // Predicated region
      $region89: #{mae_forward.6} parent=11 // pred_check
        %p691 = pneg %p530
      $region90: #{mae_forward.6} parent=11 // pred_check_branch
        %693 = sbr.rel (%p691) target = $region92
      $region91: #{mae_forward.6} parent=11 // pred_region
        _
      $region92: #{mae_forward.6} parent=11 // pred_fallthru
        _
      // Predicated region
      $region93: #{mae_forward.6} parent=11 // pred_check
        %p694 = pneg %p551
      $region94: #{mae_forward.6} parent=11 // pred_check_branch
        %696 = sbr.rel (%p694) target = $region96
      $region95: #{mae_forward.6} parent=11 // pred_region
        _
      $region96: #{mae_forward.6} parent=11 // pred_fallthru
        _
      // Predicated region
      $region97: #{mae_forward.6} parent=11 // pred_check
        %p697 = pneg %p572
      $region98: #{mae_forward.6} parent=11 // pred_check_branch
        %699 = sbr.rel (%p697) target = $region100
      $region99: #{mae_forward.6} parent=11 // pred_region
        _
      $region100: #{mae_forward.6} parent=11 // pred_fallthru
        _
      // Predicated region
      $region101: #{mae_forward.6} parent=11 // pred_check
        %p700 = pneg %p593
      $region102: #{mae_forward.6} parent=11 // pred_check_branch
        %702 = sbr.rel (%p700) target = $region104
      $region103: #{mae_forward.6} parent=11 // pred_region
        _
      $region104: #{mae_forward.6} parent=11 // pred_fallthru
        _
    $region12: #{mae_forward.6} parent=5 // pred_fallthru
      _
    %p703 = scmp.lt.s32.totalorder %s32, 2
    // Predicated region
    $region105: #{mae_forward.6} parent=5 // pred_check
      %p704 = pneg %p703
    $region106: #{mae_forward.6} parent=5 // pred_check_branch
      %706 = sbr.rel (%p704) target = $region108
    $region107: #{mae_forward.6} parent=5 // pred_region
      // Predicated region
      $region109: #{mae_forward.6} parent=107 // pred_check
        %p707 = pneg %p52
      $region110: #{mae_forward.6} parent=107 // pred_check_branch
        %709 = sbr.rel (%p707) target = $region112
      $region111: #{mae_forward.6} parent=107 // pred_region
        %p710 = scmp.lt.s32.totalorder %s32, 1
        %s711 = scalar_select %p710, %s32, 1
        %s712 = smul.addr %s711, 4
        %s713 = smul.addr %s712, 8
        %s714 = scalar_lea.vmem %s0, %s713
      $region112: #{mae_forward.6} parent=107 // pred_fallthru
        _
      // Predicated region
      $region113: #{mae_forward.6} parent=107 // pred_check
        %p715 = pneg %p78
      $region114: #{mae_forward.6} parent=107 // pred_check_branch
        %717 = sbr.rel (%p715) target = $region116
      $region115: #{mae_forward.6} parent=107 // pred_region
        %p718 = scmp.lt.s32.totalorder %s32, 1
        %s719 = scalar_select %p718, %s32, 1
        %s720 = smul.addr %s719, 2
        %s721 = smul.addr %s720, 8
        %s722 = scalar_lea.vmem %s1, %s721
      $region116: #{mae_forward.6} parent=107 // pred_fallthru
        _
      // Predicated region
      $region117: #{mae_forward.6} parent=107 // pred_check
        %p723 = pneg %p104
      $region118: #{mae_forward.6} parent=107 // pred_check_branch
        %725 = sbr.rel (%p723) target = $region120
      $region119: #{mae_forward.6} parent=107 // pred_region
        %p726 = scmp.lt.s32.totalorder %s32, 1
        %s727 = scalar_select %p726, %s32, 1
        %s728 = smul.addr %s727, 2
        %s729 = smul.addr %s728, 8
        %s730 = scalar_lea.vmem %s2, %s729
      $region120: #{mae_forward.6} parent=107 // pred_fallthru
        _
    $region108: #{mae_forward.6} parent=5 // pred_fallthru
      _
    %p731 = scmp.le.s32.totalorder 1, %s32
    %p732 = scmp.lt.s32.totalorder %s32, 3
    %p733 = pnand %p731, %p732
    %p734 = pneg %p733
    // Predicated region
    $region121: #{mae_forward.6} parent=5 // pred_check
      _
    $region122: #{mae_forward.6} parent=5 // pred_check_branch
      %736 = sbr.rel (%p733) target = $region124
    $region123: #{mae_forward.6} parent=5 // pred_region
      %s737 = ssub.s32 %s32, 1
      %p738 = scmp.lt.s32.totalorder %s37, 1
      %s739 = scalar_select %p738, %s37, 1
      %s740 = smul.addr %s739, 4
      %s741 = smul.addr %s740, 8
      %s742 = scalar_lea.vmem %s0, %s741
      %p743 = pneg %p58
      %p744 = pneg %p55
      %p745 = scmp.lt.s32.totalorder %s37, 1
      %s746 = scalar_select %p745, %s37, 1
      %s747 = smul.addr %s746, 2
      %s748 = smul.addr %s747, 8
      %s749 = scalar_lea.vmem %s1, %s748
      %p750 = pneg %p84
      %p751 = pneg %p81
      %p752 = scmp.lt.s32.totalorder %s37, 1
      %s753 = scalar_select %p752, %s37, 1
      %s754 = smul.addr %s753, 2
      %s755 = smul.addr %s754, 8
      %s756 = scalar_lea.vmem %s2, %s755
      %p757 = pneg %p110
      %p758 = pneg %p107
      %p759 = pneg %p131
      %p760 = pneg %p128
      %p761 = pneg %p152
      %p762 = pneg %p149
      %p763 = pneg %p173
      %p764 = pneg %p170
      %p765 = pneg %p194
      %p766 = pneg %p191
      %p767 = pneg %p215
      %p768 = pneg %p212
      %p769 = pneg %p236
      %p770 = pneg %p233
      %p771 = pneg %p257
      %p772 = pneg %p254
      %p773 = pneg %p278
      %p774 = pneg %p275
      %p775 = pneg %p299
      %p776 = pneg %p296
      %p777 = pneg %p320
      %p778 = pneg %p317
      %p779 = pneg %p341
      %p780 = pneg %p338
      %p781 = pneg %p362
      %p782 = pneg %p359
      %p783 = pneg %p383
      %p784 = pneg %p380
      %p785 = pneg %p404
      %p786 = pneg %p401
      %p787 = pneg %p425
      %p788 = pneg %p422
      %p789 = pneg %p446
      %p790 = pneg %p443
      %p791 = pneg %p467
      %p792 = pneg %p464
      %p793 = pneg %p488
      %p794 = pneg %p485
      %p795 = pneg %p509
      %p796 = pneg %p506
      %p797 = pneg %p530
      %p798 = pneg %p527
      %p799 = pneg %p551
      %p800 = pneg %p548
      %p801 = pneg %p572
      %p802 = pneg %p569
      %p803 = pneg %p593
      %p804 = pneg %p590
      %p805 = pneg %p619
      %p806 = pneg %p616
      %p807 = scmp.lt.s32.totalorder %s37, 1
      %s808 = scalar_select %p807, %s37, 1
      %s809 = smul.addr %s808, 2
      %s810 = smul.addr %s809, 4
      %s811 = scalar_lea.vmem %s26, %s810
      %p812 = scmp.lt.s32.totalorder %s37, 1
      %s813 = scalar_select %p812, %s37, 1
      %s814 = smul.addr %s813, 4
      %s815 = smul.addr %s814, 8
      %s816 = scalar_lea.vmem %s0, %s815
      %p817 = scmp.lt.s32.totalorder %s37, 1
      %s818 = scalar_select %p817, %s37, 1
      %s819 = smul.addr %s818, 2
      %s820 = smul.addr %s819, 8
      %s821 = scalar_lea.vmem %s1, %s820
      %p822 = scmp.lt.s32.totalorder %s37, 1
      %s823 = scalar_select %p822, %s37, 1
      %s824 = smul.addr %s823, 2
      %s825 = smul.addr %s824, 8
      %s826 = scalar_lea.vmem %s2, %s825
      %p827 = scmp.lt.s32.totalorder %s37, 1
      %s828 = scalar_select %p827, %s37, 1
      %s829 = smul.addr %s828, 2
      %s830 = smul.addr %s829, 4
      %s831 = scalar_lea.vmem %s26, %s830
      %v833 = vld [vmem:[%s816] sm:$0xff]
      %v834 = vld [vmem:[%s816 + $0x8] sm:$0xff]
      %v835 = vld [vmem:[%s816 + $0x10] sm:$0xf]
      %v836 = vld [vmem:[%s816 + $0x18] sm:$0xf]
      %v837 = vld [vmem:[%s3] sm:$0x3]
      %v838 = vld [vmem:[%s4] sm:$0x3]
      %v839 = vadd.f32 %v833, %v834
      %840 = vadd.xlane.f32.xlu0 %v839
      %v841 = vpop.xlane.xlu0 %840
      %vm842 = vcmask 1043456
      %v843 = vsel %vm842, %v835, 0.0
      %v844 = vsel %vm842, %v836, 0.0
      %v845 = vadd.f32 %v843, %v844
      %846 = vadd.xlane.f32.xlu0 %v845
      %v847 = vpop.xlane.xlu0 %846
      %v848 = vmul.f32 %v841, 0.00390625
      %v849 = vmul.f32 %v847, 0.00390625
      %v850 = vsub.f32 %v833, %v848
      %v851 = vsub.f32 %v834, %v848
      %v852 = vsub.f32 %v835, %v849
      %v853 = vsub.f32 %v836, %v849
      %v854 = vmul.f32 %v850, %v850
      %v855 = vmul.f32 %v851, %v851
      %v856 = vmul.f32 %v852, %v852
      %v857 = vmul.f32 %v853, %v853
      %v858 = vadd.f32 %v854, %v855
      %859 = vadd.xlane.f32.xlu0 %v858
      %v860 = vpop.xlane.xlu0 %859
      %v861 = vsel %vm842, %v856, 0.0
      %v862 = vsel %vm842, %v857, 0.0
      %v863 = vadd.f32 %v861, %v862
      %864 = vadd.xlane.f32.xlu0 %v863
      %v865 = vpop.xlane.xlu0 %864
      %v866 = vmul.f32 %v860, 0.00390625
      %v867 = vmul.f32 %v865, 0.00390625
      %v868 = vadd.f32 %v866, 1e-05
      %v869 = vadd.f32 %v867, 1e-05
      %v870 = vrsqrt.pop %v868
      %v871 = vrsqrt.pop %v869
      %v872 = vmul.f32 %v850, %v870
      %v873 = vmul.f32 %v851, %v870
      %v874 = vmul.f32 %v852, %v871
      %v875 = vmul.f32 %v853, %v871
      %v877 = vlaneseq
      %v878 = vshrl.u32 %v877, 7
      %v879 = vsub.s32 0, %v878
      %v880 = vrot.slane %v837, %v879
      %v881 = vlaneseq
      %v882 = vshrl.u32 %v881, 7
      %v883 = vsub.s32 1, %v882
      %v884 = vrot.slane %v837, %v883
      %v887 = vmul.f32 %v872, %v880
      %v888 = vmul.f32 %v873, %v884
      %v889 = vmul.f32 %v874, %v880
      %v890 = vmul.f32 %v875, %v884
      %v892 = vlaneseq
      %v893 = vshrl.u32 %v892, 7
      %v894 = vsub.s32 0, %v893
      %v895 = vrot.slane %v838, %v894
      %v896 = vlaneseq
      %v897 = vshrl.u32 %v896, 7
      %v898 = vsub.s32 1, %v897
      %v899 = vrot.slane %v838, %v898
      %v902 = vadd.f32 %v887, %v895
      %v903 = vadd.f32 %v888, %v899
      %v904 = vadd.f32 %v889, %v895
      %v905 = vadd.f32 %v890, %v899
      %v906 = vld [vmem:[%s5] sm:$0xf]
      %v907 = vld [vmem:[%s5 + $0x4] sm:$0xf]
      %v908 = vld [vmem:[%s5 + $0x8] sm:$0xf]
      %v909 = vld [vmem:[%s5 + $0xc] sm:$0xf]
      %v910 = vld [vmem:[%s5 + $0x10] sm:$0xf]
      %v911 = vld [vmem:[%s5 + $0x14] sm:$0xf]
      %v912 = vld [vmem:[%s5 + $0x18] sm:$0xf]
      %v913 = vld [vmem:[%s5 + $0x1c] sm:$0xf]
      %v914 = vld [vmem:[%s5 + $0x20] sm:$0xf]
      %v915 = vld [vmem:[%s5 + $0x24] sm:$0xf]
      %v916 = vld [vmem:[%s5 + $0x28] sm:$0xf]
      %v917 = vld [vmem:[%s5 + $0x2c] sm:$0xf]
      %v918 = vld [vmem:[%s5 + $0x30] sm:$0xf]
      %v919 = vld [vmem:[%s5 + $0x34] sm:$0xf]
      %v920 = vld [vmem:[%s5 + $0x38] sm:$0xf]
      %v921 = vld [vmem:[%s5 + $0x3c] sm:$0xf]
      %v922 = vld [vmem:[%s5 + $0x40] sm:$0xf]
      %v923 = vld [vmem:[%s5 + $0x44] sm:$0xf]
      %v924 = vld [vmem:[%s5 + $0x48] sm:$0xf]
      %v925 = vld [vmem:[%s5 + $0x4c] sm:$0xf]
      %v926 = vld [vmem:[%s5 + $0x50] sm:$0xf]
      %v927 = vld [vmem:[%s5 + $0x54] sm:$0xf]
      %v928 = vld [vmem:[%s5 + $0x58] sm:$0xf]
      %v929 = vld [vmem:[%s5 + $0x5c] sm:$0xf]
      %v930 = vld [vmem:[%s5 + $0x60] sm:$0xf]
      %v931 = vld [vmem:[%s5 + $0x64] sm:$0xf]
      %v932 = vld [vmem:[%s5 + $0x68] sm:$0xf]
      %v933 = vld [vmem:[%s5 + $0x6c] sm:$0xf]
      %v934 = vld [vmem:[%s5 + $0x70] sm:$0xf]
      %v935 = vld [vmem:[%s5 + $0x74] sm:$0xf]
      %v936 = vld [vmem:[%s5 + $0x78] sm:$0xf]
      %v937 = vld [vmem:[%s5 + $0x7c] sm:$0xf]
      %v938 = vpack.c.bf16 %v904, %v902
      %v939 = vpack.c.bf16 %v905, %v903
      %v940 = vld [vmem:[%s6] sm:$0x1]
      %v942 = vlaneseq
      %v943 = vshrl.u32 %v942, 7
      %v944 = vsub.s32 0, %v943
      %v945 = vrot.slane %v940, %v944
      %v979 = vunpack.c.l.b16 %v906
      %v980 = vunpack.c.l.b16 %v907
      %v981 = vunpack.c.l.b16 %v908
      %v982 = vunpack.c.l.b16 %v909
      %v983 = vunpack.c.l.b16 %v910
      %v984 = vunpack.c.l.b16 %v911
      %v985 = vunpack.c.l.b16 %v912
      %v986 = vunpack.c.l.b16 %v913
      %v987 = vunpack.c.l.b16 %v914
      %v988 = vunpack.c.l.b16 %v915
      %v989 = vunpack.c.l.b16 %v916
      %v990 = vunpack.c.l.b16 %v917
      %v991 = vunpack.c.l.b16 %v918
      %v992 = vunpack.c.l.b16 %v919
      %v993 = vunpack.c.l.b16 %v920
      %v994 = vunpack.c.l.b16 %v921
      %v995 = vunpack.c.l.b16 %v922
      %v996 = vunpack.c.l.b16 %v923
      %v997 = vunpack.c.l.b16 %v924
      %v998 = vunpack.c.l.b16 %v925
      %v999 = vunpack.c.l.b16 %v926
      %v1000 = vunpack.c.l.b16 %v927
      %v1001 = vunpack.c.l.b16 %v928
      %v1002 = vunpack.c.l.b16 %v929
      %v1003 = vunpack.c.l.b16 %v930
      %v1004 = vunpack.c.l.b16 %v931
      %v1005 = vunpack.c.l.b16 %v932
      %v1006 = vunpack.c.l.b16 %v933
      %v1007 = vunpack.c.l.b16 %v934
      %v1008 = vunpack.c.l.b16 %v935
      %v1009 = vunpack.c.l.b16 %v936
      %v1010 = vunpack.c.l.b16 %v937
      %v1011 = vpack.c.b16 %v980, %v979
      %v1012 = vpack.c.b16 %v982, %v981
      %v1013 = vpack.c.b16 %v984, %v983
      %v1014 = vpack.c.b16 %v986, %v985
      %v1015 = vpack.c.b16 %v988, %v987
      %v1016 = vpack.c.b16 %v990, %v989
      %v1017 = vpack.c.b16 %v992, %v991
      %v1018 = vpack.c.b16 %v994, %v993
      %v1019 = vpack.c.b16 %v996, %v995
      %v1020 = vpack.c.b16 %v998, %v997
      %v1021 = vpack.c.b16 %v1000, %v999
      %v1022 = vpack.c.b16 %v1002, %v1001
      %v1023 = vpack.c.b16 %v1004, %v1003
      %v1024 = vpack.c.b16 %v1006, %v1005
      %v1025 = vpack.c.b16 %v1008, %v1007
      %v1026 = vpack.c.b16 %v1010, %v1009
      %1043 = vmatprep.subr.bf16.mxu0 0
      %1044 = vmatpush1.bf16.msra.mxu0 %v1011
      %1045 = vmatprep.subr.bf16.mxu0 0
      %1046 = vmatpush1.bf16.msra.mxu0 %v1012
      %1047 = vmatprep.subr.bf16.mxu0 0
      %1048 = vmatpush1.bf16.msra.mxu0 %v1013
      %1049 = vmatprep.subr.bf16.mxu0 0
      %1050 = vmatpush1.bf16.msra.mxu0 %v1014
      %1051 = vmatprep.subr.bf16.mxu0 0
      %1052 = vmatpush1.bf16.msra.mxu0 %v1015
      %1053 = vmatprep.subr.bf16.mxu0 0
      %1054 = vmatpush1.bf16.msra.mxu0 %v1016
      %1055 = vmatprep.subr.bf16.mxu0 0
      %1056 = vmatpush1.bf16.msra.mxu0 %v1017
      %1057 = vmatprep.subr.bf16.mxu0 0
      %1058 = vmatpush1.bf16.msra.mxu0 %v1018
      %1059 = vmatprep.subr.bf16.mxu0 0
      %1060 = vmatpush1.bf16.msra.mxu0 %v1019
      %1061 = vmatprep.subr.bf16.mxu0 0
      %1062 = vmatpush1.bf16.msra.mxu0 %v1020
      %1063 = vmatprep.subr.bf16.mxu0 0
      %1064 = vmatpush1.bf16.msra.mxu0 %v1021
      %1065 = vmatprep.subr.bf16.mxu0 0
      %1066 = vmatpush1.bf16.msra.mxu0 %v1022
      %1067 = vmatprep.subr.bf16.mxu0 0
      %1068 = vmatpush1.bf16.msra.mxu0 %v1023
      %1069 = vmatprep.subr.bf16.mxu0 0
      %1070 = vmatpush1.bf16.msra.mxu0 %v1024
      %1071 = vmatprep.subr.bf16.mxu0 0
      %1072 = vmatpush1.bf16.msra.mxu0 %v1025
      %1073 = vmatprep.subr.bf16.mxu0 0
      %1074 = vmatpush1.bf16.msra.mxu0 %v1026
      %1075 = vmatprep.mubr.bf16.mxu0 %v939
      %1076 = vmatmul.mubr.bf16.gmra.mrb[0].mxu0 %v938
      %v1077 = vpop.f32.mrb[0].mxu0
      %v1078 = vadd.f32 %v945, %v1077
      %v1079 = vpop.f32.mrb[0].mxu0
      %v1080 = vpop.f32.mrb[0].mxu0
      %v1081 = vadd.f32 %v945, %v1080
      %v1082 = vpop.f32.mrb[0].mxu0
      %1083 = vdwg.mxu0
      %v1084 = vld [vmem:[%s7] sm:$0x1]
      %v1085 = vld [vmem:[%s8] sm:$0x1]
      %1086 = vadd.xlane.f32.xlu0 %v1078
      %v1087 = vpop.xlane.xlu0 %1086
      %v1088 = vsel %vm842, %v1081, 0.0
      %1089 = vadd.xlane.f32.xlu0 %v1088
      %v1090 = vpop.xlane.xlu0 %1089
      %v1091 = vmul.f32 %v1087, 0.03125
      %v1092 = vmul.f32 %v1090, 0.03125
      %v1093 = vsub.f32 %v1078, %v1091
      %v1094 = vsub.f32 %v1081, %v1092
      %v1095 = vlaneseq
      %v1096 = vand.u32 %v1095, 127
      %vm1097 = vcmp.lt.s32.totalorder %v1096, 32
      %v1098 = vsel %vm1097, %v1093, 0.0
      %v1099 = vsel %vm1097, %v1094, 0.0
      %v1100 = vmul.f32 %v1098, %v1098
      %v1101 = vmul.f32 %v1099, %v1099
      %1102 = vadd.xlane.f32.xlu0 %v1100
      %v1103 = vpop.xlane.xlu0 %1102
      %v1104 = vsel %vm842, %v1101, 0.0
      %1105 = vadd.xlane.f32.xlu0 %v1104
      %v1106 = vpop.xlane.xlu0 %1105
      %v1107 = vmul.f32 %v1103, 0.03125
      %v1108 = vmul.f32 %v1106, 0.03125
      %v1109 = vadd.f32 %v1107, 1e-05
      %v1110 = vadd.f32 %v1108, 1e-05
      %v1111 = vrsqrt.pop %v1109
      %v1112 = vrsqrt.pop %v1110
      %v1113 = vmul.f32 %v1098, %v1111
      %v1114 = vmul.f32 %v1099, %v1112
      %v1116 = vlaneseq
      %v1117 = vshrl.u32 %v1116, 7
      %v1118 = vsub.s32 0, %v1117
      %v1119 = vrot.slane %v1084, %v1118
      %v1121 = vmul.f32 %v1113, %v1119
      %v1122 = vmul.f32 %v1114, %v1119
      %v1124 = vlaneseq
      %v1125 = vshrl.u32 %v1124, 7
      %v1126 = vsub.s32 0, %v1125
      %v1127 = vrot.slane %v1085, %v1126
      %v1129 = vadd.f32 %v1121, %v1127
      %v1130 = vadd.f32 %v1122, %v1127
      %v1131 = vld [vmem:[%s821] sm:$0xff]
      %v1132 = vld [vmem:[%s821 + $0x8] sm:$0xf]
      %v1133 = vadd.f32 %v1129, %v1131
      %v1134 = vadd.f32 %v1130, %v1132
      %v1135 = vld [vmem:[%s9] sm:$0x1]
      %v1136 = vld [vmem:[%s10] sm:$0x1]
      %v1137 = vld [vmem:[%s11] sm:$0xf]
      %v1138 = vld [vmem:[%s11 + $0x4] sm:$0xf]
      %v1139 = vld [vmem:[%s11 + $0x8] sm:$0xf]
      %v1140 = vld [vmem:[%s11 + $0xc] sm:$0xf]
      %v1141 = vld [vmem:[%s12] sm:$0xf]
      %v1142 = vld [vmem:[%s12 + $0x4] sm:$0xf]
      %v1143 = vld [vmem:[%s12 + $0x8] sm:$0xf]
      %v1144 = vld [vmem:[%s12 + $0xc] sm:$0xf]
      %v1145 = vld [vmem:[%s13] sm:$0xf]
      %v1146 = vld [vmem:[%s13 + $0x4] sm:$0xf]
      %v1147 = vld [vmem:[%s13 + $0x8] sm:$0xf]
      %v1148 = vld [vmem:[%s13 + $0xc] sm:$0xf]
      %v1149 = vld [vmem:[%s14] sm:$0xf]
      %v1150 = vld [vmem:[%s14 + $0x4] sm:$0xf]
      %v1151 = vld [vmem:[%s14 + $0x8] sm:$0xf]
      %v1152 = vld [vmem:[%s14 + $0xc] sm:$0xf]
      %v1153 = vld [vmem:[%s15] sm:$0x1]
      %v1154 = vld [vmem:[%s16] sm:$0x1]
      %v1155 = vld [vmem:[%s17] sm:$0x1]
      %v1156 = vld [vmem:[%s18] sm:$0xf]
      %v1157 = vld [vmem:[%s18 + $0x4] sm:$0xf]
      %v1158 = vld [vmem:[%s18 + $0x8] sm:$0xf]
      %v1159 = vld [vmem:[%s18 + $0xc] sm:$0xf]
      %v1160 = vld [vmem:[%s18 + $0x10] sm:$0xf]
      %v1161 = vld [vmem:[%s18 + $0x14] sm:$0xf]
      %v1162 = vld [vmem:[%s18 + $0x18] sm:$0xf]
      %v1163 = vld [vmem:[%s18 + $0x1c] sm:$0xf]
      %v1164 = vld [vmem:[%s18 + $0x20] sm:$0xf]
      %v1165 = vld [vmem:[%s18 + $0x24] sm:$0xf]
      %v1166 = vld [vmem:[%s18 + $0x28] sm:$0xf]
      %v1167 = vld [vmem:[%s18 + $0x2c] sm:$0xf]
      %v1168 = vld [vmem:[%s18 + $0x30] sm:$0xf]
      %v1169 = vld [vmem:[%s18 + $0x34] sm:$0xf]
      %v1170 = vld [vmem:[%s18 + $0x38] sm:$0xf]
      %v1171 = vld [vmem:[%s18 + $0x3c] sm:$0xf]
      %v1172 = vld [vmem:[%s19] sm:$0x1]
      %v1173 = vld [vmem:[%s20] sm:$0xf]
      %v1174 = vld [vmem:[%s20 + $0x4] sm:$0xf]
      %v1175 = vld [vmem:[%s20 + $0x8] sm:$0xf]
      %v1176 = vld [vmem:[%s20 + $0xc] sm:$0xf]
      %v1177 = vld [vmem:[%s20 + $0x10] sm:$0xf]
      %v1178 = vld [vmem:[%s20 + $0x14] sm:$0xf]
      %v1179 = vld [vmem:[%s20 + $0x18] sm:$0xf]
      %v1180 = vld [vmem:[%s20 + $0x1c] sm:$0xf]
      %v1181 = vld [vmem:[%s20 + $0x20] sm:$0xf]
      %v1182 = vld [vmem:[%s20 + $0x24] sm:$0xf]
      %v1183 = vld [vmem:[%s20 + $0x28] sm:$0xf]
      %v1184 = vld [vmem:[%s20 + $0x2c] sm:$0xf]
      %v1185 = vld [vmem:[%s20 + $0x30] sm:$0xf]
      %v1186 = vld [vmem:[%s20 + $0x34] sm:$0xf]
      %v1187 = vld [vmem:[%s20 + $0x38] sm:$0xf]
      %v1188 = vld [vmem:[%s20 + $0x3c] sm:$0xf]
      %v1189 = vld [vmem:[%s21] sm:$0x1]
      %1190 = vadd.xlane.f32.xlu0 %v1133
      %v1191 = vpop.xlane.xlu0 %1190
      %v1192 = vsel %vm842, %v1134, 0.0
      %1193 = vadd.xlane.f32.xlu0 %v1192
      %v1194 = vpop.xlane.xlu0 %1193
      %v1195 = vmul.f32 %v1191, 0.03125
      %v1196 = vmul.f32 %v1194, 0.03125
      %v1197 = vsub.f32 %v1133, %v1195
      %v1198 = vsub.f32 %v1134, %v1196
      %v1199 = vsel %vm1097, %v1197, 0.0
      %v1200 = vsel %vm1097, %v1198, 0.0
      %v1201 = vmul.f32 %v1199, %v1199
      %v1202 = vmul.f32 %v1200, %v1200
      %1203 = vadd.xlane.f32.xlu0 %v1201
      %v1204 = vpop.xlane.xlu0 %1203
      %v1205 = vsel %vm842, %v1202, 0.0
      %1206 = vadd.xlane.f32.xlu0 %v1205
      %v1207 = vpop.xlane.xlu0 %1206
      %v1208 = vmul.f32 %v1204, 0.03125
      %v1209 = vmul.f32 %v1207, 0.03125
      %v1210 = vadd.f32 %v1208, 1e-05
      %v1211 = vadd.f32 %v1209, 1e-05
      %v1212 = vrsqrt.pop %v1210
      %v1213 = vrsqrt.pop %v1211
      %v1214 = vmul.f32 %v1199, %v1212
      %v1215 = vmul.f32 %v1200, %v1213
      %v1217 = vlaneseq
      %v1218 = vshrl.u32 %v1217, 7
      %v1219 = vsub.s32 0, %v1218
      %v1220 = vrot.slane %v1135, %v1219
      %v1222 = vmul.f32 %v1214, %v1220
      %v1223 = vmul.f32 %v1215, %v1220
      %v1225 = vlaneseq
      %v1226 = vshrl.u32 %v1225, 7
      %v1227 = vsub.s32 0, %v1226
      %v1228 = vrot.slane %v1136, %v1227
      %v1230 = vadd.f32 %v1222, %v1228
      %v1231 = vadd.f32 %v1223, %v1228
      %v1232 = vpack.c.bf16 %v1231, %v1230
      %1233 = vmatprep.subr.bf16.mxu0 0
      %1234 = vmatpush1.bf16.xpose.msra.mxu0 %v1137
      %1235 = vmatprep.subr.bf16.mxu0 0
      %1236 = vmatpush1.bf16.xpose.msra.mxu0 0
      %1237 = vmatprep.subr.bf16.mxu0 0
      %1238 = vmatpush1.bf16.xpose.msra.mxu0 0
      %1239 = vmatprep.subr.bf16.mxu0 0
      %1240 = vmatpush1.bf16.xpose.msra.mxu0 0
      %1241 = vmatprep.subr.bf16.mxu0 0
      %1242 = vmatpush1.bf16.xpose.msra.mxu0 0
      %1243 = vmatprep.subr.bf16.mxu0 0
      %1244 = vmatpush1.bf16.xpose.msra.mxu0 0
      %1245 = vmatprep.subr.bf16.mxu0 0
      %1246 = vmatpush1.bf16.xpose.msra.mxu0 0
      %1247 = vmatprep.subr.bf16.mxu0 0
      %1248 = vmatpush1.bf16.xpose.msra.mxu0 0
      %1249 = vmatprep.subr.bf16.mxu0 0
      %1250 = vmatpush1.bf16.xpose.msra.mxu0 0
      %1251 = vmatprep.subr.bf16.mxu0 0
      %1252 = vmatpush1.bf16.xpose.msra.mxu0 0
      %1253 = vmatprep.subr.bf16.mxu0 0
      %1254 = vmatpush1.bf16.xpose.msra.mxu0 0
      %1255 = vmatprep.subr.bf16.mxu0 0
      %1256 = vmatpush1.bf16.xpose.msra.mxu0 0
      %1257 = vmatprep.subr.bf16.mxu0 0
      %1258 = vmatpush1.bf16.xpose.msra.mxu0 0
      %1259 = vmatprep.subr.bf16.mxu0 0
      %1260 = vmatpush1.bf16.xpose.msra.mxu0 0
      %1261 = vmatprep.subr.bf16.mxu0 0
      %1262 = vmatpush1.bf16.xpose.msra.mxu0 0
      %1263 = vmatprep.subr.bf16.mxu0 0
      %1264 = vmatpush1.bf16.xpose.msra.mxu0 0
      %1265 = vmatprep.mubr.bf16.mxu0 0
      %1266 = vmatmul.mubr.bf16.gmra.mrb[0].mxu0 %v1232
      %v1267 = vpop.f32.mrb[0].mxu0
      %v1268 = vadd.f32 0.0, %v1267
      %v1269 = vpop.f32.mrb[0].mxu0
      %v1270 = vpop.f32.mrb[0].mxu0
      %v1271 = vadd.f32 0.0, %v1270
      %v1272 = vpop.f32.mrb[0].mxu0
      %1273 = vdwg.mxu0
      %1274 = vmatprep.subr.bf16.mxu0 0
      %1275 = vmatpush1.bf16.xpose.msra.mxu0 %v1138
      %1276 = vmatprep.subr.bf16.mxu0 0
      %1277 = vmatpush1.bf16.xpose.msra.mxu0 0
      %1278 = vmatprep.subr.bf16.mxu0 0
      %1279 = vmatpush1.bf16.xpose.msra.mxu0 0
      %1280 = vmatprep.subr.bf16.mxu0 0
      %1281 = vmatpush1.bf16.xpose.msra.mxu0 0
      %1282 = vmatprep.subr.bf16.mxu0 0
      %1283 = vmatpush1.bf16.xpose.msra.mxu0 0
      %1284 = vmatprep.subr.bf16.mxu0 0
      %1285 = vmatpush1.bf16.xpose.msra.mxu0 0
      %1286 = vmatprep.subr.bf16.mxu0 0
      %1287 = vmatpush1.bf16.xpose.msra.mxu0 0
      %1288 = vmatprep.subr.bf16.mxu0 0
      %1289 = vmatpush1.bf16.xpose.msra.mxu0 0
      %1290 = vmatprep.subr.bf16.mxu0 0
      %1291 = vmatpush1.bf16.xpose.msra.mxu0 0
      %1292 = vmatprep.subr.bf16.mxu0 0
      %1293 = vmatpush1.bf16.xpose.msra.mxu0 0
      %1294 = vmatprep.subr.bf16.mxu0 0
      %1295 = vmatpush1.bf16.xpose.msra.mxu0 0
      %1296 = vmatprep.subr.bf16.mxu0 0
      %1297 = vmatpush1.bf16.xpose.msra.mxu0 0
      %1298 = vmatprep.subr.bf16.mxu0 0
      %1299 = vmatpush1.bf16.xpose.msra.mxu0 0
      %1300 = vmatprep.subr.bf16.mxu0 0
      %1301 = vmatpush1.bf16.xpose.msra.mxu0 0
      %1302 = vmatprep.subr.bf16.mxu0 0
      %1303 = vmatpush1.bf16.xpose.msra.mxu0 0
      %1304 = vmatprep.subr.bf16.mxu0 0
      %1305 = vmatpush1.bf16.xpose.msra.mxu0 0
      %1306 = vmatprep.mubr.bf16.mxu0 0
      %1307 = vmatmul.mubr.bf16.gmra.mrb[0].mxu0 %v1232
      %v1308 = vpop.f32.mrb[0].mxu0
      %v1309 = vadd.f32 0.0, %v1308
      %v1310 = vpop.f32.mrb[0].mxu0
      %v1311 = vpop.f32.mrb[0].mxu0
      %v1312 = vadd.f32 0.0, %v1311
      %v1313 = vpop.f32.mrb[0].mxu0
      %1314 = vdwg.mxu0
      %1315 = vmatprep.subr.bf16.mxu0 0
      %1316 = vmatpush1.bf16.xpose.msra.mxu0 %v1139
      %1317 = vmatprep.subr.bf16.mxu0 0
      %1318 = vmatpush1.bf16.xpose.msra.mxu0 0
      %1319 = vmatprep.subr.bf16.mxu0 0
      %1320 = vmatpush1.bf16.xpose.msra.mxu0 0
      %1321 = vmatprep.subr.bf16.mxu0 0
      %1322 = vmatpush1.bf16.xpose.msra.mxu0 0
      %1323 = vmatprep.subr.bf16.mxu0 0
      %1324 = vmatpush1.bf16.xpose.msra.mxu0 0
      %1325 = vmatprep.subr.bf16.mxu0 0
      %1326 = vmatpush1.bf16.xpose.msra.mxu0 0
      %1327 = vmatprep.subr.bf16.mxu0 0
      %1328 = vmatpush1.bf16.xpose.msra.mxu0 0
      %1329 = vmatprep.subr.bf16.mxu0 0
      %1330 = vmatpush1.bf16.xpose.msra.mxu0 0
      %1331 = vmatprep.subr.bf16.mxu0 0
      %1332 = vmatpush1.bf16.xpose.msra.mxu0 0
      %1333 = vmatprep.subr.bf16.mxu0 0
      %1334 = vmatpush1.bf16.xpose.msra.mxu0 0
      %1335 = vmatprep.subr.bf16.mxu0 0
      %1336 = vmatpush1.bf16.xpose.msra.mxu0 0
      %1337 = vmatprep.subr.bf16.mxu0 0
      %1338 = vmatpush1.bf16.xpose.msra.mxu0 0
      %1339 = vmatprep.subr.bf16.mxu0 0
      %1340 = vmatpush1.bf16.xpose.msra.mxu0 0
      %1341 = vmatprep.subr.bf16.mxu0 0
      %1342 = vmatpush1.bf16.xpose.msra.mxu0 0
      %1343 = vmatprep.subr.bf16.mxu0 0
      %1344 = vmatpush1.bf16.xpose.msra.mxu0 0
      %1345 = vmatprep.subr.bf16.mxu0 0
      %1346 = vmatpush1.bf16.xpose.msra.mxu0 0
      %1347 = vmatprep.mubr.bf16.mxu0 0
      %1348 = vmatmul.mubr.bf16.gmra.mrb[0].mxu0 %v1232
      %v1349 = vpop.f32.mrb[0].mxu0
      %v1350 = vadd.f32 0.0, %v1349
      %v1351 = vpop.f32.mrb[0].mxu0
      %v1352 = vpop.f32.mrb[0].mxu0
      %v1353 = vadd.f32 0.0, %v1352
      %v1354 = vpop.f32.mrb[0].mxu0
      %1355 = vdwg.mxu0
      %1356 = vmatprep.subr.bf16.mxu0 0
      %1357 = vmatpush1.bf16.xpose.msra.mxu0 %v1140
      %1358 = vmatprep.subr.bf16.mxu0 0
      %1359 = vmatpush1.bf16.xpose.msra.mxu0 0
      %1360 = vmatprep.subr.bf16.mxu0 0
      %1361 = vmatpush1.bf16.xpose.msra.mxu0 0
      %1362 = vmatprep.subr.bf16.mxu0 0
      %1363 = vmatpush1.bf16.xpose.msra.mxu0 0
      %1364 = vmatprep.subr.bf16.mxu0 0
      %1365 = vmatpush1.bf16.xpose.msra.mxu0 0
      %1366 = vmatprep.subr.bf16.mxu0 0
      %1367 = vmatpush1.bf16.xpose.msra.mxu0 0
      %1368 = vmatprep.subr.bf16.mxu0 0
      %1369 = vmatpush1.bf16.xpose.msra.mxu0 0
      %1370 = vmatprep.subr.bf16.mxu0 0
      %1371 = vmatpush1.bf16.xpose.msra.mxu0 0
      %1372 = vmatprep.subr.bf16.mxu0 0
      %1373 = vmatpush1.bf16.xpose.msra.mxu0 0
      %1374 = vmatprep.subr.bf16.mxu0 0
      %1375 = vmatpush1.bf16.xpose.msra.mxu0 0
      %1376 = vmatprep.subr.bf16.mxu0 0
      %1377 = vmatpush1.bf16.xpose.msra.mxu0 0
      %1378 = vmatprep.subr.bf16.mxu0 0
      %1379 = vmatpush1.bf16.xpose.msra.mxu0 0
      %1380 = vmatprep.subr.bf16.mxu0 0
      %1381 = vmatpush1.bf16.xpose.msra.mxu0 0
      %1382 = vmatprep.subr.bf16.mxu0 0
      %1383 = vmatpush1.bf16.xpose.msra.mxu0 0
      %1384 = vmatprep.subr.bf16.mxu0 0
      %1385 = vmatpush1.bf16.xpose.msra.mxu0 0
      %1386 = vmatprep.subr.bf16.mxu0 0
      %1387 = vmatpush1.bf16.xpose.msra.mxu0 0
      %1388 = vmatprep.mubr.bf16.mxu0 0
      %1389 = vmatmul.mubr.bf16.gmra.mrb[0].mxu0 %v1232
      %v1390 = vpop.f32.mrb[0].mxu0
      %v1391 = vadd.f32 0.0, %v1390
      %v1392 = vpop.f32.mrb[0].mxu0
      %v1393 = vpop.f32.mrb[0].mxu0
      %v1394 = vadd.f32 0.0, %v1393
      %v1395 = vpop.f32.mrb[0].mxu0
      %1396 = vdwg.mxu0
      %1397 = vmatprep.subr.bf16.mxu0 0
      %1398 = vmatpush1.bf16.xpose.msra.mxu0 %v1141
      %1399 = vmatprep.subr.bf16.mxu0 0
      %1400 = vmatpush1.bf16.xpose.msra.mxu0 0
      %1401 = vmatprep.subr.bf16.mxu0 0
      %1402 = vmatpush1.bf16.xpose.msra.mxu0 0
      %1403 = vmatprep.subr.bf16.mxu0 0
      %1404 = vmatpush1.bf16.xpose.msra.mxu0 0
      %1405 = vmatprep.subr.bf16.mxu0 0
      %1406 = vmatpush1.bf16.xpose.msra.mxu0 0
      %1407 = vmatprep.subr.bf16.mxu0 0
      %1408 = vmatpush1.bf16.xpose.msra.mxu0 0
      %1409 = vmatprep.subr.bf16.mxu0 0
      %1410 = vmatpush1.bf16.xpose.msra.mxu0 0
      %1411 = vmatprep.subr.bf16.mxu0 0
      %1412 = vmatpush1.bf16.xpose.msra.mxu0 0
      %1413 = vmatprep.subr.bf16.mxu0 0
      %1414 = vmatpush1.bf16.xpose.msra.mxu0 0
      %1415 = vmatprep.subr.bf16.mxu0 0
      %1416 = vmatpush1.bf16.xpose.msra.mxu0 0
      %1417 = vmatprep.subr.bf16.mxu0 0
      %1418 = vmatpush1.bf16.xpose.msra.mxu0 0
      %1419 = vmatprep.subr.bf16.mxu0 0
      %1420 = vmatpush1.bf16.xpose.msra.mxu0 0
      %1421 = vmatprep.subr.bf16.mxu0 0
      %1422 = vmatpush1.bf16.xpose.msra.mxu0 0
      %1423 = vmatprep.subr.bf16.mxu0 0
      %1424 = vmatpush1.bf16.xpose.msra.mxu0 0
      %1425 = vmatprep.subr.bf16.mxu0 0
      %1426 = vmatpush1.bf16.xpose.msra.mxu0 0
      %1427 = vmatprep.subr.bf16.mxu0 0
      %1428 = vmatpush1.bf16.xpose.msra.mxu0 0
      %1429 = vmatprep.mubr.bf16.mxu0 0
      %1430 = vmatmul.mubr.bf16.gmra.mrb[0].mxu0 %v1232
      %v1431 = vpop.f32.mrb[0].mxu0
      %v1432 = vadd.f32 0.0, %v1431
      %v1433 = vpop.f32.mrb[0].mxu0
      %v1434 = vpop.f32.mrb[0].mxu0
      %v1435 = vadd.f32 0.0, %v1434
      %v1436 = vpop.f32.mrb[0].mxu0
      %1437 = vdwg.mxu0
      %1438 = vmatprep.subr.bf16.mxu0 0
      %1439 = vmatpush1.bf16.xpose.msra.mxu0 %v1142
      %1440 = vmatprep.subr.bf16.mxu0 0
      %1441 = vmatpush1.bf16.xpose.msra.mxu0 0
      %1442 = vmatprep.subr.bf16.mxu0 0
      %1443 = vmatpush1.bf16.xpose.msra.mxu0 0
      %1444 = vmatprep.subr.bf16.mxu0 0
      %1445 = vmatpush1.bf16.xpose.msra.mxu0 0
      %1446 = vmatprep.subr.bf16.mxu0 0
      %1447 = vmatpush1.bf16.xpose.msra.mxu0 0
      %1448 = vmatprep.subr.bf16.mxu0 0
      %1449 = vmatpush1.bf16.xpose.msra.mxu0 0
      %1450 = vmatprep.subr.bf16.mxu0 0
      %1451 = vmatpush1.bf16.xpose.msra.mxu0 0
      %1452 = vmatprep.subr.bf16.mxu0 0
      %1453 = vmatpush1.bf16.xpose.msra.mxu0 0
      %1454 = vmatprep.subr.bf16.mxu0 0
      %1455 = vmatpush1.bf16.xpose.msra.mxu0 0
      %1456 = vmatprep.subr.bf16.mxu0 0
      %1457 = vmatpush1.bf16.xpose.msra.mxu0 0
      %1458 = vmatprep.subr.bf16.mxu0 0
      %1459 = vmatpush1.bf16.xpose.msra.mxu0 0
      %1460 = vmatprep.subr.bf16.mxu0 0
      %1461 = vmatpush1.bf16.xpose.msra.mxu0 0
      %1462 = vmatprep.subr.bf16.mxu0 0
      %1463 = vmatpush1.bf16.xpose.msra.mxu0 0
      %1464 = vmatprep.subr.bf16.mxu0 0
      %1465 = vmatpush1.bf16.xpose.msra.mxu0 0
      %1466 = vmatprep.subr.bf16.mxu0 0
      %1467 = vmatpush1.bf16.xpose.msra.mxu0 0
      %1468 = vmatprep.subr.bf16.mxu0 0
      %1469 = vmatpush1.bf16.xpose.msra.mxu0 0
      %1470 = vmatprep.mubr.bf16.mxu0 0
      %1471 = vmatmul.mubr.bf16.gmra.mrb[0].mxu0 %v1232
      %v1472 = vpop.f32.mrb[0].mxu0
      %v1473 = vadd.f32 0.0, %v1472
      %v1474 = vpop.f32.mrb[0].mxu0
      %v1475 = vpop.f32.mrb[0].mxu0
      %v1476 = vadd.f32 0.0, %v1475
      %v1477 = vpop.f32.mrb[0].mxu0
      %1478 = vdwg.mxu0
      %1479 = vmatprep.subr.bf16.mxu0 0
      %1480 = vmatpush1.bf16.xpose.msra.mxu0 %v1143
      %1481 = vmatprep.subr.bf16.mxu0 0
      %1482 = vmatpush1.bf16.xpose.msra.mxu0 0
      %1483 = vmatprep.subr.bf16.mxu0 0
      %1484 = vmatpush1.bf16.xpose.msra.mxu0 0
      %1485 = vmatprep.subr.bf16.mxu0 0
      %1486 = vmatpush1.bf16.xpose.msra.mxu0 0
      %1487 = vmatprep.subr.bf16.mxu0 0
      %1488 = vmatpush1.bf16.xpose.msra.mxu0 0
      %1489 = vmatprep.subr.bf16.mxu0 0
      %1490 = vmatpush1.bf16.xpose.msra.mxu0 0
      %1491 = vmatprep.subr.bf16.mxu0 0
      %1492 = vmatpush1.bf16.xpose.msra.mxu0 0
      %1493 = vmatprep.subr.bf16.mxu0 0
      %1494 = vmatpush1.bf16.xpose.msra.mxu0 0
      %1495 = vmatprep.subr.bf16.mxu0 0
      %1496 = vmatpush1.bf16.xpose.msra.mxu0 0
      %1497 = vmatprep.subr.bf16.mxu0 0
      %1498 = vmatpush1.bf16.xpose.msra.mxu0 0
      %1499 = vmatprep.subr.bf16.mxu0 0
      %1500 = vmatpush1.bf16.xpose.msra.mxu0 0
      %1501 = vmatprep.subr.bf16.mxu0 0
      %1502 = vmatpush1.bf16.xpose.msra.mxu0 0
      %1503 = vmatprep.subr.bf16.mxu0 0
      %1504 = vmatpush1.bf16.xpose.msra.mxu0 0
      %1505 = vmatprep.subr.bf16.mxu0 0
      %1506 = vmatpush1.bf16.xpose.msra.mxu0 0
      %1507 = vmatprep.subr.bf16.mxu0 0
      %1508 = vmatpush1.bf16.xpose.msra.mxu0 0
      %1509 = vmatprep.subr.bf16.mxu0 0
      %1510 = vmatpush1.bf16.xpose.msra.mxu0 0
      %1511 = vmatprep.mubr.bf16.mxu0 0
      %1512 = vmatmul.mubr.bf16.gmra.mrb[0].mxu0 %v1232
      %v1513 = vpop.f32.mrb[0].mxu0
      %v1514 = vadd.f32 0.0, %v1513
      %v1515 = vpop.f32.mrb[0].mxu0
      %v1516 = vpop.f32.mrb[0].mxu0
      %v1517 = vadd.f32 0.0, %v1516
      %v1518 = vpop.f32.mrb[0].mxu0
      %1519 = vdwg.mxu0
      %1520 = vmatprep.subr.bf16.mxu0 0
      %1521 = vmatpush1.bf16.xpose.msra.mxu0 %v1144
      %1522 = vmatprep.subr.bf16.mxu0 0
      %1523 = vmatpush1.bf16.xpose.msra.mxu0 0
      %1524 = vmatprep.subr.bf16.mxu0 0
      %1525 = vmatpush1.bf16.xpose.msra.mxu0 0
      %1526 = vmatprep.subr.bf16.mxu0 0
      %1527 = vmatpush1.bf16.xpose.msra.mxu0 0
      %1528 = vmatprep.subr.bf16.mxu0 0
      %1529 = vmatpush1.bf16.xpose.msra.mxu0 0
      %1530 = vmatprep.subr.bf16.mxu0 0
      %1531 = vmatpush1.bf16.xpose.msra.mxu0 0
      %1532 = vmatprep.subr.bf16.mxu0 0
      %1533 = vmatpush1.bf16.xpose.msra.mxu0 0
      %1534 = vmatprep.subr.bf16.mxu0 0
      %1535 = vmatpush1.bf16.xpose.msra.mxu0 0
      %1536 = vmatprep.subr.bf16.mxu0 0
      %1537 = vmatpush1.bf16.xpose.msra.mxu0 0
      %1538 = vmatprep.subr.bf16.mxu0 0
      %1539 = vmatpush1.bf16.xpose.msra.mxu0 0
      %1540 = vmatprep.subr.bf16.mxu0 0
      %1541 = vmatpush1.bf16.xpose.msra.mxu0 0
      %1542 = vmatprep.subr.bf16.mxu0 0
      %1543 = vmatpush1.bf16.xpose.msra.mxu0 0
      %1544 = vmatprep.subr.bf16.mxu0 0
      %1545 = vmatpush1.bf16.xpose.msra.mxu0 0
      %1546 = vmatprep.subr.bf16.mxu0 0
      %1547 = vmatpush1.bf16.xpose.msra.mxu0 0
      %1548 = vmatprep.subr.bf16.mxu0 0
      %1549 = vmatpush1.bf16.xpose.msra.mxu0 0
      %1550 = vmatprep.subr.bf16.mxu0 0
      %1551 = vmatpush1.bf16.xpose.msra.mxu0 0
      %1552 = vmatprep.mubr.bf16.mxu0 0
      %1553 = vmatmul.mubr.bf16.gmra.mrb[0].mxu0 %v1232
      %v1554 = vpop.f32.mrb[0].mxu0
      %v1555 = vadd.f32 0.0, %v1554
      %v1556 = vpop.f32.mrb[0].mxu0
      %v1557 = vpop.f32.mrb[0].mxu0
      %v1558 = vadd.f32 0.0, %v1557
      %v1559 = vpop.f32.mrb[0].mxu0
      %1560 = vdwg.mxu0
      %1561 = vmatprep.subr.bf16.mxu0 0
      %1562 = vmatpush1.bf16.xpose.msra.mxu0 %v1145
      %1563 = vmatprep.subr.bf16.mxu0 0
      %1564 = vmatpush1.bf16.xpose.msra.mxu0 0
      %1565 = vmatprep.subr.bf16.mxu0 0
      %1566 = vmatpush1.bf16.xpose.msra.mxu0 0
      %1567 = vmatprep.subr.bf16.mxu0 0
      %1568 = vmatpush1.bf16.xpose.msra.mxu0 0
      %1569 = vmatprep.subr.bf16.mxu0 0
      %1570 = vmatpush1.bf16.xpose.msra.mxu0 0
      %1571 = vmatprep.subr.bf16.mxu0 0
      %1572 = vmatpush1.bf16.xpose.msra.mxu0 0
      %1573 = vmatprep.subr.bf16.mxu0 0
      %1574 = vmatpush1.bf16.xpose.msra.mxu0 0
      %1575 = vmatprep.subr.bf16.mxu0 0
      %1576 = vmatpush1.bf16.xpose.msra.mxu0 0
      %1577 = vmatprep.subr.bf16.mxu0 0
      %1578 = vmatpush1.bf16.xpose.msra.mxu0 0
      %1579 = vmatprep.subr.bf16.mxu0 0
      %1580 = vmatpush1.bf16.xpose.msra.mxu0 0
      %1581 = vmatprep.subr.bf16.mxu0 0
      %1582 = vmatpush1.bf16.xpose.msra.mxu0 0
      %1583 = vmatprep.subr.bf16.mxu0 0
      %1584 = vmatpush1.bf16.xpose.msra.mxu0 0
      %1585 = vmatprep.subr.bf16.mxu0 0
      %1586 = vmatpush1.bf16.xpose.msra.mxu0 0
      %1587 = vmatprep.subr.bf16.mxu0 0
      %1588 = vmatpush1.bf16.xpose.msra.mxu0 0
      %1589 = vmatprep.subr.bf16.mxu0 0
      %1590 = vmatpush1.bf16.xpose.msra.mxu0 0
      %1591 = vmatprep.subr.bf16.mxu0 0
      %1592 = vmatpush1.bf16.xpose.msra.mxu0 0
      %1593 = vmatprep.mubr.bf16.mxu0 0
      %1594 = vmatmul.mubr.bf16.gmra.mrb[0].mxu0 %v1232
      %v1595 = vpop.f32.mrb[0].mxu0
      %v1596 = vadd.f32 0.0, %v1595
      %v1597 = vpop.f32.mrb[0].mxu0
      %v1598 = vpop.f32.mrb[0].mxu0
      %v1599 = vadd.f32 0.0, %v1598
      %v1600 = vpop.f32.mrb[0].mxu0
      %1601 = vdwg.mxu0
      %1602 = vmatprep.subr.bf16.mxu0 0
      %1603 = vmatpush1.bf16.xpose.msra.mxu0 %v1146
      %1604 = vmatprep.subr.bf16.mxu0 0
      %1605 = vmatpush1.bf16.xpose.msra.mxu0 0
      %1606 = vmatprep.subr.bf16.mxu0 0
      %1607 = vmatpush1.bf16.xpose.msra.mxu0 0
      %1608 = vmatprep.subr.bf16.mxu0 0
      %1609 = vmatpush1.bf16.xpose.msra.mxu0 0
      %1610 = vmatprep.subr.bf16.mxu0 0
      %1611 = vmatpush1.bf16.xpose.msra.mxu0 0
      %1612 = vmatprep.subr.bf16.mxu0 0
      %1613 = vmatpush1.bf16.xpose.msra.mxu0 0
      %1614 = vmatprep.subr.bf16.mxu0 0
      %1615 = vmatpush1.bf16.xpose.msra.mxu0 0
      %1616 = vmatprep.subr.bf16.mxu0 0
      %1617 = vmatpush1.bf16.xpose.msra.mxu0 0
      %1618 = vmatprep.subr.bf16.mxu0 0
      %1619 = vmatpush1.bf16.xpose.msra.mxu0 0
      %1620 = vmatprep.subr.bf16.mxu0 0
      %1621 = vmatpush1.bf16.xpose.msra.mxu0 0
      %1622 = vmatprep.subr.bf16.mxu0 0
      %1623 = vmatpush1.bf16.xpose.msra.mxu0 0
      %1624 = vmatprep.subr.bf16.mxu0 0
      %1625 = vmatpush1.bf16.xpose.msra.mxu0 0
      %1626 = vmatprep.subr.bf16.mxu0 0
      %1627 = vmatpush1.bf16.xpose.msra.mxu0 0
      %1628 = vmatprep.subr.bf16.mxu0 0
      %1629 = vmatpush1.bf16.xpose.msra.mxu0 0
      %1630 = vmatprep.subr.bf16.mxu0 0
      %1631 = vmatpush1.bf16.xpose.msra.mxu0 0
      %1632 = vmatprep.subr.bf16.mxu0 0
      %1633 = vmatpush1.bf16.xpose.msra.mxu0 0
      %1634 = vmatprep.mubr.bf16.mxu0 0
      %1635 = vmatmul.mubr.bf16.gmra.mrb[0].mxu0 %v1232
      %v1636 = vpop.f32.mrb[0].mxu0
      %v1637 = vadd.f32 0.0, %v1636
      %v1638 = vpop.f32.mrb[0].mxu0
      %v1639 = vpop.f32.mrb[0].mxu0
      %v1640 = vadd.f32 0.0, %v1639
      %v1641 = vpop.f32.mrb[0].mxu0
      %1642 = vdwg.mxu0
      %1643 = vmatprep.subr.bf16.mxu0 0
      %1644 = vmatpush1.bf16.xpose.msra.mxu0 %v1147
      %1645 = vmatprep.subr.bf16.mxu0 0
      %1646 = vmatpush1.bf16.xpose.msra.mxu0 0
      %1647 = vmatprep.subr.bf16.mxu0 0
      %1648 = vmatpush1.bf16.xpose.msra.mxu0 0
      %1649 = vmatprep.subr.bf16.mxu0 0
      %1650 = vmatpush1.bf16.xpose.msra.mxu0 0
      %1651 = vmatprep.subr.bf16.mxu0 0
      %1652 = vmatpush1.bf16.xpose.msra.mxu0 0
      %1653 = vmatprep.subr.bf16.mxu0 0
      %1654 = vmatpush1.bf16.xpose.msra.mxu0 0
      %1655 = vmatprep.subr.bf16.mxu0 0
      %1656 = vmatpush1.bf16.xpose.msra.mxu0 0
      %1657 = vmatprep.subr.bf16.mxu0 0
      %1658 = vmatpush1.bf16.xpose.msra.mxu0 0
      %1659 = vmatprep.subr.bf16.mxu0 0
      %1660 = vmatpush1.bf16.xpose.msra.mxu0 0
      %1661 = vmatprep.subr.bf16.mxu0 0
      %1662 = vmatpush1.bf16.xpose.msra.mxu0 0
      %1663 = vmatprep.subr.bf16.mxu0 0
      %1664 = vmatpush1.bf16.xpose.msra.mxu0 0
      %1665 = vmatprep.subr.bf16.mxu0 0
      %1666 = vmatpush1.bf16.xpose.msra.mxu0 0
      %1667 = vmatprep.subr.bf16.mxu0 0
      %1668 = vmatpush1.bf16.xpose.msra.mxu0 0
      %1669 = vmatprep.subr.bf16.mxu0 0
      %1670 = vmatpush1.bf16.xpose.msra.mxu0 0
      %1671 = vmatprep.subr.bf16.mxu0 0
      %1672 = vmatpush1.bf16.xpose.msra.mxu0 0
      %1673 = vmatprep.subr.bf16.mxu0 0
      %1674 = vmatpush1.bf16.xpose.msra.mxu0 0
      %1675 = vmatprep.mubr.bf16.mxu0 0
      %1676 = vmatmul.mubr.bf16.gmra.mrb[0].mxu0 %v1232
      %v1677 = vpop.f32.mrb[0].mxu0
      %v1678 = vadd.f32 0.0, %v1677
      %v1679 = vpop.f32.mrb[0].mxu0
      %v1680 = vpop.f32.mrb[0].mxu0
      %v1681 = vadd.f32 0.0, %v1680
      %v1682 = vpop.f32.mrb[0].mxu0
      %1683 = vdwg.mxu0
      %1684 = vmatprep.subr.bf16.mxu0 0
      %1685 = vmatpush1.bf16.xpose.msra.mxu0 %v1148
      %1686 = vmatprep.subr.bf16.mxu0 0
      %1687 = vmatpush1.bf16.xpose.msra.mxu0 0
      %1688 = vmatprep.subr.bf16.mxu0 0
      %1689 = vmatpush1.bf16.xpose.msra.mxu0 0
      %1690 = vmatprep.subr.bf16.mxu0 0
      %1691 = vmatpush1.bf16.xpose.msra.mxu0 0
      %1692 = vmatprep.subr.bf16.mxu0 0
      %1693 = vmatpush1.bf16.xpose.msra.mxu0 0
      %1694 = vmatprep.subr.bf16.mxu0 0
      %1695 = vmatpush1.bf16.xpose.msra.mxu0 0
      %1696 = vmatprep.subr.bf16.mxu0 0
      %1697 = vmatpush1.bf16.xpose.msra.mxu0 0
      %1698 = vmatprep.subr.bf16.mxu0 0
      %1699 = vmatpush1.bf16.xpose.msra.mxu0 0
      %1700 = vmatprep.subr.bf16.mxu0 0
      %1701 = vmatpush1.bf16.xpose.msra.mxu0 0
      %1702 = vmatprep.subr.bf16.mxu0 0
      %1703 = vmatpush1.bf16.xpose.msra.mxu0 0
      %1704 = vmatprep.subr.bf16.mxu0 0
      %1705 = vmatpush1.bf16.xpose.msra.mxu0 0
      %1706 = vmatprep.subr.bf16.mxu0 0
      %1707 = vmatpush1.bf16.xpose.msra.mxu0 0
      %1708 = vmatprep.subr.bf16.mxu0 0
      %1709 = vmatpush1.bf16.xpose.msra.mxu0 0
      %1710 = vmatprep.subr.bf16.mxu0 0
      %1711 = vmatpush1.bf16.xpose.msra.mxu0 0
      %1712 = vmatprep.subr.bf16.mxu0 0
      %1713 = vmatpush1.bf16.xpose.msra.mxu0 0
      %1714 = vmatprep.subr.bf16.mxu0 0
      %1715 = vmatpush1.bf16.xpose.msra.mxu0 0
      %1716 = vmatprep.mubr.bf16.mxu0 0
      %1717 = vmatmul.mubr.bf16.gmra.mrb[0].mxu0 %v1232
      %v1718 = vpop.f32.mrb[0].mxu0
      %v1719 = vadd.f32 0.0, %v1718
      %v1720 = vpop.f32.mrb[0].mxu0
      %v1721 = vpop.f32.mrb[0].mxu0
      %v1722 = vadd.f32 0.0, %v1721
      %v1723 = vpop.f32.mrb[0].mxu0
      %1724 = vdwg.mxu0
      %v1725 = vpack.c.bf16 %v1271, %v1268
      %v1726 = vpack.c.bf16 %v1312, %v1309
      %v1727 = vpack.c.bf16 %v1353, %v1350
      %v1728 = vpack.c.bf16 %v1394, %v1391
      %v1729 = vpack.c.bf16 %v1435, %v1432
      %v1730 = vpack.c.bf16 %v1476, %v1473
      %v1731 = vpack.c.bf16 %v1517, %v1514
      %v1732 = vpack.c.bf16 %v1558, %v1555
      %vm1733 = vcmask 64512
      %v1735 = vsel %vm1733, %v1725, 0
      %v1738 = vsel %vm1733, %v1729, 0
      %1740 = vmatprep.subr.bf16.mxu0 0
      %1741 = vmatpush1.bf16.xpose.msra.mxu0 %v1738
      %1742 = vmatprep.subr.bf16.mxu0 0
      %1743 = vmatpush1.bf16.xpose.msra.mxu0 0
      %1744 = vmatprep.subr.bf16.mxu0 0
      %1745 = vmatpush1.bf16.xpose.msra.mxu0 0
      %1746 = vmatprep.subr.bf16.mxu0 0
      %1747 = vmatpush1.bf16.xpose.msra.mxu0 0
      %1748 = vmatprep.subr.bf16.mxu0 0
      %1749 = vmatpush1.bf16.xpose.msra.mxu0 0
      %1750 = vmatprep.subr.bf16.mxu0 0
      %1751 = vmatpush1.bf16.xpose.msra.mxu0 0
      %1752 = vmatprep.subr.bf16.mxu0 0
      %1753 = vmatpush1.bf16.xpose.msra.mxu0 0
      %1754 = vmatprep.subr.bf16.mxu0 0
      %1755 = vmatpush1.bf16.xpose.msra.mxu0 0
      %1756 = vmatprep.subr.bf16.mxu0 0
      %1757 = vmatpush1.bf16.xpose.msra.mxu0 0
      %1758 = vmatprep.subr.bf16.mxu0 0
      %1759 = vmatpush1.bf16.xpose.msra.mxu0 0
      %1760 = vmatprep.subr.bf16.mxu0 0
      %1761 = vmatpush1.bf16.xpose.msra.mxu0 0
      %1762 = vmatprep.subr.bf16.mxu0 0
      %1763 = vmatpush1.bf16.xpose.msra.mxu0 0
      %1764 = vmatprep.subr.bf16.mxu0 0
      %1765 = vmatpush1.bf16.xpose.msra.mxu0 0
      %1766 = vmatprep.subr.bf16.mxu0 0
      %1767 = vmatpush1.bf16.xpose.msra.mxu0 0
      %1768 = vmatprep.subr.bf16.mxu0 0
      %1769 = vmatpush1.bf16.xpose.msra.mxu0 0
      %1770 = vmatprep.subr.bf16.mxu0 0
      %1771 = vmatpush1.bf16.xpose.msra.mxu0 0
      %1772 = vmatprep.mubr.bf16.mxu0 0
      %1773 = vmatmul.mubr.bf16.gmra.mrb[0].mxu0 %v1735
      %v1774 = vpop.f32.mrb[0].mxu0
      %v1775 = vadd.f32 0.0, %v1774
      %v1776 = vpop.f32.mrb[0].mxu0
      %v1777 = vpop.f32.mrb[0].mxu0
      %v1778 = vadd.f32 0.0, %v1777
      %v1779 = vpop.f32.mrb[0].mxu0
      %1780 = vdwg.mxu0
      %v1782 = vsel %vm1733, %v1726, 0
      %v1785 = vsel %vm1733, %v1730, 0
      %1787 = vmatprep.subr.bf16.mxu0 0
      %1788 = vmatpush1.bf16.xpose.msra.mxu0 %v1785
      %1789 = vmatprep.subr.bf16.mxu0 0
      %1790 = vmatpush1.bf16.xpose.msra.mxu0 0
      %1791 = vmatprep.subr.bf16.mxu0 0
      %1792 = vmatpush1.bf16.xpose.msra.mxu0 0
      %1793 = vmatprep.subr.bf16.mxu0 0
      %1794 = vmatpush1.bf16.xpose.msra.mxu0 0
      %1795 = vmatprep.subr.bf16.mxu0 0
      %1796 = vmatpush1.bf16.xpose.msra.mxu0 0
      %1797 = vmatprep.subr.bf16.mxu0 0
      %1798 = vmatpush1.bf16.xpose.msra.mxu0 0
      %1799 = vmatprep.subr.bf16.mxu0 0
      %1800 = vmatpush1.bf16.xpose.msra.mxu0 0
      %1801 = vmatprep.subr.bf16.mxu0 0
      %1802 = vmatpush1.bf16.xpose.msra.mxu0 0
      %1803 = vmatprep.subr.bf16.mxu0 0
      %1804 = vmatpush1.bf16.xpose.msra.mxu0 0
      %1805 = vmatprep.subr.bf16.mxu0 0
      %1806 = vmatpush1.bf16.xpose.msra.mxu0 0
      %1807 = vmatprep.subr.bf16.mxu0 0
      %1808 = vmatpush1.bf16.xpose.msra.mxu0 0
      %1809 = vmatprep.subr.bf16.mxu0 0
      %1810 = vmatpush1.bf16.xpose.msra.mxu0 0
      %1811 = vmatprep.subr.bf16.mxu0 0
      %1812 = vmatpush1.bf16.xpose.msra.mxu0 0
      %1813 = vmatprep.subr.bf16.mxu0 0
      %1814 = vmatpush1.bf16.xpose.msra.mxu0 0
      %1815 = vmatprep.subr.bf16.mxu0 0
      %1816 = vmatpush1.bf16.xpose.msra.mxu0 0
      %1817 = vmatprep.subr.bf16.mxu0 0
      %1818 = vmatpush1.bf16.xpose.msra.mxu0 0
      %1819 = vmatprep.mubr.bf16.mxu0 0
      %1820 = vmatmul.mubr.bf16.gmra.mrb[0].mxu0 %v1782
      %v1821 = vpop.f32.mrb[0].mxu0
      %v1822 = vadd.f32 0.0, %v1821
      %v1823 = vpop.f32.mrb[0].mxu0
      %v1824 = vpop.f32.mrb[0].mxu0
      %v1825 = vadd.f32 0.0, %v1824
      %v1826 = vpop.f32.mrb[0].mxu0
      %1827 = vdwg.mxu0
      %v1829 = vsel %vm1733, %v1727, 0
      %v1832 = vsel %vm1733, %v1731, 0
      %1834 = vmatprep.subr.bf16.mxu0 0
      %1835 = vmatpush1.bf16.xpose.msra.mxu0 %v1832
      %1836 = vmatprep.subr.bf16.mxu0 0
      %1837 = vmatpush1.bf16.xpose.msra.mxu0 0
      %1838 = vmatprep.subr.bf16.mxu0 0
      %1839 = vmatpush1.bf16.xpose.msra.mxu0 0
      %1840 = vmatprep.subr.bf16.mxu0 0
      %1841 = vmatpush1.bf16.xpose.msra.mxu0 0
      %1842 = vmatprep.subr.bf16.mxu0 0
      %1843 = vmatpush1.bf16.xpose.msra.mxu0 0
      %1844 = vmatprep.subr.bf16.mxu0 0
      %1845 = vmatpush1.bf16.xpose.msra.mxu0 0
      %1846 = vmatprep.subr.bf16.mxu0 0
      %1847 = vmatpush1.bf16.xpose.msra.mxu0 0
      %1848 = vmatprep.subr.bf16.mxu0 0
      %1849 = vmatpush1.bf16.xpose.msra.mxu0 0
      %1850 = vmatprep.subr.bf16.mxu0 0
      %1851 = vmatpush1.bf16.xpose.msra.mxu0 0
      %1852 = vmatprep.subr.bf16.mxu0 0
      %1853 = vmatpush1.bf16.xpose.msra.mxu0 0
      %1854 = vmatprep.subr.bf16.mxu0 0
      %1855 = vmatpush1.bf16.xpose.msra.mxu0 0
      %1856 = vmatprep.subr.bf16.mxu0 0
      %1857 = vmatpush1.bf16.xpose.msra.mxu0 0
      %1858 = vmatprep.subr.bf16.mxu0 0
      %1859 = vmatpush1.bf16.xpose.msra.mxu0 0
      %1860 = vmatprep.subr.bf16.mxu0 0
      %1861 = vmatpush1.bf16.xpose.msra.mxu0 0
      %1862 = vmatprep.subr.bf16.mxu0 0
      %1863 = vmatpush1.bf16.xpose.msra.mxu0 0
      %1864 = vmatprep.subr.bf16.mxu0 0
      %1865 = vmatpush1.bf16.xpose.msra.mxu0 0
      %1866 = vmatprep.mubr.bf16.mxu0 0
      %1867 = vmatmul.mubr.bf16.gmra.mrb[0].mxu0 %v1829
      %v1868 = vpop.f32.mrb[0].mxu0
      %v1869 = vadd.f32 0.0, %v1868
      %v1870 = vpop.f32.mrb[0].mxu0
      %v1871 = vpop.f32.mrb[0].mxu0
      %v1872 = vadd.f32 0.0, %v1871
      %v1873 = vpop.f32.mrb[0].mxu0
      %1874 = vdwg.mxu0
      %v1876 = vsel %vm1733, %v1728, 0
      %v1879 = vsel %vm1733, %v1732, 0
      %1881 = vmatprep.subr.bf16.mxu0 0
      %1882 = vmatpush1.bf16.xpose.msra.mxu0 %v1879
      %1883 = vmatprep.subr.bf16.mxu0 0
      %1884 = vmatpush1.bf16.xpose.msra.mxu0 0
      %1885 = vmatprep.subr.bf16.mxu0 0
      %1886 = vmatpush1.bf16.xpose.msra.mxu0 0
      %1887 = vmatprep.subr.bf16.mxu0 0
      %1888 = vmatpush1.bf16.xpose.msra.mxu0 0
      %1889 = vmatprep.subr.bf16.mxu0 0
      %1890 = vmatpush1.bf16.xpose.msra.mxu0 0
      %1891 = vmatprep.subr.bf16.mxu0 0
      %1892 = vmatpush1.bf16.xpose.msra.mxu0 0
      %1893 = vmatprep.subr.bf16.mxu0 0
      %1894 = vmatpush1.bf16.xpose.msra.mxu0 0
      %1895 = vmatprep.subr.bf16.mxu0 0
      %1896 = vmatpush1.bf16.xpose.msra.mxu0 0
      %1897 = vmatprep.subr.bf16.mxu0 0
      %1898 = vmatpush1.bf16.xpose.msra.mxu0 0
      %1899 = vmatprep.subr.bf16.mxu0 0
      %1900 = vmatpush1.bf16.xpose.msra.mxu0 0
      %1901 = vmatprep.subr.bf16.mxu0 0
      %1902 = vmatpush1.bf16.xpose.msra.mxu0 0
      %1903 = vmatprep.subr.bf16.mxu0 0
      %1904 = vmatpush1.bf16.xpose.msra.mxu0 0
      %1905 = vmatprep.subr.bf16.mxu0 0
      %1906 = vmatpush1.bf16.xpose.msra.mxu0 0
      %1907 = vmatprep.subr.bf16.mxu0 0
      %1908 = vmatpush1.bf16.xpose.msra.mxu0 0
      %1909 = vmatprep.subr.bf16.mxu0 0
      %1910 = vmatpush1.bf16.xpose.msra.mxu0 0
      %1911 = vmatprep.subr.bf16.mxu0 0
      %1912 = vmatpush1.bf16.xpose.msra.mxu0 0
      %1913 = vmatprep.mubr.bf16.mxu0 0
      %1914 = vmatmul.mubr.bf16.gmra.mrb[0].mxu0 %v1876
      %v1915 = vpop.f32.mrb[0].mxu0
      %v1916 = vadd.f32 0.0, %v1915
      %v1917 = vpop.f32.mrb[0].mxu0
      %v1918 = vpop.f32.mrb[0].mxu0
      %v1919 = vadd.f32 0.0, %v1918
      %v1920 = vpop.f32.mrb[0].mxu0
      %1921 = vdwg.mxu0
      %v1922 = vmul.f32 %v1775, 0.35355338
      %v1923 = vmul.f32 %v1778, 0.35355338
      %v1924 = vmul.f32 %v1822, 0.35355338
      %v1925 = vmul.f32 %v1825, 0.35355338
      %v1926 = vmul.f32 %v1869, 0.35355338
      %v1927 = vmul.f32 %v1872, 0.35355338
      %v1928 = vmul.f32 %v1916, 0.35355338
      %v1929 = vmul.f32 %v1919, 0.35355338
      %vm1930 = vcmask 97280
      %v1931 = vsel %vm1930, %v1922, -inf
      %1932 = vmax.xlane.f32.xlu0 %v1931
      %v1933 = vpop.xlane.xlu0 %1932
      %vm1934 = vcmask 93184
      %v1935 = vsel %vm1934, %v1923, -inf
      %1936 = vmax.xlane.f32.xlu0 %v1935
      %v1937 = vpop.xlane.xlu0 %1936
      %v1938 = vsel %vm1930, %v1924, -inf
      %1939 = vmax.xlane.f32.xlu0 %v1938
      %v1940 = vpop.xlane.xlu0 %1939
      %v1941 = vsel %vm1934, %v1925, -inf
      %1942 = vmax.xlane.f32.xlu0 %v1941
      %v1943 = vpop.xlane.xlu0 %1942
      %v1944 = vsel %vm1930, %v1926, -inf
      %1945 = vmax.xlane.f32.xlu0 %v1944
      %v1946 = vpop.xlane.xlu0 %1945
      %v1947 = vsel %vm1934, %v1927, -inf
      %1948 = vmax.xlane.f32.xlu0 %v1947
      %v1949 = vpop.xlane.xlu0 %1948
      %v1950 = vsel %vm1930, %v1928, -inf
      %1951 = vmax.xlane.f32.xlu0 %v1950
      %v1952 = vpop.xlane.xlu0 %1951
      %v1953 = vsel %vm1934, %v1929, -inf
      %1954 = vmax.xlane.f32.xlu0 %v1953
      %v1955 = vpop.xlane.xlu0 %1954
      %v1956 = vsub.f32 %v1922, %v1933
      %v1957 = vsub.f32 %v1923, %v1937
      %v1958 = vsub.f32 %v1924, %v1940
      %v1959 = vsub.f32 %v1925, %v1943
      %v1960 = vsub.f32 %v1926, %v1946
      %v1961 = vsub.f32 %v1927, %v1949
      %v1962 = vsub.f32 %v1928, %v1952
      %v1963 = vsub.f32 %v1929, %v1955
      %v1964 = vmul.f32 %v1956, 1.442695
      %v1965 = vpow.pop %v1964
      %v1966 = vmul.f32 %v1957, 1.442695
      %v1967 = vpow.pop %v1966
      %v1968 = vmul.f32 %v1958, 1.442695
      %v1969 = vpow.pop %v1968
      %v1970 = vmul.f32 %v1959, 1.442695
      %v1971 = vpow.pop %v1970
      %v1972 = vmul.f32 %v1960, 1.442695
      %v1973 = vpow.pop %v1972
      %v1974 = vmul.f32 %v1961, 1.442695
      %v1975 = vpow.pop %v1974
      %v1976 = vmul.f32 %v1962, 1.442695
      %v1977 = vpow.pop %v1976
      %v1978 = vmul.f32 %v1963, 1.442695
      %v1979 = vpow.pop %v1978
      %v1980 = vsel %vm1930, %v1965, 0.0
      %1981 = vadd.xlane.f32.xlu0 %v1980
      %v1982 = vpop.xlane.xlu0 %1981
      %v1983 = vsel %vm1934, %v1967, 0.0
      %1984 = vadd.xlane.f32.xlu0 %v1983
      %v1985 = vpop.xlane.xlu0 %1984
      %v1986 = vsel %vm1930, %v1969, 0.0
      %1987 = vadd.xlane.f32.xlu0 %v1986
      %v1988 = vpop.xlane.xlu0 %1987
      %v1989 = vsel %vm1934, %v1971, 0.0
      %1990 = vadd.xlane.f32.xlu0 %v1989
      %v1991 = vpop.xlane.xlu0 %1990
      %v1992 = vsel %vm1930, %v1973, 0.0
      %1993 = vadd.xlane.f32.xlu0 %v1992
      %v1994 = vpop.xlane.xlu0 %1993
      %v1995 = vsel %vm1934, %v1975, 0.0
      %1996 = vadd.xlane.f32.xlu0 %v1995
      %v1997 = vpop.xlane.xlu0 %1996
      %v1998 = vsel %vm1930, %v1977, 0.0
      %1999 = vadd.xlane.f32.xlu0 %v1998
      %v2000 = vpop.xlane.xlu0 %1999
      %v2001 = vsel %vm1934, %v1979, 0.0
      %2002 = vadd.xlane.f32.xlu0 %v2001
      %v2003 = vpop.xlane.xlu0 %2002
      %v2004 = vrcp.pop %v1982
      %v2005 = vrcp.pop %v1985
      %v2006 = vrcp.pop %v1988
      %v2007 = vrcp.pop %v1991
      %v2008 = vrcp.pop %v1994
      %v2009 = vrcp.pop %v1997
      %v2010 = vrcp.pop %v2000
      %v2011 = vrcp.pop %v2003
      %v2012 = vmul.f32 %v1965, %v2004
      %v2013 = vmul.f32 %v1967, %v2005
      %v2014 = vmul.f32 %v1969, %v2006
      %v2015 = vmul.f32 %v1971, %v2007
      %v2016 = vmul.f32 %v1973, %v2008
      %v2017 = vmul.f32 %v1975, %v2009
      %v2018 = vmul.f32 %v1977, %v2010
      %v2019 = vmul.f32 %v1979, %v2011
      %v2020 = vpack.c.bf16 %v2013, %v2012
      %v2021 = vpack.c.bf16 %v2015, %v2014
      %v2022 = vpack.c.bf16 %v2017, %v2016
      %v2023 = vpack.c.bf16 %v2019, %v2018
      %v2024 = vpack.c.bf16 %v1599, %v1596
      %v2025 = vpack.c.bf16 %v1640, %v1637
      %v2026 = vpack.c.bf16 %v1681, %v1678
      %v2027 = vpack.c.bf16 %v1722, %v1719
      %v2029 = vsel %vm1930, %v2020, 0
      %vm2031 = vcmask 1045504
      %v2033 = vsel %vm2031, %v2024, 0
      %2035 = vmatprep.subr.bf16.mxu0 0
      %2036 = vmatpush1.bf16.msra.mxu0 %v2033
      %2037 = vmatprep.subr.bf16.mxu0 0
      %2038 = vmatpush1.bf16.msra.mxu0 0
      %2039 = vmatprep.subr.bf16.mxu0 0
      %2040 = vmatpush1.bf16.msra.mxu0 0
      %2041 = vmatprep.subr.bf16.mxu0 0
      %2042 = vmatpush1.bf16.msra.mxu0 0
      %2043 = vmatprep.subr.bf16.mxu0 0
      %2044 = vmatpush1.bf16.msra.mxu0 0
      %2045 = vmatprep.subr.bf16.mxu0 0
      %2046 = vmatpush1.bf16.msra.mxu0 0
      %2047 = vmatprep.subr.bf16.mxu0 0
      %2048 = vmatpush1.bf16.msra.mxu0 0
      %2049 = vmatprep.subr.bf16.mxu0 0
      %2050 = vmatpush1.bf16.msra.mxu0 0
      %2051 = vmatprep.subr.bf16.mxu0 0
      %2052 = vmatpush1.bf16.msra.mxu0 0
      %2053 = vmatprep.subr.bf16.mxu0 0
      %2054 = vmatpush1.bf16.msra.mxu0 0
      %2055 = vmatprep.subr.bf16.mxu0 0
      %2056 = vmatpush1.bf16.msra.mxu0 0
      %2057 = vmatprep.subr.bf16.mxu0 0
      %2058 = vmatpush1.bf16.msra.mxu0 0
      %2059 = vmatprep.subr.bf16.mxu0 0
      %2060 = vmatpush1.bf16.msra.mxu0 0
      %2061 = vmatprep.subr.bf16.mxu0 0
      %2062 = vmatpush1.bf16.msra.mxu0 0
      %2063 = vmatprep.subr.bf16.mxu0 0
      %2064 = vmatpush1.bf16.msra.mxu0 0
      %2065 = vmatprep.subr.bf16.mxu0 0
      %2066 = vmatpush1.bf16.msra.mxu0 0
      %2067 = vmatprep.mubr.bf16.mxu0 0
      %2068 = vmatmul.mubr.bf16.gmra.mrb[0].mxu0 %v2029
      %v2069 = vpop.f32.mrb[0].mxu0
      %v2070 = vadd.f32 0.0, %v2069
      %v2071 = vpop.f32.mrb[0].mxu0
      %v2072 = vpop.f32.mrb[0].mxu0
      %v2073 = vadd.f32 0.0, %v2072
      %v2074 = vpop.f32.mrb[0].mxu0
      %2075 = vdwg.mxu0
      %v2077 = vsel %vm1930, %v2021, 0
      %v2080 = vsel %vm2031, %v2025, 0
      %2082 = vmatprep.subr.bf16.mxu0 0
      %2083 = vmatpush1.bf16.msra.mxu0 %v2080
      %2084 = vmatprep.subr.bf16.mxu0 0
      %2085 = vmatpush1.bf16.msra.mxu0 0
      %2086 = vmatprep.subr.bf16.mxu0 0
      %2087 = vmatpush1.bf16.msra.mxu0 0
      %2088 = vmatprep.subr.bf16.mxu0 0
      %2089 = vmatpush1.bf16.msra.mxu0 0
      %2090 = vmatprep.subr.bf16.mxu0 0
      %2091 = vmatpush1.bf16.msra.mxu0 0
      %2092 = vmatprep.subr.bf16.mxu0 0
      %2093 = vmatpush1.bf16.msra.mxu0 0
      %2094 = vmatprep.subr.bf16.mxu0 0
      %2095 = vmatpush1.bf16.msra.mxu0 0
      %2096 = vmatprep.subr.bf16.mxu0 0
      %2097 = vmatpush1.bf16.msra.mxu0 0
      %2098 = vmatprep.subr.bf16.mxu0 0
      %2099 = vmatpush1.bf16.msra.mxu0 0
      %2100 = vmatprep.subr.bf16.mxu0 0
      %2101 = vmatpush1.bf16.msra.mxu0 0
      %2102 = vmatprep.subr.bf16.mxu0 0
      %2103 = vmatpush1.bf16.msra.mxu0 0
      %2104 = vmatprep.subr.bf16.mxu0 0
      %2105 = vmatpush1.bf16.msra.mxu0 0
      %2106 = vmatprep.subr.bf16.mxu0 0
      %2107 = vmatpush1.bf16.msra.mxu0 0
      %2108 = vmatprep.subr.bf16.mxu0 0
      %2109 = vmatpush1.bf16.msra.mxu0 0
      %2110 = vmatprep.subr.bf16.mxu0 0
      %2111 = vmatpush1.bf16.msra.mxu0 0
      %2112 = vmatprep.subr.bf16.mxu0 0
      %2113 = vmatpush1.bf16.msra.mxu0 0
      %2114 = vmatprep.mubr.bf16.mxu0 0
      %2115 = vmatmul.mubr.bf16.gmra.mrb[0].mxu0 %v2077
      %v2116 = vpop.f32.mrb[0].mxu0
      %v2117 = vadd.f32 0.0, %v2116
      %v2118 = vpop.f32.mrb[0].mxu0
      %v2119 = vpop.f32.mrb[0].mxu0
      %v2120 = vadd.f32 0.0, %v2119
      %v2121 = vpop.f32.mrb[0].mxu0
      %2122 = vdwg.mxu0
      %v2124 = vsel %vm1930, %v2022, 0
      %v2127 = vsel %vm2031, %v2026, 0
      %2129 = vmatprep.subr.bf16.mxu0 0
      %2130 = vmatpush1.bf16.msra.mxu0 %v2127
      %2131 = vmatprep.subr.bf16.mxu0 0
      %2132 = vmatpush1.bf16.msra.mxu0 0
      %2133 = vmatprep.subr.bf16.mxu0 0
      %2134 = vmatpush1.bf16.msra.mxu0 0
      %2135 = vmatprep.subr.bf16.mxu0 0
      %2136 = vmatpush1.bf16.msra.mxu0 0
      %2137 = vmatprep.subr.bf16.mxu0 0
      %2138 = vmatpush1.bf16.msra.mxu0 0
      %2139 = vmatprep.subr.bf16.mxu0 0
      %2140 = vmatpush1.bf16.msra.mxu0 0
      %2141 = vmatprep.subr.bf16.mxu0 0
      %2142 = vmatpush1.bf16.msra.mxu0 0
      %2143 = vmatprep.subr.bf16.mxu0 0
      %2144 = vmatpush1.bf16.msra.mxu0 0
      %2145 = vmatprep.subr.bf16.mxu0 0
      %2146 = vmatpush1.bf16.msra.mxu0 0
      %2147 = vmatprep.subr.bf16.mxu0 0
      %2148 = vmatpush1.bf16.msra.mxu0 0
      %2149 = vmatprep.subr.bf16.mxu0 0
      %2150 = vmatpush1.bf16.msra.mxu0 0
      %2151 = vmatprep.subr.bf16.mxu0 0
      %2152 = vmatpush1.bf16.msra.mxu0 0
      %2153 = vmatprep.subr.bf16.mxu0 0
      %2154 = vmatpush1.bf16.msra.mxu0 0
      %2155 = vmatprep.subr.bf16.mxu0 0
      %2156 = vmatpush1.bf16.msra.mxu0 0
      %2157 = vmatprep.subr.bf16.mxu0 0
      %2158 = vmatpush1.bf16.msra.mxu0 0
      %2159 = vmatprep.subr.bf16.mxu0 0
      %2160 = vmatpush1.bf16.msra.mxu0 0
      %2161 = vmatprep.mubr.bf16.mxu0 0
      %2162 = vmatmul.mubr.bf16.gmra.mrb[0].mxu0 %v2124
      %v2163 = vpop.f32.mrb[0].mxu0
      %v2164 = vadd.f32 0.0, %v2163
      %v2165 = vpop.f32.mrb[0].mxu0
      %v2166 = vpop.f32.mrb[0].mxu0
      %v2167 = vadd.f32 0.0, %v2166
      %v2168 = vpop.f32.mrb[0].mxu0
      %2169 = vdwg.mxu0
      %v2171 = vsel %vm1930, %v2023, 0
      %v2174 = vsel %vm2031, %v2027, 0
      %2176 = vmatprep.subr.bf16.mxu0 0
      %2177 = vmatpush1.bf16.msra.mxu0 %v2174
      %2178 = vmatprep.subr.bf16.mxu0 0
      %2179 = vmatpush1.bf16.msra.mxu0 0
      %2180 = vmatprep.subr.bf16.mxu0 0
      %2181 = vmatpush1.bf16.msra.mxu0 0
      %2182 = vmatprep.subr.bf16.mxu0 0
      %2183 = vmatpush1.bf16.msra.mxu0 0
      %2184 = vmatprep.subr.bf16.mxu0 0
      %2185 = vmatpush1.bf16.msra.mxu0 0
      %2186 = vmatprep.subr.bf16.mxu0 0
      %2187 = vmatpush1.bf16.msra.mxu0 0
      %2188 = vmatprep.subr.bf16.mxu0 0
      %2189 = vmatpush1.bf16.msra.mxu0 0
      %2190 = vmatprep.subr.bf16.mxu0 0
      %2191 = vmatpush1.bf16.msra.mxu0 0
      %2192 = vmatprep.subr.bf16.mxu0 0
      %2193 = vmatpush1.bf16.msra.mxu0 0
      %2194 = vmatprep.subr.bf16.mxu0 0
      %2195 = vmatpush1.bf16.msra.mxu0 0
      %2196 = vmatprep.subr.bf16.mxu0 0
      %2197 = vmatpush1.bf16.msra.mxu0 0
      %2198 = vmatprep.subr.bf16.mxu0 0
      %2199 = vmatpush1.bf16.msra.mxu0 0
      %2200 = vmatprep.subr.bf16.mxu0 0
      %2201 = vmatpush1.bf16.msra.mxu0 0
      %2202 = vmatprep.subr.bf16.mxu0 0
      %2203 = vmatpush1.bf16.msra.mxu0 0
      %2204 = vmatprep.subr.bf16.mxu0 0
      %2205 = vmatpush1.bf16.msra.mxu0 0
      %2206 = vmatprep.subr.bf16.mxu0 0
      %2207 = vmatpush1.bf16.msra.mxu0 0
      %2208 = vmatprep.mubr.bf16.mxu0 0
      %2209 = vmatmul.mubr.bf16.gmra.mrb[0].mxu0 %v2171
      %v2210 = vpop.f32.mrb[0].mxu0
      %v2211 = vadd.f32 0.0, %v2210
      %v2212 = vpop.f32.mrb[0].mxu0
      %v2213 = vpop.f32.mrb[0].mxu0
      %v2214 = vadd.f32 0.0, %v2213
      %v2215 = vpop.f32.mrb[0].mxu0
      %2216 = vdwg.mxu0
      %v2217 = vpack.c.bf16 %v2073, %v2070
      %v2218 = vpack.c.bf16 %v2120, %v2117
      %v2219 = vpack.c.bf16 %v2167, %v2164
      %v2220 = vpack.c.bf16 %v2214, %v2211
      %v2222 = vsel %vm1733, %v2217, 0
      %v2225 = vsel %vm842, %v1149, 0
      %2227 = vmatprep.subr.bf16.mxu0 0
      %2228 = vmatpush1.bf16.msra.mxu0 %v2225
      %2229 = vmatprep.subr.bf16.mxu0 0
      %2230 = vmatpush1.bf16.msra.mxu0 0
      %2231 = vmatprep.subr.bf16.mxu0 0
      %2232 = vmatpush1.bf16.msra.mxu0 0
      %2233 = vmatprep.subr.bf16.mxu0 0
      %2234 = vmatpush1.bf16.msra.mxu0 0
      %2235 = vmatprep.subr.bf16.mxu0 0
      %2236 = vmatpush1.bf16.msra.mxu0 0
      %2237 = vmatprep.subr.bf16.mxu0 0
      %2238 = vmatpush1.bf16.msra.mxu0 0
      %2239 = vmatprep.subr.bf16.mxu0 0
      %2240 = vmatpush1.bf16.msra.mxu0 0
      %2241 = vmatprep.subr.bf16.mxu0 0
      %2242 = vmatpush1.bf16.msra.mxu0 0
      %2243 = vmatprep.subr.bf16.mxu0 0
      %2244 = vmatpush1.bf16.msra.mxu0 0
      %2245 = vmatprep.subr.bf16.mxu0 0
      %2246 = vmatpush1.bf16.msra.mxu0 0
      %2247 = vmatprep.subr.bf16.mxu0 0
      %2248 = vmatpush1.bf16.msra.mxu0 0
      %2249 = vmatprep.subr.bf16.mxu0 0
      %2250 = vmatpush1.bf16.msra.mxu0 0
      %2251 = vmatprep.subr.bf16.mxu0 0
      %2252 = vmatpush1.bf16.msra.mxu0 0
      %2253 = vmatprep.subr.bf16.mxu0 0
      %2254 = vmatpush1.bf16.msra.mxu0 0
      %2255 = vmatprep.subr.bf16.mxu0 0
      %2256 = vmatpush1.bf16.msra.mxu0 0
      %2257 = vmatprep.subr.bf16.mxu0 0
      %2258 = vmatpush1.bf16.msra.mxu0 0
      %2259 = vmatprep.mubr.bf16.mxu0 0
      %2260 = vmatmul.mubr.bf16.gmra.mrb[0].mxu0 %v2222
      %v2261 = vpop.f32.mrb[0].mxu0
      %v2262 = vadd.f32 0.0, %v2261
      %v2263 = vpop.f32.mrb[0].mxu0
      %v2264 = vpop.f32.mrb[0].mxu0
      %v2265 = vadd.f32 0.0, %v2264
      %v2266 = vpop.f32.mrb[0].mxu0
      %2267 = vdwg.mxu0
      %v2269 = vsel %vm1733, %v2218, 0
      %v2272 = vsel %vm842, %v1150, 0
      %2274 = vmatprep.subr.bf16.mxu0 0
      %2275 = vmatpush1.bf16.msra.mxu0 %v2272
      %2276 = vmatprep.subr.bf16.mxu0 0
      %2277 = vmatpush1.bf16.msra.mxu0 0
      %2278 = vmatprep.subr.bf16.mxu0 0
      %2279 = vmatpush1.bf16.msra.mxu0 0
      %2280 = vmatprep.subr.bf16.mxu0 0
      %2281 = vmatpush1.bf16.msra.mxu0 0
      %2282 = vmatprep.subr.bf16.mxu0 0
      %2283 = vmatpush1.bf16.msra.mxu0 0
      %2284 = vmatprep.subr.bf16.mxu0 0
      %2285 = vmatpush1.bf16.msra.mxu0 0
      %2286 = vmatprep.subr.bf16.mxu0 0
      %2287 = vmatpush1.bf16.msra.mxu0 0
      %2288 = vmatprep.subr.bf16.mxu0 0
      %2289 = vmatpush1.bf16.msra.mxu0 0
      %2290 = vmatprep.subr.bf16.mxu0 0
      %2291 = vmatpush1.bf16.msra.mxu0 0
      %2292 = vmatprep.subr.bf16.mxu0 0
      %2293 = vmatpush1.bf16.msra.mxu0 0
      %2294 = vmatprep.subr.bf16.mxu0 0
      %2295 = vmatpush1.bf16.msra.mxu0 0
      %2296 = vmatprep.subr.bf16.mxu0 0
      %2297 = vmatpush1.bf16.msra.mxu0 0
      %2298 = vmatprep.subr.bf16.mxu0 0
      %2299 = vmatpush1.bf16.msra.mxu0 0
      %2300 = vmatprep.subr.bf16.mxu0 0
      %2301 = vmatpush1.bf16.msra.mxu0 0
      %2302 = vmatprep.subr.bf16.mxu0 0
      %2303 = vmatpush1.bf16.msra.mxu0 0
      %2304 = vmatprep.subr.bf16.mxu0 0
      %2305 = vmatpush1.bf16.msra.mxu0 0
      %2306 = vmatprep.mubr.bf16.mxu0 0
      %2307 = vmatmul.mubr.bf16.gmra.mrb[0].mxu0 %v2269
      %v2308 = vpop.f32.mrb[0].mxu0
      %v2309 = vadd.f32 0.0, %v2308
      %v2310 = vpop.f32.mrb[0].mxu0
      %v2311 = vpop.f32.mrb[0].mxu0
      %v2312 = vadd.f32 0.0, %v2311
      %v2313 = vpop.f32.mrb[0].mxu0
      %2314 = vdwg.mxu0
      %v2316 = vsel %vm1733, %v2219, 0
      %v2319 = vsel %vm842, %v1151, 0
      %2321 = vmatprep.subr.bf16.mxu0 0
      %2322 = vmatpush1.bf16.msra.mxu0 %v2319
      %2323 = vmatprep.subr.bf16.mxu0 0
      %2324 = vmatpush1.bf16.msra.mxu0 0
      %2325 = vmatprep.subr.bf16.mxu0 0
      %2326 = vmatpush1.bf16.msra.mxu0 0
      %2327 = vmatprep.subr.bf16.mxu0 0
      %2328 = vmatpush1.bf16.msra.mxu0 0
      %2329 = vmatprep.subr.bf16.mxu0 0
      %2330 = vmatpush1.bf16.msra.mxu0 0
      %2331 = vmatprep.subr.bf16.mxu0 0
      %2332 = vmatpush1.bf16.msra.mxu0 0
      %2333 = vmatprep.subr.bf16.mxu0 0
      %2334 = vmatpush1.bf16.msra.mxu0 0
      %2335 = vmatprep.subr.bf16.mxu0 0
      %2336 = vmatpush1.bf16.msra.mxu0 0
      %2337 = vmatprep.subr.bf16.mxu0 0
      %2338 = vmatpush1.bf16.msra.mxu0 0
      %2339 = vmatprep.subr.bf16.mxu0 0
      %2340 = vmatpush1.bf16.msra.mxu0 0
      %2341 = vmatprep.subr.bf16.mxu0 0
      %2342 = vmatpush1.bf16.msra.mxu0 0
      %2343 = vmatprep.subr.bf16.mxu0 0
      %2344 = vmatpush1.bf16.msra.mxu0 0
      %2345 = vmatprep.subr.bf16.mxu0 0
      %2346 = vmatpush1.bf16.msra.mxu0 0
      %2347 = vmatprep.subr.bf16.mxu0 0
      %2348 = vmatpush1.bf16.msra.mxu0 0
      %2349 = vmatprep.subr.bf16.mxu0 0
      %2350 = vmatpush1.bf16.msra.mxu0 0
      %2351 = vmatprep.subr.bf16.mxu0 0
      %2352 = vmatpush1.bf16.msra.mxu0 0
      %2353 = vmatprep.mubr.bf16.mxu0 0
      %2354 = vmatmul.mubr.bf16.gmra.mrb[0].mxu0 %v2316
      %v2355 = vpop.f32.mrb[0].mxu0
      %v2356 = vadd.f32 0.0, %v2355
      %v2357 = vpop.f32.mrb[0].mxu0
      %v2358 = vpop.f32.mrb[0].mxu0
      %v2359 = vadd.f32 0.0, %v2358
      %v2360 = vpop.f32.mrb[0].mxu0
      %2361 = vdwg.mxu0
      %v2363 = vsel %vm1733, %v2220, 0
      %v2366 = vsel %vm842, %v1152, 0
      %2368 = vmatprep.subr.bf16.mxu0 0
      %2369 = vmatpush1.bf16.msra.mxu0 %v2366
      %2370 = vmatprep.subr.bf16.mxu0 0
      %2371 = vmatpush1.bf16.msra.mxu0 0
      %2372 = vmatprep.subr.bf16.mxu0 0
      %2373 = vmatpush1.bf16.msra.mxu0 0
      %2374 = vmatprep.subr.bf16.mxu0 0
      %2375 = vmatpush1.bf16.msra.mxu0 0
      %2376 = vmatprep.subr.bf16.mxu0 0
      %2377 = vmatpush1.bf16.msra.mxu0 0
      %2378 = vmatprep.subr.bf16.mxu0 0
      %2379 = vmatpush1.bf16.msra.mxu0 0
      %2380 = vmatprep.subr.bf16.mxu0 0
      %2381 = vmatpush1.bf16.msra.mxu0 0
      %2382 = vmatprep.subr.bf16.mxu0 0
      %2383 = vmatpush1.bf16.msra.mxu0 0
      %2384 = vmatprep.subr.bf16.mxu0 0
      %2385 = vmatpush1.bf16.msra.mxu0 0
      %2386 = vmatprep.subr.bf16.mxu0 0
      %2387 = vmatpush1.bf16.msra.mxu0 0
      %2388 = vmatprep.subr.bf16.mxu0 0
      %2389 = vmatpush1.bf16.msra.mxu0 0
      %2390 = vmatprep.subr.bf16.mxu0 0
      %2391 = vmatpush1.bf16.msra.mxu0 0
      %2392 = vmatprep.subr.bf16.mxu0 0
      %2393 = vmatpush1.bf16.msra.mxu0 0
      %2394 = vmatprep.subr.bf16.mxu0 0
      %2395 = vmatpush1.bf16.msra.mxu0 0
      %2396 = vmatprep.subr.bf16.mxu0 0
      %2397 = vmatpush1.bf16.msra.mxu0 0
      %2398 = vmatprep.subr.bf16.mxu0 0
      %2399 = vmatpush1.bf16.msra.mxu0 0
      %2400 = vmatprep.mubr.bf16.mxu0 0
      %2401 = vmatmul.mubr.bf16.gmra.mrb[0].mxu0 %v2363
      %v2402 = vpop.f32.mrb[0].mxu0
      %v2403 = vadd.f32 0.0, %v2402
      %v2404 = vpop.f32.mrb[0].mxu0
      %v2405 = vpop.f32.mrb[0].mxu0
      %v2406 = vadd.f32 0.0, %v2405
      %v2407 = vpop.f32.mrb[0].mxu0
      %2408 = vdwg.mxu0
      %v2409 = vadd.f32 %v2262, %v2309
      %v2410 = vadd.f32 %v2409, %v2356
      %v2411 = vadd.f32 %v2410, %v2403
      %v2412 = vsel %vm842, %v2265, 0.0
      %v2413 = vsel %vm842, %v2312, 0.0
      %v2414 = vadd.f32 %v2412, %v2413
      %v2415 = vsel %vm842, %v2359, 0.0
      %v2416 = vadd.f32 %v2414, %v2415
      %v2417 = vsel %vm842, %v2406, 0.0
      %v2418 = vadd.f32 %v2416, %v2417
      %v2420 = vlaneseq
      %v2421 = vshrl.u32 %v2420, 7
      %v2422 = vsub.s32 0, %v2421
      %v2423 = vrot.slane %v1153, %v2422
      %v2425 = vadd.f32 %v2411, %v2423
      %v2426 = vadd.f32 %v2418, %v2423
      %v2427 = vadd.f32 %v1133, %v2425
      %v2428 = vadd.f32 %v1134, %v2426
      %2429 = vadd.xlane.f32.xlu0 %v2427
      %v2430 = vpop.xlane.xlu0 %2429
      %v2431 = vsel %vm842, %v2428, 0.0
      %2432 = vadd.xlane.f32.xlu0 %v2431
      %v2433 = vpop.xlane.xlu0 %2432
      %v2434 = vmul.f32 %v2430, 0.03125
      %v2435 = vmul.f32 %v2433, 0.03125
      %v2436 = vsub.f32 %v2427, %v2434
      %v2437 = vsub.f32 %v2428, %v2435
      %v2438 = vsel %vm1097, %v2436, 0.0
      %v2439 = vsel %vm1097, %v2437, 0.0
      %v2440 = vmul.f32 %v2438, %v2438
      %v2441 = vmul.f32 %v2439, %v2439
      %2442 = vadd.xlane.f32.xlu0 %v2440
      %v2443 = vpop.xlane.xlu0 %2442
      %v2444 = vsel %vm842, %v2441, 0.0
      %2445 = vadd.xlane.f32.xlu0 %v2444
      %v2446 = vpop.xlane.xlu0 %2445
      %v2447 = vmul.f32 %v2443, 0.03125
      %v2448 = vmul.f32 %v2446, 0.03125
      %v2449 = vadd.f32 %v2447, 1e-05
      %v2450 = vadd.f32 %v2448, 1e-05
      %v2451 = vrsqrt.pop %v2449
      %v2452 = vrsqrt.pop %v2450
      %v2453 = vmul.f32 %v2438, %v2451
      %v2454 = vmul.f32 %v2439, %v2452
      %v2456 = vlaneseq
      %v2457 = vshrl.u32 %v2456, 7
      %v2458 = vsub.s32 0, %v2457
      %v2459 = vrot.slane %v1154, %v2458
      %v2461 = vmul.f32 %v2453, %v2459
      %v2462 = vmul.f32 %v2454, %v2459
      %v2464 = vlaneseq
      %v2465 = vshrl.u32 %v2464, 7
      %v2466 = vsub.s32 0, %v2465
      %v2467 = vrot.slane %v1155, %v2466
      %v2469 = vadd.f32 %v2461, %v2467
      %v2470 = vadd.f32 %v2462, %v2467
      %v2471 = vpack.c.bf16 %v2470, %v2469
      %v2473 = vlaneseq
      %v2474 = vshrl.u32 %v2473, 7
      %v2475 = vsub.s32 0, %v2474
      %v2476 = vrot.slane %v1172, %v2475
      %v2494 = vunpack.c.l.b16 %v1156
      %v2495 = vunpack.c.l.b16 %v1157
      %v2496 = vunpack.c.l.b16 %v1158
      %v2497 = vunpack.c.l.b16 %v1159
      %v2498 = vunpack.c.l.b16 %v1160
      %v2499 = vunpack.c.l.b16 %v1161
      %v2500 = vunpack.c.l.b16 %v1162
      %v2501 = vunpack.c.l.b16 %v1163
      %v2502 = vunpack.c.l.b16 %v1164
      %v2503 = vunpack.c.l.b16 %v1165
      %v2504 = vunpack.c.l.b16 %v1166
      %v2505 = vunpack.c.l.b16 %v1167
      %v2506 = vunpack.c.l.b16 %v1168
      %v2507 = vunpack.c.l.b16 %v1169
      %v2508 = vunpack.c.l.b16 %v1170
      %v2509 = vunpack.c.l.b16 %v1171
      %v2510 = vpack.c.b16 %v2495, %v2494
      %v2511 = vpack.c.b16 %v2497, %v2496
      %v2512 = vpack.c.b16 %v2499, %v2498
      %v2513 = vpack.c.b16 %v2501, %v2500
      %v2514 = vpack.c.b16 %v2503, %v2502
      %v2515 = vpack.c.b16 %v2505, %v2504
      %v2516 = vpack.c.b16 %v2507, %v2506
      %v2517 = vpack.c.b16 %v2509, %v2508
      %2526 = vmatprep.subr.bf16.mxu0 0
      %2527 = vmatpush1.bf16.msra.mxu0 %v2510
      %2528 = vmatprep.subr.bf16.mxu0 0
      %2529 = vmatpush1.bf16.msra.mxu0 %v2511
      %2530 = vmatprep.subr.bf16.mxu0 0
      %2531 = vmatpush1.bf16.msra.mxu0 %v2512
      %2532 = vmatprep.subr.bf16.mxu0 0
      %2533 = vmatpush1.bf16.msra.mxu0 %v2513
      %2534 = vmatprep.subr.bf16.mxu0 0
      %2535 = vmatpush1.bf16.msra.mxu0 %v2514
      %2536 = vmatprep.subr.bf16.mxu0 0
      %2537 = vmatpush1.bf16.msra.mxu0 %v2515
      %2538 = vmatprep.subr.bf16.mxu0 0
      %2539 = vmatpush1.bf16.msra.mxu0 %v2516
      %2540 = vmatprep.subr.bf16.mxu0 0
      %2541 = vmatpush1.bf16.msra.mxu0 %v2517
      %2542 = vmatprep.subr.bf16.mxu0 0
      %2543 = vmatpush1.bf16.msra.mxu0 0
      %2544 = vmatprep.subr.bf16.mxu0 0
      %2545 = vmatpush1.bf16.msra.mxu0 0
      %2546 = vmatprep.subr.bf16.mxu0 0
      %2547 = vmatpush1.bf16.msra.mxu0 0
      %2548 = vmatprep.subr.bf16.mxu0 0
      %2549 = vmatpush1.bf16.msra.mxu0 0
      %2550 = vmatprep.subr.bf16.mxu0 0
      %2551 = vmatpush1.bf16.msra.mxu0 0
      %2552 = vmatprep.subr.bf16.mxu0 0
      %2553 = vmatpush1.bf16.msra.mxu0 0
      %2554 = vmatprep.subr.bf16.mxu0 0
      %2555 = vmatpush1.bf16.msra.mxu0 0
      %2556 = vmatprep.subr.bf16.mxu0 0
      %2557 = vmatpush1.bf16.msra.mxu0 0
      %2558 = vmatprep.mubr.bf16.mxu0 0
      %2559 = vmatmul.mubr.bf16.gmra.mrb[0].mxu0 %v2471
      %v2560 = vpop.f32.mrb[0].mxu0
      %v2561 = vadd.f32 %v2476, %v2560
      %v2562 = vpop.f32.mrb[0].mxu0
      %v2563 = vpop.f32.mrb[0].mxu0
      %v2564 = vadd.f32 %v2476, %v2563
      %v2565 = vpop.f32.mrb[0].mxu0
      %2566 = vdwg.mxu0
      %v2567 = vmul.f32 %v2561, %v2561
      %v2568 = vmul.f32 %v2564, %v2564
      %v2569 = vmul.f32 %v2561, %v2567
      %v2570 = vmul.f32 %v2564, %v2568
      %v2571 = vmul.f32 %v2569, 0.044715
      %v2572 = vmul.f32 %v2570, 0.044715
      %v2573 = vadd.f32 %v2561, %v2571
      %v2574 = vadd.f32 %v2564, %v2572
      %v2575 = vmul.f32 %v2573, 0.7978846
      %v2576 = vmul.f32 %v2574, 0.7978846
      %v2577 = vtanh.pop %v2575
      %v2578 = vtanh.pop %v2576
      %v2579 = vadd.f32 %v2577, 1.0
      %v2580 = vadd.f32 %v2578, 1.0
      %v2581 = vmul.f32 %v2579, 0.5
      %v2582 = vmul.f32 %v2580, 0.5
      %v2583 = vmul.f32 %v2561, %v2581
      %v2584 = vmul.f32 %v2564, %v2582
      %v2585 = vpack.c.bf16 %v2584, %v2583
      %v2587 = vlaneseq
      %v2588 = vshrl.u32 %v2587, 7
      %v2589 = vsub.s32 0, %v2588
      %v2590 = vrot.slane %v1189, %v2589
      %v2608 = vunpack.c.l.b16 %v1173
      %v2609 = vunpack.c.l.b16 %v1174
      %v2610 = vunpack.c.l.b16 %v1175
      %v2611 = vunpack.c.l.b16 %v1176
      %v2612 = vunpack.c.l.b16 %v1177
      %v2613 = vunpack.c.l.b16 %v1178
      %v2614 = vunpack.c.l.b16 %v1179
      %v2615 = vunpack.c.l.b16 %v1180
      %v2616 = vunpack.c.l.b16 %v1181
      %v2617 = vunpack.c.l.b16 %v1182
      %v2618 = vunpack.c.l.b16 %v1183
      %v2619 = vunpack.c.l.b16 %v1184
      %v2620 = vunpack.c.l.b16 %v1185
      %v2621 = vunpack.c.l.b16 %v1186
      %v2622 = vunpack.c.l.b16 %v1187
      %v2623 = vunpack.c.l.b16 %v1188
      %v2624 = vpack.c.b16 %v2609, %v2608
      %v2625 = vpack.c.b16 %v2611, %v2610
      %v2626 = vpack.c.b16 %v2613, %v2612
      %v2627 = vpack.c.b16 %v2615, %v2614
      %v2628 = vpack.c.b16 %v2617, %v2616
      %v2629 = vpack.c.b16 %v2619, %v2618
      %v2630 = vpack.c.b16 %v2621, %v2620
      %v2631 = vpack.c.b16 %v2623, %v2622
      %2640 = vmatprep.subr.bf16.mxu0 0
      %2641 = vmatpush1.bf16.msra.mxu0 %v2624
      %2642 = vmatprep.subr.bf16.mxu0 0
      %2643 = vmatpush1.bf16.msra.mxu0 %v2625
      %2644 = vmatprep.subr.bf16.mxu0 0
      %2645 = vmatpush1.bf16.msra.mxu0 %v2626
      %2646 = vmatprep.subr.bf16.mxu0 0
      %2647 = vmatpush1.bf16.msra.mxu0 %v2627
      %2648 = vmatprep.subr.bf16.mxu0 0
      %2649 = vmatpush1.bf16.msra.mxu0 %v2628
      %2650 = vmatprep.subr.bf16.mxu0 0
      %2651 = vmatpush1.bf16.msra.mxu0 %v2629
      %2652 = vmatprep.subr.bf16.mxu0 0
      %2653 = vmatpush1.bf16.msra.mxu0 %v2630
      %2654 = vmatprep.subr.bf16.mxu0 0
      %2655 = vmatpush1.bf16.msra.mxu0 %v2631
      %2656 = vmatprep.subr.bf16.mxu0 0
      %2657 = vmatpush1.bf16.msra.mxu0 0
      %2658 = vmatprep.subr.bf16.mxu0 0
      %2659 = vmatpush1.bf16.msra.mxu0 0
      %2660 = vmatprep.subr.bf16.mxu0 0
      %2661 = vmatpush1.bf16.msra.mxu0 0
      %2662 = vmatprep.subr.bf16.mxu0 0
      %2663 = vmatpush1.bf16.msra.mxu0 0
      %2664 = vmatprep.subr.bf16.mxu0 0
      %2665 = vmatpush1.bf16.msra.mxu0 0
      %2666 = vmatprep.subr.bf16.mxu0 0
      %2667 = vmatpush1.bf16.msra.mxu0 0
      %2668 = vmatprep.subr.bf16.mxu0 0
      %2669 = vmatpush1.bf16.msra.mxu0 0
      %2670 = vmatprep.subr.bf16.mxu0 0
      %2671 = vmatpush1.bf16.msra.mxu0 0
      %2672 = vmatprep.mubr.bf16.mxu0 0
      %2673 = vmatmul.mubr.bf16.gmra.mrb[0].mxu0 %v2585
      %v2674 = vpop.f32.mrb[0].mxu0
      %v2675 = vadd.f32 %v2590, %v2674
      %v2676 = vpop.f32.mrb[0].mxu0
      %v2677 = vpop.f32.mrb[0].mxu0
      %v2678 = vadd.f32 %v2590, %v2677
      %v2679 = vpop.f32.mrb[0].mxu0
      %2680 = vdwg.mxu0
      %v2681 = vadd.f32 %v2427, %v2675
      %v2682 = vadd.f32 %v2428, %v2678
      %v2683 = vld [vmem:[%s22] sm:$0x1]
      %v2684 = vld [vmem:[%s23] sm:$0x1]
      %2685 = vadd.xlane.f32.xlu0 %v2681
      %v2686 = vpop.xlane.xlu0 %2685
      %v2687 = vsel %vm842, %v2682, 0.0
      %2688 = vadd.xlane.f32.xlu0 %v2687
      %v2689 = vpop.xlane.xlu0 %2688
      %v2690 = vmul.f32 %v2686, 0.03125
      %v2691 = vmul.f32 %v2689, 0.03125
      %v2692 = vsub.f32 %v2681, %v2690
      %v2693 = vsub.f32 %v2682, %v2691
      %v2694 = vsel %vm1097, %v2692, 0.0
      %v2695 = vsel %vm1097, %v2693, 0.0
      %v2696 = vmul.f32 %v2694, %v2694
      %v2697 = vmul.f32 %v2695, %v2695
      %2698 = vadd.xlane.f32.xlu0 %v2696
      %v2699 = vpop.xlane.xlu0 %2698
      %v2700 = vsel %vm842, %v2697, 0.0
      %2701 = vadd.xlane.f32.xlu0 %v2700
      %v2702 = vpop.xlane.xlu0 %2701
      %v2703 = vmul.f32 %v2699, 0.03125
      %v2704 = vmul.f32 %v2702, 0.03125
      %v2705 = vadd.f32 %v2703, 1e-05
      %v2706 = vadd.f32 %v2704, 1e-05
      %v2707 = vrsqrt.pop %v2705
      %v2708 = vrsqrt.pop %v2706
      %v2709 = vmul.f32 %v2694, %v2707
      %v2710 = vmul.f32 %v2695, %v2708
      %v2712 = vlaneseq
      %v2713 = vshrl.u32 %v2712, 7
      %v2714 = vsub.s32 0, %v2713
      %v2715 = vrot.slane %v2683, %v2714
      %v2717 = vmul.f32 %v2709, %v2715
      %v2718 = vmul.f32 %v2710, %v2715
      %v2720 = vlaneseq
      %v2721 = vshrl.u32 %v2720, 7
      %v2722 = vsub.s32 0, %v2721
      %v2723 = vrot.slane %v2684, %v2722
      %v2725 = vadd.f32 %v2717, %v2723
      %v2726 = vadd.f32 %v2718, %v2723
      %v2727 = vld [vmem:[%s24] sm:$0xf]
      %v2728 = vld [vmem:[%s24 + $0x4] sm:$0xf]
      %v2729 = vld [vmem:[%s24 + $0x8] sm:$0xf]
      %v2730 = vld [vmem:[%s24 + $0xc] sm:$0xf]
      %v2731 = vld [vmem:[%s24 + $0x10] sm:$0xf]
      %v2732 = vld [vmem:[%s24 + $0x14] sm:$0xf]
      %v2733 = vld [vmem:[%s24 + $0x18] sm:$0xf]
      %v2734 = vld [vmem:[%s24 + $0x1c] sm:$0xf]
      %v2735 = vld [vmem:[%s24 + $0x20] sm:$0xf]
      %v2736 = vld [vmem:[%s24 + $0x24] sm:$0xf]
      %v2737 = vld [vmem:[%s24 + $0x28] sm:$0xf]
      %v2738 = vld [vmem:[%s24 + $0x2c] sm:$0xf]
      %v2739 = vld [vmem:[%s24 + $0x30] sm:$0xf]
      %v2740 = vld [vmem:[%s24 + $0x34] sm:$0xf]
      %v2741 = vld [vmem:[%s24 + $0x38] sm:$0xf]
      %v2742 = vld [vmem:[%s24 + $0x3c] sm:$0xf]
      %v2743 = vpack.c.bf16 %v2726, %v2725
      %v2744 = vld [vmem:[%s25] sm:$0x1]
      %v2746 = vlaneseq
      %v2747 = vshrl.u32 %v2746, 7
      %v2748 = vsub.s32 0, %v2747
      %v2749 = vrot.slane %v2744, %v2748
      %v2767 = vunpack.c.l.b16 %v2727
      %v2768 = vunpack.c.l.b16 %v2728
      %v2769 = vunpack.c.l.b16 %v2729
      %v2770 = vunpack.c.l.b16 %v2730
      %v2771 = vunpack.c.l.b16 %v2731
      %v2772 = vunpack.c.l.b16 %v2732
      %v2773 = vunpack.c.l.b16 %v2733
      %v2774 = vunpack.c.l.b16 %v2734
      %v2775 = vunpack.c.l.b16 %v2735
      %v2776 = vunpack.c.l.b16 %v2736
      %v2777 = vunpack.c.l.b16 %v2737
      %v2778 = vunpack.c.l.b16 %v2738
      %v2779 = vunpack.c.l.b16 %v2739
      %v2780 = vunpack.c.l.b16 %v2740
      %v2781 = vunpack.c.l.b16 %v2741
      %v2782 = vunpack.c.l.b16 %v2742
      %v2783 = vpack.c.b16 %v2768, %v2767
      %v2784 = vpack.c.b16 %v2770, %v2769
      %v2785 = vpack.c.b16 %v2772, %v2771
      %v2786 = vpack.c.b16 %v2774, %v2773
      %v2787 = vpack.c.b16 %v2776, %v2775
      %v2788 = vpack.c.b16 %v2778, %v2777
      %v2789 = vpack.c.b16 %v2780, %v2779
      %v2790 = vpack.c.b16 %v2782, %v2781
      %2799 = vmatprep.subr.bf16.mxu0 0
      %2800 = vmatpush1.bf16.msra.mxu0 %v2783
      %2801 = vmatprep.subr.bf16.mxu0 0
      %2802 = vmatpush1.bf16.msra.mxu0 %v2784
      %2803 = vmatprep.subr.bf16.mxu0 0
      %2804 = vmatpush1.bf16.msra.mxu0 %v2785
      %2805 = vmatprep.subr.bf16.mxu0 0
      %2806 = vmatpush1.bf16.msra.mxu0 %v2786
      %2807 = vmatprep.subr.bf16.mxu0 0
      %2808 = vmatpush1.bf16.msra.mxu0 %v2787
      %2809 = vmatprep.subr.bf16.mxu0 0
      %2810 = vmatpush1.bf16.msra.mxu0 %v2788
      %2811 = vmatprep.subr.bf16.mxu0 0
      %2812 = vmatpush1.bf16.msra.mxu0 %v2789
      %2813 = vmatprep.subr.bf16.mxu0 0
      %2814 = vmatpush1.bf16.msra.mxu0 %v2790
      %2815 = vmatprep.subr.bf16.mxu0 0
      %2816 = vmatpush1.bf16.msra.mxu0 0
      %2817 = vmatprep.subr.bf16.mxu0 0
      %2818 = vmatpush1.bf16.msra.mxu0 0
      %2819 = vmatprep.subr.bf16.mxu0 0
      %2820 = vmatpush1.bf16.msra.mxu0 0
      %2821 = vmatprep.subr.bf16.mxu0 0
      %2822 = vmatpush1.bf16.msra.mxu0 0
      %2823 = vmatprep.subr.bf16.mxu0 0
      %2824 = vmatpush1.bf16.msra.mxu0 0
      %2825 = vmatprep.subr.bf16.mxu0 0
      %2826 = vmatpush1.bf16.msra.mxu0 0
      %2827 = vmatprep.subr.bf16.mxu0 0
      %2828 = vmatpush1.bf16.msra.mxu0 0
      %2829 = vmatprep.subr.bf16.mxu0 0
      %2830 = vmatpush1.bf16.msra.mxu0 0
      %2831 = vmatprep.mubr.bf16.mxu0 0
      %2832 = vmatmul.mubr.bf16.gmra.mrb[0].mxu0 %v2743
      %v2833 = vpop.f32.mrb[0].mxu0
      %v2834 = vadd.f32 %v2749, %v2833
      %v2835 = vpop.f32.mrb[0].mxu0
      %v2836 = vpop.f32.mrb[0].mxu0
      %v2837 = vadd.f32 %v2749, %v2836
      %v2838 = vpop.f32.mrb[0].mxu0
      %2839 = vdwg.mxu0
      %v2840 = vld [vmem:[%s826] sm:$0xff]
      %v2841 = vld [vmem:[%s826 + $0x8] sm:$0xf]
      %v2842 = vadd.f32 %v2834, %v2840
      %v2843 = vadd.f32 %v2837, %v2841
      %v2844 = vpack.c.bf16 %v2843, %v2842
      %v2846 = vunpack.c.l.b16 %v2844
      %v2847 = vunpack.c.h.b16 %v2844
      %v2848 = vpack.c.b16 %v2846, %v2846
      %v2849 = vpack.c.b16 %v2847, %v2847
      %2852 = vst [vmem:[%s831] sm:$0xf] %v2848
      %2853 = vst [vmem:[%s831 + $0x4] sm:$0x3] %v2849
      %p2854 = scmp.lt.s32.totalorder %s37, 1
      %s2855 = scalar_select %p2854, %s37, 1
      %s2856 = smul.addr %s2855, 2
      %s2857 = smul.addr %s2856, 4
      %s2858 = scalar_lea.vmem %s26, %s2857
      // Predicated region
      $region125: #{mae_forward.6} parent=123 // pred_check
        %p2859 = pneg %p616
      $region126: #{mae_forward.6} parent=123 // pred_check_branch
        %2861 = sbr.rel (%p2859) target = $region128
      $region127: #{mae_forward.6} parent=123 // pred_region
        _
      $region128: #{mae_forward.6} parent=123 // pred_fallthru
        _
    $region124: #{mae_forward.6} parent=5 // pred_fallthru
      _
    %p2862 = scmp.le.s32.totalorder 2, %s32
    // Predicated region
    $region129: #{mae_forward.6} parent=5 // pred_check
      %p2863 = pneg %p2862
    $region130: #{mae_forward.6} parent=5 // pred_check_branch
      %2865 = sbr.rel (%p2863) target = $region132
    $region131: #{mae_forward.6} parent=5 // pred_region
      %s2866 = ssub.s32 %s32, 2
      // Predicated region
      $region133: #{mae_forward.6} parent=131 // pred_check
        %p2867 = pneg %p622
      $region134: #{mae_forward.6} parent=131 // pred_check_branch
        %2869 = sbr.rel (%p2867) target = $region136
      $region135: #{mae_forward.6} parent=131 // pred_region
        %p2870 = scmp.lt.s32.totalorder %s38, 1
        %s2871 = scalar_select %p2870, %s38, 1
        %s2872 = smul.addr %s2871, 2
        %s2873 = smul.addr %s2872, 4
        %s2874 = scalar_lea.vmem %s26, %s2873
      $region136: #{mae_forward.6} parent=131 // pred_fallthru
        _
    $region132: #{mae_forward.6} parent=5 // pred_fallthru
      _
  $region6: #{mae_forward.6} parent=0 // loop_footer
    %s36 = sadd.s32 1, %s32
  $region7: #{mae_forward.6} parent=0 // loop_footer_branch
    %31 = sbr.rel target = $region3
  $region8: #{mae_forward.6} parent=0 // loop_exit
    _

</llo_original>
